<compile_context>
chip_gen: v7x
topology: tpu7x:2x2x1
jax: 0.10.0
libtpu: 0.0.40
codegen_flags: <defaults>
</compile_context>

<pallas_src>
import jax
import jax.numpy as jnp
from jax import lax
from jax.experimental import pallas as pl
from jax.experimental.pallas import tpu as pltpu

LN_EPS = 1e-5
NEG_SLOPE = 0.01            # nn.LeakyReLU default
MATMUL_DTYPE = jnp.bfloat16  # MXU operand dtype (accumulation stays f32)


def _leaky(x):
    return jnp.where(x > 0, x, NEG_SLOPE * x)


def _layernorm(x, g, b):
    # x: (M, C); g, b: (1, C). PyTorch LayerNorm: biased variance, eps=1e-5.
    mean = jnp.mean(x, axis=-1, keepdims=True)
    var = jnp.mean((x - mean) ** 2, axis=-1, keepdims=True)
    return (x - mean) * lax.rsqrt(var + LN_EPS) * g + b


def _lvam_kernel(
    xp_ref,                                   # (NB, H+2, W+2, Cin) pre-padded input
    w1_ref, b1_ref, g1_ref, be1_ref,          # conv1 (9*Cin, C1) + ln1
    w2_ref, b2_ref, g2_ref, be2_ref,          # conv2 (9*C1, C2)  + ln2
    wmu_ref, bmu_ref, gmu_ref, bemu_ref,      # mu head (C2, Cout) + ln_mu
    wlv_ref, blv_ref, glv_ref, belv_ref,      # logvar head (C2, Cout) + ln_logvar
    out_ref,                                  # (NB, H*W, 2*Cout)  [mu | logvar]
    h1pad_ref,                                # scratch (NB, H+2, W+2, C1), f32
):
    NB, Hp2, Wp2, Cin = xp_ref.shape
    H, W = Hp2 - 2, Wp2 - 2
    C1 = w1_ref.shape[-1]
    Cout = wmu_ref.shape[-1]
    M = NB * H * W
    mm = w1_ref.dtype                          # MXU operand dtype (e.g. bf16)

    def im2col(ref):
        # (NB, H+2, W+2, C) padded ref -> (NB*H*W, 9*C) patch matrix,
        # tap order (dy, dx, c) matching the wrapper's weight reshape.
        c = ref.shape[-1]
        taps = [ref[:, dy:dy + H, dx:dx + W, :]
                for dy in range(3) for dx in range(3)]
        return jnp.concatenate(taps, axis=-1).reshape(M, 9 * c)

    # ---- conv1: one fused K = 9*Cin matmul -> ln1 -> leaky ----
    h1 = jnp.dot(im2col(xp_ref).astype(mm), w1_ref[...],
                 preferred_element_type=jnp.float32) + b1_ref[...]
    h1 = _leaky(_layernorm(h1, g1_ref[...], be1_ref[...]))

    # ---- conv2: scratch holds h1 with a zero halo. Only the 1-wide halo
    #      strips are zeroed (interior is fully overwritten); done every step
    #      so it stays correct when the parallel grid axis is sharded across
    #      TensorCores, each with its own scratch instance. ----
    zdt = h1pad_ref.dtype
    h1pad_ref[:, 0:1, :, :] = jnp.zeros((NB, 1, Wp2, C1), zdt)
    h1pad_ref[:, H + 1:H + 2, :, :] = jnp.zeros((NB, 1, Wp2, C1), zdt)
    h1pad_ref[:, :, 0:1, :] = jnp.zeros((NB, Hp2, 1, C1), zdt)
    h1pad_ref[:, :, W + 1:W + 2, :] = jnp.zeros((NB, Hp2, 1, C1), zdt)
    h1pad_ref[:, 1:H + 1, 1:W + 1, :] = h1.reshape(NB, H, W, C1)

    h2 = jnp.dot(im2col(h1pad_ref).astype(mm), w2_ref[...],
                 preferred_element_type=jnp.float32) + b2_ref[...]
    h2 = _leaky(_layernorm(h2, g2_ref[...], be2_ref[...]))
    h2m = h2.astype(mm)

    # ---- mu / logvar heads: 1x1 convs = matmuls -> LN -> leaky ----
    mu = jnp.dot(h2m, wmu_ref[...], preferred_element_type=jnp.float32) + bmu_ref[...]
    mu = _leaky(_layernorm(mu, gmu_ref[...], bemu_ref[...]))
    lv = jnp.dot(h2m, wlv_ref[...], preferred_element_type=jnp.float32) + blv_ref[...]
    lv = _leaky(_layernorm(lv, glv_ref[...], belv_ref[...]))

    # Single fused output: [mu | logvar] along channels. z (= mu in eval mode)
    # is aliased at the JAX level, not written again here.
    out_ref[...] = jnp.concatenate([mu, lv], axis=-1).reshape(NB, H * W, 2 * Cout)


def lvam_forward(x_nhwc, params, *, batch_block=4, matmul_dtype=MATMUL_DTYPE):
    """x_nhwc: (N, H, W, Cin) float32. Returns (z, mu, logvar), each (N, H, W, Cout)."""
    N, H, W, Cin = x_nhwc.shape
    (w1, b1, g1, be1,
     w2, b2, g2, be2,
     wmu, bmu, gmu, bemu,
     wlv, blv, glv, belv) = params
    C1 = w1.shape[-1]
    C2 = w2.shape[-1]
    Cout = wmu.shape[-1]

    # Pick a batch block that divides N (amortizes per-step overhead, M = NB*H*W).
    NB = max(1, min(batch_block, N))
    while N % NB:
        NB -= 1

    # Pre-pad spatially (padding=1) so the kernel never zero-fills the input
    # halo; reshape conv weights to im2col/matmul form and cast MXU operands.
    xp = jnp.pad(x_nhwc, ((0, 0), (1, 1), (1, 1), (0, 0)))
    w1m = w1.reshape(9 * Cin, C1).astype(matmul_dtype)
    w2m = w2.reshape(9 * C1, C2).astype(matmul_dtype)
    wmum = wmu.astype(matmul_dtype)
    wlvm = wlv.astype(matmul_dtype)
    kparams = (w1m, b1, g1, be1, w2m, b2, g2, be2,
               wmum, bmu, gmu, bemu, wlvm, blv, glv, belv)

    def full_spec(p):
        return pl.BlockSpec(p.shape, lambda n, _nd=p.ndim: (0,) * _nd)

    in_specs = [pl.BlockSpec((NB, H + 2, W + 2, Cin), lambda n: (n, 0, 0, 0))]
    in_specs += [full_spec(p) for p in kparams]
    out_spec = pl.BlockSpec((NB, H * W, 2 * Cout), lambda n: (n, 0, 0))

    # NOTE(v7x): at full DSALVANet shapes re-budget VMEM (64 MiB physical) by
    # shrinking NB / tiling spatially and setting vmem_limit_bytes; the toy
    # shapes here fit comfortably in the default scoped limit.
    out = pl.pallas_call(
        _lvam_kernel,
        out_shape=jax.ShapeDtypeStruct((N, H * W, 2 * Cout), jnp.float32),
        grid_spec=pltpu.PrefetchScalarGridSpec(
            num_scalar_prefetch=0,
            grid=(N // NB,),
            in_specs=in_specs,
            out_specs=out_spec,
            scratch_shapes=[pltpu.VMEM((NB, H + 2, W + 2, C1), jnp.float32)],
        ),
        compiler_params=pltpu.CompilerParams(
            dimension_semantics=("parallel",),   # batch axis shards across TCs on v7x
        ),
    )(xp, *kparams)

    out = out.reshape(N, H, W, 2 * Cout)
    mu = out[..., :Cout]
    logvar = out[..., Cout:]
    z = mu                                      # eval-mode reparameterize: z aliases mu
    return z, mu, logvar


def lvam_reference(x_nhwc, params, matmul_dtype=MATMUL_DTYPE):
    """Pure-JAX reference (XLA convs) with the same mixed-precision matmul policy."""
    (w1, b1, g1, be1,
     w2, b2, g2, be2,
     wmu, bmu, gmu, bemu,
     wlv, blv, glv, belv) = params
    md = matmul_dtype

    def conv3x3(x, w, b):
        y = lax.conv_general_dilated(
            x.astype(md), w.astype(md), window_strides=(1, 1), padding="SAME",
            dimension_numbers=("NHWC", "HWIO", "NHWC"),
            preferred_element_type=jnp.float32)
        return y + b

    def conv1x1(x, w, b):
        y = jnp.einsum("nhwc,cf->nhwf", x.astype(md), w.astype(md),
                       preferred_element_type=jnp.float32)
        return y + b

    def ln(x, g, be):
        m = jnp.mean(x, axis=-1, keepdims=True)
        v = jnp.mean((x - m) ** 2, axis=-1, keepdims=True)
        return (x - m) * lax.rsqrt(v + LN_EPS) * g + be

    h1 = _leaky(ln(conv3x3(x_nhwc, w1, b1), g1, be1))
    h2 = _leaky(ln(conv3x3(h1, w2, b2), g2, be2))
    mu = _leaky(ln(conv1x1(h2, wmu, bmu), gmu, bemu))
    lv = _leaky(ln(conv1x1(h2, wlv, blv), glv, belv))
    return mu, mu, lv


def make_params(key, in_dim, mid1_dim, mid2_dim, out_dim):
    ks = jax.random.split(key, 8)
    scale = 0.05
    w1 = scale * jax.random.normal(ks[0], (3, 3, in_dim, mid1_dim), jnp.float32)
    b1 = scale * jax.random.normal(ks[1], (1, mid1_dim), jnp.float32)
    w2 = scale * jax.random.normal(ks[2], (3, 3, mid1_dim, mid2_dim), jnp.float32)
    b2 = scale * jax.random.normal(ks[3], (1, mid2_dim), jnp.float32)
    wmu = scale * jax.random.normal(ks[4], (mid2_dim, out_dim), jnp.float32)
    bmu = scale * jax.random.normal(ks[5], (1, out_dim), jnp.float32)
    wlv = scale * jax.random.normal(ks[6], (mid2_dim, out_dim), jnp.float32)
    blv = scale * jax.random.normal(ks[7], (1, out_dim), jnp.float32)
    # LayerNorm affine params: PyTorch default init (gamma=1, beta=0)
    g1, be1 = jnp.ones((1, mid1_dim), jnp.float32), jnp.zeros((1, mid1_dim), jnp.float32)
    g2, be2 = jnp.ones((1, mid2_dim), jnp.float32), jnp.zeros((1, mid2_dim), jnp.float32)
    gmu, bemu = jnp.ones((1, out_dim), jnp.float32), jnp.zeros((1, out_dim), jnp.float32)
    glv, belv = jnp.ones((1, out_dim), jnp.float32), jnp.zeros((1, out_dim), jnp.float32)
    return (w1, b1, g1, be1,
            w2, b2, g2, be2,
            wmu, bmu, gmu, bemu,
            wlv, blv, glv, belv)


if __name__ == "__main__":
    # Small shapes consistent with the module (scaled-down channel dims).
    N, H, W = 8, 8, 8
    in_dim, mid1_dim, mid2_dim, out_dim = 32, 64, 64, 32

    key = jax.random.PRNGKey(0)
    kx, kp = jax.random.split(key)
    x = jax.random.normal(kx, (N, H, W, in_dim), jnp.float32)  # NHWC
    params = make_params(kp, in_dim, mid1_dim, mid2_dim, out_dim)

    z, mu, logvar = lvam_forward(x, params, batch_block=4)
    jax.block_until_ready((z, mu, logvar))

    z_ref, mu_ref, lv_ref = lvam_reference(x, params)
    assert jnp.allclose(mu, mu_ref, rtol=5e-3, atol=5e-3)
    assert jnp.allclose(logvar, lv_ref, rtol=5e-3, atol=5e-3)
    assert jnp.allclose(z, z_ref, rtol=5e-3, atol=5e-3)

    print("KERNEL_OK")
</pallas_src>

<mosaic_0001>
module attributes {stable_mosaic.version = 11 : i64} {
  func.func @_lvam_kernel(%arg0: i32, %arg1: memref<4x10x10x32xf32, #tpu.memory_space<vmem>>, %arg2: memref<288x64xbf16, #tpu.memory_space<vmem>>, %arg3: memref<1x64xf32, #tpu.memory_space<vmem>>, %arg4: memref<1x64xf32, #tpu.memory_space<vmem>>, %arg5: memref<1x64xf32, #tpu.memory_space<vmem>>, %arg6: memref<576x64xbf16, #tpu.memory_space<vmem>>, %arg7: memref<1x64xf32, #tpu.memory_space<vmem>>, %arg8: memref<1x64xf32, #tpu.memory_space<vmem>>, %arg9: memref<1x64xf32, #tpu.memory_space<vmem>>, %arg10: memref<64x32xbf16, #tpu.memory_space<vmem>>, %arg11: memref<1x32xf32, #tpu.memory_space<vmem>>, %arg12: memref<1x32xf32, #tpu.memory_space<vmem>>, %arg13: memref<1x32xf32, #tpu.memory_space<vmem>>, %arg14: memref<64x32xbf16, #tpu.memory_space<vmem>>, %arg15: memref<1x32xf32, #tpu.memory_space<vmem>>, %arg16: memref<1x32xf32, #tpu.memory_space<vmem>>, %arg17: memref<1x32xf32, #tpu.memory_space<vmem>>, %arg18: memref<4x64x64xf32, #tpu.memory_space<vmem>>, %arg19: memref<4x10x10x64xf32, #tpu.memory_space<vmem>>) attributes {dimension_semantics = [#tpu.dimension_semantics<parallel>], iteration_bounds = array<i64: 2>, scalar_prefetch = 0 : i64, scratch_operands = 1 : i64, tpu.core_type = #tpu.core_type<tc>, window_params = [{transform_indices = @transform_0, window_bounds = array<i64: 4, 10, 10, 32>}, {pipeline_mode = #tpu.pipeline_mode<synchronous>, transform_indices = @transform_1, window_bounds = array<i64: 288, 64>}, {pipeline_mode = #tpu.pipeline_mode<synchronous>, transform_indices = @transform_2, window_bounds = array<i64: 1, 64>}, {pipeline_mode = #tpu.pipeline_mode<synchronous>, transform_indices = @transform_3, window_bounds = array<i64: 1, 64>}, {pipeline_mode = #tpu.pipeline_mode<synchronous>, transform_indices = @transform_4, window_bounds = array<i64: 1, 64>}, {pipeline_mode = #tpu.pipeline_mode<synchronous>, transform_indices = @transform_5, window_bounds = array<i64: 576, 64>}, {pipeline_mode = #tpu.pipeline_mode<synchronous>, transform_indices = @transform_6, window_bounds = array<i64: 1, 64>}, {pipeline_mode = #tpu.pipeline_mode<synchronous>, transform_indices = @transform_7, window_bounds = array<i64: 1, 64>}, {pipeline_mode = #tpu.pipeline_mode<synchronous>, transform_indices = @transform_8, window_bounds = array<i64: 1, 64>}, {pipeline_mode = #tpu.pipeline_mode<synchronous>, transform_indices = @transform_9, window_bounds = array<i64: 64, 32>}, {pipeline_mode = #tpu.pipeline_mode<synchronous>, transform_indices = @transform_10, window_bounds = array<i64: 1, 32>}, {pipeline_mode = #tpu.pipeline_mode<synchronous>, transform_indices = @transform_11, window_bounds = array<i64: 1, 32>}, {pipeline_mode = #tpu.pipeline_mode<synchronous>, transform_indices = @transform_12, window_bounds = array<i64: 1, 32>}, {pipeline_mode = #tpu.pipeline_mode<synchronous>, transform_indices = @transform_13, window_bounds = array<i64: 64, 32>}, {pipeline_mode = #tpu.pipeline_mode<synchronous>, transform_indices = @transform_14, window_bounds = array<i64: 1, 32>}, {pipeline_mode = #tpu.pipeline_mode<synchronous>, transform_indices = @transform_15, window_bounds = array<i64: 1, 32>}, {pipeline_mode = #tpu.pipeline_mode<synchronous>, transform_indices = @transform_16, window_bounds = array<i64: 1, 32>}, {transform_indices = @transform_17, window_bounds = array<i64: 4, 64, 64>}]} {
    %c0 = arith.constant 0 : index
    %c0_0 = arith.constant 0 : index
    %c0_1 = arith.constant 0 : index
    %c0_2 = arith.constant 0 : index
    %0 = vector.load %arg1[%c0, %c0_0, %c0_1, %c0_2] : memref<4x10x10x32xf32, #tpu.memory_space<vmem>>, vector<4x8x8x32xf32>
    %c0_3 = arith.constant 0 : index
    %c0_4 = arith.constant 0 : index
    %c1 = arith.constant 1 : index
    %c0_5 = arith.constant 0 : index
    %1 = vector.load %arg1[%c0_3, %c0_4, %c1, %c0_5] : memref<4x10x10x32xf32, #tpu.memory_space<vmem>>, vector<4x8x8x32xf32>
    %c0_6 = arith.constant 0 : index
    %c0_7 = arith.constant 0 : index
    %c2 = arith.constant 2 : index
    %c0_8 = arith.constant 0 : index
    %2 = vector.load %arg1[%c0_6, %c0_7, %c2, %c0_8] : memref<4x10x10x32xf32, #tpu.memory_space<vmem>>, vector<4x8x8x32xf32>
    %c0_9 = arith.constant 0 : index
    %c1_10 = arith.constant 1 : index
    %c0_11 = arith.constant 0 : index
    %c0_12 = arith.constant 0 : index
    %3 = vector.load %arg1[%c0_9, %c1_10, %c0_11, %c0_12] : memref<4x10x10x32xf32, #tpu.memory_space<vmem>>, vector<4x8x8x32xf32>
    %c0_13 = arith.constant 0 : index
    %c1_14 = arith.constant 1 : index
    %c1_15 = arith.constant 1 : index
    %c0_16 = arith.constant 0 : index
    %4 = vector.load %arg1[%c0_13, %c1_14, %c1_15, %c0_16] : memref<4x10x10x32xf32, #tpu.memory_space<vmem>>, vector<4x8x8x32xf32>
    %c0_17 = arith.constant 0 : index
    %c1_18 = arith.constant 1 : index
    %c2_19 = arith.constant 2 : index
    %c0_20 = arith.constant 0 : index
    %5 = vector.load %arg1[%c0_17, %c1_18, %c2_19, %c0_20] : memref<4x10x10x32xf32, #tpu.memory_space<vmem>>, vector<4x8x8x32xf32>
    %c0_21 = arith.constant 0 : index
    %c2_22 = arith.constant 2 : index
    %c0_23 = arith.constant 0 : index
    %c0_24 = arith.constant 0 : index
    %6 = vector.load %arg1[%c0_21, %c2_22, %c0_23, %c0_24] : memref<4x10x10x32xf32, #tpu.memory_space<vmem>>, vector<4x8x8x32xf32>
    %c0_25 = arith.constant 0 : index
    %c2_26 = arith.constant 2 : index
    %c1_27 = arith.constant 1 : index
    %c0_28 = arith.constant 0 : index
    %7 = vector.load %arg1[%c0_25, %c2_26, %c1_27, %c0_28] : memref<4x10x10x32xf32, #tpu.memory_space<vmem>>, vector<4x8x8x32xf32>
    %c0_29 = arith.constant 0 : index
    %c2_30 = arith.constant 2 : index
    %c2_31 = arith.constant 2 : index
    %c0_32 = arith.constant 0 : index
    %8 = vector.load %arg1[%c0_29, %c2_30, %c2_31, %c0_32] : memref<4x10x10x32xf32, #tpu.memory_space<vmem>>, vector<4x8x8x32xf32>
    %9 = tpu.concatenate %0, %1, %2, %3, %4, %5, %6, %7, %8 in 3 : vector<4x8x8x32xf32>, vector<4x8x8x32xf32>, vector<4x8x8x32xf32>, vector<4x8x8x32xf32>, vector<4x8x8x32xf32>, vector<4x8x8x32xf32>, vector<4x8x8x32xf32>, vector<4x8x8x32xf32>, vector<4x8x8x32xf32> -> vector<4x8x8x288xf32>
    %10 = vector.shape_cast %9 : vector<4x8x8x288xf32> to vector<256x288xf32>
    %11 = arith.truncf %10 : vector<256x288xf32> to vector<256x288xbf16>
    %c0_33 = arith.constant 0 : index
    %c0_34 = arith.constant 0 : index
    %12 = vector.load %arg2[%c0_33, %c0_34] : memref<288x64xbf16, #tpu.memory_space<vmem>>, vector<288x64xbf16>
    %cst = arith.constant dense<0.000000e+00> : vector<256x64xf32>
    %13 = tpu.matmul %11, %12, %cst {dimension_numbers = #tpu.dot_dimension_numbers<[1], [0], [0], [1], [0, 0, 1, 1], [], []>} : vector<256x288xbf16>, vector<288x64xbf16>, vector<256x64xf32> -> vector<256x64xf32>
    %c0_35 = arith.constant 0 : index
    %c0_36 = arith.constant 0 : index
    %14 = vector.load %arg3[%c0_35, %c0_36] : memref<1x64xf32, #tpu.memory_space<vmem>>, vector<1x64xf32>
    %15 = vector.broadcast %14 : vector<1x64xf32> to vector<256x64xf32>
    %16 = arith.addf %13, %15 : vector<256x64xf32>
    %c0_37 = arith.constant 0 : index
    %c0_38 = arith.constant 0 : index
    %17 = vector.load %arg4[%c0_37, %c0_38] : memref<1x64xf32, #tpu.memory_space<vmem>>, vector<1x64xf32>
    %c0_39 = arith.constant 0 : index
    %c0_40 = arith.constant 0 : index
    %18 = vector.load %arg5[%c0_39, %c0_40] : memref<1x64xf32, #tpu.memory_space<vmem>>, vector<1x64xf32>
    %cst_41 = arith.constant dense<0.000000e+00> : vector<256xf32>
    %19 = vector.multi_reduction <add>, %16, %cst_41 [1] : vector<256x64xf32> to vector<256xf32>
    %20 = vector.shape_cast %19 : vector<256xf32> to vector<256x1xf32>
    %cst_42 = arith.constant 6.400000e+01 : f32
    %21 = vector.broadcast %cst_42 : f32 to vector<256x1xf32>
    %22 = arith.divf %20, %21 : vector<256x1xf32>
    %23 = vector.broadcast %22 : vector<256x1xf32> to vector<256x64xf32>
    %24 = arith.subf %16, %23 : vector<256x64xf32>
    %25 = arith.mulf %24, %24 : vector<256x64xf32>
    %cst_43 = arith.constant dense<0.000000e+00> : vector<256xf32>
    %26 = vector.multi_reduction <add>, %25, %cst_43 [1] : vector<256x64xf32> to vector<256xf32>
    %27 = vector.shape_cast %26 : vector<256xf32> to vector<256x1xf32>
    %cst_44 = arith.constant 6.400000e+01 : f32
    %28 = vector.broadcast %cst_44 : f32 to vector<256x1xf32>
    %29 = arith.divf %27, %28 : vector<256x1xf32>
    %30 = vector.broadcast %22 : vector<256x1xf32> to vector<256x64xf32>
    %31 = arith.subf %16, %30 : vector<256x64xf32>
    %cst_45 = arith.constant 9.99999974E-6 : f32
    %32 = vector.broadcast %cst_45 : f32 to vector<256x1xf32>
    %33 = arith.addf %29, %32 : vector<256x1xf32>
    %34 = math.rsqrt %33 : vector<256x1xf32>
    %35 = vector.broadcast %34 : vector<256x1xf32> to vector<256x64xf32>
    %36 = arith.mulf %31, %35 : vector<256x64xf32>
    %37 = vector.broadcast %17 : vector<1x64xf32> to vector<256x64xf32>
    %38 = arith.mulf %36, %37 : vector<256x64xf32>
    %39 = vector.broadcast %18 : vector<1x64xf32> to vector<256x64xf32>
    %40 = arith.addf %38, %39 : vector<256x64xf32>
    %cst_46 = arith.constant 0.000000e+00 : f32
    %41 = vector.broadcast %cst_46 : f32 to vector<256x64xf32>
    %42 = arith.cmpf ogt, %40, %41 : vector<256x64xf32>
    %cst_47 = arith.constant 0.00999999977 : f32
    %43 = vector.broadcast %cst_47 : f32 to vector<256x64xf32>
    %44 = arith.mulf %43, %40 : vector<256x64xf32>
    %45 = arith.select %42, %40, %44 : vector<256x64xi1>, vector<256x64xf32>
    %cst_48 = arith.constant 0.000000e+00 : f32
    %46 = vector.broadcast %cst_48 : f32 to vector<4x1x10x64xf32>
    %c0_49 = arith.constant 0 : index
    %c0_50 = arith.constant 0 : index
    %c0_51 = arith.constant 0 : index
    %c0_52 = arith.constant 0 : index
    %47 = vector.load %arg19[%c0_49, %c0_50, %c0_51, %c0_52] : memref<4x10x10x64xf32, #tpu.memory_space<vmem>>, vector<4x1x10x64xf32>
    tpu.vector_store %arg19[%c0_49, %c0_50, %c0_51, %c0_52], %46 {strides = array<i32>} : memref<4x10x10x64xf32, #tpu.memory_space<vmem>>, vector<4x1x10x64xf32>,
    %cst_53 = arith.constant 0.000000e+00 : f32
    %48 = vector.broadcast %cst_53 : f32 to vector<4x1x10x64xf32>
    %c0_54 = arith.constant 0 : index
    %c9 = arith.constant 9 : index
    %c0_55 = arith.constant 0 : index
    %c0_56 = arith.constant 0 : index
    %49 = vector.load %arg19[%c0_54, %c9, %c0_55, %c0_56] : memref<4x10x10x64xf32, #tpu.memory_space<vmem>>, vector<4x1x10x64xf32>
    tpu.vector_store %arg19[%c0_54, %c9, %c0_55, %c0_56], %48 {strides = array<i32>} : memref<4x10x10x64xf32, #tpu.memory_space<vmem>>, vector<4x1x10x64xf32>,
    %cst_57 = arith.constant 0.000000e+00 : f32
    %50 = vector.broadcast %cst_57 : f32 to vector<4x10x1x64xf32>
    %c0_58 = arith.constant 0 : index
    %c0_59 = arith.constant 0 : index
    %c0_60 = arith.constant 0 : index
    %c0_61 = arith.constant 0 : index
    %51 = vector.load %arg19[%c0_58, %c0_59, %c0_60, %c0_61] : memref<4x10x10x64xf32, #tpu.memory_space<vmem>>, vector<4x10x1x64xf32>
    tpu.vector_store %arg19[%c0_58, %c0_59, %c0_60, %c0_61], %50 {strides = array<i32>} : memref<4x10x10x64xf32, #tpu.memory_space<vmem>>, vector<4x10x1x64xf32>,
    %cst_62 = arith.constant 0.000000e+00 : f32
    %52 = vector.broadcast %cst_62 : f32 to vector<4x10x1x64xf32>
    %c0_63 = arith.constant 0 : index
    %c0_64 = arith.constant 0 : index
    %c9_65 = arith.constant 9 : index
    %c0_66 = arith.constant 0 : index
    %53 = vector.load %arg19[%c0_63, %c0_64, %c9_65, %c0_66] : memref<4x10x10x64xf32, #tpu.memory_space<vmem>>, vector<4x10x1x64xf32>
    tpu.vector_store %arg19[%c0_63, %c0_64, %c9_65, %c0_66], %52 {strides = array<i32>} : memref<4x10x10x64xf32, #tpu.memory_space<vmem>>, vector<4x10x1x64xf32>,
    %54 = vector.shape_cast %45 : vector<256x64xf32> to vector<4x8x8x64xf32>
    %c0_67 = arith.constant 0 : index
    %c1_68 = arith.constant 1 : index
    %c1_69 = arith.constant 1 : index
    %c0_70 = arith.constant 0 : index
    %55 = vector.load %arg19[%c0_67, %c1_68, %c1_69, %c0_70] : memref<4x10x10x64xf32, #tpu.memory_space<vmem>>, vector<4x8x8x64xf32>
    tpu.vector_store %arg19[%c0_67, %c1_68, %c1_69, %c0_70], %54 {strides = array<i32>} : memref<4x10x10x64xf32, #tpu.memory_space<vmem>>, vector<4x8x8x64xf32>,
    %c0_71 = arith.constant 0 : index
    %c0_72 = arith.constant 0 : index
    %c0_73 = arith.constant 0 : index
    %c0_74 = arith.constant 0 : index
    %56 = vector.load %arg19[%c0_71, %c0_72, %c0_73, %c0_74] : memref<4x10x10x64xf32, #tpu.memory_space<vmem>>, vector<4x8x8x64xf32>
    %c0_75 = arith.constant 0 : index
    %c0_76 = arith.constant 0 : index
    %c1_77 = arith.constant 1 : index
    %c0_78 = arith.constant 0 : index
    %57 = vector.load %arg19[%c0_75, %c0_76, %c1_77, %c0_78] : memref<4x10x10x64xf32, #tpu.memory_space<vmem>>, vector<4x8x8x64xf32>
    %c0_79 = arith.constant 0 : index
    %c0_80 = arith.constant 0 : index
    %c2_81 = arith.constant 2 : index
    %c0_82 = arith.constant 0 : index
    %58 = vector.load %arg19[%c0_79, %c0_80, %c2_81, %c0_82] : memref<4x10x10x64xf32, #tpu.memory_space<vmem>>, vector<4x8x8x64xf32>
    %c0_83 = arith.constant 0 : index
    %c1_84 = arith.constant 1 : index
    %c0_85 = arith.constant 0 : index
    %c0_86 = arith.constant 0 : index
    %59 = vector.load %arg19[%c0_83, %c1_84, %c0_85, %c0_86] : memref<4x10x10x64xf32, #tpu.memory_space<vmem>>, vector<4x8x8x64xf32>
    %c0_87 = arith.constant 0 : index
    %c1_88 = arith.constant 1 : index
    %c1_89 = arith.constant 1 : index
    %c0_90 = arith.constant 0 : index
    %60 = vector.load %arg19[%c0_87, %c1_88, %c1_89, %c0_90] : memref<4x10x10x64xf32, #tpu.memory_space<vmem>>, vector<4x8x8x64xf32>
    %c0_91 = arith.constant 0 : index
    %c1_92 = arith.constant 1 : index
    %c2_93 = arith.constant 2 : index
    %c0_94 = arith.constant 0 : index
    %61 = vector.load %arg19[%c0_91, %c1_92, %c2_93, %c0_94] : memref<4x10x10x64xf32, #tpu.memory_space<vmem>>, vector<4x8x8x64xf32>
    %c0_95 = arith.constant 0 : index
    %c2_96 = arith.constant 2 : index
    %c0_97 = arith.constant 0 : index
    %c0_98 = arith.constant 0 : index
    %62 = vector.load %arg19[%c0_95, %c2_96, %c0_97, %c0_98] : memref<4x10x10x64xf32, #tpu.memory_space<vmem>>, vector<4x8x8x64xf32>
    %c0_99 = arith.constant 0 : index
    %c2_100 = arith.constant 2 : index
    %c1_101 = arith.constant 1 : index
    %c0_102 = arith.constant 0 : index
    %63 = vector.load %arg19[%c0_99, %c2_100, %c1_101, %c0_102] : memref<4x10x10x64xf32, #tpu.memory_space<vmem>>, vector<4x8x8x64xf32>
    %c0_103 = arith.constant 0 : index
    %c2_104 = arith.constant 2 : index
    %c2_105 = arith.constant 2 : index
    %c0_106 = arith.constant 0 : index
    %64 = vector.load %arg19[%c0_103, %c2_104, %c2_105, %c0_106] : memref<4x10x10x64xf32, #tpu.memory_space<vmem>>, vector<4x8x8x64xf32>
    %65 = tpu.concatenate %56, %57, %58, %59, %60, %61, %62, %63, %64 in 3 : vector<4x8x8x64xf32>, vector<4x8x8x64xf32>, vector<4x8x8x64xf32>, vector<4x8x8x64xf32>, vector<4x8x8x64xf32>, vector<4x8x8x64xf32>, vector<4x8x8x64xf32>, vector<4x8x8x64xf32>, vector<4x8x8x64xf32> -> vector<4x8x8x576xf32>
    %66 = vector.shape_cast %65 : vector<4x8x8x576xf32> to vector<256x576xf32>
    %67 = arith.truncf %66 : vector<256x576xf32> to vector<256x576xbf16>
    %c0_107 = arith.constant 0 : index
    %c0_108 = arith.constant 0 : index
    %68 = vector.load %arg6[%c0_107, %c0_108] : memref<576x64xbf16, #tpu.memory_space<vmem>>, vector<576x64xbf16>
    %cst_109 = arith.constant dense<0.000000e+00> : vector<256x64xf32>
    %69 = tpu.matmul %67, %68, %cst_109 {dimension_numbers = #tpu.dot_dimension_numbers<[1], [0], [0], [1], [0, 0, 1, 1], [], []>} : vector<256x576xbf16>, vector<576x64xbf16>, vector<256x64xf32> -> vector<256x64xf32>
    %c0_110 = arith.constant 0 : index
    %c0_111 = arith.constant 0 : index
    %70 = vector.load %arg7[%c0_110, %c0_111] : memref<1x64xf32, #tpu.memory_space<vmem>>, vector<1x64xf32>
    %71 = vector.broadcast %70 : vector<1x64xf32> to vector<256x64xf32>
    %72 = arith.addf %69, %71 : vector<256x64xf32>
    %c0_112 = arith.constant 0 : index
    %c0_113 = arith.constant 0 : index
    %73 = vector.load %arg8[%c0_112, %c0_113] : memref<1x64xf32, #tpu.memory_space<vmem>>, vector<1x64xf32>
    %c0_114 = arith.constant 0 : index
    %c0_115 = arith.constant 0 : index
    %74 = vector.load %arg9[%c0_114, %c0_115] : memref<1x64xf32, #tpu.memory_space<vmem>>, vector<1x64xf32>
    %cst_116 = arith.constant dense<0.000000e+00> : vector<256xf32>
    %75 = vector.multi_reduction <add>, %72, %cst_116 [1] : vector<256x64xf32> to vector<256xf32>
    %76 = vector.shape_cast %75 : vector<256xf32> to vector<256x1xf32>
    %cst_117 = arith.constant 6.400000e+01 : f32
    %77 = vector.broadcast %cst_117 : f32 to vector<256x1xf32>
    %78 = arith.divf %76, %77 : vector<256x1xf32>
    %79 = vector.broadcast %78 : vector<256x1xf32> to vector<256x64xf32>
    %80 = arith.subf %72, %79 : vector<256x64xf32>
    %81 = arith.mulf %80, %80 : vector<256x64xf32>
    %cst_118 = arith.constant dense<0.000000e+00> : vector<256xf32>
    %82 = vector.multi_reduction <add>, %81, %cst_118 [1] : vector<256x64xf32> to vector<256xf32>
    %83 = vector.shape_cast %82 : vector<256xf32> to vector<256x1xf32>
    %cst_119 = arith.constant 6.400000e+01 : f32
    %84 = vector.broadcast %cst_119 : f32 to vector<256x1xf32>
    %85 = arith.divf %83, %84 : vector<256x1xf32>
    %86 = vector.broadcast %78 : vector<256x1xf32> to vector<256x64xf32>
    %87 = arith.subf %72, %86 : vector<256x64xf32>
    %cst_120 = arith.constant 9.99999974E-6 : f32
    %88 = vector.broadcast %cst_120 : f32 to vector<256x1xf32>
    %89 = arith.addf %85, %88 : vector<256x1xf32>
    %90 = math.rsqrt %89 : vector<256x1xf32>
    %91 = vector.broadcast %90 : vector<256x1xf32> to vector<256x64xf32>
    %92 = arith.mulf %87, %91 : vector<256x64xf32>
    %93 = vector.broadcast %73 : vector<1x64xf32> to vector<256x64xf32>
    %94 = arith.mulf %92, %93 : vector<256x64xf32>
    %95 = vector.broadcast %74 : vector<1x64xf32> to vector<256x64xf32>
    %96 = arith.addf %94, %95 : vector<256x64xf32>
    %cst_121 = arith.constant 0.000000e+00 : f32
    %97 = vector.broadcast %cst_121 : f32 to vector<256x64xf32>
    %98 = arith.cmpf ogt, %96, %97 : vector<256x64xf32>
    %cst_122 = arith.constant 0.00999999977 : f32
    %99 = vector.broadcast %cst_122 : f32 to vector<256x64xf32>
    %100 = arith.mulf %99, %96 : vector<256x64xf32>
    %101 = arith.select %98, %96, %100 : vector<256x64xi1>, vector<256x64xf32>
    %102 = arith.truncf %101 : vector<256x64xf32> to vector<256x64xbf16>
    %c0_123 = arith.constant 0 : index
    %c0_124 = arith.constant 0 : index
    %103 = vector.load %arg10[%c0_123, %c0_124] : memref<64x32xbf16, #tpu.memory_space<vmem>>, vector<64x32xbf16>
    %cst_125 = arith.constant dense<0.000000e+00> : vector<256x32xf32>
    %104 = tpu.matmul %102, %103, %cst_125 {dimension_numbers = #tpu.dot_dimension_numbers<[1], [0], [0], [1], [0, 0, 1, 1], [], []>} : vector<256x64xbf16>, vector<64x32xbf16>, vector<256x32xf32> -> vector<256x32xf32>
    %c0_126 = arith.constant 0 : index
    %c0_127 = arith.constant 0 : index
    %105 = vector.load %arg11[%c0_126, %c0_127] : memref<1x32xf32, #tpu.memory_space<vmem>>, vector<1x32xf32>
    %106 = vector.broadcast %105 : vector<1x32xf32> to vector<256x32xf32>
    %107 = arith.addf %104, %106 : vector<256x32xf32>
    %c0_128 = arith.constant 0 : index
    %c0_129 = arith.constant 0 : index
    %108 = vector.load %arg12[%c0_128, %c0_129] : memref<1x32xf32, #tpu.memory_space<vmem>>, vector<1x32xf32>
    %c0_130 = arith.constant 0 : index
    %c0_131 = arith.constant 0 : index
    %109 = vector.load %arg13[%c0_130, %c0_131] : memref<1x32xf32, #tpu.memory_space<vmem>>, vector<1x32xf32>
    %cst_132 = arith.constant dense<0.000000e+00> : vector<256xf32>
    %110 = vector.multi_reduction <add>, %107, %cst_132 [1] : vector<256x32xf32> to vector<256xf32>
    %111 = vector.shape_cast %110 : vector<256xf32> to vector<256x1xf32>
    %cst_133 = arith.constant 3.200000e+01 : f32
    %112 = vector.broadcast %cst_133 : f32 to vector<256x1xf32>
    %113 = arith.divf %111, %112 : vector<256x1xf32>
    %114 = vector.broadcast %113 : vector<256x1xf32> to vector<256x32xf32>
    %115 = arith.subf %107, %114 : vector<256x32xf32>
    %116 = arith.mulf %115, %115 : vector<256x32xf32>
    %cst_134 = arith.constant dense<0.000000e+00> : vector<256xf32>
    %117 = vector.multi_reduction <add>, %116, %cst_134 [1] : vector<256x32xf32> to vector<256xf32>
    %118 = vector.shape_cast %117 : vector<256xf32> to vector<256x1xf32>
    %cst_135 = arith.constant 3.200000e+01 : f32
    %119 = vector.broadcast %cst_135 : f32 to vector<256x1xf32>
    %120 = arith.divf %118, %119 : vector<256x1xf32>
    %121 = vector.broadcast %113 : vector<256x1xf32> to vector<256x32xf32>
    %122 = arith.subf %107, %121 : vector<256x32xf32>
    %cst_136 = arith.constant 9.99999974E-6 : f32
    %123 = vector.broadcast %cst_136 : f32 to vector<256x1xf32>
    %124 = arith.addf %120, %123 : vector<256x1xf32>
    %125 = math.rsqrt %124 : vector<256x1xf32>
    %126 = vector.broadcast %125 : vector<256x1xf32> to vector<256x32xf32>
    %127 = arith.mulf %122, %126 : vector<256x32xf32>
    %128 = vector.broadcast %108 : vector<1x32xf32> to vector<256x32xf32>
    %129 = arith.mulf %127, %128 : vector<256x32xf32>
    %130 = vector.broadcast %109 : vector<1x32xf32> to vector<256x32xf32>
    %131 = arith.addf %129, %130 : vector<256x32xf32>
    %cst_137 = arith.constant 0.000000e+00 : f32
    %132 = vector.broadcast %cst_137 : f32 to vector<256x32xf32>
    %133 = arith.cmpf ogt, %131, %132 : vector<256x32xf32>
    %cst_138 = arith.constant 0.00999999977 : f32
    %134 = vector.broadcast %cst_138 : f32 to vector<256x32xf32>
    %135 = arith.mulf %134, %131 : vector<256x32xf32>
    %136 = arith.select %133, %131, %135 : vector<256x32xi1>, vector<256x32xf32>
    %c0_139 = arith.constant 0 : index
    %c0_140 = arith.constant 0 : index
    %137 = vector.load %arg14[%c0_139, %c0_140] : memref<64x32xbf16, #tpu.memory_space<vmem>>, vector<64x32xbf16>
    %cst_141 = arith.constant dense<0.000000e+00> : vector<256x32xf32>
    %138 = tpu.matmul %102, %137, %cst_141 {dimension_numbers = #tpu.dot_dimension_numbers<[1], [0], [0], [1], [0, 0, 1, 1], [], []>} : vector<256x64xbf16>, vector<64x32xbf16>, vector<256x32xf32> -> vector<256x32xf32>
    %c0_142 = arith.constant 0 : index
    %c0_143 = arith.constant 0 : index
    %139 = vector.load %arg15[%c0_142, %c0_143] : memref<1x32xf32, #tpu.memory_space<vmem>>, vector<1x32xf32>
    %140 = vector.broadcast %139 : vector<1x32xf32> to vector<256x32xf32>
    %141 = arith.addf %138, %140 : vector<256x32xf32>
    %c0_144 = arith.constant 0 : index
    %c0_145 = arith.constant 0 : index
    %142 = vector.load %arg16[%c0_144, %c0_145] : memref<1x32xf32, #tpu.memory_space<vmem>>, vector<1x32xf32>
    %c0_146 = arith.constant 0 : index
    %c0_147 = arith.constant 0 : index
    %143 = vector.load %arg17[%c0_146, %c0_147] : memref<1x32xf32, #tpu.memory_space<vmem>>, vector<1x32xf32>
    %cst_148 = arith.constant dense<0.000000e+00> : vector<256xf32>
    %144 = vector.multi_reduction <add>, %141, %cst_148 [1] : vector<256x32xf32> to vector<256xf32>
    %145 = vector.shape_cast %144 : vector<256xf32> to vector<256x1xf32>
    %cst_149 = arith.constant 3.200000e+01 : f32
    %146 = vector.broadcast %cst_149 : f32 to vector<256x1xf32>
    %147 = arith.divf %145, %146 : vector<256x1xf32>
    %148 = vector.broadcast %147 : vector<256x1xf32> to vector<256x32xf32>
    %149 = arith.subf %141, %148 : vector<256x32xf32>
    %150 = arith.mulf %149, %149 : vector<256x32xf32>
    %cst_150 = arith.constant dense<0.000000e+00> : vector<256xf32>
    %151 = vector.multi_reduction <add>, %150, %cst_150 [1] : vector<256x32xf32> to vector<256xf32>
    %152 = vector.shape_cast %151 : vector<256xf32> to vector<256x1xf32>
    %cst_151 = arith.constant 3.200000e+01 : f32
    %153 = vector.broadcast %cst_151 : f32 to vector<256x1xf32>
    %154 = arith.divf %152, %153 : vector<256x1xf32>
    %155 = vector.broadcast %147 : vector<256x1xf32> to vector<256x32xf32>
    %156 = arith.subf %141, %155 : vector<256x32xf32>
    %cst_152 = arith.constant 9.99999974E-6 : f32
    %157 = vector.broadcast %cst_152 : f32 to vector<256x1xf32>
    %158 = arith.addf %154, %157 : vector<256x1xf32>
    %159 = math.rsqrt %158 : vector<256x1xf32>
    %160 = vector.broadcast %159 : vector<256x1xf32> to vector<256x32xf32>
    %161 = arith.mulf %156, %160 : vector<256x32xf32>
    %162 = vector.broadcast %142 : vector<1x32xf32> to vector<256x32xf32>
    %163 = arith.mulf %161, %162 : vector<256x32xf32>
    %164 = vector.broadcast %143 : vector<1x32xf32> to vector<256x32xf32>
    %165 = arith.addf %163, %164 : vector<256x32xf32>
    %cst_153 = arith.constant 0.000000e+00 : f32
    %166 = vector.broadcast %cst_153 : f32 to vector<256x32xf32>
    %167 = arith.cmpf ogt, %165, %166 : vector<256x32xf32>
    %cst_154 = arith.constant 0.00999999977 : f32
    %168 = vector.broadcast %cst_154 : f32 to vector<256x32xf32>
    %169 = arith.mulf %168, %165 : vector<256x32xf32>
    %170 = arith.select %167, %165, %169 : vector<256x32xi1>, vector<256x32xf32>
    %171 = tpu.concatenate %136, %170 in 1 : vector<256x32xf32>, vector<256x32xf32> -> vector<256x64xf32>
    %172 = vector.shape_cast %171 : vector<256x64xf32> to vector<4x64x64xf32>
    %c0_155 = arith.constant 0 : index
    %c0_156 = arith.constant 0 : index
    %c0_157 = arith.constant 0 : index
    %173 = vector.load %arg18[%c0_155, %c0_156, %c0_157] : memref<4x64x64xf32, #tpu.memory_space<vmem>>, vector<4x64x64xf32>
    tpu.vector_store %arg18[%c0_155, %c0_156, %c0_157], %172 {strides = array<i32>} : memref<4x64x64xf32, #tpu.memory_space<vmem>>, vector<4x64x64xf32>,
    return
  }
  func.func @transform_0(%arg0: i32) -> (i32, i32, i32, i32) {
    %c0_i32 = arith.constant 0 : i32
    %c0_i32_0 = arith.constant 0 : i32
    %c0_i32_1 = arith.constant 0 : i32
    %c0_i32_2 = arith.constant 0 : i32
    return %arg0, %c0_i32, %c0_i32_0, %c0_i32_1 : i32, i32, i32, i32
  }
  func.func @transform_1(%arg0: i32) -> (i32, i32) {
    %c0_i32 = arith.constant 0 : i32
    %c0_i32_0 = arith.constant 0 : i32
    %c0_i32_1 = arith.constant 0 : i32
    return %c0_i32, %c0_i32_0 : i32, i32
  }
  func.func @transform_2(%arg0: i32) -> (i32, i32) {
    %c0_i32 = arith.constant 0 : i32
    %c0_i32_0 = arith.constant 0 : i32
    %c0_i32_1 = arith.constant 0 : i32
    return %c0_i32, %c0_i32_0 : i32, i32
  }
  func.func @transform_3(%arg0: i32) -> (i32, i32) {
    %c0_i32 = arith.constant 0 : i32
    %c0_i32_0 = arith.constant 0 : i32
    %c0_i32_1 = arith.constant 0 : i32
    return %c0_i32, %c0_i32_0 : i32, i32
  }
  func.func @transform_4(%arg0: i32) -> (i32, i32) {
    %c0_i32 = arith.constant 0 : i32
    %c0_i32_0 = arith.constant 0 : i32
    %c0_i32_1 = arith.constant 0 : i32
    return %c0_i32, %c0_i32_0 : i32, i32
  }
  func.func @transform_5(%arg0: i32) -> (i32, i32) {
    %c0_i32 = arith.constant 0 : i32
    %c0_i32_0 = arith.constant 0 : i32
    %c0_i32_1 = arith.constant 0 : i32
    return %c0_i32, %c0_i32_0 : i32, i32
  }
  func.func @transform_6(%arg0: i32) -> (i32, i32) {
    %c0_i32 = arith.constant 0 : i32
    %c0_i32_0 = arith.constant 0 : i32
    %c0_i32_1 = arith.constant 0 : i32
    return %c0_i32, %c0_i32_0 : i32, i32
  }
  func.func @transform_7(%arg0: i32) -> (i32, i32) {
    %c0_i32 = arith.constant 0 : i32
    %c0_i32_0 = arith.constant 0 : i32
    %c0_i32_1 = arith.constant 0 : i32
    return %c0_i32, %c0_i32_0 : i32, i32
  }
  func.func @transform_8(%arg0: i32) -> (i32, i32) {
    %c0_i32 = arith.constant 0 : i32
    %c0_i32_0 = arith.constant 0 : i32
    %c0_i32_1 = arith.constant 0 : i32
    return %c0_i32, %c0_i32_0 : i32, i32
  }
  func.func @transform_9(%arg0: i32) -> (i32, i32) {
    %c0_i32 = arith.constant 0 : i32
    %c0_i32_0 = arith.constant 0 : i32
    %c0_i32_1 = arith.constant 0 : i32
    return %c0_i32, %c0_i32_0 : i32, i32
  }
  func.func @transform_10(%arg0: i32) -> (i32, i32) {
    %c0_i32 = arith.constant 0 : i32
    %c0_i32_0 = arith.constant 0 : i32
    %c0_i32_1 = arith.constant 0 : i32
    return %c0_i32, %c0_i32_0 : i32, i32
  }
  func.func @transform_11(%arg0: i32) -> (i32, i32) {
    %c0_i32 = arith.constant 0 : i32
    %c0_i32_0 = arith.constant 0 : i32
    %c0_i32_1 = arith.constant 0 : i32
    return %c0_i32, %c0_i32_0 : i32, i32
  }
  func.func @transform_12(%arg0: i32) -> (i32, i32) {
    %c0_i32 = arith.constant 0 : i32
    %c0_i32_0 = arith.constant 0 : i32
    %c0_i32_1 = arith.constant 0 : i32
    return %c0_i32, %c0_i32_0 : i32, i32
  }
  func.func @transform_13(%arg0: i32) -> (i32, i32) {
    %c0_i32 = arith.constant 0 : i32
    %c0_i32_0 = arith.constant 0 : i32
    %c0_i32_1 = arith.constant 0 : i32
    return %c0_i32, %c0_i32_0 : i32, i32
  }
  func.func @transform_14(%arg0: i32) -> (i32, i32) {
    %c0_i32 = arith.constant 0 : i32
    %c0_i32_0 = arith.constant 0 : i32
    %c0_i32_1 = arith.constant 0 : i32
    return %c0_i32, %c0_i32_0 : i32, i32
  }
  func.func @transform_15(%arg0: i32) -> (i32, i32) {
    %c0_i32 = arith.constant 0 : i32
    %c0_i32_0 = arith.constant 0 : i32
    %c0_i32_1 = arith.constant 0 : i32
    return %c0_i32, %c0_i32_0 : i32, i32
  }
  func.func @transform_16(%arg0: i32) -> (i32, i32) {
    %c0_i32 = arith.constant 0 : i32
    %c0_i32_0 = arith.constant 0 : i32
    %c0_i32_1 = arith.constant 0 : i32
    return %c0_i32, %c0_i32_0 : i32, i32
  }
  func.func @transform_17(%arg0: i32) -> (i32, i32, i32) {
    %c0_i32 = arith.constant 0 : i32
    %c0_i32_0 = arith.constant 0 : i32
    %c0_i32_1 = arith.constant 0 : i32
    return %arg0, %c0_i32, %c0_i32_0 : i32, i32, i32
  }
}

</mosaic_0001>

<llo_original>
// kernel: tpu_custom_call.1
$region0: #{tpu_custom_call.1}
  #allocation0 [shape = 'u32[]', space=smem, size = 0x4, offset = 0x4, fixed_abs, tag = 'smem constant byte address 0x4 - core index']
  #allocation1 [shape = 'u32[144,128]{1,0:T(1,128)}', space=vmem, size = 0x12000, scoped, tag = 'internal scratch']
  #allocation2 [shape = 'f32[4,10,10,64]{3,2,1,0:T(8,128)}', space=vmem, size = 0x50000, scoped, tag = 'scratch operand']
  %s0 = inlined_call_operand.vmem [shape: f32[8,10,10,32], index: 0, kind: input, shape index: {}]
  %s1 = inlined_call_operand.vmem [shape: bf16[288,64], index: 1, kind: input, shape index: {}]
  %s2 = inlined_call_operand.vmem [shape: f32[1,64], index: 2, kind: input, shape index: {}]
  %s3 = inlined_call_operand.vmem [shape: f32[1,64], index: 3, kind: input, shape index: {}]
  %s4 = inlined_call_operand.vmem [shape: f32[1,64], index: 4, kind: input, shape index: {}]
  %s5 = inlined_call_operand.vmem [shape: bf16[576,64], index: 5, kind: input, shape index: {}]
  %s6 = inlined_call_operand.vmem [shape: f32[1,64], index: 6, kind: input, shape index: {}]
  %s7 = inlined_call_operand.vmem [shape: f32[1,64], index: 7, kind: input, shape index: {}]
  %s8 = inlined_call_operand.vmem [shape: f32[1,64], index: 8, kind: input, shape index: {}]
  %s9 = inlined_call_operand.vmem [shape: bf16[64,32], index: 9, kind: input, shape index: {}]
  %s10 = inlined_call_operand.vmem [shape: f32[1,32], index: 10, kind: input, shape index: {}]
  %s11 = inlined_call_operand.vmem [shape: f32[1,32], index: 11, kind: input, shape index: {}]
  %s12 = inlined_call_operand.vmem [shape: f32[1,32], index: 12, kind: input, shape index: {}]
  %s13 = inlined_call_operand.vmem [shape: bf16[64,32], index: 13, kind: input, shape index: {}]
  %s14 = inlined_call_operand.vmem [shape: f32[1,32], index: 14, kind: input, shape index: {}]
  %s15 = inlined_call_operand.vmem [shape: f32[1,32], index: 15, kind: input, shape index: {}]
  %s16 = inlined_call_operand.vmem [shape: f32[1,32], index: 16, kind: input, shape index: {}]
  %s17 = inlined_call_operand.hbm [shape: f32[8,64,64], index: 17, kind: output, shape index: {}]
  %s18 = sld [smem:[#allocation0]]
  $region101: #{tpu_custom_call.1} parent=0
    _
  %s20 = ssub.s32 1, %s18
  %s21 = scalar_select 0, %s20, %s18
  $region1: #{tpu_custom_call.1} parent=0
    #allocation3 [shape = 'u8[262144]{0}', space=vmem, size = 0x40000, scoped, tag = 'output window, operand 0']
    #allocation4 [shape = 's32[2]{0}', space=sflag, size = 0x8, scoped, tag = 'scoped memory for tpu_custom_call.1']
    %22 = vsyncpa [#allocation4], 0
    %s23 = scalar_lea.sflag [#allocation4], 1
    %24 = vsyncpa %s23, 0
    loop: start=0, step=1, limit=4
    $region2: #{tpu_custom_call.1} parent=1 // loop_pre_header
      _
    $region3: #{tpu_custom_call.1} parent=1 // loop_header
      %s26 = sphi 0, %s30
      %p27 = scmp.ge.s32.totalorder %s26, 4
      %s36 = sphi 0, %s38
      %s39 = sphi 0, %s36
      %s40 = sphi 0, %s39
      %s56 = sphi 0, %s40
      %s60 = sphi 0, %s60
      %s62 = sphi 0, %s60
      %s63 = sphi 0, %s62
      %s77 = sphi 0, %s63
      %s81 = sphi 0, %s81
      %s83 = sphi 0, %s81
      %s84 = sphi 0, %s83
      %s98 = sphi 0, %s84
      %s102 = sphi 0, %s102
      %s104 = sphi 0, %s102
      %s105 = sphi 0, %s104
      %s119 = sphi 0, %s105
      %s123 = sphi 0, %s123
      %s125 = sphi 0, %s123
      %s126 = sphi 0, %s125
      %s140 = sphi 0, %s126
      %s144 = sphi 0, %s144
      %s146 = sphi 0, %s144
      %s147 = sphi 0, %s146
      %s161 = sphi 0, %s147
      %s165 = sphi 0, %s165
      %s167 = sphi 0, %s165
      %s168 = sphi 0, %s167
      %s182 = sphi 0, %s168
      %s186 = sphi 0, %s186
      %s188 = sphi 0, %s186
      %s189 = sphi 0, %s188
      %s203 = sphi 0, %s189
      %s207 = sphi 0, %s207
      %s209 = sphi 0, %s207
      %s210 = sphi 0, %s209
      %s224 = sphi 0, %s210
      %s228 = sphi 0, %s228
      %s230 = sphi 0, %s228
      %s231 = sphi 0, %s230
      %s245 = sphi 0, %s231
      %s249 = sphi 0, %s249
      %s251 = sphi 0, %s249
      %s252 = sphi 0, %s251
      %s266 = sphi 0, %s252
      %s270 = sphi 0, %s270
      %s272 = sphi 0, %s270
      %s273 = sphi 0, %s272
      %s287 = sphi 0, %s273
      %s291 = sphi 0, %s291
      %s293 = sphi 0, %s291
      %s294 = sphi 0, %s293
      %s308 = sphi 0, %s294
      %s312 = sphi 0, %s312
      %s314 = sphi 0, %s312
      %s315 = sphi 0, %s314
      %s329 = sphi 0, %s315
      %s333 = sphi 0, %s333
      %s335 = sphi 0, %s333
      %s336 = sphi 0, %s335
      %s350 = sphi 0, %s336
      %s354 = sphi 0, %s354
      %s356 = sphi 0, %s354
      %s357 = sphi 0, %s356
      %s371 = sphi 0, %s357
      %s375 = sphi 0, %s375
      %s377 = sphi 0, %s375
      %s378 = sphi 0, %s377
      %s392 = sphi 0, %s378
      %s398 = sphi 0, %s400
      %s401 = sphi 0, %s398
      %s402 = sphi 0, %s401
      %s418 = sphi 0, %s402
    $region4: #{tpu_custom_call.1} parent=1 // loop_header_branch
      %29 = sbr.rel (%p27) target = $region8
    $region5: #{tpu_custom_call.1} parent=1 // loop_body
      %s31 = ssub.s32 %s26, 1
      %s32 = ssub.s32 %s26, 2
      %s33 = sadd.s32 %s26, 1
      %s34 = ssub.s32 %s26, %s33
      %p35 = scmp.eq.s32.totalorder %s34, 0
      %s37 = sadd.s32 %s36, 1
      %s38 = scalar_select %p35, %s36, %s37
      %p41 = pneg %p35
      %p42 = scmp.eq.s32.totalorder %s26, 1
      %p43 = por %p41, %p42
      %p44 = scmp.ne.s32.totalorder %s36, %s39
      %p45 = scmp.eq.s32.totalorder %s26, 0
      %p46 = por %p44, %p45
      %p47 = scmp.ne.s32.totalorder %s36, %s39
      %p48 = scmp.eq.s32.totalorder %s31, 1
      %p49 = por %p47, %p48
      %p50 = scmp.ne.s32.totalorder %s39, %s40
      %p51 = scmp.eq.s32.totalorder %s31, 0
      %p52 = por %p50, %p51
      %p53 = scmp.ne.s32.totalorder %s39, %s40
      %p54 = scmp.eq.s32.totalorder %s32, 1
      %p55 = por %p53, %p54
      %p57 = scmp.ne.s32.totalorder %s40, %s56
      %p58 = scmp.eq.s32.totalorder %s32, 0
      %p59 = por %p57, %p58
      %s61 = sadd.s32 %s60, 1
      %p64 = scmp.eq.s32.totalorder %s26, 1
      %p65 = scmp.ne.s32.totalorder %s60, %s62
      %p66 = scmp.eq.s32.totalorder %s26, 0
      %p67 = por %p65, %p66
      %p68 = scmp.ne.s32.totalorder %s60, %s62
      %p69 = scmp.eq.s32.totalorder %s31, 1
      %p70 = por %p68, %p69
      %p71 = scmp.ne.s32.totalorder %s62, %s63
      %p72 = scmp.eq.s32.totalorder %s31, 0
      %p73 = por %p71, %p72
      %p74 = scmp.ne.s32.totalorder %s62, %s63
      %p75 = scmp.eq.s32.totalorder %s32, 1
      %p76 = por %p74, %p75
      %p78 = scmp.ne.s32.totalorder %s63, %s77
      %p79 = scmp.eq.s32.totalorder %s32, 0
      %p80 = por %p78, %p79
      %s82 = sadd.s32 %s81, 1
      %p85 = scmp.eq.s32.totalorder %s26, 1
      %p86 = scmp.ne.s32.totalorder %s81, %s83
      %p87 = scmp.eq.s32.totalorder %s26, 0
      %p88 = por %p86, %p87
      %p89 = scmp.ne.s32.totalorder %s81, %s83
      %p90 = scmp.eq.s32.totalorder %s31, 1
      %p91 = por %p89, %p90
      %p92 = scmp.ne.s32.totalorder %s83, %s84
      %p93 = scmp.eq.s32.totalorder %s31, 0
      %p94 = por %p92, %p93
      %p95 = scmp.ne.s32.totalorder %s83, %s84
      %p96 = scmp.eq.s32.totalorder %s32, 1
      %p97 = por %p95, %p96
      %p99 = scmp.ne.s32.totalorder %s84, %s98
      %p100 = scmp.eq.s32.totalorder %s32, 0
      %p101 = por %p99, %p100
      %s103 = sadd.s32 %s102, 1
      %p106 = scmp.eq.s32.totalorder %s26, 1
      %p107 = scmp.ne.s32.totalorder %s102, %s104
      %p108 = scmp.eq.s32.totalorder %s26, 0
      %p109 = por %p107, %p108
      %p110 = scmp.ne.s32.totalorder %s102, %s104
      %p111 = scmp.eq.s32.totalorder %s31, 1
      %p112 = por %p110, %p111
      %p113 = scmp.ne.s32.totalorder %s104, %s105
      %p114 = scmp.eq.s32.totalorder %s31, 0
      %p115 = por %p113, %p114
      %p116 = scmp.ne.s32.totalorder %s104, %s105
      %p117 = scmp.eq.s32.totalorder %s32, 1
      %p118 = por %p116, %p117
      %p120 = scmp.ne.s32.totalorder %s105, %s119
      %p121 = scmp.eq.s32.totalorder %s32, 0
      %p122 = por %p120, %p121
      %s124 = sadd.s32 %s123, 1
      %p127 = scmp.eq.s32.totalorder %s26, 1
      %p128 = scmp.ne.s32.totalorder %s123, %s125
      %p129 = scmp.eq.s32.totalorder %s26, 0
      %p130 = por %p128, %p129
      %p131 = scmp.ne.s32.totalorder %s123, %s125
      %p132 = scmp.eq.s32.totalorder %s31, 1
      %p133 = por %p131, %p132
      %p134 = scmp.ne.s32.totalorder %s125, %s126
      %p135 = scmp.eq.s32.totalorder %s31, 0
      %p136 = por %p134, %p135
      %p137 = scmp.ne.s32.totalorder %s125, %s126
      %p138 = scmp.eq.s32.totalorder %s32, 1
      %p139 = por %p137, %p138
      %p141 = scmp.ne.s32.totalorder %s126, %s140
      %p142 = scmp.eq.s32.totalorder %s32, 0
      %p143 = por %p141, %p142
      %s145 = sadd.s32 %s144, 1
      %p148 = scmp.eq.s32.totalorder %s26, 1
      %p149 = scmp.ne.s32.totalorder %s144, %s146
      %p150 = scmp.eq.s32.totalorder %s26, 0
      %p151 = por %p149, %p150
      %p152 = scmp.ne.s32.totalorder %s144, %s146
      %p153 = scmp.eq.s32.totalorder %s31, 1
      %p154 = por %p152, %p153
      %p155 = scmp.ne.s32.totalorder %s146, %s147
      %p156 = scmp.eq.s32.totalorder %s31, 0
      %p157 = por %p155, %p156
      %p158 = scmp.ne.s32.totalorder %s146, %s147
      %p159 = scmp.eq.s32.totalorder %s32, 1
      %p160 = por %p158, %p159
      %p162 = scmp.ne.s32.totalorder %s147, %s161
      %p163 = scmp.eq.s32.totalorder %s32, 0
      %p164 = por %p162, %p163
      %s166 = sadd.s32 %s165, 1
      %p169 = scmp.eq.s32.totalorder %s26, 1
      %p170 = scmp.ne.s32.totalorder %s165, %s167
      %p171 = scmp.eq.s32.totalorder %s26, 0
      %p172 = por %p170, %p171
      %p173 = scmp.ne.s32.totalorder %s165, %s167
      %p174 = scmp.eq.s32.totalorder %s31, 1
      %p175 = por %p173, %p174
      %p176 = scmp.ne.s32.totalorder %s167, %s168
      %p177 = scmp.eq.s32.totalorder %s31, 0
      %p178 = por %p176, %p177
      %p179 = scmp.ne.s32.totalorder %s167, %s168
      %p180 = scmp.eq.s32.totalorder %s32, 1
      %p181 = por %p179, %p180
      %p183 = scmp.ne.s32.totalorder %s168, %s182
      %p184 = scmp.eq.s32.totalorder %s32, 0
      %p185 = por %p183, %p184
      %s187 = sadd.s32 %s186, 1
      %p190 = scmp.eq.s32.totalorder %s26, 1
      %p191 = scmp.ne.s32.totalorder %s186, %s188
      %p192 = scmp.eq.s32.totalorder %s26, 0
      %p193 = por %p191, %p192
      %p194 = scmp.ne.s32.totalorder %s186, %s188
      %p195 = scmp.eq.s32.totalorder %s31, 1
      %p196 = por %p194, %p195
      %p197 = scmp.ne.s32.totalorder %s188, %s189
      %p198 = scmp.eq.s32.totalorder %s31, 0
      %p199 = por %p197, %p198
      %p200 = scmp.ne.s32.totalorder %s188, %s189
      %p201 = scmp.eq.s32.totalorder %s32, 1
      %p202 = por %p200, %p201
      %p204 = scmp.ne.s32.totalorder %s189, %s203
      %p205 = scmp.eq.s32.totalorder %s32, 0
      %p206 = por %p204, %p205
      %s208 = sadd.s32 %s207, 1
      %p211 = scmp.eq.s32.totalorder %s26, 1
      %p212 = scmp.ne.s32.totalorder %s207, %s209
      %p213 = scmp.eq.s32.totalorder %s26, 0
      %p214 = por %p212, %p213
      %p215 = scmp.ne.s32.totalorder %s207, %s209
      %p216 = scmp.eq.s32.totalorder %s31, 1
      %p217 = por %p215, %p216
      %p218 = scmp.ne.s32.totalorder %s209, %s210
      %p219 = scmp.eq.s32.totalorder %s31, 0
      %p220 = por %p218, %p219
      %p221 = scmp.ne.s32.totalorder %s209, %s210
      %p222 = scmp.eq.s32.totalorder %s32, 1
      %p223 = por %p221, %p222
      %p225 = scmp.ne.s32.totalorder %s210, %s224
      %p226 = scmp.eq.s32.totalorder %s32, 0
      %p227 = por %p225, %p226
      %s229 = sadd.s32 %s228, 1
      %p232 = scmp.eq.s32.totalorder %s26, 1
      %p233 = scmp.ne.s32.totalorder %s228, %s230
      %p234 = scmp.eq.s32.totalorder %s26, 0
      %p235 = por %p233, %p234
      %p236 = scmp.ne.s32.totalorder %s228, %s230
      %p237 = scmp.eq.s32.totalorder %s31, 1
      %p238 = por %p236, %p237
      %p239 = scmp.ne.s32.totalorder %s230, %s231
      %p240 = scmp.eq.s32.totalorder %s31, 0
      %p241 = por %p239, %p240
      %p242 = scmp.ne.s32.totalorder %s230, %s231
      %p243 = scmp.eq.s32.totalorder %s32, 1
      %p244 = por %p242, %p243
      %p246 = scmp.ne.s32.totalorder %s231, %s245
      %p247 = scmp.eq.s32.totalorder %s32, 0
      %p248 = por %p246, %p247
      %s250 = sadd.s32 %s249, 1
      %p253 = scmp.eq.s32.totalorder %s26, 1
      %p254 = scmp.ne.s32.totalorder %s249, %s251
      %p255 = scmp.eq.s32.totalorder %s26, 0
      %p256 = por %p254, %p255
      %p257 = scmp.ne.s32.totalorder %s249, %s251
      %p258 = scmp.eq.s32.totalorder %s31, 1
      %p259 = por %p257, %p258
      %p260 = scmp.ne.s32.totalorder %s251, %s252
      %p261 = scmp.eq.s32.totalorder %s31, 0
      %p262 = por %p260, %p261
      %p263 = scmp.ne.s32.totalorder %s251, %s252
      %p264 = scmp.eq.s32.totalorder %s32, 1
      %p265 = por %p263, %p264
      %p267 = scmp.ne.s32.totalorder %s252, %s266
      %p268 = scmp.eq.s32.totalorder %s32, 0
      %p269 = por %p267, %p268
      %s271 = sadd.s32 %s270, 1
      %p274 = scmp.eq.s32.totalorder %s26, 1
      %p275 = scmp.ne.s32.totalorder %s270, %s272
      %p276 = scmp.eq.s32.totalorder %s26, 0
      %p277 = por %p275, %p276
      %p278 = scmp.ne.s32.totalorder %s270, %s272
      %p279 = scmp.eq.s32.totalorder %s31, 1
      %p280 = por %p278, %p279
      %p281 = scmp.ne.s32.totalorder %s272, %s273
      %p282 = scmp.eq.s32.totalorder %s31, 0
      %p283 = por %p281, %p282
      %p284 = scmp.ne.s32.totalorder %s272, %s273
      %p285 = scmp.eq.s32.totalorder %s32, 1
      %p286 = por %p284, %p285
      %p288 = scmp.ne.s32.totalorder %s273, %s287
      %p289 = scmp.eq.s32.totalorder %s32, 0
      %p290 = por %p288, %p289
      %s292 = sadd.s32 %s291, 1
      %p295 = scmp.eq.s32.totalorder %s26, 1
      %p296 = scmp.ne.s32.totalorder %s291, %s293
      %p297 = scmp.eq.s32.totalorder %s26, 0
      %p298 = por %p296, %p297
      %p299 = scmp.ne.s32.totalorder %s291, %s293
      %p300 = scmp.eq.s32.totalorder %s31, 1
      %p301 = por %p299, %p300
      %p302 = scmp.ne.s32.totalorder %s293, %s294
      %p303 = scmp.eq.s32.totalorder %s31, 0
      %p304 = por %p302, %p303
      %p305 = scmp.ne.s32.totalorder %s293, %s294
      %p306 = scmp.eq.s32.totalorder %s32, 1
      %p307 = por %p305, %p306
      %p309 = scmp.ne.s32.totalorder %s294, %s308
      %p310 = scmp.eq.s32.totalorder %s32, 0
      %p311 = por %p309, %p310
      %s313 = sadd.s32 %s312, 1
      %p316 = scmp.eq.s32.totalorder %s26, 1
      %p317 = scmp.ne.s32.totalorder %s312, %s314
      %p318 = scmp.eq.s32.totalorder %s26, 0
      %p319 = por %p317, %p318
      %p320 = scmp.ne.s32.totalorder %s312, %s314
      %p321 = scmp.eq.s32.totalorder %s31, 1
      %p322 = por %p320, %p321
      %p323 = scmp.ne.s32.totalorder %s314, %s315
      %p324 = scmp.eq.s32.totalorder %s31, 0
      %p325 = por %p323, %p324
      %p326 = scmp.ne.s32.totalorder %s314, %s315
      %p327 = scmp.eq.s32.totalorder %s32, 1
      %p328 = por %p326, %p327
      %p330 = scmp.ne.s32.totalorder %s315, %s329
      %p331 = scmp.eq.s32.totalorder %s32, 0
      %p332 = por %p330, %p331
      %s334 = sadd.s32 %s333, 1
      %p337 = scmp.eq.s32.totalorder %s26, 1
      %p338 = scmp.ne.s32.totalorder %s333, %s335
      %p339 = scmp.eq.s32.totalorder %s26, 0
      %p340 = por %p338, %p339
      %p341 = scmp.ne.s32.totalorder %s333, %s335
      %p342 = scmp.eq.s32.totalorder %s31, 1
      %p343 = por %p341, %p342
      %p344 = scmp.ne.s32.totalorder %s335, %s336
      %p345 = scmp.eq.s32.totalorder %s31, 0
      %p346 = por %p344, %p345
      %p347 = scmp.ne.s32.totalorder %s335, %s336
      %p348 = scmp.eq.s32.totalorder %s32, 1
      %p349 = por %p347, %p348
      %p351 = scmp.ne.s32.totalorder %s336, %s350
      %p352 = scmp.eq.s32.totalorder %s32, 0
      %p353 = por %p351, %p352
      %s355 = sadd.s32 %s354, 1
      %p358 = scmp.eq.s32.totalorder %s26, 1
      %p359 = scmp.ne.s32.totalorder %s354, %s356
      %p360 = scmp.eq.s32.totalorder %s26, 0
      %p361 = por %p359, %p360
      %p362 = scmp.ne.s32.totalorder %s354, %s356
      %p363 = scmp.eq.s32.totalorder %s31, 1
      %p364 = por %p362, %p363
      %p365 = scmp.ne.s32.totalorder %s356, %s357
      %p366 = scmp.eq.s32.totalorder %s31, 0
      %p367 = por %p365, %p366
      %p368 = scmp.ne.s32.totalorder %s356, %s357
      %p369 = scmp.eq.s32.totalorder %s32, 1
      %p370 = por %p368, %p369
      %p372 = scmp.ne.s32.totalorder %s357, %s371
      %p373 = scmp.eq.s32.totalorder %s32, 0
      %p374 = por %p372, %p373
      %s376 = sadd.s32 %s375, 1
      %p379 = scmp.eq.s32.totalorder %s26, 1
      %p380 = scmp.ne.s32.totalorder %s375, %s377
      %p381 = scmp.eq.s32.totalorder %s26, 0
      %p382 = por %p380, %p381
      %p383 = scmp.ne.s32.totalorder %s375, %s377
      %p384 = scmp.eq.s32.totalorder %s31, 1
      %p385 = por %p383, %p384
      %p386 = scmp.ne.s32.totalorder %s377, %s378
      %p387 = scmp.eq.s32.totalorder %s31, 0
      %p388 = por %p386, %p387
      %p389 = scmp.ne.s32.totalorder %s377, %s378
      %p390 = scmp.eq.s32.totalorder %s32, 1
      %p391 = por %p389, %p390
      %p393 = scmp.ne.s32.totalorder %s378, %s392
      %p394 = scmp.eq.s32.totalorder %s32, 0
      %p395 = por %p393, %p394
      %s396 = ssub.s32 %s26, %s33
      %p397 = scmp.eq.s32.totalorder %s396, 0
      %s399 = sadd.s32 %s398, 1
      %s400 = scalar_select %p397, %s398, %s399
      %p403 = pneg %p397
      %p404 = scmp.eq.s32.totalorder %s26, 1
      %p405 = por %p403, %p404
      %p406 = scmp.ne.s32.totalorder %s398, %s401
      %p407 = scmp.eq.s32.totalorder %s26, 0
      %p408 = por %p406, %p407
      %p409 = scmp.ne.s32.totalorder %s398, %s401
      %p410 = scmp.eq.s32.totalorder %s31, 1
      %p411 = por %p409, %p410
      %p412 = scmp.ne.s32.totalorder %s401, %s402
      %p413 = scmp.eq.s32.totalorder %s31, 0
      %p414 = por %p412, %p413
      %p415 = scmp.ne.s32.totalorder %s401, %s402
      %p416 = scmp.eq.s32.totalorder %s32, 1
      %p417 = por %p415, %p416
      %p419 = scmp.ne.s32.totalorder %s402, %s418
      %p420 = scmp.eq.s32.totalorder %s32, 0
      %p421 = por %p419, %p420
      %p422 = scmp.le.s32.totalorder 1, %s26
      %p423 = scmp.lt.s32.totalorder %s26, 3
      %p424 = pnand %p422, %p423
      %p425 = pneg %p424
      // Predicated region
      $region9: #{tpu_custom_call.1} parent=5 // pred_check
        _
      $region10: #{tpu_custom_call.1} parent=5 // pred_check_branch
        %427 = sbr.rel (%p424) target = $region12
      $region11: #{tpu_custom_call.1} parent=5 // pred_region
        %s428 = ssub.s32 %s26, 1
        // Predicated region
        $region13: #{tpu_custom_call.1} parent=11 // pred_check
          %p429 = pneg %p73
        $region14: #{tpu_custom_call.1} parent=11 // pred_check_branch
          %431 = sbr.rel (%p429) target = $region16
        $region15: #{tpu_custom_call.1} parent=11 // pred_region
          _
        $region16: #{tpu_custom_call.1} parent=11 // pred_fallthru
          _
        // Predicated region
        $region17: #{tpu_custom_call.1} parent=11 // pred_check
          %p432 = pneg %p94
        $region18: #{tpu_custom_call.1} parent=11 // pred_check_branch
          %434 = sbr.rel (%p432) target = $region20
        $region19: #{tpu_custom_call.1} parent=11 // pred_region
          _
        $region20: #{tpu_custom_call.1} parent=11 // pred_fallthru
          _
        // Predicated region
        $region21: #{tpu_custom_call.1} parent=11 // pred_check
          %p435 = pneg %p115
        $region22: #{tpu_custom_call.1} parent=11 // pred_check_branch
          %437 = sbr.rel (%p435) target = $region24
        $region23: #{tpu_custom_call.1} parent=11 // pred_region
          _
        $region24: #{tpu_custom_call.1} parent=11 // pred_fallthru
          _
        // Predicated region
        $region25: #{tpu_custom_call.1} parent=11 // pred_check
          %p438 = pneg %p136
        $region26: #{tpu_custom_call.1} parent=11 // pred_check_branch
          %440 = sbr.rel (%p438) target = $region28
        $region27: #{tpu_custom_call.1} parent=11 // pred_region
          _
        $region28: #{tpu_custom_call.1} parent=11 // pred_fallthru
          _
        // Predicated region
        $region29: #{tpu_custom_call.1} parent=11 // pred_check
          %p441 = pneg %p157
        $region30: #{tpu_custom_call.1} parent=11 // pred_check_branch
          %443 = sbr.rel (%p441) target = $region32
        $region31: #{tpu_custom_call.1} parent=11 // pred_region
          _
        $region32: #{tpu_custom_call.1} parent=11 // pred_fallthru
          _
        // Predicated region
        $region33: #{tpu_custom_call.1} parent=11 // pred_check
          %p444 = pneg %p178
        $region34: #{tpu_custom_call.1} parent=11 // pred_check_branch
          %446 = sbr.rel (%p444) target = $region36
        $region35: #{tpu_custom_call.1} parent=11 // pred_region
          _
        $region36: #{tpu_custom_call.1} parent=11 // pred_fallthru
          _
        // Predicated region
        $region37: #{tpu_custom_call.1} parent=11 // pred_check
          %p447 = pneg %p199
        $region38: #{tpu_custom_call.1} parent=11 // pred_check_branch
          %449 = sbr.rel (%p447) target = $region40
        $region39: #{tpu_custom_call.1} parent=11 // pred_region
          _
        $region40: #{tpu_custom_call.1} parent=11 // pred_fallthru
          _
        // Predicated region
        $region41: #{tpu_custom_call.1} parent=11 // pred_check
          %p450 = pneg %p220
        $region42: #{tpu_custom_call.1} parent=11 // pred_check_branch
          %452 = sbr.rel (%p450) target = $region44
        $region43: #{tpu_custom_call.1} parent=11 // pred_region
          _
        $region44: #{tpu_custom_call.1} parent=11 // pred_fallthru
          _
        // Predicated region
        $region45: #{tpu_custom_call.1} parent=11 // pred_check
          %p453 = pneg %p241
        $region46: #{tpu_custom_call.1} parent=11 // pred_check_branch
          %455 = sbr.rel (%p453) target = $region48
        $region47: #{tpu_custom_call.1} parent=11 // pred_region
          _
        $region48: #{tpu_custom_call.1} parent=11 // pred_fallthru
          _
        // Predicated region
        $region49: #{tpu_custom_call.1} parent=11 // pred_check
          %p456 = pneg %p262
        $region50: #{tpu_custom_call.1} parent=11 // pred_check_branch
          %458 = sbr.rel (%p456) target = $region52
        $region51: #{tpu_custom_call.1} parent=11 // pred_region
          _
        $region52: #{tpu_custom_call.1} parent=11 // pred_fallthru
          _
        // Predicated region
        $region53: #{tpu_custom_call.1} parent=11 // pred_check
          %p459 = pneg %p283
        $region54: #{tpu_custom_call.1} parent=11 // pred_check_branch
          %461 = sbr.rel (%p459) target = $region56
        $region55: #{tpu_custom_call.1} parent=11 // pred_region
          _
        $region56: #{tpu_custom_call.1} parent=11 // pred_fallthru
          _
        // Predicated region
        $region57: #{tpu_custom_call.1} parent=11 // pred_check
          %p462 = pneg %p304
        $region58: #{tpu_custom_call.1} parent=11 // pred_check_branch
          %464 = sbr.rel (%p462) target = $region60
        $region59: #{tpu_custom_call.1} parent=11 // pred_region
          _
        $region60: #{tpu_custom_call.1} parent=11 // pred_fallthru
          _
        // Predicated region
        $region61: #{tpu_custom_call.1} parent=11 // pred_check
          %p465 = pneg %p325
        $region62: #{tpu_custom_call.1} parent=11 // pred_check_branch
          %467 = sbr.rel (%p465) target = $region64
        $region63: #{tpu_custom_call.1} parent=11 // pred_region
          _
        $region64: #{tpu_custom_call.1} parent=11 // pred_fallthru
          _
        // Predicated region
        $region65: #{tpu_custom_call.1} parent=11 // pred_check
          %p468 = pneg %p346
        $region66: #{tpu_custom_call.1} parent=11 // pred_check_branch
          %470 = sbr.rel (%p468) target = $region68
        $region67: #{tpu_custom_call.1} parent=11 // pred_region
          _
        $region68: #{tpu_custom_call.1} parent=11 // pred_fallthru
          _
        // Predicated region
        $region69: #{tpu_custom_call.1} parent=11 // pred_check
          %p471 = pneg %p367
        $region70: #{tpu_custom_call.1} parent=11 // pred_check_branch
          %473 = sbr.rel (%p471) target = $region72
        $region71: #{tpu_custom_call.1} parent=11 // pred_region
          _
        $region72: #{tpu_custom_call.1} parent=11 // pred_fallthru
          _
        // Predicated region
        $region73: #{tpu_custom_call.1} parent=11 // pred_check
          %p474 = pneg %p388
        $region74: #{tpu_custom_call.1} parent=11 // pred_check_branch
          %476 = sbr.rel (%p474) target = $region76
        $region75: #{tpu_custom_call.1} parent=11 // pred_region
          _
        $region76: #{tpu_custom_call.1} parent=11 // pred_fallthru
          _
      $region12: #{tpu_custom_call.1} parent=5 // pred_fallthru
        _
      %p477 = scmp.lt.s32.totalorder %s26, 2
      // Predicated region
      $region77: #{tpu_custom_call.1} parent=5 // pred_check
        %p478 = pneg %p477
      $region78: #{tpu_custom_call.1} parent=5 // pred_check_branch
        %480 = sbr.rel (%p478) target = $region80
      $region79: #{tpu_custom_call.1} parent=5 // pred_region
        // Predicated region
        $region81: #{tpu_custom_call.1} parent=79 // pred_check
          %p481 = pneg %p46
        $region82: #{tpu_custom_call.1} parent=79 // pred_check_branch
          %483 = sbr.rel (%p481) target = $region84
        $region83: #{tpu_custom_call.1} parent=79 // pred_region
          %s484 = smul.u32 4, %s26
          %p485 = scmp.lt.s32.totalorder %s484, 7
          %s486 = scalar_select %p485, %s484, 7
          %s487 = smul.addr %s486, 20
          %s488 = smul.addr %s487, 8
          %s489 = scalar_lea.vmem %s0, %s488
          %s490 = smul.u32 4, %s26
        $region84: #{tpu_custom_call.1} parent=79 // pred_fallthru
          _
      $region80: #{tpu_custom_call.1} parent=5 // pred_fallthru
        _
      %p491 = scmp.le.s32.totalorder 1, %s26
      %p492 = scmp.lt.s32.totalorder %s26, 3
      %p493 = pnand %p491, %p492
      %p494 = pneg %p493
      // Predicated region
      $region85: #{tpu_custom_call.1} parent=5 // pred_check
        _
      $region86: #{tpu_custom_call.1} parent=5 // pred_check_branch
        %496 = sbr.rel (%p493) target = $region88
      $region87: #{tpu_custom_call.1} parent=5 // pred_region
        %s497 = ssub.s32 %s26, 1
        %s498 = smul.u32 4, %s31
        %p499 = scmp.lt.s32.totalorder %s498, 7
        %s500 = scalar_select %p499, %s498, 7
        %s501 = smul.addr %s500, 20
        %s502 = smul.addr %s501, 8
        %s503 = scalar_lea.vmem %s0, %s502
        %p504 = pneg %p52
        %p505 = pneg %p49
        %p506 = pneg %p73
        %p507 = pneg %p70
        %p508 = pneg %p94
        %p509 = pneg %p91
        %p510 = pneg %p115
        %p511 = pneg %p112
        %p512 = pneg %p136
        %p513 = pneg %p133
        %p514 = pneg %p157
        %p515 = pneg %p154
        %p516 = pneg %p178
        %p517 = pneg %p175
        %p518 = pneg %p199
        %p519 = pneg %p196
        %p520 = pneg %p220
        %p521 = pneg %p217
        %p522 = pneg %p241
        %p523 = pneg %p238
        %p524 = pneg %p262
        %p525 = pneg %p259
        %p526 = pneg %p283
        %p527 = pneg %p280
        %p528 = pneg %p304
        %p529 = pneg %p301
        %p530 = pneg %p325
        %p531 = pneg %p322
        %p532 = pneg %p346
        %p533 = pneg %p343
        %p534 = pneg %p367
        %p535 = pneg %p364
        %p536 = pneg %p388
        %p537 = pneg %p385
        %p538 = pneg %p414
        %p539 = pneg %p411
        %s540 = sand.u32 %s401, 1
        %s541 = scalar_lea.sflag [#allocation4], %s540
        %s542 = sand.u32 %s401, 1
        %s543 = smul.addr %s542, 256
        %s544 = scalar_lea.vmem [#allocation3], %s543
        %s545 = smul.u32 4, %s31
        %p546 = scmp.lt.s32.totalorder %s545, 7
        %s547 = scalar_select %p546, %s545, 7
        %s548 = smul.addr %s547, 20
        %s549 = smul.addr %s548, 8
        %s550 = scalar_lea.vmem %s0, %s549
        %s551 = smul.u32 4, %s31
        %s552 = smul.u32 4, %s31
        %v554 = vld [vmem:[%s550] sm:$0xff]
        %v555 = vld [vmem:[%s550 + $0x10] sm:$0xff]
        %v556 = vld [vmem:[%s550 + $0x20] sm:$0xff]
        %v557 = vld [vmem:[%s550 + $0x30] sm:$0xff]
        %v558 = vld [vmem:[%s550 + $0x40] sm:$0xff]
        %v559 = vld [vmem:[%s550 + $0x50] sm:$0xff]
        %v560 = vld [vmem:[%s550 + $0x60] sm:$0xff]
        %v561 = vld [vmem:[%s550 + $0x70] sm:$0xff]
        %v562 = vld [vmem:[%s550 + $0xa0] sm:$0xff]
        %v563 = vld [vmem:[%s550 + $0xb0] sm:$0xff]
        %v564 = vld [vmem:[%s550 + $0xc0] sm:$0xff]
        %v565 = vld [vmem:[%s550 + $0xd0] sm:$0xff]
        %v566 = vld [vmem:[%s550 + $0xe0] sm:$0xff]
        %v567 = vld [vmem:[%s550 + $0xf0] sm:$0xff]
        %v568 = vld [vmem:[%s550 + $0x100] sm:$0xff]
        %v569 = vld [vmem:[%s550 + $0x110] sm:$0xff]
        %v570 = vld [vmem:[%s550 + $0x140] sm:$0xff]
        %v571 = vld [vmem:[%s550 + $0x150] sm:$0xff]
        %v572 = vld [vmem:[%s550 + $0x160] sm:$0xff]
        %v573 = vld [vmem:[%s550 + $0x170] sm:$0xff]
        %v574 = vld [vmem:[%s550 + $0x180] sm:$0xff]
        %v575 = vld [vmem:[%s550 + $0x190] sm:$0xff]
        %v576 = vld [vmem:[%s550 + $0x1a0] sm:$0xff]
        %v577 = vld [vmem:[%s550 + $0x1b0] sm:$0xff]
        %v578 = vld [vmem:[%s550 + $0x1e0] sm:$0xff]
        %v579 = vld [vmem:[%s550 + $0x1f0] sm:$0xff]
        %v580 = vld [vmem:[%s550 + $0x200] sm:$0xff]
        %v581 = vld [vmem:[%s550 + $0x210] sm:$0xff]
        %v582 = vld [vmem:[%s550 + $0x220] sm:$0xff]
        %v583 = vld [vmem:[%s550 + $0x230] sm:$0xff]
        %v584 = vld [vmem:[%s550 + $0x240] sm:$0xff]
        %v585 = vld [vmem:[%s550 + $0x250] sm:$0xff]
        %v586 = vld [vmem:[%s550 + $0x1] sm:$0xff]
        %v587 = vld [vmem:[%s550 + $0x11] sm:$0xff]
        %v588 = vld [vmem:[%s550 + $0x21] sm:$0xff]
        %v589 = vld [vmem:[%s550 + $0x31] sm:$0xff]
        %v590 = vld [vmem:[%s550 + $0x41] sm:$0xff]
        %v591 = vld [vmem:[%s550 + $0x51] sm:$0xff]
        %v592 = vld [vmem:[%s550 + $0x61] sm:$0xff]
        %v593 = vld [vmem:[%s550 + $0x71] sm:$0xff]
        %v594 = vld [vmem:[%s550 + $0xa1] sm:$0xff]
        %v595 = vld [vmem:[%s550 + $0xb1] sm:$0xff]
        %v596 = vld [vmem:[%s550 + $0xc1] sm:$0xff]
        %v597 = vld [vmem:[%s550 + $0xd1] sm:$0xff]
        %v598 = vld [vmem:[%s550 + $0xe1] sm:$0xff]
        %v599 = vld [vmem:[%s550 + $0xf1] sm:$0xff]
        %v600 = vld [vmem:[%s550 + $0x101] sm:$0xff]
        %v601 = vld [vmem:[%s550 + $0x111] sm:$0xff]
        %v602 = vld [vmem:[%s550 + $0x141] sm:$0xff]
        %v603 = vld [vmem:[%s550 + $0x151] sm:$0xff]
        %v604 = vld [vmem:[%s550 + $0x161] sm:$0xff]
        %v605 = vld [vmem:[%s550 + $0x171] sm:$0xff]
        %v606 = vld [vmem:[%s550 + $0x181] sm:$0xff]
        %v607 = vld [vmem:[%s550 + $0x191] sm:$0xff]
        %v608 = vld [vmem:[%s550 + $0x1a1] sm:$0xff]
        %v609 = vld [vmem:[%s550 + $0x1b1] sm:$0xff]
        %v610 = vld [vmem:[%s550 + $0x1e1] sm:$0xff]
        %v611 = vld [vmem:[%s550 + $0x1f1] sm:$0xff]
        %v612 = vld [vmem:[%s550 + $0x201] sm:$0xff]
        %v613 = vld [vmem:[%s550 + $0x211] sm:$0xff]
        %v614 = vld [vmem:[%s550 + $0x221] sm:$0xff]
        %v615 = vld [vmem:[%s550 + $0x231] sm:$0xff]
        %v616 = vld [vmem:[%s550 + $0x241] sm:$0xff]
        %v617 = vld [vmem:[%s550 + $0x251] sm:$0xff]
        %v618 = vld [vmem:[%s550 + $0x2] sm:$0xff]
        %v619 = vld [vmem:[%s550 + $0x12] sm:$0xff]
        %v620 = vld [vmem:[%s550 + $0x22] sm:$0xff]
        %v621 = vld [vmem:[%s550 + $0x32] sm:$0xff]
        %v622 = vld [vmem:[%s550 + $0x42] sm:$0xff]
        %v623 = vld [vmem:[%s550 + $0x52] sm:$0xff]
        %v624 = vld [vmem:[%s550 + $0x62] sm:$0xff]
        %v625 = vld [vmem:[%s550 + $0x72] sm:$0xff]
        %v626 = vld [vmem:[%s550 + $0xa2] sm:$0xff]
        %v627 = vld [vmem:[%s550 + $0xb2] sm:$0xff]
        %v628 = vld [vmem:[%s550 + $0xc2] sm:$0xff]
        %v629 = vld [vmem:[%s550 + $0xd2] sm:$0xff]
        %v630 = vld [vmem:[%s550 + $0xe2] sm:$0xff]
        %v631 = vld [vmem:[%s550 + $0xf2] sm:$0xff]
        %v632 = vld [vmem:[%s550 + $0x102] sm:$0xff]
        %v633 = vld [vmem:[%s550 + $0x112] sm:$0xff]
        %v634 = vld [vmem:[%s550 + $0x142] sm:$0xff]
        %v635 = vld [vmem:[%s550 + $0x152] sm:$0xff]
        %v636 = vld [vmem:[%s550 + $0x162] sm:$0xff]
        %v637 = vld [vmem:[%s550 + $0x172] sm:$0xff]
        %v638 = vld [vmem:[%s550 + $0x182] sm:$0xff]
        %v639 = vld [vmem:[%s550 + $0x192] sm:$0xff]
        %v640 = vld [vmem:[%s550 + $0x1a2] sm:$0xff]
        %v641 = vld [vmem:[%s550 + $0x1b2] sm:$0xff]
        %v642 = vld [vmem:[%s550 + $0x1e2] sm:$0xff]
        %v643 = vld [vmem:[%s550 + $0x1f2] sm:$0xff]
        %v644 = vld [vmem:[%s550 + $0x202] sm:$0xff]
        %v645 = vld [vmem:[%s550 + $0x212] sm:$0xff]
        %v646 = vld [vmem:[%s550 + $0x222] sm:$0xff]
        %v647 = vld [vmem:[%s550 + $0x232] sm:$0xff]
        %v648 = vld [vmem:[%s550 + $0x242] sm:$0xff]
        %v649 = vld [vmem:[%s550 + $0x252] sm:$0xff]
        %s650 = scalar_lea.vmem %s550, 16
        %v651 = vld [vmem:[%s650] sm:$0xff]
        %v652 = vld [vmem:[%s650 + $0x10] sm:$0xff]
        %v653 = vld [vmem:[%s650 + $0x20] sm:$0xff]
        %v654 = vld [vmem:[%s650 + $0x30] sm:$0xff]
        %v655 = vld [vmem:[%s650 + $0x40] sm:$0xff]
        %v656 = vld [vmem:[%s650 + $0x50] sm:$0xff]
        %v657 = vld [vmem:[%s650 + $0x60] sm:$0xff]
        %v658 = vld [vmem:[%s650 + $0x70] sm:$0xff]
        %v659 = vld [vmem:[%s650 + $0xa0] sm:$0xff]
        %v660 = vld [vmem:[%s650 + $0xb0] sm:$0xff]
        %v661 = vld [vmem:[%s650 + $0xc0] sm:$0xff]
        %v662 = vld [vmem:[%s650 + $0xd0] sm:$0xff]
        %v663 = vld [vmem:[%s650 + $0xe0] sm:$0xff]
        %v664 = vld [vmem:[%s650 + $0xf0] sm:$0xff]
        %v665 = vld [vmem:[%s650 + $0x100] sm:$0xff]
        %v666 = vld [vmem:[%s650 + $0x110] sm:$0xff]
        %v667 = vld [vmem:[%s650 + $0x140] sm:$0xff]
        %v668 = vld [vmem:[%s650 + $0x150] sm:$0xff]
        %v669 = vld [vmem:[%s650 + $0x160] sm:$0xff]
        %v670 = vld [vmem:[%s650 + $0x170] sm:$0xff]
        %v671 = vld [vmem:[%s650 + $0x180] sm:$0xff]
        %v672 = vld [vmem:[%s650 + $0x190] sm:$0xff]
        %v673 = vld [vmem:[%s650 + $0x1a0] sm:$0xff]
        %v674 = vld [vmem:[%s650 + $0x1b0] sm:$0xff]
        %v675 = vld [vmem:[%s650 + $0x1e0] sm:$0xff]
        %v676 = vld [vmem:[%s650 + $0x1f0] sm:$0xff]
        %v677 = vld [vmem:[%s650 + $0x200] sm:$0xff]
        %v678 = vld [vmem:[%s650 + $0x210] sm:$0xff]
        %v679 = vld [vmem:[%s650 + $0x220] sm:$0xff]
        %v680 = vld [vmem:[%s650 + $0x230] sm:$0xff]
        %v681 = vld [vmem:[%s650 + $0x240] sm:$0xff]
        %v682 = vld [vmem:[%s650 + $0x250] sm:$0xff]
        %v683 = vld [vmem:[%s650 + $0x1] sm:$0xff]
        %v684 = vld [vmem:[%s650 + $0x11] sm:$0xff]
        %v685 = vld [vmem:[%s650 + $0x21] sm:$0xff]
        %v686 = vld [vmem:[%s650 + $0x31] sm:$0xff]
        %v687 = vld [vmem:[%s650 + $0x41] sm:$0xff]
        %v688 = vld [vmem:[%s650 + $0x51] sm:$0xff]
        %v689 = vld [vmem:[%s650 + $0x61] sm:$0xff]
        %v690 = vld [vmem:[%s650 + $0x71] sm:$0xff]
        %v691 = vld [vmem:[%s650 + $0xa1] sm:$0xff]
        %v692 = vld [vmem:[%s650 + $0xb1] sm:$0xff]
        %v693 = vld [vmem:[%s650 + $0xc1] sm:$0xff]
        %v694 = vld [vmem:[%s650 + $0xd1] sm:$0xff]
        %v695 = vld [vmem:[%s650 + $0xe1] sm:$0xff]
        %v696 = vld [vmem:[%s650 + $0xf1] sm:$0xff]
        %v697 = vld [vmem:[%s650 + $0x101] sm:$0xff]
        %v698 = vld [vmem:[%s650 + $0x111] sm:$0xff]
        %v699 = vld [vmem:[%s650 + $0x141] sm:$0xff]
        %v700 = vld [vmem:[%s650 + $0x151] sm:$0xff]
        %v701 = vld [vmem:[%s650 + $0x161] sm:$0xff]
        %v702 = vld [vmem:[%s650 + $0x171] sm:$0xff]
        %v703 = vld [vmem:[%s650 + $0x181] sm:$0xff]
        %v704 = vld [vmem:[%s650 + $0x191] sm:$0xff]
        %v705 = vld [vmem:[%s650 + $0x1a1] sm:$0xff]
        %v706 = vld [vmem:[%s650 + $0x1b1] sm:$0xff]
        %v707 = vld [vmem:[%s650 + $0x1e1] sm:$0xff]
        %v708 = vld [vmem:[%s650 + $0x1f1] sm:$0xff]
        %v709 = vld [vmem:[%s650 + $0x201] sm:$0xff]
        %v710 = vld [vmem:[%s650 + $0x211] sm:$0xff]
        %v711 = vld [vmem:[%s650 + $0x221] sm:$0xff]
        %v712 = vld [vmem:[%s650 + $0x231] sm:$0xff]
        %v713 = vld [vmem:[%s650 + $0x241] sm:$0xff]
        %v714 = vld [vmem:[%s650 + $0x251] sm:$0xff]
        %v715 = vld [vmem:[%s650 + $0x2] sm:$0xff]
        %v716 = vld [vmem:[%s650 + $0x12] sm:$0xff]
        %v717 = vld [vmem:[%s650 + $0x22] sm:$0xff]
        %v718 = vld [vmem:[%s650 + $0x32] sm:$0xff]
        %v719 = vld [vmem:[%s650 + $0x42] sm:$0xff]
        %v720 = vld [vmem:[%s650 + $0x52] sm:$0xff]
        %v721 = vld [vmem:[%s650 + $0x62] sm:$0xff]
        %v722 = vld [vmem:[%s650 + $0x72] sm:$0xff]
        %v723 = vld [vmem:[%s650 + $0xa2] sm:$0xff]
        %v724 = vld [vmem:[%s650 + $0xb2] sm:$0xff]
        %v725 = vld [vmem:[%s650 + $0xc2] sm:$0xff]
        %v726 = vld [vmem:[%s650 + $0xd2] sm:$0xff]
        %v727 = vld [vmem:[%s650 + $0xe2] sm:$0xff]
        %v728 = vld [vmem:[%s650 + $0xf2] sm:$0xff]
        %v729 = vld [vmem:[%s650 + $0x102] sm:$0xff]
        %v730 = vld [vmem:[%s650 + $0x112] sm:$0xff]
        %v731 = vld [vmem:[%s650 + $0x142] sm:$0xff]
        %v732 = vld [vmem:[%s650 + $0x152] sm:$0xff]
        %v733 = vld [vmem:[%s650 + $0x162] sm:$0xff]
        %v734 = vld [vmem:[%s650 + $0x172] sm:$0xff]
        %v735 = vld [vmem:[%s650 + $0x182] sm:$0xff]
        %v736 = vld [vmem:[%s650 + $0x192] sm:$0xff]
        %v737 = vld [vmem:[%s650 + $0x1a2] sm:$0xff]
        %v738 = vld [vmem:[%s650 + $0x1b2] sm:$0xff]
        %v739 = vld [vmem:[%s650 + $0x1e2] sm:$0xff]
        %v740 = vld [vmem:[%s650 + $0x1f2] sm:$0xff]
        %v741 = vld [vmem:[%s650 + $0x202] sm:$0xff]
        %v742 = vld [vmem:[%s650 + $0x212] sm:$0xff]
        %v743 = vld [vmem:[%s650 + $0x222] sm:$0xff]
        %v744 = vld [vmem:[%s650 + $0x232] sm:$0xff]
        %v745 = vld [vmem:[%s650 + $0x242] sm:$0xff]
        %v746 = vld [vmem:[%s650 + $0x252] sm:$0xff]
        %s747 = scalar_lea.vmem %s550, 32
        %v748 = vld [vmem:[%s747] sm:$0xff]
        %v749 = vld [vmem:[%s747 + $0x10] sm:$0xff]
        %v750 = vld [vmem:[%s747 + $0x20] sm:$0xff]
        %v751 = vld [vmem:[%s747 + $0x30] sm:$0xff]
        %v752 = vld [vmem:[%s747 + $0x40] sm:$0xff]
        %v753 = vld [vmem:[%s747 + $0x50] sm:$0xff]
        %v754 = vld [vmem:[%s747 + $0x60] sm:$0xff]
        %v755 = vld [vmem:[%s747 + $0x70] sm:$0xff]
        %v756 = vld [vmem:[%s747 + $0xa0] sm:$0xff]
        %v757 = vld [vmem:[%s747 + $0xb0] sm:$0xff]
        %v758 = vld [vmem:[%s747 + $0xc0] sm:$0xff]
        %v759 = vld [vmem:[%s747 + $0xd0] sm:$0xff]
        %v760 = vld [vmem:[%s747 + $0xe0] sm:$0xff]
        %v761 = vld [vmem:[%s747 + $0xf0] sm:$0xff]
        %v762 = vld [vmem:[%s747 + $0x100] sm:$0xff]
        %v763 = vld [vmem:[%s747 + $0x110] sm:$0xff]
        %v764 = vld [vmem:[%s747 + $0x140] sm:$0xff]
        %v765 = vld [vmem:[%s747 + $0x150] sm:$0xff]
        %v766 = vld [vmem:[%s747 + $0x160] sm:$0xff]
        %v767 = vld [vmem:[%s747 + $0x170] sm:$0xff]
        %v768 = vld [vmem:[%s747 + $0x180] sm:$0xff]
        %v769 = vld [vmem:[%s747 + $0x190] sm:$0xff]
        %v770 = vld [vmem:[%s747 + $0x1a0] sm:$0xff]
        %v771 = vld [vmem:[%s747 + $0x1b0] sm:$0xff]
        %v772 = vld [vmem:[%s747 + $0x1e0] sm:$0xff]
        %v773 = vld [vmem:[%s747 + $0x1f0] sm:$0xff]
        %v774 = vld [vmem:[%s747 + $0x200] sm:$0xff]
        %v775 = vld [vmem:[%s747 + $0x210] sm:$0xff]
        %v776 = vld [vmem:[%s747 + $0x220] sm:$0xff]
        %v777 = vld [vmem:[%s747 + $0x230] sm:$0xff]
        %v778 = vld [vmem:[%s747 + $0x240] sm:$0xff]
        %v779 = vld [vmem:[%s747 + $0x250] sm:$0xff]
        %v780 = vld [vmem:[%s747 + $0x1] sm:$0xff]
        %v781 = vld [vmem:[%s747 + $0x11] sm:$0xff]
        %v782 = vld [vmem:[%s747 + $0x21] sm:$0xff]
        %v783 = vld [vmem:[%s747 + $0x31] sm:$0xff]
        %v784 = vld [vmem:[%s747 + $0x41] sm:$0xff]
        %v785 = vld [vmem:[%s747 + $0x51] sm:$0xff]
        %v786 = vld [vmem:[%s747 + $0x61] sm:$0xff]
        %v787 = vld [vmem:[%s747 + $0x71] sm:$0xff]
        %v788 = vld [vmem:[%s747 + $0xa1] sm:$0xff]
        %v789 = vld [vmem:[%s747 + $0xb1] sm:$0xff]
        %v790 = vld [vmem:[%s747 + $0xc1] sm:$0xff]
        %v791 = vld [vmem:[%s747 + $0xd1] sm:$0xff]
        %v792 = vld [vmem:[%s747 + $0xe1] sm:$0xff]
        %v793 = vld [vmem:[%s747 + $0xf1] sm:$0xff]
        %v794 = vld [vmem:[%s747 + $0x101] sm:$0xff]
        %v795 = vld [vmem:[%s747 + $0x111] sm:$0xff]
        %v796 = vld [vmem:[%s747 + $0x141] sm:$0xff]
        %v797 = vld [vmem:[%s747 + $0x151] sm:$0xff]
        %v798 = vld [vmem:[%s747 + $0x161] sm:$0xff]
        %v799 = vld [vmem:[%s747 + $0x171] sm:$0xff]
        %v800 = vld [vmem:[%s747 + $0x181] sm:$0xff]
        %v801 = vld [vmem:[%s747 + $0x191] sm:$0xff]
        %v802 = vld [vmem:[%s747 + $0x1a1] sm:$0xff]
        %v803 = vld [vmem:[%s747 + $0x1b1] sm:$0xff]
        %v804 = vld [vmem:[%s747 + $0x1e1] sm:$0xff]
        %v805 = vld [vmem:[%s747 + $0x1f1] sm:$0xff]
        %v806 = vld [vmem:[%s747 + $0x201] sm:$0xff]
        %v807 = vld [vmem:[%s747 + $0x211] sm:$0xff]
        %v808 = vld [vmem:[%s747 + $0x221] sm:$0xff]
        %v809 = vld [vmem:[%s747 + $0x231] sm:$0xff]
        %v810 = vld [vmem:[%s747 + $0x241] sm:$0xff]
        %v811 = vld [vmem:[%s747 + $0x251] sm:$0xff]
        %v812 = vld [vmem:[%s747 + $0x2] sm:$0xff]
        %v813 = vld [vmem:[%s747 + $0x12] sm:$0xff]
        %v814 = vld [vmem:[%s747 + $0x22] sm:$0xff]
        %v815 = vld [vmem:[%s747 + $0x32] sm:$0xff]
        %v816 = vld [vmem:[%s747 + $0x42] sm:$0xff]
        %v817 = vld [vmem:[%s747 + $0x52] sm:$0xff]
        %v818 = vld [vmem:[%s747 + $0x62] sm:$0xff]
        %v819 = vld [vmem:[%s747 + $0x72] sm:$0xff]
        %v820 = vld [vmem:[%s747 + $0xa2] sm:$0xff]
        %v821 = vld [vmem:[%s747 + $0xb2] sm:$0xff]
        %v822 = vld [vmem:[%s747 + $0xc2] sm:$0xff]
        %v823 = vld [vmem:[%s747 + $0xd2] sm:$0xff]
        %v824 = vld [vmem:[%s747 + $0xe2] sm:$0xff]
        %v825 = vld [vmem:[%s747 + $0xf2] sm:$0xff]
        %v826 = vld [vmem:[%s747 + $0x102] sm:$0xff]
        %v827 = vld [vmem:[%s747 + $0x112] sm:$0xff]
        %v828 = vld [vmem:[%s747 + $0x142] sm:$0xff]
        %v829 = vld [vmem:[%s747 + $0x152] sm:$0xff]
        %v830 = vld [vmem:[%s747 + $0x162] sm:$0xff]
        %v831 = vld [vmem:[%s747 + $0x172] sm:$0xff]
        %v832 = vld [vmem:[%s747 + $0x182] sm:$0xff]
        %v833 = vld [vmem:[%s747 + $0x192] sm:$0xff]
        %v834 = vld [vmem:[%s747 + $0x1a2] sm:$0xff]
        %v835 = vld [vmem:[%s747 + $0x1b2] sm:$0xff]
        %v836 = vld [vmem:[%s747 + $0x1e2] sm:$0xff]
        %v837 = vld [vmem:[%s747 + $0x1f2] sm:$0xff]
        %v838 = vld [vmem:[%s747 + $0x202] sm:$0xff]
        %v839 = vld [vmem:[%s747 + $0x212] sm:$0xff]
        %v840 = vld [vmem:[%s747 + $0x222] sm:$0xff]
        %v841 = vld [vmem:[%s747 + $0x232] sm:$0xff]
        %v842 = vld [vmem:[%s747 + $0x242] sm:$0xff]
        %v843 = vld [vmem:[%s747 + $0x252] sm:$0xff]
        %876 = vrot.lane.b32.xlu0 %v586, 32
        %v877 = vpop.permute.xlu0 %876
        %878 = vrot.lane.b32.xlu0 %v587, 32
        %v879 = vpop.permute.xlu0 %878
        %880 = vrot.lane.b32.xlu0 %v588, 32
        %v881 = vpop.permute.xlu0 %880
        %882 = vrot.lane.b32.xlu0 %v589, 32
        %v883 = vpop.permute.xlu0 %882
        %884 = vrot.lane.b32.xlu0 %v590, 32
        %v885 = vpop.permute.xlu0 %884
        %886 = vrot.lane.b32.xlu0 %v591, 32
        %v887 = vpop.permute.xlu0 %886
        %888 = vrot.lane.b32.xlu0 %v592, 32
        %v889 = vpop.permute.xlu0 %888
        %890 = vrot.lane.b32.xlu0 %v593, 32
        %v891 = vpop.permute.xlu0 %890
        %892 = vrot.lane.b32.xlu0 %v594, 32
        %v893 = vpop.permute.xlu0 %892
        %894 = vrot.lane.b32.xlu0 %v595, 32
        %v895 = vpop.permute.xlu0 %894
        %896 = vrot.lane.b32.xlu0 %v596, 32
        %v897 = vpop.permute.xlu0 %896
        %898 = vrot.lane.b32.xlu0 %v597, 32
        %v899 = vpop.permute.xlu0 %898
        %900 = vrot.lane.b32.xlu0 %v598, 32
        %v901 = vpop.permute.xlu0 %900
        %902 = vrot.lane.b32.xlu0 %v599, 32
        %v903 = vpop.permute.xlu0 %902
        %904 = vrot.lane.b32.xlu0 %v600, 32
        %v905 = vpop.permute.xlu0 %904
        %906 = vrot.lane.b32.xlu0 %v601, 32
        %v907 = vpop.permute.xlu0 %906
        %908 = vrot.lane.b32.xlu0 %v602, 32
        %v909 = vpop.permute.xlu0 %908
        %910 = vrot.lane.b32.xlu0 %v603, 32
        %v911 = vpop.permute.xlu0 %910
        %912 = vrot.lane.b32.xlu0 %v604, 32
        %v913 = vpop.permute.xlu0 %912
        %914 = vrot.lane.b32.xlu0 %v605, 32
        %v915 = vpop.permute.xlu0 %914
        %916 = vrot.lane.b32.xlu0 %v606, 32
        %v917 = vpop.permute.xlu0 %916
        %918 = vrot.lane.b32.xlu0 %v607, 32
        %v919 = vpop.permute.xlu0 %918
        %920 = vrot.lane.b32.xlu0 %v608, 32
        %v921 = vpop.permute.xlu0 %920
        %922 = vrot.lane.b32.xlu0 %v609, 32
        %v923 = vpop.permute.xlu0 %922
        %924 = vrot.lane.b32.xlu0 %v610, 32
        %v925 = vpop.permute.xlu0 %924
        %926 = vrot.lane.b32.xlu0 %v611, 32
        %v927 = vpop.permute.xlu0 %926
        %928 = vrot.lane.b32.xlu0 %v612, 32
        %v929 = vpop.permute.xlu0 %928
        %930 = vrot.lane.b32.xlu0 %v613, 32
        %v931 = vpop.permute.xlu0 %930
        %932 = vrot.lane.b32.xlu0 %v614, 32
        %v933 = vpop.permute.xlu0 %932
        %934 = vrot.lane.b32.xlu0 %v615, 32
        %v935 = vpop.permute.xlu0 %934
        %936 = vrot.lane.b32.xlu0 %v616, 32
        %v937 = vpop.permute.xlu0 %936
        %938 = vrot.lane.b32.xlu0 %v617, 32
        %v939 = vpop.permute.xlu0 %938
        %1004 = vrot.lane.b32.xlu0 %v618, 64
        %v1005 = vpop.permute.xlu0 %1004
        %1006 = vrot.lane.b32.xlu0 %v619, 64
        %v1007 = vpop.permute.xlu0 %1006
        %1008 = vrot.lane.b32.xlu0 %v620, 64
        %v1009 = vpop.permute.xlu0 %1008
        %1010 = vrot.lane.b32.xlu0 %v621, 64
        %v1011 = vpop.permute.xlu0 %1010
        %1012 = vrot.lane.b32.xlu0 %v622, 64
        %v1013 = vpop.permute.xlu0 %1012
        %1014 = vrot.lane.b32.xlu0 %v623, 64
        %v1015 = vpop.permute.xlu0 %1014
        %1016 = vrot.lane.b32.xlu0 %v624, 64
        %v1017 = vpop.permute.xlu0 %1016
        %1018 = vrot.lane.b32.xlu0 %v625, 64
        %v1019 = vpop.permute.xlu0 %1018
        %1020 = vrot.lane.b32.xlu0 %v626, 64
        %v1021 = vpop.permute.xlu0 %1020
        %1022 = vrot.lane.b32.xlu0 %v627, 64
        %v1023 = vpop.permute.xlu0 %1022
        %1024 = vrot.lane.b32.xlu0 %v628, 64
        %v1025 = vpop.permute.xlu0 %1024
        %1026 = vrot.lane.b32.xlu0 %v629, 64
        %v1027 = vpop.permute.xlu0 %1026
        %1028 = vrot.lane.b32.xlu0 %v630, 64
        %v1029 = vpop.permute.xlu0 %1028
        %1030 = vrot.lane.b32.xlu0 %v631, 64
        %v1031 = vpop.permute.xlu0 %1030
        %1032 = vrot.lane.b32.xlu0 %v632, 64
        %v1033 = vpop.permute.xlu0 %1032
        %1034 = vrot.lane.b32.xlu0 %v633, 64
        %v1035 = vpop.permute.xlu0 %1034
        %1036 = vrot.lane.b32.xlu0 %v634, 64
        %v1037 = vpop.permute.xlu0 %1036
        %1038 = vrot.lane.b32.xlu0 %v635, 64
        %v1039 = vpop.permute.xlu0 %1038
        %1040 = vrot.lane.b32.xlu0 %v636, 64
        %v1041 = vpop.permute.xlu0 %1040
        %1042 = vrot.lane.b32.xlu0 %v637, 64
        %v1043 = vpop.permute.xlu0 %1042
        %1044 = vrot.lane.b32.xlu0 %v638, 64
        %v1045 = vpop.permute.xlu0 %1044
        %1046 = vrot.lane.b32.xlu0 %v639, 64
        %v1047 = vpop.permute.xlu0 %1046
        %1048 = vrot.lane.b32.xlu0 %v640, 64
        %v1049 = vpop.permute.xlu0 %1048
        %1050 = vrot.lane.b32.xlu0 %v641, 64
        %v1051 = vpop.permute.xlu0 %1050
        %1052 = vrot.lane.b32.xlu0 %v642, 64
        %v1053 = vpop.permute.xlu0 %1052
        %1054 = vrot.lane.b32.xlu0 %v643, 64
        %v1055 = vpop.permute.xlu0 %1054
        %1056 = vrot.lane.b32.xlu0 %v644, 64
        %v1057 = vpop.permute.xlu0 %1056
        %1058 = vrot.lane.b32.xlu0 %v645, 64
        %v1059 = vpop.permute.xlu0 %1058
        %1060 = vrot.lane.b32.xlu0 %v646, 64
        %v1061 = vpop.permute.xlu0 %1060
        %1062 = vrot.lane.b32.xlu0 %v647, 64
        %v1063 = vpop.permute.xlu0 %1062
        %1064 = vrot.lane.b32.xlu0 %v648, 64
        %v1065 = vpop.permute.xlu0 %1064
        %1066 = vrot.lane.b32.xlu0 %v649, 64
        %v1067 = vpop.permute.xlu0 %1066
        %1132 = vrot.lane.b32.xlu0 %v651, 96
        %v1133 = vpop.permute.xlu0 %1132
        %1134 = vrot.lane.b32.xlu0 %v652, 96
        %v1135 = vpop.permute.xlu0 %1134
        %1136 = vrot.lane.b32.xlu0 %v653, 96
        %v1137 = vpop.permute.xlu0 %1136
        %1138 = vrot.lane.b32.xlu0 %v654, 96
        %v1139 = vpop.permute.xlu0 %1138
        %1140 = vrot.lane.b32.xlu0 %v655, 96
        %v1141 = vpop.permute.xlu0 %1140
        %1142 = vrot.lane.b32.xlu0 %v656, 96
        %v1143 = vpop.permute.xlu0 %1142
        %1144 = vrot.lane.b32.xlu0 %v657, 96
        %v1145 = vpop.permute.xlu0 %1144
        %1146 = vrot.lane.b32.xlu0 %v658, 96
        %v1147 = vpop.permute.xlu0 %1146
        %1148 = vrot.lane.b32.xlu0 %v659, 96
        %v1149 = vpop.permute.xlu0 %1148
        %1150 = vrot.lane.b32.xlu0 %v660, 96
        %v1151 = vpop.permute.xlu0 %1150
        %1152 = vrot.lane.b32.xlu0 %v661, 96
        %v1153 = vpop.permute.xlu0 %1152
        %1154 = vrot.lane.b32.xlu0 %v662, 96
        %v1155 = vpop.permute.xlu0 %1154
        %1156 = vrot.lane.b32.xlu0 %v663, 96
        %v1157 = vpop.permute.xlu0 %1156
        %1158 = vrot.lane.b32.xlu0 %v664, 96
        %v1159 = vpop.permute.xlu0 %1158
        %1160 = vrot.lane.b32.xlu0 %v665, 96
        %v1161 = vpop.permute.xlu0 %1160
        %1162 = vrot.lane.b32.xlu0 %v666, 96
        %v1163 = vpop.permute.xlu0 %1162
        %1164 = vrot.lane.b32.xlu0 %v667, 96
        %v1165 = vpop.permute.xlu0 %1164
        %1166 = vrot.lane.b32.xlu0 %v668, 96
        %v1167 = vpop.permute.xlu0 %1166
        %1168 = vrot.lane.b32.xlu0 %v669, 96
        %v1169 = vpop.permute.xlu0 %1168
        %1170 = vrot.lane.b32.xlu0 %v670, 96
        %v1171 = vpop.permute.xlu0 %1170
        %1172 = vrot.lane.b32.xlu0 %v671, 96
        %v1173 = vpop.permute.xlu0 %1172
        %1174 = vrot.lane.b32.xlu0 %v672, 96
        %v1175 = vpop.permute.xlu0 %1174
        %1176 = vrot.lane.b32.xlu0 %v673, 96
        %v1177 = vpop.permute.xlu0 %1176
        %1178 = vrot.lane.b32.xlu0 %v674, 96
        %v1179 = vpop.permute.xlu0 %1178
        %1180 = vrot.lane.b32.xlu0 %v675, 96
        %v1181 = vpop.permute.xlu0 %1180
        %1182 = vrot.lane.b32.xlu0 %v676, 96
        %v1183 = vpop.permute.xlu0 %1182
        %1184 = vrot.lane.b32.xlu0 %v677, 96
        %v1185 = vpop.permute.xlu0 %1184
        %1186 = vrot.lane.b32.xlu0 %v678, 96
        %v1187 = vpop.permute.xlu0 %1186
        %1188 = vrot.lane.b32.xlu0 %v679, 96
        %v1189 = vpop.permute.xlu0 %1188
        %1190 = vrot.lane.b32.xlu0 %v680, 96
        %v1191 = vpop.permute.xlu0 %1190
        %1192 = vrot.lane.b32.xlu0 %v681, 96
        %v1193 = vpop.permute.xlu0 %1192
        %1194 = vrot.lane.b32.xlu0 %v682, 96
        %v1195 = vpop.permute.xlu0 %1194
        %1260 = vrot.lane.b32.xlu0 %v715, 32
        %v1261 = vpop.permute.xlu0 %1260
        %1262 = vrot.lane.b32.xlu0 %v716, 32
        %v1263 = vpop.permute.xlu0 %1262
        %1264 = vrot.lane.b32.xlu0 %v717, 32
        %v1265 = vpop.permute.xlu0 %1264
        %1266 = vrot.lane.b32.xlu0 %v718, 32
        %v1267 = vpop.permute.xlu0 %1266
        %1268 = vrot.lane.b32.xlu0 %v719, 32
        %v1269 = vpop.permute.xlu0 %1268
        %1270 = vrot.lane.b32.xlu0 %v720, 32
        %v1271 = vpop.permute.xlu0 %1270
        %1272 = vrot.lane.b32.xlu0 %v721, 32
        %v1273 = vpop.permute.xlu0 %1272
        %1274 = vrot.lane.b32.xlu0 %v722, 32
        %v1275 = vpop.permute.xlu0 %1274
        %1276 = vrot.lane.b32.xlu0 %v723, 32
        %v1277 = vpop.permute.xlu0 %1276
        %1278 = vrot.lane.b32.xlu0 %v724, 32
        %v1279 = vpop.permute.xlu0 %1278
        %1280 = vrot.lane.b32.xlu0 %v725, 32
        %v1281 = vpop.permute.xlu0 %1280
        %1282 = vrot.lane.b32.xlu0 %v726, 32
        %v1283 = vpop.permute.xlu0 %1282
        %1284 = vrot.lane.b32.xlu0 %v727, 32
        %v1285 = vpop.permute.xlu0 %1284
        %1286 = vrot.lane.b32.xlu0 %v728, 32
        %v1287 = vpop.permute.xlu0 %1286
        %1288 = vrot.lane.b32.xlu0 %v729, 32
        %v1289 = vpop.permute.xlu0 %1288
        %1290 = vrot.lane.b32.xlu0 %v730, 32
        %v1291 = vpop.permute.xlu0 %1290
        %1292 = vrot.lane.b32.xlu0 %v731, 32
        %v1293 = vpop.permute.xlu0 %1292
        %1294 = vrot.lane.b32.xlu0 %v732, 32
        %v1295 = vpop.permute.xlu0 %1294
        %1296 = vrot.lane.b32.xlu0 %v733, 32
        %v1297 = vpop.permute.xlu0 %1296
        %1298 = vrot.lane.b32.xlu0 %v734, 32
        %v1299 = vpop.permute.xlu0 %1298
        %1300 = vrot.lane.b32.xlu0 %v735, 32
        %v1301 = vpop.permute.xlu0 %1300
        %1302 = vrot.lane.b32.xlu0 %v736, 32
        %v1303 = vpop.permute.xlu0 %1302
        %1304 = vrot.lane.b32.xlu0 %v737, 32
        %v1305 = vpop.permute.xlu0 %1304
        %1306 = vrot.lane.b32.xlu0 %v738, 32
        %v1307 = vpop.permute.xlu0 %1306
        %1308 = vrot.lane.b32.xlu0 %v739, 32
        %v1309 = vpop.permute.xlu0 %1308
        %1310 = vrot.lane.b32.xlu0 %v740, 32
        %v1311 = vpop.permute.xlu0 %1310
        %1312 = vrot.lane.b32.xlu0 %v741, 32
        %v1313 = vpop.permute.xlu0 %1312
        %1314 = vrot.lane.b32.xlu0 %v742, 32
        %v1315 = vpop.permute.xlu0 %1314
        %1316 = vrot.lane.b32.xlu0 %v743, 32
        %v1317 = vpop.permute.xlu0 %1316
        %1318 = vrot.lane.b32.xlu0 %v744, 32
        %v1319 = vpop.permute.xlu0 %1318
        %1320 = vrot.lane.b32.xlu0 %v745, 32
        %v1321 = vpop.permute.xlu0 %1320
        %1322 = vrot.lane.b32.xlu0 %v746, 32
        %v1323 = vpop.permute.xlu0 %1322
        %1388 = vrot.lane.b32.xlu0 %v748, 64
        %v1389 = vpop.permute.xlu0 %1388
        %1390 = vrot.lane.b32.xlu0 %v749, 64
        %v1391 = vpop.permute.xlu0 %1390
        %1392 = vrot.lane.b32.xlu0 %v750, 64
        %v1393 = vpop.permute.xlu0 %1392
        %1394 = vrot.lane.b32.xlu0 %v751, 64
        %v1395 = vpop.permute.xlu0 %1394
        %1396 = vrot.lane.b32.xlu0 %v752, 64
        %v1397 = vpop.permute.xlu0 %1396
        %1398 = vrot.lane.b32.xlu0 %v753, 64
        %v1399 = vpop.permute.xlu0 %1398
        %1400 = vrot.lane.b32.xlu0 %v754, 64
        %v1401 = vpop.permute.xlu0 %1400
        %1402 = vrot.lane.b32.xlu0 %v755, 64
        %v1403 = vpop.permute.xlu0 %1402
        %1404 = vrot.lane.b32.xlu0 %v756, 64
        %v1405 = vpop.permute.xlu0 %1404
        %1406 = vrot.lane.b32.xlu0 %v757, 64
        %v1407 = vpop.permute.xlu0 %1406
        %1408 = vrot.lane.b32.xlu0 %v758, 64
        %v1409 = vpop.permute.xlu0 %1408
        %1410 = vrot.lane.b32.xlu0 %v759, 64
        %v1411 = vpop.permute.xlu0 %1410
        %1412 = vrot.lane.b32.xlu0 %v760, 64
        %v1413 = vpop.permute.xlu0 %1412
        %1414 = vrot.lane.b32.xlu0 %v761, 64
        %v1415 = vpop.permute.xlu0 %1414
        %1416 = vrot.lane.b32.xlu0 %v762, 64
        %v1417 = vpop.permute.xlu0 %1416
        %1418 = vrot.lane.b32.xlu0 %v763, 64
        %v1419 = vpop.permute.xlu0 %1418
        %1420 = vrot.lane.b32.xlu0 %v764, 64
        %v1421 = vpop.permute.xlu0 %1420
        %1422 = vrot.lane.b32.xlu0 %v765, 64
        %v1423 = vpop.permute.xlu0 %1422
        %1424 = vrot.lane.b32.xlu0 %v766, 64
        %v1425 = vpop.permute.xlu0 %1424
        %1426 = vrot.lane.b32.xlu0 %v767, 64
        %v1427 = vpop.permute.xlu0 %1426
        %1428 = vrot.lane.b32.xlu0 %v768, 64
        %v1429 = vpop.permute.xlu0 %1428
        %1430 = vrot.lane.b32.xlu0 %v769, 64
        %v1431 = vpop.permute.xlu0 %1430
        %1432 = vrot.lane.b32.xlu0 %v770, 64
        %v1433 = vpop.permute.xlu0 %1432
        %1434 = vrot.lane.b32.xlu0 %v771, 64
        %v1435 = vpop.permute.xlu0 %1434
        %1436 = vrot.lane.b32.xlu0 %v772, 64
        %v1437 = vpop.permute.xlu0 %1436
        %1438 = vrot.lane.b32.xlu0 %v773, 64
        %v1439 = vpop.permute.xlu0 %1438
        %1440 = vrot.lane.b32.xlu0 %v774, 64
        %v1441 = vpop.permute.xlu0 %1440
        %1442 = vrot.lane.b32.xlu0 %v775, 64
        %v1443 = vpop.permute.xlu0 %1442
        %1444 = vrot.lane.b32.xlu0 %v776, 64
        %v1445 = vpop.permute.xlu0 %1444
        %1446 = vrot.lane.b32.xlu0 %v777, 64
        %v1447 = vpop.permute.xlu0 %1446
        %1448 = vrot.lane.b32.xlu0 %v778, 64
        %v1449 = vpop.permute.xlu0 %1448
        %1450 = vrot.lane.b32.xlu0 %v779, 64
        %v1451 = vpop.permute.xlu0 %1450
        %1516 = vrot.lane.b32.xlu0 %v780, 96
        %v1517 = vpop.permute.xlu0 %1516
        %1518 = vrot.lane.b32.xlu0 %v781, 96
        %v1519 = vpop.permute.xlu0 %1518
        %1520 = vrot.lane.b32.xlu0 %v782, 96
        %v1521 = vpop.permute.xlu0 %1520
        %1522 = vrot.lane.b32.xlu0 %v783, 96
        %v1523 = vpop.permute.xlu0 %1522
        %1524 = vrot.lane.b32.xlu0 %v784, 96
        %v1525 = vpop.permute.xlu0 %1524
        %1526 = vrot.lane.b32.xlu0 %v785, 96
        %v1527 = vpop.permute.xlu0 %1526
        %1528 = vrot.lane.b32.xlu0 %v786, 96
        %v1529 = vpop.permute.xlu0 %1528
        %1530 = vrot.lane.b32.xlu0 %v787, 96
        %v1531 = vpop.permute.xlu0 %1530
        %1532 = vrot.lane.b32.xlu0 %v788, 96
        %v1533 = vpop.permute.xlu0 %1532
        %1534 = vrot.lane.b32.xlu0 %v789, 96
        %v1535 = vpop.permute.xlu0 %1534
        %1536 = vrot.lane.b32.xlu0 %v790, 96
        %v1537 = vpop.permute.xlu0 %1536
        %1538 = vrot.lane.b32.xlu0 %v791, 96
        %v1539 = vpop.permute.xlu0 %1538
        %1540 = vrot.lane.b32.xlu0 %v792, 96
        %v1541 = vpop.permute.xlu0 %1540
        %1542 = vrot.lane.b32.xlu0 %v793, 96
        %v1543 = vpop.permute.xlu0 %1542
        %1544 = vrot.lane.b32.xlu0 %v794, 96
        %v1545 = vpop.permute.xlu0 %1544
        %1546 = vrot.lane.b32.xlu0 %v795, 96
        %v1547 = vpop.permute.xlu0 %1546
        %1548 = vrot.lane.b32.xlu0 %v796, 96
        %v1549 = vpop.permute.xlu0 %1548
        %1550 = vrot.lane.b32.xlu0 %v797, 96
        %v1551 = vpop.permute.xlu0 %1550
        %1552 = vrot.lane.b32.xlu0 %v798, 96
        %v1553 = vpop.permute.xlu0 %1552
        %1554 = vrot.lane.b32.xlu0 %v799, 96
        %v1555 = vpop.permute.xlu0 %1554
        %1556 = vrot.lane.b32.xlu0 %v800, 96
        %v1557 = vpop.permute.xlu0 %1556
        %1558 = vrot.lane.b32.xlu0 %v801, 96
        %v1559 = vpop.permute.xlu0 %1558
        %1560 = vrot.lane.b32.xlu0 %v802, 96
        %v1561 = vpop.permute.xlu0 %1560
        %1562 = vrot.lane.b32.xlu0 %v803, 96
        %v1563 = vpop.permute.xlu0 %1562
        %1564 = vrot.lane.b32.xlu0 %v804, 96
        %v1565 = vpop.permute.xlu0 %1564
        %1566 = vrot.lane.b32.xlu0 %v805, 96
        %v1567 = vpop.permute.xlu0 %1566
        %1568 = vrot.lane.b32.xlu0 %v806, 96
        %v1569 = vpop.permute.xlu0 %1568
        %1570 = vrot.lane.b32.xlu0 %v807, 96
        %v1571 = vpop.permute.xlu0 %1570
        %1572 = vrot.lane.b32.xlu0 %v808, 96
        %v1573 = vpop.permute.xlu0 %1572
        %1574 = vrot.lane.b32.xlu0 %v809, 96
        %v1575 = vpop.permute.xlu0 %1574
        %1576 = vrot.lane.b32.xlu0 %v810, 96
        %v1577 = vpop.permute.xlu0 %1576
        %1578 = vrot.lane.b32.xlu0 %v811, 96
        %v1579 = vpop.permute.xlu0 %1578
        %vm1612 = vcmask 261120
        %v1613 = vsel %vm1612, %v554, %v877
        %v1614 = vsel %vm1612, %v555, %v879
        %v1615 = vsel %vm1612, %v556, %v881
        %v1616 = vsel %vm1612, %v557, %v883
        %v1617 = vsel %vm1612, %v558, %v885
        %v1618 = vsel %vm1612, %v559, %v887
        %v1619 = vsel %vm1612, %v560, %v889
        %v1620 = vsel %vm1612, %v561, %v891
        %v1621 = vsel %vm1612, %v562, %v893
        %v1622 = vsel %vm1612, %v563, %v895
        %v1623 = vsel %vm1612, %v564, %v897
        %v1624 = vsel %vm1612, %v565, %v899
        %v1625 = vsel %vm1612, %v566, %v901
        %v1626 = vsel %vm1612, %v567, %v903
        %v1627 = vsel %vm1612, %v568, %v905
        %v1628 = vsel %vm1612, %v569, %v907
        %v1629 = vsel %vm1612, %v570, %v909
        %v1630 = vsel %vm1612, %v571, %v911
        %v1631 = vsel %vm1612, %v572, %v913
        %v1632 = vsel %vm1612, %v573, %v915
        %v1633 = vsel %vm1612, %v574, %v917
        %v1634 = vsel %vm1612, %v575, %v919
        %v1635 = vsel %vm1612, %v576, %v921
        %v1636 = vsel %vm1612, %v577, %v923
        %v1637 = vsel %vm1612, %v578, %v925
        %v1638 = vsel %vm1612, %v579, %v927
        %v1639 = vsel %vm1612, %v580, %v929
        %v1640 = vsel %vm1612, %v581, %v931
        %v1641 = vsel %vm1612, %v582, %v933
        %v1642 = vsel %vm1612, %v583, %v935
        %v1643 = vsel %vm1612, %v584, %v937
        %v1644 = vsel %vm1612, %v585, %v939
        %vm1645 = vcmask 523264
        %v1646 = vsel %vm1645, %v1613, %v1005
        %v1647 = vsel %vm1645, %v1614, %v1007
        %v1648 = vsel %vm1645, %v1615, %v1009
        %v1649 = vsel %vm1645, %v1616, %v1011
        %v1650 = vsel %vm1645, %v1617, %v1013
        %v1651 = vsel %vm1645, %v1618, %v1015
        %v1652 = vsel %vm1645, %v1619, %v1017
        %v1653 = vsel %vm1645, %v1620, %v1019
        %v1654 = vsel %vm1645, %v1621, %v1021
        %v1655 = vsel %vm1645, %v1622, %v1023
        %v1656 = vsel %vm1645, %v1623, %v1025
        %v1657 = vsel %vm1645, %v1624, %v1027
        %v1658 = vsel %vm1645, %v1625, %v1029
        %v1659 = vsel %vm1645, %v1626, %v1031
        %v1660 = vsel %vm1645, %v1627, %v1033
        %v1661 = vsel %vm1645, %v1628, %v1035
        %v1662 = vsel %vm1645, %v1629, %v1037
        %v1663 = vsel %vm1645, %v1630, %v1039
        %v1664 = vsel %vm1645, %v1631, %v1041
        %v1665 = vsel %vm1645, %v1632, %v1043
        %v1666 = vsel %vm1645, %v1633, %v1045
        %v1667 = vsel %vm1645, %v1634, %v1047
        %v1668 = vsel %vm1645, %v1635, %v1049
        %v1669 = vsel %vm1645, %v1636, %v1051
        %v1670 = vsel %vm1645, %v1637, %v1053
        %v1671 = vsel %vm1645, %v1638, %v1055
        %v1672 = vsel %vm1645, %v1639, %v1057
        %v1673 = vsel %vm1645, %v1640, %v1059
        %v1674 = vsel %vm1645, %v1641, %v1061
        %v1675 = vsel %vm1645, %v1642, %v1063
        %v1676 = vsel %vm1645, %v1643, %v1065
        %v1677 = vsel %vm1645, %v1644, %v1067
        %vm1678 = vcmask 785408
        %v1679 = vsel %vm1678, %v1646, %v1133
        %v1680 = vsel %vm1678, %v1647, %v1135
        %v1681 = vsel %vm1678, %v1648, %v1137
        %v1682 = vsel %vm1678, %v1649, %v1139
        %v1683 = vsel %vm1678, %v1650, %v1141
        %v1684 = vsel %vm1678, %v1651, %v1143
        %v1685 = vsel %vm1678, %v1652, %v1145
        %v1686 = vsel %vm1678, %v1653, %v1147
        %v1687 = vsel %vm1678, %v1654, %v1149
        %v1688 = vsel %vm1678, %v1655, %v1151
        %v1689 = vsel %vm1678, %v1656, %v1153
        %v1690 = vsel %vm1678, %v1657, %v1155
        %v1691 = vsel %vm1678, %v1658, %v1157
        %v1692 = vsel %vm1678, %v1659, %v1159
        %v1693 = vsel %vm1678, %v1660, %v1161
        %v1694 = vsel %vm1678, %v1661, %v1163
        %v1695 = vsel %vm1678, %v1662, %v1165
        %v1696 = vsel %vm1678, %v1663, %v1167
        %v1697 = vsel %vm1678, %v1664, %v1169
        %v1698 = vsel %vm1678, %v1665, %v1171
        %v1699 = vsel %vm1678, %v1666, %v1173
        %v1700 = vsel %vm1678, %v1667, %v1175
        %v1701 = vsel %vm1678, %v1668, %v1177
        %v1702 = vsel %vm1678, %v1669, %v1179
        %v1703 = vsel %vm1678, %v1670, %v1181
        %v1704 = vsel %vm1678, %v1671, %v1183
        %v1705 = vsel %vm1678, %v1672, %v1185
        %v1706 = vsel %vm1678, %v1673, %v1187
        %v1707 = vsel %vm1678, %v1674, %v1189
        %v1708 = vsel %vm1678, %v1675, %v1191
        %v1709 = vsel %vm1678, %v1676, %v1193
        %v1710 = vsel %vm1678, %v1677, %v1195
        %v1711 = vsel %vm1612, %v683, %v1261
        %v1712 = vsel %vm1612, %v684, %v1263
        %v1713 = vsel %vm1612, %v685, %v1265
        %v1714 = vsel %vm1612, %v686, %v1267
        %v1715 = vsel %vm1612, %v687, %v1269
        %v1716 = vsel %vm1612, %v688, %v1271
        %v1717 = vsel %vm1612, %v689, %v1273
        %v1718 = vsel %vm1612, %v690, %v1275
        %v1719 = vsel %vm1612, %v691, %v1277
        %v1720 = vsel %vm1612, %v692, %v1279
        %v1721 = vsel %vm1612, %v693, %v1281
        %v1722 = vsel %vm1612, %v694, %v1283
        %v1723 = vsel %vm1612, %v695, %v1285
        %v1724 = vsel %vm1612, %v696, %v1287
        %v1725 = vsel %vm1612, %v697, %v1289
        %v1726 = vsel %vm1612, %v698, %v1291
        %v1727 = vsel %vm1612, %v699, %v1293
        %v1728 = vsel %vm1612, %v700, %v1295
        %v1729 = vsel %vm1612, %v701, %v1297
        %v1730 = vsel %vm1612, %v702, %v1299
        %v1731 = vsel %vm1612, %v703, %v1301
        %v1732 = vsel %vm1612, %v704, %v1303
        %v1733 = vsel %vm1612, %v705, %v1305
        %v1734 = vsel %vm1612, %v706, %v1307
        %v1735 = vsel %vm1612, %v707, %v1309
        %v1736 = vsel %vm1612, %v708, %v1311
        %v1737 = vsel %vm1612, %v709, %v1313
        %v1738 = vsel %vm1612, %v710, %v1315
        %v1739 = vsel %vm1612, %v711, %v1317
        %v1740 = vsel %vm1612, %v712, %v1319
        %v1741 = vsel %vm1612, %v713, %v1321
        %v1742 = vsel %vm1612, %v714, %v1323
        %v1743 = vsel %vm1645, %v1711, %v1389
        %v1744 = vsel %vm1645, %v1712, %v1391
        %v1745 = vsel %vm1645, %v1713, %v1393
        %v1746 = vsel %vm1645, %v1714, %v1395
        %v1747 = vsel %vm1645, %v1715, %v1397
        %v1748 = vsel %vm1645, %v1716, %v1399
        %v1749 = vsel %vm1645, %v1717, %v1401
        %v1750 = vsel %vm1645, %v1718, %v1403
        %v1751 = vsel %vm1645, %v1719, %v1405
        %v1752 = vsel %vm1645, %v1720, %v1407
        %v1753 = vsel %vm1645, %v1721, %v1409
        %v1754 = vsel %vm1645, %v1722, %v1411
        %v1755 = vsel %vm1645, %v1723, %v1413
        %v1756 = vsel %vm1645, %v1724, %v1415
        %v1757 = vsel %vm1645, %v1725, %v1417
        %v1758 = vsel %vm1645, %v1726, %v1419
        %v1759 = vsel %vm1645, %v1727, %v1421
        %v1760 = vsel %vm1645, %v1728, %v1423
        %v1761 = vsel %vm1645, %v1729, %v1425
        %v1762 = vsel %vm1645, %v1730, %v1427
        %v1763 = vsel %vm1645, %v1731, %v1429
        %v1764 = vsel %vm1645, %v1732, %v1431
        %v1765 = vsel %vm1645, %v1733, %v1433
        %v1766 = vsel %vm1645, %v1734, %v1435
        %v1767 = vsel %vm1645, %v1735, %v1437
        %v1768 = vsel %vm1645, %v1736, %v1439
        %v1769 = vsel %vm1645, %v1737, %v1441
        %v1770 = vsel %vm1645, %v1738, %v1443
        %v1771 = vsel %vm1645, %v1739, %v1445
        %v1772 = vsel %vm1645, %v1740, %v1447
        %v1773 = vsel %vm1645, %v1741, %v1449
        %v1774 = vsel %vm1645, %v1742, %v1451
        %v1775 = vsel %vm1678, %v1743, %v1517
        %v1776 = vsel %vm1678, %v1744, %v1519
        %v1777 = vsel %vm1678, %v1745, %v1521
        %v1778 = vsel %vm1678, %v1746, %v1523
        %v1779 = vsel %vm1678, %v1747, %v1525
        %v1780 = vsel %vm1678, %v1748, %v1527
        %v1781 = vsel %vm1678, %v1749, %v1529
        %v1782 = vsel %vm1678, %v1750, %v1531
        %v1783 = vsel %vm1678, %v1751, %v1533
        %v1784 = vsel %vm1678, %v1752, %v1535
        %v1785 = vsel %vm1678, %v1753, %v1537
        %v1786 = vsel %vm1678, %v1754, %v1539
        %v1787 = vsel %vm1678, %v1755, %v1541
        %v1788 = vsel %vm1678, %v1756, %v1543
        %v1789 = vsel %vm1678, %v1757, %v1545
        %v1790 = vsel %vm1678, %v1758, %v1547
        %v1791 = vsel %vm1678, %v1759, %v1549
        %v1792 = vsel %vm1678, %v1760, %v1551
        %v1793 = vsel %vm1678, %v1761, %v1553
        %v1794 = vsel %vm1678, %v1762, %v1555
        %v1795 = vsel %vm1678, %v1763, %v1557
        %v1796 = vsel %vm1678, %v1764, %v1559
        %v1797 = vsel %vm1678, %v1765, %v1561
        %v1798 = vsel %vm1678, %v1766, %v1563
        %v1799 = vsel %vm1678, %v1767, %v1565
        %v1800 = vsel %vm1678, %v1768, %v1567
        %v1801 = vsel %vm1678, %v1769, %v1569
        %v1802 = vsel %vm1678, %v1770, %v1571
        %v1803 = vsel %vm1678, %v1771, %v1573
        %v1804 = vsel %vm1678, %v1772, %v1575
        %v1805 = vsel %vm1678, %v1773, %v1577
        %v1806 = vsel %vm1678, %v1774, %v1579
        %v1807 = vpack.c.bf16 %v1680, %v1679
        %v1808 = vpack.c.bf16 %v1776, %v1775
        %v1809 = vpack.c.bf16 %v813, %v812
        %v1810 = vpack.c.bf16 %v1682, %v1681
        %v1811 = vpack.c.bf16 %v1778, %v1777
        %v1812 = vpack.c.bf16 %v815, %v814
        %v1813 = vpack.c.bf16 %v1684, %v1683
        %v1814 = vpack.c.bf16 %v1780, %v1779
        %v1815 = vpack.c.bf16 %v817, %v816
        %v1816 = vpack.c.bf16 %v1686, %v1685
        %v1817 = vpack.c.bf16 %v1782, %v1781
        %v1818 = vpack.c.bf16 %v819, %v818
        %v1819 = vpack.c.bf16 %v1688, %v1687
        %v1820 = vpack.c.bf16 %v1784, %v1783
        %v1821 = vpack.c.bf16 %v821, %v820
        %v1822 = vpack.c.bf16 %v1690, %v1689
        %v1823 = vpack.c.bf16 %v1786, %v1785
        %v1824 = vpack.c.bf16 %v823, %v822
        %v1825 = vpack.c.bf16 %v1692, %v1691
        %v1826 = vpack.c.bf16 %v1788, %v1787
        %v1827 = vpack.c.bf16 %v825, %v824
        %v1828 = vpack.c.bf16 %v1694, %v1693
        %v1829 = vpack.c.bf16 %v1790, %v1789
        %v1830 = vpack.c.bf16 %v827, %v826
        %v1831 = vpack.c.bf16 %v1696, %v1695
        %v1832 = vpack.c.bf16 %v1792, %v1791
        %v1833 = vpack.c.bf16 %v829, %v828
        %v1834 = vpack.c.bf16 %v1698, %v1697
        %v1835 = vpack.c.bf16 %v1794, %v1793
        %v1836 = vpack.c.bf16 %v831, %v830
        %v1837 = vpack.c.bf16 %v1700, %v1699
        %v1838 = vpack.c.bf16 %v1796, %v1795
        %v1839 = vpack.c.bf16 %v833, %v832
        %v1840 = vpack.c.bf16 %v1702, %v1701
        %v1841 = vpack.c.bf16 %v1798, %v1797
        %v1842 = vpack.c.bf16 %v835, %v834
        %v1843 = vpack.c.bf16 %v1704, %v1703
        %v1844 = vpack.c.bf16 %v1800, %v1799
        %v1845 = vpack.c.bf16 %v837, %v836
        %v1846 = vpack.c.bf16 %v1706, %v1705
        %v1847 = vpack.c.bf16 %v1802, %v1801
        %v1848 = vpack.c.bf16 %v839, %v838
        %v1849 = vpack.c.bf16 %v1708, %v1707
        %v1850 = vpack.c.bf16 %v1804, %v1803
        %v1851 = vpack.c.bf16 %v841, %v840
        %v1852 = vpack.c.bf16 %v1710, %v1709
        %v1853 = vpack.c.bf16 %v1806, %v1805
        %v1854 = vpack.c.bf16 %v843, %v842
        %v1855 = vld [vmem:[%s1] sm:$0xf]
        %v1856 = vld [vmem:[%s1 + $0x4] sm:$0xf]
        %v1857 = vld [vmem:[%s1 + $0x8] sm:$0xf]
        %v1858 = vld [vmem:[%s1 + $0xc] sm:$0xf]
        %v1859 = vld [vmem:[%s1 + $0x10] sm:$0xf]
        %v1860 = vld [vmem:[%s1 + $0x14] sm:$0xf]
        %v1861 = vld [vmem:[%s1 + $0x18] sm:$0xf]
        %v1862 = vld [vmem:[%s1 + $0x1c] sm:$0xf]
        %v1863 = vld [vmem:[%s1 + $0x20] sm:$0xf]
        %v1864 = vld [vmem:[%s1 + $0x24] sm:$0xf]
        %v1865 = vld [vmem:[%s1 + $0x28] sm:$0xf]
        %v1866 = vld [vmem:[%s1 + $0x2c] sm:$0xf]
        %v1867 = vld [vmem:[%s1 + $0x30] sm:$0xf]
        %v1868 = vld [vmem:[%s1 + $0x34] sm:$0xf]
        %v1869 = vld [vmem:[%s1 + $0x38] sm:$0xf]
        %v1870 = vld [vmem:[%s1 + $0x3c] sm:$0xf]
        %v1871 = vld [vmem:[%s1 + $0x40] sm:$0xf]
        %v1872 = vld [vmem:[%s1 + $0x44] sm:$0xf]
        %v1873 = vld [vmem:[%s1 + $0x48] sm:$0xf]
        %v1874 = vld [vmem:[%s1 + $0x4c] sm:$0xf]
        %v1875 = vld [vmem:[%s1 + $0x50] sm:$0xf]
        %v1876 = vld [vmem:[%s1 + $0x54] sm:$0xf]
        %v1877 = vld [vmem:[%s1 + $0x58] sm:$0xf]
        %v1878 = vld [vmem:[%s1 + $0x5c] sm:$0xf]
        %v1879 = vld [vmem:[%s1 + $0x60] sm:$0xf]
        %v1880 = vld [vmem:[%s1 + $0x64] sm:$0xf]
        %v1881 = vld [vmem:[%s1 + $0x68] sm:$0xf]
        %v1882 = vld [vmem:[%s1 + $0x6c] sm:$0xf]
        %v1883 = vld [vmem:[%s1 + $0x70] sm:$0xf]
        %v1884 = vld [vmem:[%s1 + $0x74] sm:$0xf]
        %v1885 = vld [vmem:[%s1 + $0x78] sm:$0xf]
        %v1886 = vld [vmem:[%s1 + $0x7c] sm:$0xf]
        %v1887 = vld [vmem:[%s1 + $0x80] sm:$0xf]
        %v1888 = vld [vmem:[%s1 + $0x84] sm:$0xf]
        %v1889 = vld [vmem:[%s1 + $0x88] sm:$0xf]
        %v1890 = vld [vmem:[%s1 + $0x8c] sm:$0xf]
        %v1891 = vld [vmem:[%s2] sm:$0x1]
        %v1893 = vlaneseq
        %v1894 = vshrl.u32 %v1893, 7
        %v1895 = vsub.s32 0, %v1894
        %v1896 = vrot.slane %v1891, %v1895
        %v1934 = vunpack.c.l.b16 %v1855
        %v1935 = vunpack.c.l.b16 %v1856
        %v1936 = vunpack.c.l.b16 %v1857
        %v1937 = vunpack.c.l.b16 %v1858
        %v1938 = vunpack.c.l.b16 %v1859
        %v1939 = vunpack.c.l.b16 %v1860
        %v1940 = vunpack.c.l.b16 %v1861
        %v1941 = vunpack.c.l.b16 %v1862
        %v1942 = vunpack.c.l.b16 %v1863
        %v1943 = vunpack.c.l.b16 %v1864
        %v1944 = vunpack.c.l.b16 %v1865
        %v1945 = vunpack.c.l.b16 %v1866
        %v1946 = vunpack.c.l.b16 %v1867
        %v1947 = vunpack.c.l.b16 %v1868
        %v1948 = vunpack.c.l.b16 %v1869
        %v1949 = vunpack.c.l.b16 %v1870
        %v1950 = vunpack.c.l.b16 %v1871
        %v1951 = vunpack.c.l.b16 %v1872
        %v1952 = vunpack.c.l.b16 %v1873
        %v1953 = vunpack.c.l.b16 %v1874
        %v1954 = vunpack.c.l.b16 %v1875
        %v1955 = vunpack.c.l.b16 %v1876
        %v1956 = vunpack.c.l.b16 %v1877
        %v1957 = vunpack.c.l.b16 %v1878
        %v1958 = vunpack.c.l.b16 %v1879
        %v1959 = vunpack.c.l.b16 %v1880
        %v1960 = vunpack.c.l.b16 %v1881
        %v1961 = vunpack.c.l.b16 %v1882
        %v1962 = vunpack.c.l.b16 %v1883
        %v1963 = vunpack.c.l.b16 %v1884
        %v1964 = vunpack.c.l.b16 %v1885
        %v1965 = vunpack.c.l.b16 %v1886
        %v1966 = vunpack.c.l.b16 %v1887
        %v1967 = vunpack.c.l.b16 %v1888
        %v1968 = vunpack.c.l.b16 %v1889
        %v1969 = vunpack.c.l.b16 %v1890
        %v1970 = vpack.c.b16 %v1935, %v1934
        %v1971 = vpack.c.b16 %v1937, %v1936
        %v1972 = vpack.c.b16 %v1939, %v1938
        %v1973 = vpack.c.b16 %v1941, %v1940
        %v1974 = vpack.c.b16 %v1943, %v1942
        %v1975 = vpack.c.b16 %v1945, %v1944
        %v1976 = vpack.c.b16 %v1947, %v1946
        %v1977 = vpack.c.b16 %v1949, %v1948
        %v1978 = vpack.c.b16 %v1951, %v1950
        %v1979 = vpack.c.b16 %v1953, %v1952
        %v1980 = vpack.c.b16 %v1955, %v1954
        %v1981 = vpack.c.b16 %v1957, %v1956
        %v1982 = vpack.c.b16 %v1959, %v1958
        %v1983 = vpack.c.b16 %v1961, %v1960
        %v1984 = vpack.c.b16 %v1963, %v1962
        %v1985 = vpack.c.b16 %v1965, %v1964
        %v1986 = vpack.c.b16 %v1967, %v1966
        %v1987 = vpack.c.b16 %v1969, %v1968
        %v2007 = vsel %vm1612, %v1809, 0
        %v2010 = vsel %vm1612, %v1812, 0
        %v2013 = vsel %vm1612, %v1815, 0
        %v2016 = vsel %vm1612, %v1818, 0
        %v2019 = vsel %vm1612, %v1821, 0
        %v2022 = vsel %vm1612, %v1824, 0
        %v2025 = vsel %vm1612, %v1827, 0
        %v2028 = vsel %vm1612, %v1830, 0
        %v2031 = vsel %vm1612, %v1833, 0
        %v2034 = vsel %vm1612, %v1836, 0
        %v2037 = vsel %vm1612, %v1839, 0
        %v2040 = vsel %vm1612, %v1842, 0
        %v2043 = vsel %vm1612, %v1845, 0
        %v2046 = vsel %vm1612, %v1848, 0
        %v2049 = vsel %vm1612, %v1851, 0
        %v2052 = vsel %vm1612, %v1854, 0
        %2054 = vmatprep.subr.bf16.mxu0 0
        %2055 = vmatpush1.bf16.msra.mxu0 %v1970
        %2056 = vmatprep.subr.bf16.mxu0 0
        %2057 = vmatpush1.bf16.msra.mxu0 %v1971
        %2058 = vmatprep.subr.bf16.mxu0 0
        %2059 = vmatpush1.bf16.msra.mxu0 %v1972
        %2060 = vmatprep.subr.bf16.mxu0 0
        %2061 = vmatpush1.bf16.msra.mxu0 %v1973
        %2062 = vmatprep.subr.bf16.mxu0 0
        %2063 = vmatpush1.bf16.msra.mxu0 %v1974
        %2064 = vmatprep.subr.bf16.mxu0 0
        %2065 = vmatpush1.bf16.msra.mxu0 %v1975
        %2066 = vmatprep.subr.bf16.mxu0 0
        %2067 = vmatpush1.bf16.msra.mxu0 %v1976
        %2068 = vmatprep.subr.bf16.mxu0 0
        %2069 = vmatpush1.bf16.msra.mxu0 %v1977
        %2070 = vmatprep.subr.bf16.mxu0 0
        %2071 = vmatpush1.bf16.msra.mxu0 %v1978
        %2072 = vmatprep.subr.bf16.mxu0 0
        %2073 = vmatpush1.bf16.msra.mxu0 %v1979
        %2074 = vmatprep.subr.bf16.mxu0 0
        %2075 = vmatpush1.bf16.msra.mxu0 %v1980
        %2076 = vmatprep.subr.bf16.mxu0 0
        %2077 = vmatpush1.bf16.msra.mxu0 %v1981
        %2078 = vmatprep.subr.bf16.mxu0 0
        %2079 = vmatpush1.bf16.msra.mxu0 %v1982
        %2080 = vmatprep.subr.bf16.mxu0 0
        %2081 = vmatpush1.bf16.msra.mxu0 %v1983
        %2082 = vmatprep.subr.bf16.mxu0 0
        %2083 = vmatpush1.bf16.msra.mxu0 %v1984
        %2084 = vmatprep.subr.bf16.mxu0 0
        %2085 = vmatpush1.bf16.msra.mxu0 %v1985
        %2086 = vmatprep.mubr.bf16.mxu0 %v1808
        %2087 = vmatmul.mubr.bf16.gmra.mrb[0].mxu0 %v1807
        %v2088 = vpop.f32.mrb[0].mxu0
        %v2089 = vadd.f32 %v1896, %v2088
        %v2090 = vpop.f32.mrb[0].mxu0
        %v2091 = vpop.f32.mrb[0].mxu0
        %v2092 = vadd.f32 %v1896, %v2091
        %v2093 = vpop.f32.mrb[0].mxu0
        %2094 = vmatprep.mubr.bf16.mxu0 %v1811
        %2095 = vmatmul.mubr.bf16.gmra.mrb[0].mxu0 %v1810
        %v2096 = vpop.f32.mrb[0].mxu0
        %v2097 = vadd.f32 %v1896, %v2096
        %v2098 = vpop.f32.mrb[0].mxu0
        %v2099 = vpop.f32.mrb[0].mxu0
        %v2100 = vadd.f32 %v1896, %v2099
        %v2101 = vpop.f32.mrb[0].mxu0
        %2102 = vmatprep.mubr.bf16.mxu0 %v1814
        %2103 = vmatmul.mubr.bf16.gmra.mrb[0].mxu0 %v1813
        %v2104 = vpop.f32.mrb[0].mxu0
        %v2105 = vadd.f32 %v1896, %v2104
        %v2106 = vpop.f32.mrb[0].mxu0
        %v2107 = vpop.f32.mrb[0].mxu0
        %v2108 = vadd.f32 %v1896, %v2107
        %v2109 = vpop.f32.mrb[0].mxu0
        %2110 = vmatprep.mubr.bf16.mxu0 %v1817
        %2111 = vmatmul.mubr.bf16.gmra.mrb[0].mxu0 %v1816
        %v2112 = vpop.f32.mrb[0].mxu0
        %v2113 = vadd.f32 %v1896, %v2112
        %v2114 = vpop.f32.mrb[0].mxu0
        %v2115 = vpop.f32.mrb[0].mxu0
        %v2116 = vadd.f32 %v1896, %v2115
        %v2117 = vpop.f32.mrb[0].mxu0
        %2118 = vmatprep.mubr.bf16.mxu0 %v1820
        %2119 = vmatmul.mubr.bf16.gmra.mrb[0].mxu0 %v1819
        %v2120 = vpop.f32.mrb[0].mxu0
        %v2121 = vadd.f32 %v1896, %v2120
        %v2122 = vpop.f32.mrb[0].mxu0
        %v2123 = vpop.f32.mrb[0].mxu0
        %v2124 = vadd.f32 %v1896, %v2123
        %v2125 = vpop.f32.mrb[0].mxu0
        %2126 = vmatprep.mubr.bf16.mxu0 %v1823
        %2127 = vmatmul.mubr.bf16.gmra.mrb[0].mxu0 %v1822
        %v2128 = vpop.f32.mrb[0].mxu0
        %v2129 = vadd.f32 %v1896, %v2128
        %v2130 = vpop.f32.mrb[0].mxu0
        %v2131 = vpop.f32.mrb[0].mxu0
        %v2132 = vadd.f32 %v1896, %v2131
        %v2133 = vpop.f32.mrb[0].mxu0
        %2134 = vmatprep.mubr.bf16.mxu0 %v1826
        %2135 = vmatmul.mubr.bf16.gmra.mrb[0].mxu0 %v1825
        %v2136 = vpop.f32.mrb[0].mxu0
        %v2137 = vadd.f32 %v1896, %v2136
        %v2138 = vpop.f32.mrb[0].mxu0
        %v2139 = vpop.f32.mrb[0].mxu0
        %v2140 = vadd.f32 %v1896, %v2139
        %v2141 = vpop.f32.mrb[0].mxu0
        %2142 = vmatprep.mubr.bf16.mxu0 %v1829
        %2143 = vmatmul.mubr.bf16.gmra.mrb[0].mxu0 %v1828
        %v2144 = vpop.f32.mrb[0].mxu0
        %v2145 = vadd.f32 %v1896, %v2144
        %v2146 = vpop.f32.mrb[0].mxu0
        %v2147 = vpop.f32.mrb[0].mxu0
        %v2148 = vadd.f32 %v1896, %v2147
        %v2149 = vpop.f32.mrb[0].mxu0
        %2150 = vmatprep.mubr.bf16.mxu0 %v1832
        %2151 = vmatmul.mubr.bf16.gmra.mrb[0].mxu0 %v1831
        %v2152 = vpop.f32.mrb[0].mxu0
        %v2153 = vadd.f32 %v1896, %v2152
        %v2154 = vpop.f32.mrb[0].mxu0
        %v2155 = vpop.f32.mrb[0].mxu0
        %v2156 = vadd.f32 %v1896, %v2155
        %v2157 = vpop.f32.mrb[0].mxu0
        %2158 = vmatprep.mubr.bf16.mxu0 %v1835
        %2159 = vmatmul.mubr.bf16.gmra.mrb[0].mxu0 %v1834
        %v2160 = vpop.f32.mrb[0].mxu0
        %v2161 = vadd.f32 %v1896, %v2160
        %v2162 = vpop.f32.mrb[0].mxu0
        %v2163 = vpop.f32.mrb[0].mxu0
        %v2164 = vadd.f32 %v1896, %v2163
        %v2165 = vpop.f32.mrb[0].mxu0
        %2166 = vmatprep.mubr.bf16.mxu0 %v1838
        %2167 = vmatmul.mubr.bf16.gmra.mrb[0].mxu0 %v1837
        %v2168 = vpop.f32.mrb[0].mxu0
        %v2169 = vadd.f32 %v1896, %v2168
        %v2170 = vpop.f32.mrb[0].mxu0
        %v2171 = vpop.f32.mrb[0].mxu0
        %v2172 = vadd.f32 %v1896, %v2171
        %v2173 = vpop.f32.mrb[0].mxu0
        %2174 = vmatprep.mubr.bf16.mxu0 %v1841
        %2175 = vmatmul.mubr.bf16.gmra.mrb[0].mxu0 %v1840
        %v2176 = vpop.f32.mrb[0].mxu0
        %v2177 = vadd.f32 %v1896, %v2176
        %v2178 = vpop.f32.mrb[0].mxu0
        %v2179 = vpop.f32.mrb[0].mxu0
        %v2180 = vadd.f32 %v1896, %v2179
        %v2181 = vpop.f32.mrb[0].mxu0
        %2182 = vmatprep.mubr.bf16.mxu0 %v1844
        %2183 = vmatmul.mubr.bf16.gmra.mrb[0].mxu0 %v1843
        %v2184 = vpop.f32.mrb[0].mxu0
        %v2185 = vadd.f32 %v1896, %v2184
        %v2186 = vpop.f32.mrb[0].mxu0
        %v2187 = vpop.f32.mrb[0].mxu0
        %v2188 = vadd.f32 %v1896, %v2187
        %v2189 = vpop.f32.mrb[0].mxu0
        %2190 = vmatprep.mubr.bf16.mxu0 %v1847
        %2191 = vmatmul.mubr.bf16.gmra.mrb[0].mxu0 %v1846
        %v2192 = vpop.f32.mrb[0].mxu0
        %v2193 = vadd.f32 %v1896, %v2192
        %v2194 = vpop.f32.mrb[0].mxu0
        %v2195 = vpop.f32.mrb[0].mxu0
        %v2196 = vadd.f32 %v1896, %v2195
        %v2197 = vpop.f32.mrb[0].mxu0
        %2198 = vmatprep.mubr.bf16.mxu0 %v1850
        %2199 = vmatmul.mubr.bf16.gmra.mrb[0].mxu0 %v1849
        %v2200 = vpop.f32.mrb[0].mxu0
        %v2201 = vadd.f32 %v1896, %v2200
        %v2202 = vpop.f32.mrb[0].mxu0
        %v2203 = vpop.f32.mrb[0].mxu0
        %v2204 = vadd.f32 %v1896, %v2203
        %v2205 = vpop.f32.mrb[0].mxu0
        %2206 = vmatprep.mubr.bf16.mxu0 %v1853
        %2207 = vmatmul.mubr.bf16.gmra.mrb[0].mxu0 %v1852
        %v2208 = vpop.f32.mrb[0].mxu0
        %v2209 = vadd.f32 %v1896, %v2208
        %v2210 = vpop.f32.mrb[0].mxu0
        %v2211 = vpop.f32.mrb[0].mxu0
        %v2212 = vadd.f32 %v1896, %v2211
        %v2213 = vpop.f32.mrb[0].mxu0
        %2214 = vdwg.mxu0
        %2215 = vmatprep.subr.bf16.mxu0 0
        %2216 = vmatpush1.bf16.msra.mxu0 %v1986
        %2217 = vmatprep.subr.bf16.mxu0 0
        %2218 = vmatpush1.bf16.msra.mxu0 %v1987
        %2219 = vmatprep.subr.bf16.mxu0 0
        %2220 = vmatpush1.bf16.msra.mxu0 0
        %2221 = vmatprep.subr.bf16.mxu0 0
        %2222 = vmatpush1.bf16.msra.mxu0 0
        %2223 = vmatprep.subr.bf16.mxu0 0
        %2224 = vmatpush1.bf16.msra.mxu0 0
        %2225 = vmatprep.subr.bf16.mxu0 0
        %2226 = vmatpush1.bf16.msra.mxu0 0
        %2227 = vmatprep.subr.bf16.mxu0 0
        %2228 = vmatpush1.bf16.msra.mxu0 0
        %2229 = vmatprep.subr.bf16.mxu0 0
        %2230 = vmatpush1.bf16.msra.mxu0 0
        %2231 = vmatprep.subr.bf16.mxu0 0
        %2232 = vmatpush1.bf16.msra.mxu0 0
        %2233 = vmatprep.subr.bf16.mxu0 0
        %2234 = vmatpush1.bf16.msra.mxu0 0
        %2235 = vmatprep.subr.bf16.mxu0 0
        %2236 = vmatpush1.bf16.msra.mxu0 0
        %2237 = vmatprep.subr.bf16.mxu0 0
        %2238 = vmatpush1.bf16.msra.mxu0 0
        %2239 = vmatprep.subr.bf16.mxu0 0
        %2240 = vmatpush1.bf16.msra.mxu0 0
        %2241 = vmatprep.subr.bf16.mxu0 0
        %2242 = vmatpush1.bf16.msra.mxu0 0
        %2243 = vmatprep.subr.bf16.mxu0 0
        %2244 = vmatpush1.bf16.msra.mxu0 0
        %2245 = vmatprep.subr.bf16.mxu0 0
        %2246 = vmatpush1.bf16.msra.mxu0 0
        %2247 = vmatprep.mubr.bf16.mxu0 0
        %2248 = vmatmul.mubr.bf16.gmra.mrb[0].mxu0 %v2007
        %v2249 = vpop.f32.mrb[0].mxu0
        %v2250 = vadd.f32 %v2089, %v2249
        %v2251 = vpop.f32.mrb[0].mxu0
        %v2252 = vpop.f32.mrb[0].mxu0
        %v2253 = vadd.f32 %v2092, %v2252
        %v2254 = vpop.f32.mrb[0].mxu0
        %2255 = vmatprep.mubr.bf16.mxu0 0
        %2256 = vmatmul.mubr.bf16.gmra.mrb[0].mxu0 %v2010
        %v2257 = vpop.f32.mrb[0].mxu0
        %v2258 = vadd.f32 %v2097, %v2257
        %v2259 = vpop.f32.mrb[0].mxu0
        %v2260 = vpop.f32.mrb[0].mxu0
        %v2261 = vadd.f32 %v2100, %v2260
        %v2262 = vpop.f32.mrb[0].mxu0
        %2263 = vmatprep.mubr.bf16.mxu0 0
        %2264 = vmatmul.mubr.bf16.gmra.mrb[0].mxu0 %v2013
        %v2265 = vpop.f32.mrb[0].mxu0
        %v2266 = vadd.f32 %v2105, %v2265
        %v2267 = vpop.f32.mrb[0].mxu0
        %v2268 = vpop.f32.mrb[0].mxu0
        %v2269 = vadd.f32 %v2108, %v2268
        %v2270 = vpop.f32.mrb[0].mxu0
        %2271 = vmatprep.mubr.bf16.mxu0 0
        %2272 = vmatmul.mubr.bf16.gmra.mrb[0].mxu0 %v2016
        %v2273 = vpop.f32.mrb[0].mxu0
        %v2274 = vadd.f32 %v2113, %v2273
        %v2275 = vpop.f32.mrb[0].mxu0
        %v2276 = vpop.f32.mrb[0].mxu0
        %v2277 = vadd.f32 %v2116, %v2276
        %v2278 = vpop.f32.mrb[0].mxu0
        %2279 = vmatprep.mubr.bf16.mxu0 0
        %2280 = vmatmul.mubr.bf16.gmra.mrb[0].mxu0 %v2019
        %v2281 = vpop.f32.mrb[0].mxu0
        %v2282 = vadd.f32 %v2121, %v2281
        %v2283 = vpop.f32.mrb[0].mxu0
        %v2284 = vpop.f32.mrb[0].mxu0
        %v2285 = vadd.f32 %v2124, %v2284
        %v2286 = vpop.f32.mrb[0].mxu0
        %2287 = vmatprep.mubr.bf16.mxu0 0
        %2288 = vmatmul.mubr.bf16.gmra.mrb[0].mxu0 %v2022
        %v2289 = vpop.f32.mrb[0].mxu0
        %v2290 = vadd.f32 %v2129, %v2289
        %v2291 = vpop.f32.mrb[0].mxu0
        %v2292 = vpop.f32.mrb[0].mxu0
        %v2293 = vadd.f32 %v2132, %v2292
        %v2294 = vpop.f32.mrb[0].mxu0
        %2295 = vmatprep.mubr.bf16.mxu0 0
        %2296 = vmatmul.mubr.bf16.gmra.mrb[0].mxu0 %v2025
        %v2297 = vpop.f32.mrb[0].mxu0
        %v2298 = vadd.f32 %v2137, %v2297
        %v2299 = vpop.f32.mrb[0].mxu0
        %v2300 = vpop.f32.mrb[0].mxu0
        %v2301 = vadd.f32 %v2140, %v2300
        %v2302 = vpop.f32.mrb[0].mxu0
        %2303 = vmatprep.mubr.bf16.mxu0 0
        %2304 = vmatmul.mubr.bf16.gmra.mrb[0].mxu0 %v2028
        %v2305 = vpop.f32.mrb[0].mxu0
        %v2306 = vadd.f32 %v2145, %v2305
        %v2307 = vpop.f32.mrb[0].mxu0
        %v2308 = vpop.f32.mrb[0].mxu0
        %v2309 = vadd.f32 %v2148, %v2308
        %v2310 = vpop.f32.mrb[0].mxu0
        %2311 = vmatprep.mubr.bf16.mxu0 0
        %2312 = vmatmul.mubr.bf16.gmra.mrb[0].mxu0 %v2031
        %v2313 = vpop.f32.mrb[0].mxu0
        %v2314 = vadd.f32 %v2153, %v2313
        %v2315 = vpop.f32.mrb[0].mxu0
        %v2316 = vpop.f32.mrb[0].mxu0
        %v2317 = vadd.f32 %v2156, %v2316
        %v2318 = vpop.f32.mrb[0].mxu0
        %2319 = vmatprep.mubr.bf16.mxu0 0
        %2320 = vmatmul.mubr.bf16.gmra.mrb[0].mxu0 %v2034
        %v2321 = vpop.f32.mrb[0].mxu0
        %v2322 = vadd.f32 %v2161, %v2321
        %v2323 = vpop.f32.mrb[0].mxu0
        %v2324 = vpop.f32.mrb[0].mxu0
        %v2325 = vadd.f32 %v2164, %v2324
        %v2326 = vpop.f32.mrb[0].mxu0
        %2327 = vmatprep.mubr.bf16.mxu0 0
        %2328 = vmatmul.mubr.bf16.gmra.mrb[0].mxu0 %v2037
        %v2329 = vpop.f32.mrb[0].mxu0
        %v2330 = vadd.f32 %v2169, %v2329
        %v2331 = vpop.f32.mrb[0].mxu0
        %v2332 = vpop.f32.mrb[0].mxu0
        %v2333 = vadd.f32 %v2172, %v2332
        %v2334 = vpop.f32.mrb[0].mxu0
        %2335 = vmatprep.mubr.bf16.mxu0 0
        %2336 = vmatmul.mubr.bf16.gmra.mrb[0].mxu0 %v2040
        %v2337 = vpop.f32.mrb[0].mxu0
        %v2338 = vadd.f32 %v2177, %v2337
        %v2339 = vpop.f32.mrb[0].mxu0
        %v2340 = vpop.f32.mrb[0].mxu0
        %v2341 = vadd.f32 %v2180, %v2340
        %v2342 = vpop.f32.mrb[0].mxu0
        %2343 = vmatprep.mubr.bf16.mxu0 0
        %2344 = vmatmul.mubr.bf16.gmra.mrb[0].mxu0 %v2043
        %v2345 = vpop.f32.mrb[0].mxu0
        %v2346 = vadd.f32 %v2185, %v2345
        %v2347 = vpop.f32.mrb[0].mxu0
        %v2348 = vpop.f32.mrb[0].mxu0
        %v2349 = vadd.f32 %v2188, %v2348
        %v2350 = vpop.f32.mrb[0].mxu0
        %2351 = vmatprep.mubr.bf16.mxu0 0
        %2352 = vmatmul.mubr.bf16.gmra.mrb[0].mxu0 %v2046
        %v2353 = vpop.f32.mrb[0].mxu0
        %v2354 = vadd.f32 %v2193, %v2353
        %v2355 = vpop.f32.mrb[0].mxu0
        %v2356 = vpop.f32.mrb[0].mxu0
        %v2357 = vadd.f32 %v2196, %v2356
        %v2358 = vpop.f32.mrb[0].mxu0
        %2359 = vmatprep.mubr.bf16.mxu0 0
        %2360 = vmatmul.mubr.bf16.gmra.mrb[0].mxu0 %v2049
        %v2361 = vpop.f32.mrb[0].mxu0
        %v2362 = vadd.f32 %v2201, %v2361
        %v2363 = vpop.f32.mrb[0].mxu0
        %v2364 = vpop.f32.mrb[0].mxu0
        %v2365 = vadd.f32 %v2204, %v2364
        %v2366 = vpop.f32.mrb[0].mxu0
        %2367 = vmatprep.mubr.bf16.mxu0 0
        %2368 = vmatmul.mubr.bf16.gmra.mrb[0].mxu0 %v2052
        %v2369 = vpop.f32.mrb[0].mxu0
        %v2370 = vadd.f32 %v2209, %v2369
        %v2371 = vpop.f32.mrb[0].mxu0
        %v2372 = vpop.f32.mrb[0].mxu0
        %v2373 = vadd.f32 %v2212, %v2372
        %v2374 = vpop.f32.mrb[0].mxu0
        %2375 = vdwg.mxu0
        %v2376 = vld [vmem:[%s3] sm:$0x1]
        %v2377 = vld [vmem:[%s4] sm:$0x1]
        %v2378 = vsel %vm1645, %v2250, 0.0
        %2379 = vadd.xlane.f32.xlu0 %v2378
        %v2380 = vpop.xlane.xlu0 %2379
        %v2381 = vsel %vm1645, %v2253, 0.0
        %2382 = vadd.xlane.f32.xlu0 %v2381
        %v2383 = vpop.xlane.xlu0 %2382
        %v2384 = vsel %vm1645, %v2258, 0.0
        %2385 = vadd.xlane.f32.xlu0 %v2384
        %v2386 = vpop.xlane.xlu0 %2385
        %v2387 = vsel %vm1645, %v2261, 0.0
        %2388 = vadd.xlane.f32.xlu0 %v2387
        %v2389 = vpop.xlane.xlu0 %2388
        %v2390 = vsel %vm1645, %v2266, 0.0
        %2391 = vadd.xlane.f32.xlu0 %v2390
        %v2392 = vpop.xlane.xlu0 %2391
        %v2393 = vsel %vm1645, %v2269, 0.0
        %2394 = vadd.xlane.f32.xlu0 %v2393
        %v2395 = vpop.xlane.xlu0 %2394
        %v2396 = vsel %vm1645, %v2274, 0.0
        %2397 = vadd.xlane.f32.xlu0 %v2396
        %v2398 = vpop.xlane.xlu0 %2397
        %v2399 = vsel %vm1645, %v2277, 0.0
        %2400 = vadd.xlane.f32.xlu0 %v2399
        %v2401 = vpop.xlane.xlu0 %2400
        %v2402 = vsel %vm1645, %v2282, 0.0
        %2403 = vadd.xlane.f32.xlu0 %v2402
        %v2404 = vpop.xlane.xlu0 %2403
        %v2405 = vsel %vm1645, %v2285, 0.0
        %2406 = vadd.xlane.f32.xlu0 %v2405
        %v2407 = vpop.xlane.xlu0 %2406
        %v2408 = vsel %vm1645, %v2290, 0.0
        %2409 = vadd.xlane.f32.xlu0 %v2408
        %v2410 = vpop.xlane.xlu0 %2409
        %v2411 = vsel %vm1645, %v2293, 0.0
        %2412 = vadd.xlane.f32.xlu0 %v2411
        %v2413 = vpop.xlane.xlu0 %2412
        %v2414 = vsel %vm1645, %v2298, 0.0
        %2415 = vadd.xlane.f32.xlu0 %v2414
        %v2416 = vpop.xlane.xlu0 %2415
        %v2417 = vsel %vm1645, %v2301, 0.0
        %2418 = vadd.xlane.f32.xlu0 %v2417
        %v2419 = vpop.xlane.xlu0 %2418
        %v2420 = vsel %vm1645, %v2306, 0.0
        %2421 = vadd.xlane.f32.xlu0 %v2420
        %v2422 = vpop.xlane.xlu0 %2421
        %v2423 = vsel %vm1645, %v2309, 0.0
        %2424 = vadd.xlane.f32.xlu0 %v2423
        %v2425 = vpop.xlane.xlu0 %2424
        %v2426 = vsel %vm1645, %v2314, 0.0
        %2427 = vadd.xlane.f32.xlu0 %v2426
        %v2428 = vpop.xlane.xlu0 %2427
        %v2429 = vsel %vm1645, %v2317, 0.0
        %2430 = vadd.xlane.f32.xlu0 %v2429
        %v2431 = vpop.xlane.xlu0 %2430
        %v2432 = vsel %vm1645, %v2322, 0.0
        %2433 = vadd.xlane.f32.xlu0 %v2432
        %v2434 = vpop.xlane.xlu0 %2433
        %v2435 = vsel %vm1645, %v2325, 0.0
        %2436 = vadd.xlane.f32.xlu0 %v2435
        %v2437 = vpop.xlane.xlu0 %2436
        %v2438 = vsel %vm1645, %v2330, 0.0
        %2439 = vadd.xlane.f32.xlu0 %v2438
        %v2440 = vpop.xlane.xlu0 %2439
        %v2441 = vsel %vm1645, %v2333, 0.0
        %2442 = vadd.xlane.f32.xlu0 %v2441
        %v2443 = vpop.xlane.xlu0 %2442
        %v2444 = vsel %vm1645, %v2338, 0.0
        %2445 = vadd.xlane.f32.xlu0 %v2444
        %v2446 = vpop.xlane.xlu0 %2445
        %v2447 = vsel %vm1645, %v2341, 0.0
        %2448 = vadd.xlane.f32.xlu0 %v2447
        %v2449 = vpop.xlane.xlu0 %2448
        %v2450 = vsel %vm1645, %v2346, 0.0
        %2451 = vadd.xlane.f32.xlu0 %v2450
        %v2452 = vpop.xlane.xlu0 %2451
        %v2453 = vsel %vm1645, %v2349, 0.0
        %2454 = vadd.xlane.f32.xlu0 %v2453
        %v2455 = vpop.xlane.xlu0 %2454
        %v2456 = vsel %vm1645, %v2354, 0.0
        %2457 = vadd.xlane.f32.xlu0 %v2456
        %v2458 = vpop.xlane.xlu0 %2457
        %v2459 = vsel %vm1645, %v2357, 0.0
        %2460 = vadd.xlane.f32.xlu0 %v2459
        %v2461 = vpop.xlane.xlu0 %2460
        %v2462 = vsel %vm1645, %v2362, 0.0
        %2463 = vadd.xlane.f32.xlu0 %v2462
        %v2464 = vpop.xlane.xlu0 %2463
        %v2465 = vsel %vm1645, %v2365, 0.0
        %2466 = vadd.xlane.f32.xlu0 %v2465
        %v2467 = vpop.xlane.xlu0 %2466
        %v2468 = vsel %vm1645, %v2370, 0.0
        %2469 = vadd.xlane.f32.xlu0 %v2468
        %v2470 = vpop.xlane.xlu0 %2469
        %v2471 = vsel %vm1645, %v2373, 0.0
        %2472 = vadd.xlane.f32.xlu0 %v2471
        %v2473 = vpop.xlane.xlu0 %2472
        %v2474 = vrcp.pop 64.0
        %v2475 = vmul.f32 %v2380, %v2474
        %v2476 = vmul.f32 %v2383, %v2474
        %v2477 = vmul.f32 %v2386, %v2474
        %v2478 = vmul.f32 %v2389, %v2474
        %v2479 = vmul.f32 %v2392, %v2474
        %v2480 = vmul.f32 %v2395, %v2474
        %v2481 = vmul.f32 %v2398, %v2474
        %v2482 = vmul.f32 %v2401, %v2474
        %v2483 = vmul.f32 %v2404, %v2474
        %v2484 = vmul.f32 %v2407, %v2474
        %v2485 = vmul.f32 %v2410, %v2474
        %v2486 = vmul.f32 %v2413, %v2474
        %v2487 = vmul.f32 %v2416, %v2474
        %v2488 = vmul.f32 %v2419, %v2474
        %v2489 = vmul.f32 %v2422, %v2474
        %v2490 = vmul.f32 %v2425, %v2474
        %v2491 = vmul.f32 %v2428, %v2474
        %v2492 = vmul.f32 %v2431, %v2474
        %v2493 = vmul.f32 %v2434, %v2474
        %v2494 = vmul.f32 %v2437, %v2474
        %v2495 = vmul.f32 %v2440, %v2474
        %v2496 = vmul.f32 %v2443, %v2474
        %v2497 = vmul.f32 %v2446, %v2474
        %v2498 = vmul.f32 %v2449, %v2474
        %v2499 = vmul.f32 %v2452, %v2474
        %v2500 = vmul.f32 %v2455, %v2474
        %v2501 = vmul.f32 %v2458, %v2474
        %v2502 = vmul.f32 %v2461, %v2474
        %v2503 = vmul.f32 %v2464, %v2474
        %v2504 = vmul.f32 %v2467, %v2474
        %v2505 = vmul.f32 %v2470, %v2474
        %v2506 = vmul.f32 %v2473, %v2474
        %v2507 = vsub.f32 %v2250, %v2475
        %v2508 = vsub.f32 %v2253, %v2476
        %v2509 = vsub.f32 %v2258, %v2477
        %v2510 = vsub.f32 %v2261, %v2478
        %v2511 = vsub.f32 %v2266, %v2479
        %v2512 = vsub.f32 %v2269, %v2480
        %v2513 = vsub.f32 %v2274, %v2481
        %v2514 = vsub.f32 %v2277, %v2482
        %v2515 = vsub.f32 %v2282, %v2483
        %v2516 = vsub.f32 %v2285, %v2484
        %v2517 = vsub.f32 %v2290, %v2485
        %v2518 = vsub.f32 %v2293, %v2486
        %v2519 = vsub.f32 %v2298, %v2487
        %v2520 = vsub.f32 %v2301, %v2488
        %v2521 = vsub.f32 %v2306, %v2489
        %v2522 = vsub.f32 %v2309, %v2490
        %v2523 = vsub.f32 %v2314, %v2491
        %v2524 = vsub.f32 %v2317, %v2492
        %v2525 = vsub.f32 %v2322, %v2493
        %v2526 = vsub.f32 %v2325, %v2494
        %v2527 = vsub.f32 %v2330, %v2495
        %v2528 = vsub.f32 %v2333, %v2496
        %v2529 = vsub.f32 %v2338, %v2497
        %v2530 = vsub.f32 %v2341, %v2498
        %v2531 = vsub.f32 %v2346, %v2499
        %v2532 = vsub.f32 %v2349, %v2500
        %v2533 = vsub.f32 %v2354, %v2501
        %v2534 = vsub.f32 %v2357, %v2502
        %v2535 = vsub.f32 %v2362, %v2503
        %v2536 = vsub.f32 %v2365, %v2504
        %v2537 = vsub.f32 %v2370, %v2505
        %v2538 = vsub.f32 %v2373, %v2506
        %v2539 = vmul.f32 %v2507, %v2507
        %v2540 = vmul.f32 %v2508, %v2508
        %v2541 = vmul.f32 %v2509, %v2509
        %v2542 = vmul.f32 %v2510, %v2510
        %v2543 = vmul.f32 %v2511, %v2511
        %v2544 = vmul.f32 %v2512, %v2512
        %v2545 = vmul.f32 %v2513, %v2513
        %v2546 = vmul.f32 %v2514, %v2514
        %v2547 = vmul.f32 %v2515, %v2515
        %v2548 = vmul.f32 %v2516, %v2516
        %v2549 = vmul.f32 %v2517, %v2517
        %v2550 = vmul.f32 %v2518, %v2518
        %v2551 = vmul.f32 %v2519, %v2519
        %v2552 = vmul.f32 %v2520, %v2520
        %v2553 = vmul.f32 %v2521, %v2521
        %v2554 = vmul.f32 %v2522, %v2522
        %v2555 = vmul.f32 %v2523, %v2523
        %v2556 = vmul.f32 %v2524, %v2524
        %v2557 = vmul.f32 %v2525, %v2525
        %v2558 = vmul.f32 %v2526, %v2526
        %v2559 = vmul.f32 %v2527, %v2527
        %v2560 = vmul.f32 %v2528, %v2528
        %v2561 = vmul.f32 %v2529, %v2529
        %v2562 = vmul.f32 %v2530, %v2530
        %v2563 = vmul.f32 %v2531, %v2531
        %v2564 = vmul.f32 %v2532, %v2532
        %v2565 = vmul.f32 %v2533, %v2533
        %v2566 = vmul.f32 %v2534, %v2534
        %v2567 = vmul.f32 %v2535, %v2535
        %v2568 = vmul.f32 %v2536, %v2536
        %v2569 = vmul.f32 %v2537, %v2537
        %v2570 = vmul.f32 %v2538, %v2538
        %v2571 = vsel %vm1645, %v2539, 0.0
        %2572 = vadd.xlane.f32.xlu0 %v2571
        %v2573 = vpop.xlane.xlu0 %2572
        %v2574 = vsel %vm1645, %v2540, 0.0
        %2575 = vadd.xlane.f32.xlu0 %v2574
        %v2576 = vpop.xlane.xlu0 %2575
        %v2577 = vsel %vm1645, %v2541, 0.0
        %2578 = vadd.xlane.f32.xlu0 %v2577
        %v2579 = vpop.xlane.xlu0 %2578
        %v2580 = vsel %vm1645, %v2542, 0.0
        %2581 = vadd.xlane.f32.xlu0 %v2580
        %v2582 = vpop.xlane.xlu0 %2581
        %v2583 = vsel %vm1645, %v2543, 0.0
        %2584 = vadd.xlane.f32.xlu0 %v2583
        %v2585 = vpop.xlane.xlu0 %2584
        %v2586 = vsel %vm1645, %v2544, 0.0
        %2587 = vadd.xlane.f32.xlu0 %v2586
        %v2588 = vpop.xlane.xlu0 %2587
        %v2589 = vsel %vm1645, %v2545, 0.0
        %2590 = vadd.xlane.f32.xlu0 %v2589
        %v2591 = vpop.xlane.xlu0 %2590
        %v2592 = vsel %vm1645, %v2546, 0.0
        %2593 = vadd.xlane.f32.xlu0 %v2592
        %v2594 = vpop.xlane.xlu0 %2593
        %v2595 = vsel %vm1645, %v2547, 0.0
        %2596 = vadd.xlane.f32.xlu0 %v2595
        %v2597 = vpop.xlane.xlu0 %2596
        %v2598 = vsel %vm1645, %v2548, 0.0
        %2599 = vadd.xlane.f32.xlu0 %v2598
        %v2600 = vpop.xlane.xlu0 %2599
        %v2601 = vsel %vm1645, %v2549, 0.0
        %2602 = vadd.xlane.f32.xlu0 %v2601
        %v2603 = vpop.xlane.xlu0 %2602
        %v2604 = vsel %vm1645, %v2550, 0.0
        %2605 = vadd.xlane.f32.xlu0 %v2604
        %v2606 = vpop.xlane.xlu0 %2605
        %v2607 = vsel %vm1645, %v2551, 0.0
        %2608 = vadd.xlane.f32.xlu0 %v2607
        %v2609 = vpop.xlane.xlu0 %2608
        %v2610 = vsel %vm1645, %v2552, 0.0
        %2611 = vadd.xlane.f32.xlu0 %v2610
        %v2612 = vpop.xlane.xlu0 %2611
        %v2613 = vsel %vm1645, %v2553, 0.0
        %2614 = vadd.xlane.f32.xlu0 %v2613
        %v2615 = vpop.xlane.xlu0 %2614
        %v2616 = vsel %vm1645, %v2554, 0.0
        %2617 = vadd.xlane.f32.xlu0 %v2616
        %v2618 = vpop.xlane.xlu0 %2617
        %v2619 = vsel %vm1645, %v2555, 0.0
        %2620 = vadd.xlane.f32.xlu0 %v2619
        %v2621 = vpop.xlane.xlu0 %2620
        %v2622 = vsel %vm1645, %v2556, 0.0
        %2623 = vadd.xlane.f32.xlu0 %v2622
        %v2624 = vpop.xlane.xlu0 %2623
        %v2625 = vsel %vm1645, %v2557, 0.0
        %2626 = vadd.xlane.f32.xlu0 %v2625
        %v2627 = vpop.xlane.xlu0 %2626
        %v2628 = vsel %vm1645, %v2558, 0.0
        %2629 = vadd.xlane.f32.xlu0 %v2628
        %v2630 = vpop.xlane.xlu0 %2629
        %v2631 = vsel %vm1645, %v2559, 0.0
        %2632 = vadd.xlane.f32.xlu0 %v2631
        %v2633 = vpop.xlane.xlu0 %2632
        %v2634 = vsel %vm1645, %v2560, 0.0
        %2635 = vadd.xlane.f32.xlu0 %v2634
        %v2636 = vpop.xlane.xlu0 %2635
        %v2637 = vsel %vm1645, %v2561, 0.0
        %2638 = vadd.xlane.f32.xlu0 %v2637
        %v2639 = vpop.xlane.xlu0 %2638
        %v2640 = vsel %vm1645, %v2562, 0.0
        %2641 = vadd.xlane.f32.xlu0 %v2640
        %v2642 = vpop.xlane.xlu0 %2641
        %v2643 = vsel %vm1645, %v2563, 0.0
        %2644 = vadd.xlane.f32.xlu0 %v2643
        %v2645 = vpop.xlane.xlu0 %2644
        %v2646 = vsel %vm1645, %v2564, 0.0
        %2647 = vadd.xlane.f32.xlu0 %v2646
        %v2648 = vpop.xlane.xlu0 %2647
        %v2649 = vsel %vm1645, %v2565, 0.0
        %2650 = vadd.xlane.f32.xlu0 %v2649
        %v2651 = vpop.xlane.xlu0 %2650
        %v2652 = vsel %vm1645, %v2566, 0.0
        %2653 = vadd.xlane.f32.xlu0 %v2652
        %v2654 = vpop.xlane.xlu0 %2653
        %v2655 = vsel %vm1645, %v2567, 0.0
        %2656 = vadd.xlane.f32.xlu0 %v2655
        %v2657 = vpop.xlane.xlu0 %2656
        %v2658 = vsel %vm1645, %v2568, 0.0
        %2659 = vadd.xlane.f32.xlu0 %v2658
        %v2660 = vpop.xlane.xlu0 %2659
        %v2661 = vsel %vm1645, %v2569, 0.0
        %2662 = vadd.xlane.f32.xlu0 %v2661
        %v2663 = vpop.xlane.xlu0 %2662
        %v2664 = vsel %vm1645, %v2570, 0.0
        %2665 = vadd.xlane.f32.xlu0 %v2664
        %v2666 = vpop.xlane.xlu0 %2665
        %v2667 = vmul.f32 %v2573, %v2474
        %v2668 = vmul.f32 %v2576, %v2474
        %v2669 = vmul.f32 %v2579, %v2474
        %v2670 = vmul.f32 %v2582, %v2474
        %v2671 = vmul.f32 %v2585, %v2474
        %v2672 = vmul.f32 %v2588, %v2474
        %v2673 = vmul.f32 %v2591, %v2474
        %v2674 = vmul.f32 %v2594, %v2474
        %v2675 = vmul.f32 %v2597, %v2474
        %v2676 = vmul.f32 %v2600, %v2474
        %v2677 = vmul.f32 %v2603, %v2474
        %v2678 = vmul.f32 %v2606, %v2474
        %v2679 = vmul.f32 %v2609, %v2474
        %v2680 = vmul.f32 %v2612, %v2474
        %v2681 = vmul.f32 %v2615, %v2474
        %v2682 = vmul.f32 %v2618, %v2474
        %v2683 = vmul.f32 %v2621, %v2474
        %v2684 = vmul.f32 %v2624, %v2474
        %v2685 = vmul.f32 %v2627, %v2474
        %v2686 = vmul.f32 %v2630, %v2474
        %v2687 = vmul.f32 %v2633, %v2474
        %v2688 = vmul.f32 %v2636, %v2474
        %v2689 = vmul.f32 %v2639, %v2474
        %v2690 = vmul.f32 %v2642, %v2474
        %v2691 = vmul.f32 %v2645, %v2474
        %v2692 = vmul.f32 %v2648, %v2474
        %v2693 = vmul.f32 %v2651, %v2474
        %v2694 = vmul.f32 %v2654, %v2474
        %v2695 = vmul.f32 %v2657, %v2474
        %v2696 = vmul.f32 %v2660, %v2474
        %v2697 = vmul.f32 %v2663, %v2474
        %v2698 = vmul.f32 %v2666, %v2474
        %v2699 = vadd.f32 %v2667, 1e-05
        %v2700 = vadd.f32 %v2668, 1e-05
        %v2701 = vadd.f32 %v2669, 1e-05
        %v2702 = vadd.f32 %v2670, 1e-05
        %v2703 = vadd.f32 %v2671, 1e-05
        %v2704 = vadd.f32 %v2672, 1e-05
        %v2705 = vadd.f32 %v2673, 1e-05
        %v2706 = vadd.f32 %v2674, 1e-05
        %v2707 = vadd.f32 %v2675, 1e-05
        %v2708 = vadd.f32 %v2676, 1e-05
        %v2709 = vadd.f32 %v2677, 1e-05
        %v2710 = vadd.f32 %v2678, 1e-05
        %v2711 = vadd.f32 %v2679, 1e-05
        %v2712 = vadd.f32 %v2680, 1e-05
        %v2713 = vadd.f32 %v2681, 1e-05
        %v2714 = vadd.f32 %v2682, 1e-05
        %v2715 = vadd.f32 %v2683, 1e-05
        %v2716 = vadd.f32 %v2684, 1e-05
        %v2717 = vadd.f32 %v2685, 1e-05
        %v2718 = vadd.f32 %v2686, 1e-05
        %v2719 = vadd.f32 %v2687, 1e-05
        %v2720 = vadd.f32 %v2688, 1e-05
        %v2721 = vadd.f32 %v2689, 1e-05
        %v2722 = vadd.f32 %v2690, 1e-05
        %v2723 = vadd.f32 %v2691, 1e-05
        %v2724 = vadd.f32 %v2692, 1e-05
        %v2725 = vadd.f32 %v2693, 1e-05
        %v2726 = vadd.f32 %v2694, 1e-05
        %v2727 = vadd.f32 %v2695, 1e-05
        %v2728 = vadd.f32 %v2696, 1e-05
        %v2729 = vadd.f32 %v2697, 1e-05
        %v2730 = vadd.f32 %v2698, 1e-05
        %v2731 = vrsqrt.pop %v2699
        %v2732 = vrsqrt.pop %v2700
        %v2733 = vrsqrt.pop %v2701
        %v2734 = vrsqrt.pop %v2702
        %v2735 = vrsqrt.pop %v2703
        %v2736 = vrsqrt.pop %v2704
        %v2737 = vrsqrt.pop %v2705
        %v2738 = vrsqrt.pop %v2706
        %v2739 = vrsqrt.pop %v2707
        %v2740 = vrsqrt.pop %v2708
        %v2741 = vrsqrt.pop %v2709
        %v2742 = vrsqrt.pop %v2710
        %v2743 = vrsqrt.pop %v2711
        %v2744 = vrsqrt.pop %v2712
        %v2745 = vrsqrt.pop %v2713
        %v2746 = vrsqrt.pop %v2714
        %v2747 = vrsqrt.pop %v2715
        %v2748 = vrsqrt.pop %v2716
        %v2749 = vrsqrt.pop %v2717
        %v2750 = vrsqrt.pop %v2718
        %v2751 = vrsqrt.pop %v2719
        %v2752 = vrsqrt.pop %v2720
        %v2753 = vrsqrt.pop %v2721
        %v2754 = vrsqrt.pop %v2722
        %v2755 = vrsqrt.pop %v2723
        %v2756 = vrsqrt.pop %v2724
        %v2757 = vrsqrt.pop %v2725
        %v2758 = vrsqrt.pop %v2726
        %v2759 = vrsqrt.pop %v2727
        %v2760 = vrsqrt.pop %v2728
        %v2761 = vrsqrt.pop %v2729
        %v2762 = vrsqrt.pop %v2730
        %v2763 = vmul.f32 %v2507, %v2731
        %v2764 = vmul.f32 %v2508, %v2732
        %v2765 = vmul.f32 %v2509, %v2733
        %v2766 = vmul.f32 %v2510, %v2734
        %v2767 = vmul.f32 %v2511, %v2735
        %v2768 = vmul.f32 %v2512, %v2736
        %v2769 = vmul.f32 %v2513, %v2737
        %v2770 = vmul.f32 %v2514, %v2738
        %v2771 = vmul.f32 %v2515, %v2739
        %v2772 = vmul.f32 %v2516, %v2740
        %v2773 = vmul.f32 %v2517, %v2741
        %v2774 = vmul.f32 %v2518, %v2742
        %v2775 = vmul.f32 %v2519, %v2743
        %v2776 = vmul.f32 %v2520, %v2744
        %v2777 = vmul.f32 %v2521, %v2745
        %v2778 = vmul.f32 %v2522, %v2746
        %v2779 = vmul.f32 %v2523, %v2747
        %v2780 = vmul.f32 %v2524, %v2748
        %v2781 = vmul.f32 %v2525, %v2749
        %v2782 = vmul.f32 %v2526, %v2750
        %v2783 = vmul.f32 %v2527, %v2751
        %v2784 = vmul.f32 %v2528, %v2752
        %v2785 = vmul.f32 %v2529, %v2753
        %v2786 = vmul.f32 %v2530, %v2754
        %v2787 = vmul.f32 %v2531, %v2755
        %v2788 = vmul.f32 %v2532, %v2756
        %v2789 = vmul.f32 %v2533, %v2757
        %v2790 = vmul.f32 %v2534, %v2758
        %v2791 = vmul.f32 %v2535, %v2759
        %v2792 = vmul.f32 %v2536, %v2760
        %v2793 = vmul.f32 %v2537, %v2761
        %v2794 = vmul.f32 %v2538, %v2762
        %v2796 = vlaneseq
        %v2797 = vshrl.u32 %v2796, 7
        %v2798 = vsub.s32 0, %v2797
        %v2799 = vrot.slane %v2376, %v2798
        %v2801 = vmul.f32 %v2763, %v2799
        %v2802 = vmul.f32 %v2764, %v2799
        %v2803 = vmul.f32 %v2765, %v2799
        %v2804 = vmul.f32 %v2766, %v2799
        %v2805 = vmul.f32 %v2767, %v2799
        %v2806 = vmul.f32 %v2768, %v2799
        %v2807 = vmul.f32 %v2769, %v2799
        %v2808 = vmul.f32 %v2770, %v2799
        %v2809 = vmul.f32 %v2771, %v2799
        %v2810 = vmul.f32 %v2772, %v2799
        %v2811 = vmul.f32 %v2773, %v2799
        %v2812 = vmul.f32 %v2774, %v2799
        %v2813 = vmul.f32 %v2775, %v2799
        %v2814 = vmul.f32 %v2776, %v2799
        %v2815 = vmul.f32 %v2777, %v2799
        %v2816 = vmul.f32 %v2778, %v2799
        %v2817 = vmul.f32 %v2779, %v2799
        %v2818 = vmul.f32 %v2780, %v2799
        %v2819 = vmul.f32 %v2781, %v2799
        %v2820 = vmul.f32 %v2782, %v2799
        %v2821 = vmul.f32 %v2783, %v2799
        %v2822 = vmul.f32 %v2784, %v2799
        %v2823 = vmul.f32 %v2785, %v2799
        %v2824 = vmul.f32 %v2786, %v2799
        %v2825 = vmul.f32 %v2787, %v2799
        %v2826 = vmul.f32 %v2788, %v2799
        %v2827 = vmul.f32 %v2789, %v2799
        %v2828 = vmul.f32 %v2790, %v2799
        %v2829 = vmul.f32 %v2791, %v2799
        %v2830 = vmul.f32 %v2792, %v2799
        %v2831 = vmul.f32 %v2793, %v2799
        %v2832 = vmul.f32 %v2794, %v2799
        %v2834 = vlaneseq
        %v2835 = vshrl.u32 %v2834, 7
        %v2836 = vsub.s32 0, %v2835
        %v2837 = vrot.slane %v2377, %v2836
        %v2839 = vadd.f32 %v2801, %v2837
        %v2840 = vadd.f32 %v2802, %v2837
        %v2841 = vadd.f32 %v2803, %v2837
        %v2842 = vadd.f32 %v2804, %v2837
        %v2843 = vadd.f32 %v2805, %v2837
        %v2844 = vadd.f32 %v2806, %v2837
        %v2845 = vadd.f32 %v2807, %v2837
        %v2846 = vadd.f32 %v2808, %v2837
        %v2847 = vadd.f32 %v2809, %v2837
        %v2848 = vadd.f32 %v2810, %v2837
        %v2849 = vadd.f32 %v2811, %v2837
        %v2850 = vadd.f32 %v2812, %v2837
        %v2851 = vadd.f32 %v2813, %v2837
        %v2852 = vadd.f32 %v2814, %v2837
        %v2853 = vadd.f32 %v2815, %v2837
        %v2854 = vadd.f32 %v2816, %v2837
        %v2855 = vadd.f32 %v2817, %v2837
        %v2856 = vadd.f32 %v2818, %v2837
        %v2857 = vadd.f32 %v2819, %v2837
        %v2858 = vadd.f32 %v2820, %v2837
        %v2859 = vadd.f32 %v2821, %v2837
        %v2860 = vadd.f32 %v2822, %v2837
        %v2861 = vadd.f32 %v2823, %v2837
        %v2862 = vadd.f32 %v2824, %v2837
        %v2863 = vadd.f32 %v2825, %v2837
        %v2864 = vadd.f32 %v2826, %v2837
        %v2865 = vadd.f32 %v2827, %v2837
        %v2866 = vadd.f32 %v2828, %v2837
        %v2867 = vadd.f32 %v2829, %v2837
        %v2868 = vadd.f32 %v2830, %v2837
        %v2869 = vadd.f32 %v2831, %v2837
        %v2870 = vadd.f32 %v2832, %v2837
        %vm2871 = vcmp.gt.f32.partialorder %v2839, 0.0
        %vm2872 = vcmp.gt.f32.partialorder %v2840, 0.0
        %vm2873 = vcmp.gt.f32.partialorder %v2841, 0.0
        %vm2874 = vcmp.gt.f32.partialorder %v2842, 0.0
        %vm2875 = vcmp.gt.f32.partialorder %v2843, 0.0
        %vm2876 = vcmp.gt.f32.partialorder %v2844, 0.0
        %vm2877 = vcmp.gt.f32.partialorder %v2845, 0.0
        %vm2878 = vcmp.gt.f32.partialorder %v2846, 0.0
        %vm2879 = vcmp.gt.f32.partialorder %v2847, 0.0
        %vm2880 = vcmp.gt.f32.partialorder %v2848, 0.0
        %vm2881 = vcmp.gt.f32.partialorder %v2849, 0.0
        %vm2882 = vcmp.gt.f32.partialorder %v2850, 0.0
        %vm2883 = vcmp.gt.f32.partialorder %v2851, 0.0
        %vm2884 = vcmp.gt.f32.partialorder %v2852, 0.0
        %vm2885 = vcmp.gt.f32.partialorder %v2853, 0.0
        %vm2886 = vcmp.gt.f32.partialorder %v2854, 0.0
        %vm2887 = vcmp.gt.f32.partialorder %v2855, 0.0
        %vm2888 = vcmp.gt.f32.partialorder %v2856, 0.0
        %vm2889 = vcmp.gt.f32.partialorder %v2857, 0.0
        %vm2890 = vcmp.gt.f32.partialorder %v2858, 0.0
        %vm2891 = vcmp.gt.f32.partialorder %v2859, 0.0
        %vm2892 = vcmp.gt.f32.partialorder %v2860, 0.0
        %vm2893 = vcmp.gt.f32.partialorder %v2861, 0.0
        %vm2894 = vcmp.gt.f32.partialorder %v2862, 0.0
        %vm2895 = vcmp.gt.f32.partialorder %v2863, 0.0
        %vm2896 = vcmp.gt.f32.partialorder %v2864, 0.0
        %vm2897 = vcmp.gt.f32.partialorder %v2865, 0.0
        %vm2898 = vcmp.gt.f32.partialorder %v2866, 0.0
        %vm2899 = vcmp.gt.f32.partialorder %v2867, 0.0
        %vm2900 = vcmp.gt.f32.partialorder %v2868, 0.0
        %vm2901 = vcmp.gt.f32.partialorder %v2869, 0.0
        %vm2902 = vcmp.gt.f32.partialorder %v2870, 0.0
        %v2903 = vmul.f32 %v2839, 0.01
        %v2904 = vmul.f32 %v2840, 0.01
        %v2905 = vmul.f32 %v2841, 0.01
        %v2906 = vmul.f32 %v2842, 0.01
        %v2907 = vmul.f32 %v2843, 0.01
        %v2908 = vmul.f32 %v2844, 0.01
        %v2909 = vmul.f32 %v2845, 0.01
        %v2910 = vmul.f32 %v2846, 0.01
        %v2911 = vmul.f32 %v2847, 0.01
        %v2912 = vmul.f32 %v2848, 0.01
        %v2913 = vmul.f32 %v2849, 0.01
        %v2914 = vmul.f32 %v2850, 0.01
        %v2915 = vmul.f32 %v2851, 0.01
        %v2916 = vmul.f32 %v2852, 0.01
        %v2917 = vmul.f32 %v2853, 0.01
        %v2918 = vmul.f32 %v2854, 0.01
        %v2919 = vmul.f32 %v2855, 0.01
        %v2920 = vmul.f32 %v2856, 0.01
        %v2921 = vmul.f32 %v2857, 0.01
        %v2922 = vmul.f32 %v2858, 0.01
        %v2923 = vmul.f32 %v2859, 0.01
        %v2924 = vmul.f32 %v2860, 0.01
        %v2925 = vmul.f32 %v2861, 0.01
        %v2926 = vmul.f32 %v2862, 0.01
        %v2927 = vmul.f32 %v2863, 0.01
        %v2928 = vmul.f32 %v2864, 0.01
        %v2929 = vmul.f32 %v2865, 0.01
        %v2930 = vmul.f32 %v2866, 0.01
        %v2931 = vmul.f32 %v2867, 0.01
        %v2932 = vmul.f32 %v2868, 0.01
        %v2933 = vmul.f32 %v2869, 0.01
        %v2934 = vmul.f32 %v2870, 0.01
        %v2935 = vsel %vm2871, %v2839, %v2903
        %v2936 = vsel %vm2872, %v2840, %v2904
        %v2937 = vsel %vm2873, %v2841, %v2905
        %v2938 = vsel %vm2874, %v2842, %v2906
        %v2939 = vsel %vm2875, %v2843, %v2907
        %v2940 = vsel %vm2876, %v2844, %v2908
        %v2941 = vsel %vm2877, %v2845, %v2909
        %v2942 = vsel %vm2878, %v2846, %v2910
        %v2943 = vsel %vm2879, %v2847, %v2911
        %v2944 = vsel %vm2880, %v2848, %v2912
        %v2945 = vsel %vm2881, %v2849, %v2913
        %v2946 = vsel %vm2882, %v2850, %v2914
        %v2947 = vsel %vm2883, %v2851, %v2915
        %v2948 = vsel %vm2884, %v2852, %v2916
        %v2949 = vsel %vm2885, %v2853, %v2917
        %v2950 = vsel %vm2886, %v2854, %v2918
        %v2951 = vsel %vm2887, %v2855, %v2919
        %v2952 = vsel %vm2888, %v2856, %v2920
        %v2953 = vsel %vm2889, %v2857, %v2921
        %v2954 = vsel %vm2890, %v2858, %v2922
        %v2955 = vsel %vm2891, %v2859, %v2923
        %v2956 = vsel %vm2892, %v2860, %v2924
        %v2957 = vsel %vm2893, %v2861, %v2925
        %v2958 = vsel %vm2894, %v2862, %v2926
        %v2959 = vsel %vm2895, %v2863, %v2927
        %v2960 = vsel %vm2896, %v2864, %v2928
        %v2961 = vsel %vm2897, %v2865, %v2929
        %v2962 = vsel %vm2898, %v2866, %v2930
        %v2963 = vsel %vm2899, %v2867, %v2931
        %v2964 = vsel %vm2900, %v2868, %v2932
        %v2965 = vsel %vm2901, %v2869, %v2933
        %v2966 = vsel %vm2902, %v2870, %v2934
        %2967 = vst.msk [vmem:[#allocation2] sm:$0xff] %vm1645, 0.0
        %vm2968 = vcmask 517120
        %2969 = vst.msk [vmem:[#allocation2 + $0x8] sm:$0x3] %vm2968, 0.0
        %2970 = vst.msk [vmem:[#allocation2 + $0xa0] sm:$0xff] %vm1645, 0.0
        %2971 = vst.msk [vmem:[#allocation2 + $0xa8] sm:$0x3] %vm2968, 0.0
        %2972 = vst.msk [vmem:[#allocation2 + $0x140] sm:$0xff] %vm1645, 0.0
        %2973 = vst.msk [vmem:[#allocation2 + $0x148] sm:$0x3] %vm2968, 0.0
        %2974 = vst.msk [vmem:[#allocation2 + $0x1e0] sm:$0xff] %vm1645, 0.0
        %2975 = vst.msk [vmem:[#allocation2 + $0x1e8] sm:$0x3] %vm2968, 0.0
        %s2976 = scalar_lea.vmem [#allocation2], 144
        %2977 = vst.msk [vmem:[%s2976] sm:$0xff] %vm1645, 0.0
        %2978 = vst.msk [vmem:[%s2976 + $0x8] sm:$0x3] %vm2968, 0.0
        %2979 = vst.msk [vmem:[%s2976 + $0xa0] sm:$0xff] %vm1645, 0.0
        %2980 = vst.msk [vmem:[%s2976 + $0xa8] sm:$0x3] %vm2968, 0.0
        %2981 = vst.msk [vmem:[%s2976 + $0x140] sm:$0xff] %vm1645, 0.0
        %2982 = vst.msk [vmem:[%s2976 + $0x148] sm:$0x3] %vm2968, 0.0
        %2983 = vst.msk [vmem:[%s2976 + $0x1e0] sm:$0xff] %vm1645, 0.0
        %2984 = vst.msk [vmem:[%s2976 + $0x1e8] sm:$0x3] %vm2968, 0.0
        %vm2985 = vcmask 516096
        %2986 = vst.msk [vmem:[#allocation2] sm:$0x1] %vm2985, 0.0
        %2987 = vst.msk [vmem:[#allocation2 + $0x10] sm:$0x1] %vm2985, 0.0
        %2988 = vst.msk [vmem:[#allocation2 + $0x20] sm:$0x1] %vm2985, 0.0
        %2989 = vst.msk [vmem:[#allocation2 + $0x30] sm:$0x1] %vm2985, 0.0
        %2990 = vst.msk [vmem:[#allocation2 + $0x40] sm:$0x1] %vm2985, 0.0
        %2991 = vst.msk [vmem:[#allocation2 + $0x50] sm:$0x1] %vm2985, 0.0
        %2992 = vst.msk [vmem:[#allocation2 + $0x60] sm:$0x1] %vm2985, 0.0
        %2993 = vst.msk [vmem:[#allocation2 + $0x70] sm:$0x1] %vm2985, 0.0
        %2994 = vst.msk [vmem:[#allocation2 + $0x80] sm:$0x1] %vm2985, 0.0
        %2995 = vst.msk [vmem:[#allocation2 + $0x90] sm:$0x1] %vm2985, 0.0
        %2996 = vst.msk [vmem:[#allocation2 + $0xa0] sm:$0x1] %vm2985, 0.0
        %2997 = vst.msk [vmem:[#allocation2 + $0xb0] sm:$0x1] %vm2985, 0.0
        %2998 = vst.msk [vmem:[#allocation2 + $0xc0] sm:$0x1] %vm2985, 0.0
        %2999 = vst.msk [vmem:[#allocation2 + $0xd0] sm:$0x1] %vm2985, 0.0
        %3000 = vst.msk [vmem:[#allocation2 + $0xe0] sm:$0x1] %vm2985, 0.0
        %3001 = vst.msk [vmem:[#allocation2 + $0xf0] sm:$0x1] %vm2985, 0.0
        %3002 = vst.msk [vmem:[#allocation2 + $0x100] sm:$0x1] %vm2985, 0.0
        %3003 = vst.msk [vmem:[#allocation2 + $0x110] sm:$0x1] %vm2985, 0.0
        %3004 = vst.msk [vmem:[#allocation2 + $0x120] sm:$0x1] %vm2985, 0.0
        %3005 = vst.msk [vmem:[#allocation2 + $0x130] sm:$0x1] %vm2985, 0.0
        %3006 = vst.msk [vmem:[#allocation2 + $0x140] sm:$0x1] %vm2985, 0.0
        %3007 = vst.msk [vmem:[#allocation2 + $0x150] sm:$0x1] %vm2985, 0.0
        %3008 = vst.msk [vmem:[#allocation2 + $0x160] sm:$0x1] %vm2985, 0.0
        %3009 = vst.msk [vmem:[#allocation2 + $0x170] sm:$0x1] %vm2985, 0.0
        %3010 = vst.msk [vmem:[#allocation2 + $0x180] sm:$0x1] %vm2985, 0.0
        %3011 = vst.msk [vmem:[#allocation2 + $0x190] sm:$0x1] %vm2985, 0.0
        %3012 = vst.msk [vmem:[#allocation2 + $0x1a0] sm:$0x1] %vm2985, 0.0
        %3013 = vst.msk [vmem:[#allocation2 + $0x1b0] sm:$0x1] %vm2985, 0.0
        %3014 = vst.msk [vmem:[#allocation2 + $0x1c0] sm:$0x1] %vm2985, 0.0
        %3015 = vst.msk [vmem:[#allocation2 + $0x1d0] sm:$0x1] %vm2985, 0.0
        %3016 = vst.msk [vmem:[#allocation2 + $0x1e0] sm:$0x1] %vm2985, 0.0
        %3017 = vst.msk [vmem:[#allocation2 + $0x1f0] sm:$0x1] %vm2985, 0.0
        %3018 = vst.msk [vmem:[#allocation2 + $0x200] sm:$0x1] %vm2985, 0.0
        %3019 = vst.msk [vmem:[#allocation2 + $0x210] sm:$0x1] %vm2985, 0.0
        %3020 = vst.msk [vmem:[#allocation2 + $0x220] sm:$0x1] %vm2985, 0.0
        %3021 = vst.msk [vmem:[#allocation2 + $0x230] sm:$0x1] %vm2985, 0.0
        %3022 = vst.msk [vmem:[#allocation2 + $0x240] sm:$0x1] %vm2985, 0.0
        %3023 = vst.msk [vmem:[#allocation2 + $0x250] sm:$0x1] %vm2985, 0.0
        %3024 = vst.msk [vmem:[#allocation2 + $0x260] sm:$0x1] %vm2985, 0.0
        %3025 = vst.msk [vmem:[#allocation2 + $0x270] sm:$0x1] %vm2985, 0.0
        %3026 = vst.msk [vmem:[#allocation2 + $0x9] sm:$0x1] %vm2985, 0.0
        %3027 = vst.msk [vmem:[#allocation2 + $0x19] sm:$0x1] %vm2985, 0.0
        %3028 = vst.msk [vmem:[#allocation2 + $0x29] sm:$0x1] %vm2985, 0.0
        %3029 = vst.msk [vmem:[#allocation2 + $0x39] sm:$0x1] %vm2985, 0.0
        %3030 = vst.msk [vmem:[#allocation2 + $0x49] sm:$0x1] %vm2985, 0.0
        %3031 = vst.msk [vmem:[#allocation2 + $0x59] sm:$0x1] %vm2985, 0.0
        %3032 = vst.msk [vmem:[#allocation2 + $0x69] sm:$0x1] %vm2985, 0.0
        %3033 = vst.msk [vmem:[#allocation2 + $0x79] sm:$0x1] %vm2985, 0.0
        %3034 = vst.msk [vmem:[#allocation2 + $0x89] sm:$0x1] %vm2985, 0.0
        %3035 = vst.msk [vmem:[#allocation2 + $0x99] sm:$0x1] %vm2985, 0.0
        %3036 = vst.msk [vmem:[#allocation2 + $0xa9] sm:$0x1] %vm2985, 0.0
        %3037 = vst.msk [vmem:[#allocation2 + $0xb9] sm:$0x1] %vm2985, 0.0
        %3038 = vst.msk [vmem:[#allocation2 + $0xc9] sm:$0x1] %vm2985, 0.0
        %3039 = vst.msk [vmem:[#allocation2 + $0xd9] sm:$0x1] %vm2985, 0.0
        %3040 = vst.msk [vmem:[#allocation2 + $0xe9] sm:$0x1] %vm2985, 0.0
        %3041 = vst.msk [vmem:[#allocation2 + $0xf9] sm:$0x1] %vm2985, 0.0
        %3042 = vst.msk [vmem:[#allocation2 + $0x109] sm:$0x1] %vm2985, 0.0
        %3043 = vst.msk [vmem:[#allocation2 + $0x119] sm:$0x1] %vm2985, 0.0
        %3044 = vst.msk [vmem:[#allocation2 + $0x129] sm:$0x1] %vm2985, 0.0
        %3045 = vst.msk [vmem:[#allocation2 + $0x139] sm:$0x1] %vm2985, 0.0
        %3046 = vst.msk [vmem:[#allocation2 + $0x149] sm:$0x1] %vm2985, 0.0
        %3047 = vst.msk [vmem:[#allocation2 + $0x159] sm:$0x1] %vm2985, 0.0
        %3048 = vst.msk [vmem:[#allocation2 + $0x169] sm:$0x1] %vm2985, 0.0
        %3049 = vst.msk [vmem:[#allocation2 + $0x179] sm:$0x1] %vm2985, 0.0
        %3050 = vst.msk [vmem:[#allocation2 + $0x189] sm:$0x1] %vm2985, 0.0
        %3051 = vst.msk [vmem:[#allocation2 + $0x199] sm:$0x1] %vm2985, 0.0
        %3052 = vst.msk [vmem:[#allocation2 + $0x1a9] sm:$0x1] %vm2985, 0.0
        %3053 = vst.msk [vmem:[#allocation2 + $0x1b9] sm:$0x1] %vm2985, 0.0
        %3054 = vst.msk [vmem:[#allocation2 + $0x1c9] sm:$0x1] %vm2985, 0.0
        %3055 = vst.msk [vmem:[#allocation2 + $0x1d9] sm:$0x1] %vm2985, 0.0
        %3056 = vst.msk [vmem:[#allocation2 + $0x1e9] sm:$0x1] %vm2985, 0.0
        %3057 = vst.msk [vmem:[#allocation2 + $0x1f9] sm:$0x1] %vm2985, 0.0
        %3058 = vst.msk [vmem:[#allocation2 + $0x209] sm:$0x1] %vm2985, 0.0
        %3059 = vst.msk [vmem:[#allocation2 + $0x219] sm:$0x1] %vm2985, 0.0
        %3060 = vst.msk [vmem:[#allocation2 + $0x229] sm:$0x1] %vm2985, 0.0
        %3061 = vst.msk [vmem:[#allocation2 + $0x239] sm:$0x1] %vm2985, 0.0
        %3062 = vst.msk [vmem:[#allocation2 + $0x249] sm:$0x1] %vm2985, 0.0
        %3063 = vst.msk [vmem:[#allocation2 + $0x259] sm:$0x1] %vm2985, 0.0
        %3064 = vst.msk [vmem:[#allocation2 + $0x269] sm:$0x1] %vm2985, 0.0
        %3065 = vst.msk [vmem:[#allocation2 + $0x279] sm:$0x1] %vm2985, 0.0
        %s3066 = scalar_lea.vmem [#allocation2], 16
        %3067 = vst.msk [vmem:[%s3066 + $0x1] sm:$0xff] %vm1645, %v2935
        %3068 = vst.msk [vmem:[%s3066 + $0x11] sm:$0xff] %vm1645, %v2936
        %3069 = vst.msk [vmem:[%s3066 + $0x21] sm:$0xff] %vm1645, %v2937
        %3070 = vst.msk [vmem:[%s3066 + $0x31] sm:$0xff] %vm1645, %v2938
        %3071 = vst.msk [vmem:[%s3066 + $0x41] sm:$0xff] %vm1645, %v2939
        %3072 = vst.msk [vmem:[%s3066 + $0x51] sm:$0xff] %vm1645, %v2940
        %3073 = vst.msk [vmem:[%s3066 + $0x61] sm:$0xff] %vm1645, %v2941
        %3074 = vst.msk [vmem:[%s3066 + $0x71] sm:$0xff] %vm1645, %v2942
        %3075 = vst.msk [vmem:[%s3066 + $0xa1] sm:$0xff] %vm1645, %v2943
        %3076 = vst.msk [vmem:[%s3066 + $0xb1] sm:$0xff] %vm1645, %v2944
        %3077 = vst.msk [vmem:[%s3066 + $0xc1] sm:$0xff] %vm1645, %v2945
        %3078 = vst.msk [vmem:[%s3066 + $0xd1] sm:$0xff] %vm1645, %v2946
        %3079 = vst.msk [vmem:[%s3066 + $0xe1] sm:$0xff] %vm1645, %v2947
        %3080 = vst.msk [vmem:[%s3066 + $0xf1] sm:$0xff] %vm1645, %v2948
        %3081 = vst.msk [vmem:[%s3066 + $0x101] sm:$0xff] %vm1645, %v2949
        %3082 = vst.msk [vmem:[%s3066 + $0x111] sm:$0xff] %vm1645, %v2950
        %3083 = vst.msk [vmem:[%s3066 + $0x141] sm:$0xff] %vm1645, %v2951
        %3084 = vst.msk [vmem:[%s3066 + $0x151] sm:$0xff] %vm1645, %v2952
        %3085 = vst.msk [vmem:[%s3066 + $0x161] sm:$0xff] %vm1645, %v2953
        %3086 = vst.msk [vmem:[%s3066 + $0x171] sm:$0xff] %vm1645, %v2954
        %3087 = vst.msk [vmem:[%s3066 + $0x181] sm:$0xff] %vm1645, %v2955
        %3088 = vst.msk [vmem:[%s3066 + $0x191] sm:$0xff] %vm1645, %v2956
        %3089 = vst.msk [vmem:[%s3066 + $0x1a1] sm:$0xff] %vm1645, %v2957
        %3090 = vst.msk [vmem:[%s3066 + $0x1b1] sm:$0xff] %vm1645, %v2958
        %3091 = vst.msk [vmem:[%s3066 + $0x1e1] sm:$0xff] %vm1645, %v2959
        %3092 = vst.msk [vmem:[%s3066 + $0x1f1] sm:$0xff] %vm1645, %v2960
        %3093 = vst.msk [vmem:[%s3066 + $0x201] sm:$0xff] %vm1645, %v2961
        %3094 = vst.msk [vmem:[%s3066 + $0x211] sm:$0xff] %vm1645, %v2962
        %3095 = vst.msk [vmem:[%s3066 + $0x221] sm:$0xff] %vm1645, %v2963
        %3096 = vst.msk [vmem:[%s3066 + $0x231] sm:$0xff] %vm1645, %v2964
        %3097 = vst.msk [vmem:[%s3066 + $0x241] sm:$0xff] %vm1645, %v2965
        %3098 = vst.msk [vmem:[%s3066 + $0x251] sm:$0xff] %vm1645, %v2966
        %v3099 = vld [vmem:[#allocation2] sm:$0xff]
        %v3100 = vld [vmem:[#allocation2 + $0x10] sm:$0xff]
        %v3101 = vld [vmem:[#allocation2 + $0x20] sm:$0xff]
        %v3102 = vld [vmem:[#allocation2 + $0x30] sm:$0xff]
        %v3103 = vld [vmem:[#allocation2 + $0x40] sm:$0xff]
        %v3104 = vld [vmem:[#allocation2 + $0x50] sm:$0xff]
        %v3105 = vld [vmem:[#allocation2 + $0x60] sm:$0xff]
        %v3106 = vld [vmem:[#allocation2 + $0x70] sm:$0xff]
        %v3107 = vld [vmem:[#allocation2 + $0xa0] sm:$0xff]
        %v3108 = vld [vmem:[#allocation2 + $0xb0] sm:$0xff]
        %v3109 = vld [vmem:[#allocation2 + $0xc0] sm:$0xff]
        %v3110 = vld [vmem:[#allocation2 + $0xd0] sm:$0xff]
        %v3111 = vld [vmem:[#allocation2 + $0xe0] sm:$0xff]
        %v3112 = vld [vmem:[#allocation2 + $0xf0] sm:$0xff]
        %v3113 = vld [vmem:[#allocation2 + $0x100] sm:$0xff]
        %v3114 = vld [vmem:[#allocation2 + $0x110] sm:$0xff]
        %v3115 = vld [vmem:[#allocation2 + $0x140] sm:$0xff]
        %v3116 = vld [vmem:[#allocation2 + $0x150] sm:$0xff]
        %v3117 = vld [vmem:[#allocation2 + $0x160] sm:$0xff]
        %v3118 = vld [vmem:[#allocation2 + $0x170] sm:$0xff]
        %v3119 = vld [vmem:[#allocation2 + $0x180] sm:$0xff]
        %v3120 = vld [vmem:[#allocation2 + $0x190] sm:$0xff]
        %v3121 = vld [vmem:[#allocation2 + $0x1a0] sm:$0xff]
        %v3122 = vld [vmem:[#allocation2 + $0x1b0] sm:$0xff]
        %v3123 = vld [vmem:[#allocation2 + $0x1e0] sm:$0xff]
        %v3124 = vld [vmem:[#allocation2 + $0x1f0] sm:$0xff]
        %v3125 = vld [vmem:[#allocation2 + $0x200] sm:$0xff]
        %v3126 = vld [vmem:[#allocation2 + $0x210] sm:$0xff]
        %v3127 = vld [vmem:[#allocation2 + $0x220] sm:$0xff]
        %v3128 = vld [vmem:[#allocation2 + $0x230] sm:$0xff]
        %v3129 = vld [vmem:[#allocation2 + $0x240] sm:$0xff]
        %v3130 = vld [vmem:[#allocation2 + $0x250] sm:$0xff]
        %v3131 = vld [vmem:[#allocation2 + $0x1] sm:$0xff]
        %v3132 = vld [vmem:[#allocation2 + $0x11] sm:$0xff]
        %v3133 = vld [vmem:[#allocation2 + $0x21] sm:$0xff]
        %v3134 = vld [vmem:[#allocation2 + $0x31] sm:$0xff]
        %v3135 = vld [vmem:[#allocation2 + $0x41] sm:$0xff]
        %v3136 = vld [vmem:[#allocation2 + $0x51] sm:$0xff]
        %v3137 = vld [vmem:[#allocation2 + $0x61] sm:$0xff]
        %v3138 = vld [vmem:[#allocation2 + $0x71] sm:$0xff]
        %v3139 = vld [vmem:[#allocation2 + $0xa1] sm:$0xff]
        %v3140 = vld [vmem:[#allocation2 + $0xb1] sm:$0xff]
        %v3141 = vld [vmem:[#allocation2 + $0xc1] sm:$0xff]
        %v3142 = vld [vmem:[#allocation2 + $0xd1] sm:$0xff]
        %v3143 = vld [vmem:[#allocation2 + $0xe1] sm:$0xff]
        %v3144 = vld [vmem:[#allocation2 + $0xf1] sm:$0xff]
        %v3145 = vld [vmem:[#allocation2 + $0x101] sm:$0xff]
        %v3146 = vld [vmem:[#allocation2 + $0x111] sm:$0xff]
        %v3147 = vld [vmem:[#allocation2 + $0x141] sm:$0xff]
        %v3148 = vld [vmem:[#allocation2 + $0x151] sm:$0xff]
        %v3149 = vld [vmem:[#allocation2 + $0x161] sm:$0xff]
        %v3150 = vld [vmem:[#allocation2 + $0x171] sm:$0xff]
        %v3151 = vld [vmem:[#allocation2 + $0x181] sm:$0xff]
        %v3152 = vld [vmem:[#allocation2 + $0x191] sm:$0xff]
        %v3153 = vld [vmem:[#allocation2 + $0x1a1] sm:$0xff]
        %v3154 = vld [vmem:[#allocation2 + $0x1b1] sm:$0xff]
        %v3155 = vld [vmem:[#allocation2 + $0x1e1] sm:$0xff]
        %v3156 = vld [vmem:[#allocation2 + $0x1f1] sm:$0xff]
        %v3157 = vld [vmem:[#allocation2 + $0x201] sm:$0xff]
        %v3158 = vld [vmem:[#allocation2 + $0x211] sm:$0xff]
        %v3159 = vld [vmem:[#allocation2 + $0x221] sm:$0xff]
        %v3160 = vld [vmem:[#allocation2 + $0x231] sm:$0xff]
        %v3161 = vld [vmem:[#allocation2 + $0x241] sm:$0xff]
        %v3162 = vld [vmem:[#allocation2 + $0x251] sm:$0xff]
        %v3163 = vld [vmem:[#allocation2 + $0x2] sm:$0xff]
        %v3164 = vld [vmem:[#allocation2 + $0x12] sm:$0xff]
        %v3165 = vld [vmem:[#allocation2 + $0x22] sm:$0xff]
        %v3166 = vld [vmem:[#allocation2 + $0x32] sm:$0xff]
        %v3167 = vld [vmem:[#allocation2 + $0x42] sm:$0xff]
        %v3168 = vld [vmem:[#allocation2 + $0x52] sm:$0xff]
        %v3169 = vld [vmem:[#allocation2 + $0x62] sm:$0xff]
        %v3170 = vld [vmem:[#allocation2 + $0x72] sm:$0xff]
        %v3171 = vld [vmem:[#allocation2 + $0xa2] sm:$0xff]
        %v3172 = vld [vmem:[#allocation2 + $0xb2] sm:$0xff]
        %v3173 = vld [vmem:[#allocation2 + $0xc2] sm:$0xff]
        %v3174 = vld [vmem:[#allocation2 + $0xd2] sm:$0xff]
        %v3175 = vld [vmem:[#allocation2 + $0xe2] sm:$0xff]
        %v3176 = vld [vmem:[#allocation2 + $0xf2] sm:$0xff]
        %v3177 = vld [vmem:[#allocation2 + $0x102] sm:$0xff]
        %v3178 = vld [vmem:[#allocation2 + $0x112] sm:$0xff]
        %v3179 = vld [vmem:[#allocation2 + $0x142] sm:$0xff]
        %v3180 = vld [vmem:[#allocation2 + $0x152] sm:$0xff]
        %v3181 = vld [vmem:[#allocation2 + $0x162] sm:$0xff]
        %v3182 = vld [vmem:[#allocation2 + $0x172] sm:$0xff]
        %v3183 = vld [vmem:[#allocation2 + $0x182] sm:$0xff]
        %v3184 = vld [vmem:[#allocation2 + $0x192] sm:$0xff]
        %v3185 = vld [vmem:[#allocation2 + $0x1a2] sm:$0xff]
        %v3186 = vld [vmem:[#allocation2 + $0x1b2] sm:$0xff]
        %v3187 = vld [vmem:[#allocation2 + $0x1e2] sm:$0xff]
        %v3188 = vld [vmem:[#allocation2 + $0x1f2] sm:$0xff]
        %v3189 = vld [vmem:[#allocation2 + $0x202] sm:$0xff]
        %v3190 = vld [vmem:[#allocation2 + $0x212] sm:$0xff]
        %v3191 = vld [vmem:[#allocation2 + $0x222] sm:$0xff]
        %v3192 = vld [vmem:[#allocation2 + $0x232] sm:$0xff]
        %v3193 = vld [vmem:[#allocation2 + $0x242] sm:$0xff]
        %v3194 = vld [vmem:[#allocation2 + $0x252] sm:$0xff]
        %v3195 = vld [vmem:[%s3066] sm:$0xff]
        %v3196 = vld [vmem:[%s3066 + $0x10] sm:$0xff]
        %v3197 = vld [vmem:[%s3066 + $0x20] sm:$0xff]
        %v3198 = vld [vmem:[%s3066 + $0x30] sm:$0xff]
        %v3199 = vld [vmem:[%s3066 + $0x40] sm:$0xff]
        %v3200 = vld [vmem:[%s3066 + $0x50] sm:$0xff]
        %v3201 = vld [vmem:[%s3066 + $0x60] sm:$0xff]
        %v3202 = vld [vmem:[%s3066 + $0x70] sm:$0xff]
        %v3203 = vld [vmem:[%s3066 + $0xa0] sm:$0xff]
        %v3204 = vld [vmem:[%s3066 + $0xb0] sm:$0xff]
        %v3205 = vld [vmem:[%s3066 + $0xc0] sm:$0xff]
        %v3206 = vld [vmem:[%s3066 + $0xd0] sm:$0xff]
        %v3207 = vld [vmem:[%s3066 + $0xe0] sm:$0xff]
        %v3208 = vld [vmem:[%s3066 + $0xf0] sm:$0xff]
        %v3209 = vld [vmem:[%s3066 + $0x100] sm:$0xff]
        %v3210 = vld [vmem:[%s3066 + $0x110] sm:$0xff]
        %v3211 = vld [vmem:[%s3066 + $0x140] sm:$0xff]
        %v3212 = vld [vmem:[%s3066 + $0x150] sm:$0xff]
        %v3213 = vld [vmem:[%s3066 + $0x160] sm:$0xff]
        %v3214 = vld [vmem:[%s3066 + $0x170] sm:$0xff]
        %v3215 = vld [vmem:[%s3066 + $0x180] sm:$0xff]
        %v3216 = vld [vmem:[%s3066 + $0x190] sm:$0xff]
        %v3217 = vld [vmem:[%s3066 + $0x1a0] sm:$0xff]
        %v3218 = vld [vmem:[%s3066 + $0x1b0] sm:$0xff]
        %v3219 = vld [vmem:[%s3066 + $0x1e0] sm:$0xff]
        %v3220 = vld [vmem:[%s3066 + $0x1f0] sm:$0xff]
        %v3221 = vld [vmem:[%s3066 + $0x200] sm:$0xff]
        %v3222 = vld [vmem:[%s3066 + $0x210] sm:$0xff]
        %v3223 = vld [vmem:[%s3066 + $0x220] sm:$0xff]
        %v3224 = vld [vmem:[%s3066 + $0x230] sm:$0xff]
        %v3225 = vld [vmem:[%s3066 + $0x240] sm:$0xff]
        %v3226 = vld [vmem:[%s3066 + $0x250] sm:$0xff]
        %v3227 = vld [vmem:[%s3066 + $0x1] sm:$0xff]
        %v3228 = vld [vmem:[%s3066 + $0x11] sm:$0xff]
        %v3229 = vld [vmem:[%s3066 + $0x21] sm:$0xff]
        %v3230 = vld [vmem:[%s3066 + $0x31] sm:$0xff]
        %v3231 = vld [vmem:[%s3066 + $0x41] sm:$0xff]
        %v3232 = vld [vmem:[%s3066 + $0x51] sm:$0xff]
        %v3233 = vld [vmem:[%s3066 + $0x61] sm:$0xff]
        %v3234 = vld [vmem:[%s3066 + $0x71] sm:$0xff]
        %v3235 = vld [vmem:[%s3066 + $0xa1] sm:$0xff]
        %v3236 = vld [vmem:[%s3066 + $0xb1] sm:$0xff]
        %v3237 = vld [vmem:[%s3066 + $0xc1] sm:$0xff]
        %v3238 = vld [vmem:[%s3066 + $0xd1] sm:$0xff]
        %v3239 = vld [vmem:[%s3066 + $0xe1] sm:$0xff]
        %v3240 = vld [vmem:[%s3066 + $0xf1] sm:$0xff]
        %v3241 = vld [vmem:[%s3066 + $0x101] sm:$0xff]
        %v3242 = vld [vmem:[%s3066 + $0x111] sm:$0xff]
        %v3243 = vld [vmem:[%s3066 + $0x141] sm:$0xff]
        %v3244 = vld [vmem:[%s3066 + $0x151] sm:$0xff]
        %v3245 = vld [vmem:[%s3066 + $0x161] sm:$0xff]
        %v3246 = vld [vmem:[%s3066 + $0x171] sm:$0xff]
        %v3247 = vld [vmem:[%s3066 + $0x181] sm:$0xff]
        %v3248 = vld [vmem:[%s3066 + $0x191] sm:$0xff]
        %v3249 = vld [vmem:[%s3066 + $0x1a1] sm:$0xff]
        %v3250 = vld [vmem:[%s3066 + $0x1b1] sm:$0xff]
        %v3251 = vld [vmem:[%s3066 + $0x1e1] sm:$0xff]
        %v3252 = vld [vmem:[%s3066 + $0x1f1] sm:$0xff]
        %v3253 = vld [vmem:[%s3066 + $0x201] sm:$0xff]
        %v3254 = vld [vmem:[%s3066 + $0x211] sm:$0xff]
        %v3255 = vld [vmem:[%s3066 + $0x221] sm:$0xff]
        %v3256 = vld [vmem:[%s3066 + $0x231] sm:$0xff]
        %v3257 = vld [vmem:[%s3066 + $0x241] sm:$0xff]
        %v3258 = vld [vmem:[%s3066 + $0x251] sm:$0xff]
        %v3259 = vld [vmem:[%s3066 + $0x2] sm:$0xff]
        %v3260 = vld [vmem:[%s3066 + $0x12] sm:$0xff]
        %v3261 = vld [vmem:[%s3066 + $0x22] sm:$0xff]
        %v3262 = vld [vmem:[%s3066 + $0x32] sm:$0xff]
        %v3263 = vld [vmem:[%s3066 + $0x42] sm:$0xff]
        %v3264 = vld [vmem:[%s3066 + $0x52] sm:$0xff]
        %v3265 = vld [vmem:[%s3066 + $0x62] sm:$0xff]
        %v3266 = vld [vmem:[%s3066 + $0x72] sm:$0xff]
        %v3267 = vld [vmem:[%s3066 + $0xa2] sm:$0xff]
        %v3268 = vld [vmem:[%s3066 + $0xb2] sm:$0xff]
        %v3269 = vld [vmem:[%s3066 + $0xc2] sm:$0xff]
        %v3270 = vld [vmem:[%s3066 + $0xd2] sm:$0xff]
        %v3271 = vld [vmem:[%s3066 + $0xe2] sm:$0xff]
        %v3272 = vld [vmem:[%s3066 + $0xf2] sm:$0xff]
        %v3273 = vld [vmem:[%s3066 + $0x102] sm:$0xff]
        %v3274 = vld [vmem:[%s3066 + $0x112] sm:$0xff]
        %v3275 = vld [vmem:[%s3066 + $0x142] sm:$0xff]
        %v3276 = vld [vmem:[%s3066 + $0x152] sm:$0xff]
        %v3277 = vld [vmem:[%s3066 + $0x162] sm:$0xff]
        %v3278 = vld [vmem:[%s3066 + $0x172] sm:$0xff]
        %v3279 = vld [vmem:[%s3066 + $0x182] sm:$0xff]
        %v3280 = vld [vmem:[%s3066 + $0x192] sm:$0xff]
        %v3281 = vld [vmem:[%s3066 + $0x1a2] sm:$0xff]
        %v3282 = vld [vmem:[%s3066 + $0x1b2] sm:$0xff]
        %v3283 = vld [vmem:[%s3066 + $0x1e2] sm:$0xff]
        %v3284 = vld [vmem:[%s3066 + $0x1f2] sm:$0xff]
        %v3285 = vld [vmem:[%s3066 + $0x202] sm:$0xff]
        %v3286 = vld [vmem:[%s3066 + $0x212] sm:$0xff]
        %v3287 = vld [vmem:[%s3066 + $0x222] sm:$0xff]
        %v3288 = vld [vmem:[%s3066 + $0x232] sm:$0xff]
        %v3289 = vld [vmem:[%s3066 + $0x242] sm:$0xff]
        %v3290 = vld [vmem:[%s3066 + $0x252] sm:$0xff]
        %s3291 = scalar_lea.vmem [#allocation2], 32
        %v3292 = vld [vmem:[%s3291] sm:$0xff]
        %v3293 = vld [vmem:[%s3291 + $0x10] sm:$0xff]
        %v3294 = vld [vmem:[%s3291 + $0x20] sm:$0xff]
        %v3295 = vld [vmem:[%s3291 + $0x30] sm:$0xff]
        %v3296 = vld [vmem:[%s3291 + $0x40] sm:$0xff]
        %v3297 = vld [vmem:[%s3291 + $0x50] sm:$0xff]
        %v3298 = vld [vmem:[%s3291 + $0x60] sm:$0xff]
        %v3299 = vld [vmem:[%s3291 + $0x70] sm:$0xff]
        %v3300 = vld [vmem:[%s3291 + $0xa0] sm:$0xff]
        %v3301 = vld [vmem:[%s3291 + $0xb0] sm:$0xff]
        %v3302 = vld [vmem:[%s3291 + $0xc0] sm:$0xff]
        %v3303 = vld [vmem:[%s3291 + $0xd0] sm:$0xff]
        %v3304 = vld [vmem:[%s3291 + $0xe0] sm:$0xff]
        %v3305 = vld [vmem:[%s3291 + $0xf0] sm:$0xff]
        %v3306 = vld [vmem:[%s3291 + $0x100] sm:$0xff]
        %v3307 = vld [vmem:[%s3291 + $0x110] sm:$0xff]
        %v3308 = vld [vmem:[%s3291 + $0x140] sm:$0xff]
        %v3309 = vld [vmem:[%s3291 + $0x150] sm:$0xff]
        %v3310 = vld [vmem:[%s3291 + $0x160] sm:$0xff]
        %v3311 = vld [vmem:[%s3291 + $0x170] sm:$0xff]
        %v3312 = vld [vmem:[%s3291 + $0x180] sm:$0xff]
        %v3313 = vld [vmem:[%s3291 + $0x190] sm:$0xff]
        %v3314 = vld [vmem:[%s3291 + $0x1a0] sm:$0xff]
        %v3315 = vld [vmem:[%s3291 + $0x1b0] sm:$0xff]
        %v3316 = vld [vmem:[%s3291 + $0x1e0] sm:$0xff]
        %v3317 = vld [vmem:[%s3291 + $0x1f0] sm:$0xff]
        %v3318 = vld [vmem:[%s3291 + $0x200] sm:$0xff]
        %v3319 = vld [vmem:[%s3291 + $0x210] sm:$0xff]
        %v3320 = vld [vmem:[%s3291 + $0x220] sm:$0xff]
        %v3321 = vld [vmem:[%s3291 + $0x230] sm:$0xff]
        %v3322 = vld [vmem:[%s3291 + $0x240] sm:$0xff]
        %v3323 = vld [vmem:[%s3291 + $0x250] sm:$0xff]
        %v3324 = vld [vmem:[%s3291 + $0x1] sm:$0xff]
        %v3325 = vld [vmem:[%s3291 + $0x11] sm:$0xff]
        %v3326 = vld [vmem:[%s3291 + $0x21] sm:$0xff]
        %v3327 = vld [vmem:[%s3291 + $0x31] sm:$0xff]
        %v3328 = vld [vmem:[%s3291 + $0x41] sm:$0xff]
        %v3329 = vld [vmem:[%s3291 + $0x51] sm:$0xff]
        %v3330 = vld [vmem:[%s3291 + $0x61] sm:$0xff]
        %v3331 = vld [vmem:[%s3291 + $0x71] sm:$0xff]
        %v3332 = vld [vmem:[%s3291 + $0xa1] sm:$0xff]
        %v3333 = vld [vmem:[%s3291 + $0xb1] sm:$0xff]
        %v3334 = vld [vmem:[%s3291 + $0xc1] sm:$0xff]
        %v3335 = vld [vmem:[%s3291 + $0xd1] sm:$0xff]
        %v3336 = vld [vmem:[%s3291 + $0xe1] sm:$0xff]
        %v3337 = vld [vmem:[%s3291 + $0xf1] sm:$0xff]
        %v3338 = vld [vmem:[%s3291 + $0x101] sm:$0xff]
        %v3339 = vld [vmem:[%s3291 + $0x111] sm:$0xff]
        %v3340 = vld [vmem:[%s3291 + $0x141] sm:$0xff]
        %v3341 = vld [vmem:[%s3291 + $0x151] sm:$0xff]
        %v3342 = vld [vmem:[%s3291 + $0x161] sm:$0xff]
        %v3343 = vld [vmem:[%s3291 + $0x171] sm:$0xff]
        %v3344 = vld [vmem:[%s3291 + $0x181] sm:$0xff]
        %v3345 = vld [vmem:[%s3291 + $0x191] sm:$0xff]
        %v3346 = vld [vmem:[%s3291 + $0x1a1] sm:$0xff]
        %v3347 = vld [vmem:[%s3291 + $0x1b1] sm:$0xff]
        %v3348 = vld [vmem:[%s3291 + $0x1e1] sm:$0xff]
        %v3349 = vld [vmem:[%s3291 + $0x1f1] sm:$0xff]
        %v3350 = vld [vmem:[%s3291 + $0x201] sm:$0xff]
        %v3351 = vld [vmem:[%s3291 + $0x211] sm:$0xff]
        %v3352 = vld [vmem:[%s3291 + $0x221] sm:$0xff]
        %v3353 = vld [vmem:[%s3291 + $0x231] sm:$0xff]
        %v3354 = vld [vmem:[%s3291 + $0x241] sm:$0xff]
        %v3355 = vld [vmem:[%s3291 + $0x251] sm:$0xff]
        %v3356 = vld [vmem:[%s3291 + $0x2] sm:$0xff]
        %v3357 = vld [vmem:[%s3291 + $0x12] sm:$0xff]
        %v3358 = vld [vmem:[%s3291 + $0x22] sm:$0xff]
        %v3359 = vld [vmem:[%s3291 + $0x32] sm:$0xff]
        %v3360 = vld [vmem:[%s3291 + $0x42] sm:$0xff]
        %v3361 = vld [vmem:[%s3291 + $0x52] sm:$0xff]
        %v3362 = vld [vmem:[%s3291 + $0x62] sm:$0xff]
        %v3363 = vld [vmem:[%s3291 + $0x72] sm:$0xff]
        %v3364 = vld [vmem:[%s3291 + $0xa2] sm:$0xff]
        %v3365 = vld [vmem:[%s3291 + $0xb2] sm:$0xff]
        %v3366 = vld [vmem:[%s3291 + $0xc2] sm:$0xff]
        %v3367 = vld [vmem:[%s3291 + $0xd2] sm:$0xff]
        %v3368 = vld [vmem:[%s3291 + $0xe2] sm:$0xff]
        %v3369 = vld [vmem:[%s3291 + $0xf2] sm:$0xff]
        %v3370 = vld [vmem:[%s3291 + $0x102] sm:$0xff]
        %v3371 = vld [vmem:[%s3291 + $0x112] sm:$0xff]
        %v3372 = vld [vmem:[%s3291 + $0x142] sm:$0xff]
        %v3373 = vld [vmem:[%s3291 + $0x152] sm:$0xff]
        %v3374 = vld [vmem:[%s3291 + $0x162] sm:$0xff]
        %v3375 = vld [vmem:[%s3291 + $0x172] sm:$0xff]
        %v3376 = vld [vmem:[%s3291 + $0x182] sm:$0xff]
        %v3377 = vld [vmem:[%s3291 + $0x192] sm:$0xff]
        %v3378 = vld [vmem:[%s3291 + $0x1a2] sm:$0xff]
        %v3379 = vld [vmem:[%s3291 + $0x1b2] sm:$0xff]
        %v3380 = vld [vmem:[%s3291 + $0x1e2] sm:$0xff]
        %v3381 = vld [vmem:[%s3291 + $0x1f2] sm:$0xff]
        %v3382 = vld [vmem:[%s3291 + $0x202] sm:$0xff]
        %v3383 = vld [vmem:[%s3291 + $0x212] sm:$0xff]
        %v3384 = vld [vmem:[%s3291 + $0x222] sm:$0xff]
        %v3385 = vld [vmem:[%s3291 + $0x232] sm:$0xff]
        %v3386 = vld [vmem:[%s3291 + $0x242] sm:$0xff]
        %v3387 = vld [vmem:[%s3291 + $0x252] sm:$0xff]
        %3420 = vrot.lane.b32.xlu0 %v3131, 64
        %v3421 = vpop.permute.xlu0 %3420
        %3422 = vrot.lane.b32.xlu0 %v3132, 64
        %v3423 = vpop.permute.xlu0 %3422
        %3424 = vrot.lane.b32.xlu0 %v3133, 64
        %v3425 = vpop.permute.xlu0 %3424
        %3426 = vrot.lane.b32.xlu0 %v3134, 64
        %v3427 = vpop.permute.xlu0 %3426
        %3428 = vrot.lane.b32.xlu0 %v3135, 64
        %v3429 = vpop.permute.xlu0 %3428
        %3430 = vrot.lane.b32.xlu0 %v3136, 64
        %v3431 = vpop.permute.xlu0 %3430
        %3432 = vrot.lane.b32.xlu0 %v3137, 64
        %v3433 = vpop.permute.xlu0 %3432
        %3434 = vrot.lane.b32.xlu0 %v3138, 64
        %v3435 = vpop.permute.xlu0 %3434
        %3436 = vrot.lane.b32.xlu0 %v3139, 64
        %v3437 = vpop.permute.xlu0 %3436
        %3438 = vrot.lane.b32.xlu0 %v3140, 64
        %v3439 = vpop.permute.xlu0 %3438
        %3440 = vrot.lane.b32.xlu0 %v3141, 64
        %v3441 = vpop.permute.xlu0 %3440
        %3442 = vrot.lane.b32.xlu0 %v3142, 64
        %v3443 = vpop.permute.xlu0 %3442
        %3444 = vrot.lane.b32.xlu0 %v3143, 64
        %v3445 = vpop.permute.xlu0 %3444
        %3446 = vrot.lane.b32.xlu0 %v3144, 64
        %v3447 = vpop.permute.xlu0 %3446
        %3448 = vrot.lane.b32.xlu0 %v3145, 64
        %v3449 = vpop.permute.xlu0 %3448
        %3450 = vrot.lane.b32.xlu0 %v3146, 64
        %v3451 = vpop.permute.xlu0 %3450
        %3452 = vrot.lane.b32.xlu0 %v3147, 64
        %v3453 = vpop.permute.xlu0 %3452
        %3454 = vrot.lane.b32.xlu0 %v3148, 64
        %v3455 = vpop.permute.xlu0 %3454
        %3456 = vrot.lane.b32.xlu0 %v3149, 64
        %v3457 = vpop.permute.xlu0 %3456
        %3458 = vrot.lane.b32.xlu0 %v3150, 64
        %v3459 = vpop.permute.xlu0 %3458
        %3460 = vrot.lane.b32.xlu0 %v3151, 64
        %v3461 = vpop.permute.xlu0 %3460
        %3462 = vrot.lane.b32.xlu0 %v3152, 64
        %v3463 = vpop.permute.xlu0 %3462
        %3464 = vrot.lane.b32.xlu0 %v3153, 64
        %v3465 = vpop.permute.xlu0 %3464
        %3466 = vrot.lane.b32.xlu0 %v3154, 64
        %v3467 = vpop.permute.xlu0 %3466
        %3468 = vrot.lane.b32.xlu0 %v3155, 64
        %v3469 = vpop.permute.xlu0 %3468
        %3470 = vrot.lane.b32.xlu0 %v3156, 64
        %v3471 = vpop.permute.xlu0 %3470
        %3472 = vrot.lane.b32.xlu0 %v3157, 64
        %v3473 = vpop.permute.xlu0 %3472
        %3474 = vrot.lane.b32.xlu0 %v3158, 64
        %v3475 = vpop.permute.xlu0 %3474
        %3476 = vrot.lane.b32.xlu0 %v3159, 64
        %v3477 = vpop.permute.xlu0 %3476
        %3478 = vrot.lane.b32.xlu0 %v3160, 64
        %v3479 = vpop.permute.xlu0 %3478
        %3480 = vrot.lane.b32.xlu0 %v3161, 64
        %v3481 = vpop.permute.xlu0 %3480
        %3482 = vrot.lane.b32.xlu0 %v3162, 64
        %v3483 = vpop.permute.xlu0 %3482
        %3548 = vrot.lane.b32.xlu0 %v3195, 64
        %v3549 = vpop.permute.xlu0 %3548
        %3550 = vrot.lane.b32.xlu0 %v3196, 64
        %v3551 = vpop.permute.xlu0 %3550
        %3552 = vrot.lane.b32.xlu0 %v3197, 64
        %v3553 = vpop.permute.xlu0 %3552
        %3554 = vrot.lane.b32.xlu0 %v3198, 64
        %v3555 = vpop.permute.xlu0 %3554
        %3556 = vrot.lane.b32.xlu0 %v3199, 64
        %v3557 = vpop.permute.xlu0 %3556
        %3558 = vrot.lane.b32.xlu0 %v3200, 64
        %v3559 = vpop.permute.xlu0 %3558
        %3560 = vrot.lane.b32.xlu0 %v3201, 64
        %v3561 = vpop.permute.xlu0 %3560
        %3562 = vrot.lane.b32.xlu0 %v3202, 64
        %v3563 = vpop.permute.xlu0 %3562
        %3564 = vrot.lane.b32.xlu0 %v3203, 64
        %v3565 = vpop.permute.xlu0 %3564
        %3566 = vrot.lane.b32.xlu0 %v3204, 64
        %v3567 = vpop.permute.xlu0 %3566
        %3568 = vrot.lane.b32.xlu0 %v3205, 64
        %v3569 = vpop.permute.xlu0 %3568
        %3570 = vrot.lane.b32.xlu0 %v3206, 64
        %v3571 = vpop.permute.xlu0 %3570
        %3572 = vrot.lane.b32.xlu0 %v3207, 64
        %v3573 = vpop.permute.xlu0 %3572
        %3574 = vrot.lane.b32.xlu0 %v3208, 64
        %v3575 = vpop.permute.xlu0 %3574
        %3576 = vrot.lane.b32.xlu0 %v3209, 64
        %v3577 = vpop.permute.xlu0 %3576
        %3578 = vrot.lane.b32.xlu0 %v3210, 64
        %v3579 = vpop.permute.xlu0 %3578
        %3580 = vrot.lane.b32.xlu0 %v3211, 64
        %v3581 = vpop.permute.xlu0 %3580
        %3582 = vrot.lane.b32.xlu0 %v3212, 64
        %v3583 = vpop.permute.xlu0 %3582
        %3584 = vrot.lane.b32.xlu0 %v3213, 64
        %v3585 = vpop.permute.xlu0 %3584
        %3586 = vrot.lane.b32.xlu0 %v3214, 64
        %v3587 = vpop.permute.xlu0 %3586
        %3588 = vrot.lane.b32.xlu0 %v3215, 64
        %v3589 = vpop.permute.xlu0 %3588
        %3590 = vrot.lane.b32.xlu0 %v3216, 64
        %v3591 = vpop.permute.xlu0 %3590
        %3592 = vrot.lane.b32.xlu0 %v3217, 64
        %v3593 = vpop.permute.xlu0 %3592
        %3594 = vrot.lane.b32.xlu0 %v3218, 64
        %v3595 = vpop.permute.xlu0 %3594
        %3596 = vrot.lane.b32.xlu0 %v3219, 64
        %v3597 = vpop.permute.xlu0 %3596
        %3598 = vrot.lane.b32.xlu0 %v3220, 64
        %v3599 = vpop.permute.xlu0 %3598
        %3600 = vrot.lane.b32.xlu0 %v3221, 64
        %v3601 = vpop.permute.xlu0 %3600
        %3602 = vrot.lane.b32.xlu0 %v3222, 64
        %v3603 = vpop.permute.xlu0 %3602
        %3604 = vrot.lane.b32.xlu0 %v3223, 64
        %v3605 = vpop.permute.xlu0 %3604
        %3606 = vrot.lane.b32.xlu0 %v3224, 64
        %v3607 = vpop.permute.xlu0 %3606
        %3608 = vrot.lane.b32.xlu0 %v3225, 64
        %v3609 = vpop.permute.xlu0 %3608
        %3610 = vrot.lane.b32.xlu0 %v3226, 64
        %v3611 = vpop.permute.xlu0 %3610
        %3676 = vrot.lane.b32.xlu0 %v3259, 64
        %v3677 = vpop.permute.xlu0 %3676
        %3678 = vrot.lane.b32.xlu0 %v3260, 64
        %v3679 = vpop.permute.xlu0 %3678
        %3680 = vrot.lane.b32.xlu0 %v3261, 64
        %v3681 = vpop.permute.xlu0 %3680
        %3682 = vrot.lane.b32.xlu0 %v3262, 64
        %v3683 = vpop.permute.xlu0 %3682
        %3684 = vrot.lane.b32.xlu0 %v3263, 64
        %v3685 = vpop.permute.xlu0 %3684
        %3686 = vrot.lane.b32.xlu0 %v3264, 64
        %v3687 = vpop.permute.xlu0 %3686
        %3688 = vrot.lane.b32.xlu0 %v3265, 64
        %v3689 = vpop.permute.xlu0 %3688
        %3690 = vrot.lane.b32.xlu0 %v3266, 64
        %v3691 = vpop.permute.xlu0 %3690
        %3692 = vrot.lane.b32.xlu0 %v3267, 64
        %v3693 = vpop.permute.xlu0 %3692
        %3694 = vrot.lane.b32.xlu0 %v3268, 64
        %v3695 = vpop.permute.xlu0 %3694
        %3696 = vrot.lane.b32.xlu0 %v3269, 64
        %v3697 = vpop.permute.xlu0 %3696
        %3698 = vrot.lane.b32.xlu0 %v3270, 64
        %v3699 = vpop.permute.xlu0 %3698
        %3700 = vrot.lane.b32.xlu0 %v3271, 64
        %v3701 = vpop.permute.xlu0 %3700
        %3702 = vrot.lane.b32.xlu0 %v3272, 64
        %v3703 = vpop.permute.xlu0 %3702
        %3704 = vrot.lane.b32.xlu0 %v3273, 64
        %v3705 = vpop.permute.xlu0 %3704
        %3706 = vrot.lane.b32.xlu0 %v3274, 64
        %v3707 = vpop.permute.xlu0 %3706
        %3708 = vrot.lane.b32.xlu0 %v3275, 64
        %v3709 = vpop.permute.xlu0 %3708
        %3710 = vrot.lane.b32.xlu0 %v3276, 64
        %v3711 = vpop.permute.xlu0 %3710
        %3712 = vrot.lane.b32.xlu0 %v3277, 64
        %v3713 = vpop.permute.xlu0 %3712
        %3714 = vrot.lane.b32.xlu0 %v3278, 64
        %v3715 = vpop.permute.xlu0 %3714
        %3716 = vrot.lane.b32.xlu0 %v3279, 64
        %v3717 = vpop.permute.xlu0 %3716
        %3718 = vrot.lane.b32.xlu0 %v3280, 64
        %v3719 = vpop.permute.xlu0 %3718
        %3720 = vrot.lane.b32.xlu0 %v3281, 64
        %v3721 = vpop.permute.xlu0 %3720
        %3722 = vrot.lane.b32.xlu0 %v3282, 64
        %v3723 = vpop.permute.xlu0 %3722
        %3724 = vrot.lane.b32.xlu0 %v3283, 64
        %v3725 = vpop.permute.xlu0 %3724
        %3726 = vrot.lane.b32.xlu0 %v3284, 64
        %v3727 = vpop.permute.xlu0 %3726
        %3728 = vrot.lane.b32.xlu0 %v3285, 64
        %v3729 = vpop.permute.xlu0 %3728
        %3730 = vrot.lane.b32.xlu0 %v3286, 64
        %v3731 = vpop.permute.xlu0 %3730
        %3732 = vrot.lane.b32.xlu0 %v3287, 64
        %v3733 = vpop.permute.xlu0 %3732
        %3734 = vrot.lane.b32.xlu0 %v3288, 64
        %v3735 = vpop.permute.xlu0 %3734
        %3736 = vrot.lane.b32.xlu0 %v3289, 64
        %v3737 = vpop.permute.xlu0 %3736
        %3738 = vrot.lane.b32.xlu0 %v3290, 64
        %v3739 = vpop.permute.xlu0 %3738
        %3804 = vrot.lane.b32.xlu0 %v3324, 64
        %v3805 = vpop.permute.xlu0 %3804
        %3806 = vrot.lane.b32.xlu0 %v3325, 64
        %v3807 = vpop.permute.xlu0 %3806
        %3808 = vrot.lane.b32.xlu0 %v3326, 64
        %v3809 = vpop.permute.xlu0 %3808
        %3810 = vrot.lane.b32.xlu0 %v3327, 64
        %v3811 = vpop.permute.xlu0 %3810
        %3812 = vrot.lane.b32.xlu0 %v3328, 64
        %v3813 = vpop.permute.xlu0 %3812
        %3814 = vrot.lane.b32.xlu0 %v3329, 64
        %v3815 = vpop.permute.xlu0 %3814
        %3816 = vrot.lane.b32.xlu0 %v3330, 64
        %v3817 = vpop.permute.xlu0 %3816
        %3818 = vrot.lane.b32.xlu0 %v3331, 64
        %v3819 = vpop.permute.xlu0 %3818
        %3820 = vrot.lane.b32.xlu0 %v3332, 64
        %v3821 = vpop.permute.xlu0 %3820
        %3822 = vrot.lane.b32.xlu0 %v3333, 64
        %v3823 = vpop.permute.xlu0 %3822
        %3824 = vrot.lane.b32.xlu0 %v3334, 64
        %v3825 = vpop.permute.xlu0 %3824
        %3826 = vrot.lane.b32.xlu0 %v3335, 64
        %v3827 = vpop.permute.xlu0 %3826
        %3828 = vrot.lane.b32.xlu0 %v3336, 64
        %v3829 = vpop.permute.xlu0 %3828
        %3830 = vrot.lane.b32.xlu0 %v3337, 64
        %v3831 = vpop.permute.xlu0 %3830
        %3832 = vrot.lane.b32.xlu0 %v3338, 64
        %v3833 = vpop.permute.xlu0 %3832
        %3834 = vrot.lane.b32.xlu0 %v3339, 64
        %v3835 = vpop.permute.xlu0 %3834
        %3836 = vrot.lane.b32.xlu0 %v3340, 64
        %v3837 = vpop.permute.xlu0 %3836
        %3838 = vrot.lane.b32.xlu0 %v3341, 64
        %v3839 = vpop.permute.xlu0 %3838
        %3840 = vrot.lane.b32.xlu0 %v3342, 64
        %v3841 = vpop.permute.xlu0 %3840
        %3842 = vrot.lane.b32.xlu0 %v3343, 64
        %v3843 = vpop.permute.xlu0 %3842
        %3844 = vrot.lane.b32.xlu0 %v3344, 64
        %v3845 = vpop.permute.xlu0 %3844
        %3846 = vrot.lane.b32.xlu0 %v3345, 64
        %v3847 = vpop.permute.xlu0 %3846
        %3848 = vrot.lane.b32.xlu0 %v3346, 64
        %v3849 = vpop.permute.xlu0 %3848
        %3850 = vrot.lane.b32.xlu0 %v3347, 64
        %v3851 = vpop.permute.xlu0 %3850
        %3852 = vrot.lane.b32.xlu0 %v3348, 64
        %v3853 = vpop.permute.xlu0 %3852
        %3854 = vrot.lane.b32.xlu0 %v3349, 64
        %v3855 = vpop.permute.xlu0 %3854
        %3856 = vrot.lane.b32.xlu0 %v3350, 64
        %v3857 = vpop.permute.xlu0 %3856
        %3858 = vrot.lane.b32.xlu0 %v3351, 64
        %v3859 = vpop.permute.xlu0 %3858
        %3860 = vrot.lane.b32.xlu0 %v3352, 64
        %v3861 = vpop.permute.xlu0 %3860
        %3862 = vrot.lane.b32.xlu0 %v3353, 64
        %v3863 = vpop.permute.xlu0 %3862
        %3864 = vrot.lane.b32.xlu0 %v3354, 64
        %v3865 = vpop.permute.xlu0 %3864
        %3866 = vrot.lane.b32.xlu0 %v3355, 64
        %v3867 = vpop.permute.xlu0 %3866
        %v3900 = vsel %vm1645, %v3099, %v3421
        %v3901 = vsel %vm1645, %v3100, %v3423
        %v3902 = vsel %vm1645, %v3101, %v3425
        %v3903 = vsel %vm1645, %v3102, %v3427
        %v3904 = vsel %vm1645, %v3103, %v3429
        %v3905 = vsel %vm1645, %v3104, %v3431
        %v3906 = vsel %vm1645, %v3105, %v3433
        %v3907 = vsel %vm1645, %v3106, %v3435
        %v3908 = vsel %vm1645, %v3107, %v3437
        %v3909 = vsel %vm1645, %v3108, %v3439
        %v3910 = vsel %vm1645, %v3109, %v3441
        %v3911 = vsel %vm1645, %v3110, %v3443
        %v3912 = vsel %vm1645, %v3111, %v3445
        %v3913 = vsel %vm1645, %v3112, %v3447
        %v3914 = vsel %vm1645, %v3113, %v3449
        %v3915 = vsel %vm1645, %v3114, %v3451
        %v3916 = vsel %vm1645, %v3115, %v3453
        %v3917 = vsel %vm1645, %v3116, %v3455
        %v3918 = vsel %vm1645, %v3117, %v3457
        %v3919 = vsel %vm1645, %v3118, %v3459
        %v3920 = vsel %vm1645, %v3119, %v3461
        %v3921 = vsel %vm1645, %v3120, %v3463
        %v3922 = vsel %vm1645, %v3121, %v3465
        %v3923 = vsel %vm1645, %v3122, %v3467
        %v3924 = vsel %vm1645, %v3123, %v3469
        %v3925 = vsel %vm1645, %v3124, %v3471
        %v3926 = vsel %vm1645, %v3125, %v3473
        %v3927 = vsel %vm1645, %v3126, %v3475
        %v3928 = vsel %vm1645, %v3127, %v3477
        %v3929 = vsel %vm1645, %v3128, %v3479
        %v3930 = vsel %vm1645, %v3129, %v3481
        %v3931 = vsel %vm1645, %v3130, %v3483
        %v3932 = vsel %vm1645, %v3163, %v3549
        %v3933 = vsel %vm1645, %v3164, %v3551
        %v3934 = vsel %vm1645, %v3165, %v3553
        %v3935 = vsel %vm1645, %v3166, %v3555
        %v3936 = vsel %vm1645, %v3167, %v3557
        %v3937 = vsel %vm1645, %v3168, %v3559
        %v3938 = vsel %vm1645, %v3169, %v3561
        %v3939 = vsel %vm1645, %v3170, %v3563
        %v3940 = vsel %vm1645, %v3171, %v3565
        %v3941 = vsel %vm1645, %v3172, %v3567
        %v3942 = vsel %vm1645, %v3173, %v3569
        %v3943 = vsel %vm1645, %v3174, %v3571
        %v3944 = vsel %vm1645, %v3175, %v3573
        %v3945 = vsel %vm1645, %v3176, %v3575
        %v3946 = vsel %vm1645, %v3177, %v3577
        %v3947 = vsel %vm1645, %v3178, %v3579
        %v3948 = vsel %vm1645, %v3179, %v3581
        %v3949 = vsel %vm1645, %v3180, %v3583
        %v3950 = vsel %vm1645, %v3181, %v3585
        %v3951 = vsel %vm1645, %v3182, %v3587
        %v3952 = vsel %vm1645, %v3183, %v3589
        %v3953 = vsel %vm1645, %v3184, %v3591
        %v3954 = vsel %vm1645, %v3185, %v3593
        %v3955 = vsel %vm1645, %v3186, %v3595
        %v3956 = vsel %vm1645, %v3187, %v3597
        %v3957 = vsel %vm1645, %v3188, %v3599
        %v3958 = vsel %vm1645, %v3189, %v3601
        %v3959 = vsel %vm1645, %v3190, %v3603
        %v3960 = vsel %vm1645, %v3191, %v3605
        %v3961 = vsel %vm1645, %v3192, %v3607
        %v3962 = vsel %vm1645, %v3193, %v3609
        %v3963 = vsel %vm1645, %v3194, %v3611
        %v3964 = vsel %vm1645, %v3227, %v3677
        %v3965 = vsel %vm1645, %v3228, %v3679
        %v3966 = vsel %vm1645, %v3229, %v3681
        %v3967 = vsel %vm1645, %v3230, %v3683
        %v3968 = vsel %vm1645, %v3231, %v3685
        %v3969 = vsel %vm1645, %v3232, %v3687
        %v3970 = vsel %vm1645, %v3233, %v3689
        %v3971 = vsel %vm1645, %v3234, %v3691
        %v3972 = vsel %vm1645, %v3235, %v3693
        %v3973 = vsel %vm1645, %v3236, %v3695
        %v3974 = vsel %vm1645, %v3237, %v3697
        %v3975 = vsel %vm1645, %v3238, %v3699
        %v3976 = vsel %vm1645, %v3239, %v3701
        %v3977 = vsel %vm1645, %v3240, %v3703
        %v3978 = vsel %vm1645, %v3241, %v3705
        %v3979 = vsel %vm1645, %v3242, %v3707
        %v3980 = vsel %vm1645, %v3243, %v3709
        %v3981 = vsel %vm1645, %v3244, %v3711
        %v3982 = vsel %vm1645, %v3245, %v3713
        %v3983 = vsel %vm1645, %v3246, %v3715
        %v3984 = vsel %vm1645, %v3247, %v3717
        %v3985 = vsel %vm1645, %v3248, %v3719
        %v3986 = vsel %vm1645, %v3249, %v3721
        %v3987 = vsel %vm1645, %v3250, %v3723
        %v3988 = vsel %vm1645, %v3251, %v3725
        %v3989 = vsel %vm1645, %v3252, %v3727
        %v3990 = vsel %vm1645, %v3253, %v3729
        %v3991 = vsel %vm1645, %v3254, %v3731
        %v3992 = vsel %vm1645, %v3255, %v3733
        %v3993 = vsel %vm1645, %v3256, %v3735
        %v3994 = vsel %vm1645, %v3257, %v3737
        %v3995 = vsel %vm1645, %v3258, %v3739
        %v3996 = vsel %vm1645, %v3292, %v3805
        %v3997 = vsel %vm1645, %v3293, %v3807
        %v3998 = vsel %vm1645, %v3294, %v3809
        %v3999 = vsel %vm1645, %v3295, %v3811
        %v4000 = vsel %vm1645, %v3296, %v3813
        %v4001 = vsel %vm1645, %v3297, %v3815
        %v4002 = vsel %vm1645, %v3298, %v3817
        %v4003 = vsel %vm1645, %v3299, %v3819
        %v4004 = vsel %vm1645, %v3300, %v3821
        %v4005 = vsel %vm1645, %v3301, %v3823
        %v4006 = vsel %vm1645, %v3302, %v3825
        %v4007 = vsel %vm1645, %v3303, %v3827
        %v4008 = vsel %vm1645, %v3304, %v3829
        %v4009 = vsel %vm1645, %v3305, %v3831
        %v4010 = vsel %vm1645, %v3306, %v3833
        %v4011 = vsel %vm1645, %v3307, %v3835
        %v4012 = vsel %vm1645, %v3308, %v3837
        %v4013 = vsel %vm1645, %v3309, %v3839
        %v4014 = vsel %vm1645, %v3310, %v3841
        %v4015 = vsel %vm1645, %v3311, %v3843
        %v4016 = vsel %vm1645, %v3312, %v3845
        %v4017 = vsel %vm1645, %v3313, %v3847
        %v4018 = vsel %vm1645, %v3314, %v3849
        %v4019 = vsel %vm1645, %v3315, %v3851
        %v4020 = vsel %vm1645, %v3316, %v3853
        %v4021 = vsel %vm1645, %v3317, %v3855
        %v4022 = vsel %vm1645, %v3318, %v3857
        %v4023 = vsel %vm1645, %v3319, %v3859
        %v4024 = vsel %vm1645, %v3320, %v3861
        %v4025 = vsel %vm1645, %v3321, %v3863
        %v4026 = vsel %vm1645, %v3322, %v3865
        %v4027 = vsel %vm1645, %v3323, %v3867
        %v4028 = vpack.c.bf16 %v3901, %v3900
        %v4029 = vpack.c.bf16 %v3933, %v3932
        %v4030 = vpack.c.bf16 %v3965, %v3964
        %v4031 = vpack.c.bf16 %v3997, %v3996
        %v4032 = vpack.c.bf16 %v3357, %v3356
        %v4033 = vpack.c.bf16 %v3903, %v3902
        %v4034 = vpack.c.bf16 %v3935, %v3934
        %v4035 = vpack.c.bf16 %v3967, %v3966
        %v4036 = vpack.c.bf16 %v3999, %v3998
        %v4037 = vpack.c.bf16 %v3359, %v3358
        %v4038 = vpack.c.bf16 %v3905, %v3904
        %v4039 = vpack.c.bf16 %v3937, %v3936
        %v4040 = vpack.c.bf16 %v3969, %v3968
        %v4041 = vpack.c.bf16 %v4001, %v4000
        %v4042 = vpack.c.bf16 %v3361, %v3360
        %v4043 = vpack.c.bf16 %v3907, %v3906
        %v4044 = vpack.c.bf16 %v3939, %v3938
        %v4045 = vpack.c.bf16 %v3971, %v3970
        %v4046 = vpack.c.bf16 %v4003, %v4002
        %v4047 = vpack.c.bf16 %v3363, %v3362
        %v4048 = vpack.c.bf16 %v3909, %v3908
        %v4049 = vpack.c.bf16 %v3941, %v3940
        %v4050 = vpack.c.bf16 %v3973, %v3972
        %v4051 = vpack.c.bf16 %v4005, %v4004
        %v4052 = vpack.c.bf16 %v3365, %v3364
        %v4053 = vpack.c.bf16 %v3911, %v3910
        %v4054 = vpack.c.bf16 %v3943, %v3942
        %v4055 = vpack.c.bf16 %v3975, %v3974
        %v4056 = vpack.c.bf16 %v4007, %v4006
        %v4057 = vpack.c.bf16 %v3367, %v3366
        %v4058 = vpack.c.bf16 %v3913, %v3912
        %v4059 = vpack.c.bf16 %v3945, %v3944
        %v4060 = vpack.c.bf16 %v3977, %v3976
        %v4061 = vpack.c.bf16 %v4009, %v4008
        %v4062 = vpack.c.bf16 %v3369, %v3368
        %v4063 = vpack.c.bf16 %v3915, %v3914
        %v4064 = vpack.c.bf16 %v3947, %v3946
        %v4065 = vpack.c.bf16 %v3979, %v3978
        %v4066 = vpack.c.bf16 %v4011, %v4010
        %v4067 = vpack.c.bf16 %v3371, %v3370
        %v4068 = vpack.c.bf16 %v3917, %v3916
        %v4069 = vpack.c.bf16 %v3949, %v3948
        %v4070 = vpack.c.bf16 %v3981, %v3980
        %v4071 = vpack.c.bf16 %v4013, %v4012
        %v4072 = vpack.c.bf16 %v3373, %v3372
        %v4073 = vpack.c.bf16 %v3919, %v3918
        %v4074 = vpack.c.bf16 %v3951, %v3950
        %v4075 = vpack.c.bf16 %v3983, %v3982
        %v4076 = vpack.c.bf16 %v4015, %v4014
        %v4077 = vpack.c.bf16 %v3375, %v3374
        %v4078 = vpack.c.bf16 %v3921, %v3920
        %v4079 = vpack.c.bf16 %v3953, %v3952
        %v4080 = vpack.c.bf16 %v3985, %v3984
        %v4081 = vpack.c.bf16 %v4017, %v4016
        %v4082 = vpack.c.bf16 %v3377, %v3376
        %v4083 = vpack.c.bf16 %v3923, %v3922
        %v4084 = vpack.c.bf16 %v3955, %v3954
        %v4085 = vpack.c.bf16 %v3987, %v3986
        %v4086 = vpack.c.bf16 %v4019, %v4018
        %v4087 = vpack.c.bf16 %v3379, %v3378
        %v4088 = vpack.c.bf16 %v3925, %v3924
        %v4089 = vpack.c.bf16 %v3957, %v3956
        %v4090 = vpack.c.bf16 %v3989, %v3988
        %v4091 = vpack.c.bf16 %v4021, %v4020
        %v4092 = vpack.c.bf16 %v3381, %v3380
        %v4093 = vpack.c.bf16 %v3927, %v3926
        %v4094 = vpack.c.bf16 %v3959, %v3958
        %v4095 = vpack.c.bf16 %v3991, %v3990
        %v4096 = vpack.c.bf16 %v4023, %v4022
        %v4097 = vpack.c.bf16 %v3383, %v3382
        %v4098 = vpack.c.bf16 %v3929, %v3928
        %v4099 = vpack.c.bf16 %v3961, %v3960
        %v4100 = vpack.c.bf16 %v3993, %v3992
        %v4101 = vpack.c.bf16 %v4025, %v4024
        %v4102 = vpack.c.bf16 %v3385, %v3384
        %v4103 = vpack.c.bf16 %v3931, %v3930
        %v4104 = vpack.c.bf16 %v3963, %v3962
        %v4105 = vpack.c.bf16 %v3995, %v3994
        %v4106 = vpack.c.bf16 %v4027, %v4026
        %v4107 = vpack.c.bf16 %v3387, %v3386
        %v4108 = vld [vmem:[%s5] sm:$0xf]
        %v4109 = vld [vmem:[%s5 + $0x4] sm:$0xf]
        %v4110 = vld [vmem:[%s5 + $0x8] sm:$0xf]
        %v4111 = vld [vmem:[%s5 + $0xc] sm:$0xf]
        %v4112 = vld [vmem:[%s5 + $0x10] sm:$0xf]
        %v4113 = vld [vmem:[%s5 + $0x14] sm:$0xf]
        %v4114 = vld [vmem:[%s5 + $0x18] sm:$0xf]
        %v4115 = vld [vmem:[%s5 + $0x1c] sm:$0xf]
        %v4116 = vld [vmem:[%s5 + $0x20] sm:$0xf]
        %v4117 = vld [vmem:[%s5 + $0x24] sm:$0xf]
        %v4118 = vld [vmem:[%s5 + $0x28] sm:$0xf]
        %v4119 = vld [vmem:[%s5 + $0x2c] sm:$0xf]
        %v4120 = vld [vmem:[%s5 + $0x30] sm:$0xf]
        %v4121 = vld [vmem:[%s5 + $0x34] sm:$0xf]
        %v4122 = vld [vmem:[%s5 + $0x38] sm:$0xf]
        %v4123 = vld [vmem:[%s5 + $0x3c] sm:$0xf]
        %v4124 = vld [vmem:[%s5 + $0x40] sm:$0xf]
        %v4125 = vld [vmem:[%s5 + $0x44] sm:$0xf]
        %v4126 = vld [vmem:[%s5 + $0x48] sm:$0xf]
        %v4127 = vld [vmem:[%s5 + $0x4c] sm:$0xf]
        %v4128 = vld [vmem:[%s5 + $0x50] sm:$0xf]
        %v4129 = vld [vmem:[%s5 + $0x54] sm:$0xf]
        %v4130 = vld [vmem:[%s5 + $0x58] sm:$0xf]
        %v4131 = vld [vmem:[%s5 + $0x5c] sm:$0xf]
        %v4132 = vld [vmem:[%s5 + $0x60] sm:$0xf]
        %v4133 = vld [vmem:[%s5 + $0x64] sm:$0xf]
        %v4134 = vld [vmem:[%s5 + $0x68] sm:$0xf]
        %v4135 = vld [vmem:[%s5 + $0x6c] sm:$0xf]
        %v4136 = vld [vmem:[%s5 + $0x70] sm:$0xf]
        %v4137 = vld [vmem:[%s5 + $0x74] sm:$0xf]
        %v4138 = vld [vmem:[%s5 + $0x78] sm:$0xf]
        %v4139 = vld [vmem:[%s5 + $0x7c] sm:$0xf]
        %v4140 = vld [vmem:[%s5 + $0x80] sm:$0xf]
        %v4141 = vld [vmem:[%s5 + $0x84] sm:$0xf]
        %v4142 = vld [vmem:[%s5 + $0x88] sm:$0xf]
        %v4143 = vld [vmem:[%s5 + $0x8c] sm:$0xf]
        %v4144 = vld [vmem:[%s5 + $0x90] sm:$0xf]
        %v4145 = vld [vmem:[%s5 + $0x94] sm:$0xf]
        %v4146 = vld [vmem:[%s5 + $0x98] sm:$0xf]
        %v4147 = vld [vmem:[%s5 + $0x9c] sm:$0xf]
        %v4148 = vld [vmem:[%s5 + $0xa0] sm:$0xf]
        %v4149 = vld [vmem:[%s5 + $0xa4] sm:$0xf]
        %v4150 = vld [vmem:[%s5 + $0xa8] sm:$0xf]
        %v4151 = vld [vmem:[%s5 + $0xac] sm:$0xf]
        %v4152 = vld [vmem:[%s5 + $0xb0] sm:$0xf]
        %v4153 = vld [vmem:[%s5 + $0xb4] sm:$0xf]
        %v4154 = vld [vmem:[%s5 + $0xb8] sm:$0xf]
        %v4155 = vld [vmem:[%s5 + $0xbc] sm:$0xf]
        %v4156 = vld [vmem:[%s5 + $0xc0] sm:$0xf]
        %v4157 = vld [vmem:[%s5 + $0xc4] sm:$0xf]
        %v4158 = vld [vmem:[%s5 + $0xc8] sm:$0xf]
        %v4159 = vld [vmem:[%s5 + $0xcc] sm:$0xf]
        %v4160 = vld [vmem:[%s5 + $0xd0] sm:$0xf]
        %v4161 = vld [vmem:[%s5 + $0xd4] sm:$0xf]
        %v4162 = vld [vmem:[%s5 + $0xd8] sm:$0xf]
        %v4163 = vld [vmem:[%s5 + $0xdc] sm:$0xf]
        %v4164 = vld [vmem:[%s5 + $0xe0] sm:$0xf]
        %v4165 = vld [vmem:[%s5 + $0xe4] sm:$0xf]
        %v4166 = vld [vmem:[%s5 + $0xe8] sm:$0xf]
        %v4167 = vld [vmem:[%s5 + $0xec] sm:$0xf]
        %v4168 = vld [vmem:[%s5 + $0xf0] sm:$0xf]
        %v4169 = vld [vmem:[%s5 + $0xf4] sm:$0xf]
        %v4170 = vld [vmem:[%s5 + $0xf8] sm:$0xf]
        %v4171 = vld [vmem:[%s5 + $0xfc] sm:$0xf]
        %v4172 = vld [vmem:[%s5 + $0x100] sm:$0xf]
        %v4173 = vld [vmem:[%s5 + $0x104] sm:$0xf]
        %v4174 = vld [vmem:[%s5 + $0x108] sm:$0xf]
        %v4175 = vld [vmem:[%s5 + $0x10c] sm:$0xf]
        %v4176 = vld [vmem:[%s5 + $0x110] sm:$0xf]
        %v4177 = vld [vmem:[%s5 + $0x114] sm:$0xf]
        %v4178 = vld [vmem:[%s5 + $0x118] sm:$0xf]
        %v4179 = vld [vmem:[%s5 + $0x11c] sm:$0xf]
        %v4180 = vld [vmem:[%s6] sm:$0x1]
        %v4182 = vlaneseq
        %v4183 = vshrl.u32 %v4182, 7
        %v4184 = vsub.s32 0, %v4183
        %v4185 = vrot.slane %v4180, %v4184
        %v4259 = vunpack.c.l.b16 %v4108
        %v4260 = vunpack.c.l.b16 %v4109
        %v4261 = vunpack.c.l.b16 %v4110
        %v4262 = vunpack.c.l.b16 %v4111
        %v4263 = vunpack.c.l.b16 %v4112
        %v4264 = vunpack.c.l.b16 %v4113
        %v4265 = vunpack.c.l.b16 %v4114
        %v4266 = vunpack.c.l.b16 %v4115
        %v4267 = vunpack.c.l.b16 %v4116
        %v4268 = vunpack.c.l.b16 %v4117
        %v4269 = vunpack.c.l.b16 %v4118
        %v4270 = vunpack.c.l.b16 %v4119
        %v4271 = vunpack.c.l.b16 %v4120
        %v4272 = vunpack.c.l.b16 %v4121
        %v4273 = vunpack.c.l.b16 %v4122
        %v4274 = vunpack.c.l.b16 %v4123
        %v4275 = vunpack.c.l.b16 %v4124
        %v4276 = vunpack.c.l.b16 %v4125
        %v4277 = vunpack.c.l.b16 %v4126
        %v4278 = vunpack.c.l.b16 %v4127
        %v4279 = vunpack.c.l.b16 %v4128
        %v4280 = vunpack.c.l.b16 %v4129
        %v4281 = vunpack.c.l.b16 %v4130
        %v4282 = vunpack.c.l.b16 %v4131
        %v4283 = vunpack.c.l.b16 %v4132
        %v4284 = vunpack.c.l.b16 %v4133
        %v4285 = vunpack.c.l.b16 %v4134
        %v4286 = vunpack.c.l.b16 %v4135
        %v4287 = vunpack.c.l.b16 %v4136
        %v4288 = vunpack.c.l.b16 %v4137
        %v4289 = vunpack.c.l.b16 %v4138
        %v4290 = vunpack.c.l.b16 %v4139
        %v4291 = vunpack.c.l.b16 %v4140
        %v4292 = vunpack.c.l.b16 %v4141
        %v4293 = vunpack.c.l.b16 %v4142
        %v4294 = vunpack.c.l.b16 %v4143
        %v4295 = vunpack.c.l.b16 %v4144
        %v4296 = vunpack.c.l.b16 %v4145
        %v4297 = vunpack.c.l.b16 %v4146
        %v4298 = vunpack.c.l.b16 %v4147
        %v4299 = vunpack.c.l.b16 %v4148
        %v4300 = vunpack.c.l.b16 %v4149
        %v4301 = vunpack.c.l.b16 %v4150
        %v4302 = vunpack.c.l.b16 %v4151
        %v4303 = vunpack.c.l.b16 %v4152
        %v4304 = vunpack.c.l.b16 %v4153
        %v4305 = vunpack.c.l.b16 %v4154
        %v4306 = vunpack.c.l.b16 %v4155
        %v4307 = vunpack.c.l.b16 %v4156
        %v4308 = vunpack.c.l.b16 %v4157
        %v4309 = vunpack.c.l.b16 %v4158
        %v4310 = vunpack.c.l.b16 %v4159
        %v4311 = vunpack.c.l.b16 %v4160
        %v4312 = vunpack.c.l.b16 %v4161
        %v4313 = vunpack.c.l.b16 %v4162
        %v4314 = vunpack.c.l.b16 %v4163
        %v4315 = vunpack.c.l.b16 %v4164
        %v4316 = vunpack.c.l.b16 %v4165
        %v4317 = vunpack.c.l.b16 %v4166
        %v4318 = vunpack.c.l.b16 %v4167
        %v4319 = vunpack.c.l.b16 %v4168
        %v4320 = vunpack.c.l.b16 %v4169
        %v4321 = vunpack.c.l.b16 %v4170
        %v4322 = vunpack.c.l.b16 %v4171
        %v4323 = vunpack.c.l.b16 %v4172
        %v4324 = vunpack.c.l.b16 %v4173
        %v4325 = vunpack.c.l.b16 %v4174
        %v4326 = vunpack.c.l.b16 %v4175
        %v4327 = vunpack.c.l.b16 %v4176
        %v4328 = vunpack.c.l.b16 %v4177
        %v4329 = vunpack.c.l.b16 %v4178
        %v4330 = vunpack.c.l.b16 %v4179
        %v4331 = vpack.c.b16 %v4260, %v4259
        %v4332 = vpack.c.b16 %v4262, %v4261
        %v4333 = vpack.c.b16 %v4264, %v4263
        %v4334 = vpack.c.b16 %v4266, %v4265
        %v4335 = vpack.c.b16 %v4268, %v4267
        %v4336 = vpack.c.b16 %v4270, %v4269
        %v4337 = vpack.c.b16 %v4272, %v4271
        %v4338 = vpack.c.b16 %v4274, %v4273
        %v4339 = vpack.c.b16 %v4276, %v4275
        %v4340 = vpack.c.b16 %v4278, %v4277
        %v4341 = vpack.c.b16 %v4280, %v4279
        %v4342 = vpack.c.b16 %v4282, %v4281
        %v4343 = vpack.c.b16 %v4284, %v4283
        %v4344 = vpack.c.b16 %v4286, %v4285
        %v4345 = vpack.c.b16 %v4288, %v4287
        %v4346 = vpack.c.b16 %v4290, %v4289
        %v4347 = vpack.c.b16 %v4292, %v4291
        %v4348 = vpack.c.b16 %v4294, %v4293
        %v4349 = vpack.c.b16 %v4296, %v4295
        %v4350 = vpack.c.b16 %v4298, %v4297
        %v4351 = vpack.c.b16 %v4300, %v4299
        %v4352 = vpack.c.b16 %v4302, %v4301
        %v4353 = vpack.c.b16 %v4304, %v4303
        %v4354 = vpack.c.b16 %v4306, %v4305
        %v4355 = vpack.c.b16 %v4308, %v4307
        %v4356 = vpack.c.b16 %v4310, %v4309
        %v4357 = vpack.c.b16 %v4312, %v4311
        %v4358 = vpack.c.b16 %v4314, %v4313
        %v4359 = vpack.c.b16 %v4316, %v4315
        %v4360 = vpack.c.b16 %v4318, %v4317
        %v4361 = vpack.c.b16 %v4320, %v4319
        %v4362 = vpack.c.b16 %v4322, %v4321
        %v4363 = vpack.c.b16 %v4324, %v4323
        %v4364 = vpack.c.b16 %v4326, %v4325
        %v4365 = vpack.c.b16 %v4328, %v4327
        %v4366 = vpack.c.b16 %v4330, %v4329
        %v4404 = vsel %vm1645, %v4032, 0
        %v4407 = vsel %vm1645, %v4037, 0
        %v4410 = vsel %vm1645, %v4042, 0
        %v4413 = vsel %vm1645, %v4047, 0
        %v4416 = vsel %vm1645, %v4052, 0
        %v4419 = vsel %vm1645, %v4057, 0
        %v4422 = vsel %vm1645, %v4062, 0
        %v4425 = vsel %vm1645, %v4067, 0
        %v4428 = vsel %vm1645, %v4072, 0
        %v4431 = vsel %vm1645, %v4077, 0
        %v4434 = vsel %vm1645, %v4082, 0
        %v4437 = vsel %vm1645, %v4087, 0
        %v4440 = vsel %vm1645, %v4092, 0
        %v4443 = vsel %vm1645, %v4097, 0
        %v4446 = vsel %vm1645, %v4102, 0
        %v4449 = vsel %vm1645, %v4107, 0
        %4451 = vmatprep.subr.bf16.mxu0 0
        %4452 = vmatpush1.bf16.msra.mxu0 %v4331
        %4453 = vmatprep.subr.bf16.mxu0 0
        %4454 = vmatpush1.bf16.msra.mxu0 %v4332
        %4455 = vmatprep.subr.bf16.mxu0 0
        %4456 = vmatpush1.bf16.msra.mxu0 %v4333
        %4457 = vmatprep.subr.bf16.mxu0 0
        %4458 = vmatpush1.bf16.msra.mxu0 %v4334
        %4459 = vmatprep.subr.bf16.mxu0 0
        %4460 = vmatpush1.bf16.msra.mxu0 %v4335
        %4461 = vmatprep.subr.bf16.mxu0 0
        %4462 = vmatpush1.bf16.msra.mxu0 %v4336
        %4463 = vmatprep.subr.bf16.mxu0 0
        %4464 = vmatpush1.bf16.msra.mxu0 %v4337
        %4465 = vmatprep.subr.bf16.mxu0 0
        %4466 = vmatpush1.bf16.msra.mxu0 %v4338
        %4467 = vmatprep.subr.bf16.mxu0 0
        %4468 = vmatpush1.bf16.msra.mxu0 %v4339
        %4469 = vmatprep.subr.bf16.mxu0 0
        %4470 = vmatpush1.bf16.msra.mxu0 %v4340
        %4471 = vmatprep.subr.bf16.mxu0 0
        %4472 = vmatpush1.bf16.msra.mxu0 %v4341
        %4473 = vmatprep.subr.bf16.mxu0 0
        %4474 = vmatpush1.bf16.msra.mxu0 %v4342
        %4475 = vmatprep.subr.bf16.mxu0 0
        %4476 = vmatpush1.bf16.msra.mxu0 %v4343
        %4477 = vmatprep.subr.bf16.mxu0 0
        %4478 = vmatpush1.bf16.msra.mxu0 %v4344
        %4479 = vmatprep.subr.bf16.mxu0 0
        %4480 = vmatpush1.bf16.msra.mxu0 %v4345
        %4481 = vmatprep.subr.bf16.mxu0 0
        %4482 = vmatpush1.bf16.msra.mxu0 %v4346
        %4483 = vmatprep.mubr.bf16.mxu0 %v4029
        %4484 = vmatmul.mubr.bf16.gmra.mrb[0].mxu0 %v4028
        %v4485 = vpop.f32.mrb[0].mxu0
        %v4486 = vadd.f32 %v4185, %v4485
        %v4487 = vpop.f32.mrb[0].mxu0
        %v4488 = vpop.f32.mrb[0].mxu0
        %v4489 = vadd.f32 %v4185, %v4488
        %v4490 = vpop.f32.mrb[0].mxu0
        %4491 = vmatprep.mubr.bf16.mxu0 %v4034
        %4492 = vmatmul.mubr.bf16.gmra.mrb[0].mxu0 %v4033
        %v4493 = vpop.f32.mrb[0].mxu0
        %v4494 = vadd.f32 %v4185, %v4493
        %v4495 = vpop.f32.mrb[0].mxu0
        %v4496 = vpop.f32.mrb[0].mxu0
        %v4497 = vadd.f32 %v4185, %v4496
        %v4498 = vpop.f32.mrb[0].mxu0
        %4499 = vmatprep.mubr.bf16.mxu0 %v4039
        %4500 = vmatmul.mubr.bf16.gmra.mrb[0].mxu0 %v4038
        %v4501 = vpop.f32.mrb[0].mxu0
        %v4502 = vadd.f32 %v4185, %v4501
        %v4503 = vpop.f32.mrb[0].mxu0
        %v4504 = vpop.f32.mrb[0].mxu0
        %v4505 = vadd.f32 %v4185, %v4504
        %v4506 = vpop.f32.mrb[0].mxu0
        %4507 = vmatprep.mubr.bf16.mxu0 %v4044
        %4508 = vmatmul.mubr.bf16.gmra.mrb[0].mxu0 %v4043
        %v4509 = vpop.f32.mrb[0].mxu0
        %v4510 = vadd.f32 %v4185, %v4509
        %v4511 = vpop.f32.mrb[0].mxu0
        %v4512 = vpop.f32.mrb[0].mxu0
        %v4513 = vadd.f32 %v4185, %v4512
        %v4514 = vpop.f32.mrb[0].mxu0
        %4515 = vmatprep.mubr.bf16.mxu0 %v4049
        %4516 = vmatmul.mubr.bf16.gmra.mrb[0].mxu0 %v4048
        %v4517 = vpop.f32.mrb[0].mxu0
        %v4518 = vadd.f32 %v4185, %v4517
        %v4519 = vpop.f32.mrb[0].mxu0
        %v4520 = vpop.f32.mrb[0].mxu0
        %v4521 = vadd.f32 %v4185, %v4520
        %v4522 = vpop.f32.mrb[0].mxu0
        %4523 = vmatprep.mubr.bf16.mxu0 %v4054
        %4524 = vmatmul.mubr.bf16.gmra.mrb[0].mxu0 %v4053
        %v4525 = vpop.f32.mrb[0].mxu0
        %v4526 = vadd.f32 %v4185, %v4525
        %v4527 = vpop.f32.mrb[0].mxu0
        %v4528 = vpop.f32.mrb[0].mxu0
        %v4529 = vadd.f32 %v4185, %v4528
        %v4530 = vpop.f32.mrb[0].mxu0
        %4531 = vmatprep.mubr.bf16.mxu0 %v4059
        %4532 = vmatmul.mubr.bf16.gmra.mrb[0].mxu0 %v4058
        %v4533 = vpop.f32.mrb[0].mxu0
        %v4534 = vadd.f32 %v4185, %v4533
        %v4535 = vpop.f32.mrb[0].mxu0
        %v4536 = vpop.f32.mrb[0].mxu0
        %v4537 = vadd.f32 %v4185, %v4536
        %v4538 = vpop.f32.mrb[0].mxu0
        %4539 = vmatprep.mubr.bf16.mxu0 %v4064
        %4540 = vmatmul.mubr.bf16.gmra.mrb[0].mxu0 %v4063
        %v4541 = vpop.f32.mrb[0].mxu0
        %v4542 = vadd.f32 %v4185, %v4541
        %v4543 = vpop.f32.mrb[0].mxu0
        %v4544 = vpop.f32.mrb[0].mxu0
        %v4545 = vadd.f32 %v4185, %v4544
        %v4546 = vpop.f32.mrb[0].mxu0
        %4547 = vmatprep.mubr.bf16.mxu0 %v4069
        %4548 = vmatmul.mubr.bf16.gmra.mrb[0].mxu0 %v4068
        %v4549 = vpop.f32.mrb[0].mxu0
        %v4550 = vadd.f32 %v4185, %v4549
        %v4551 = vpop.f32.mrb[0].mxu0
        %v4552 = vpop.f32.mrb[0].mxu0
        %v4553 = vadd.f32 %v4185, %v4552
        %v4554 = vpop.f32.mrb[0].mxu0
        %4555 = vmatprep.mubr.bf16.mxu0 %v4074
        %4556 = vmatmul.mubr.bf16.gmra.mrb[0].mxu0 %v4073
        %v4557 = vpop.f32.mrb[0].mxu0
        %v4558 = vadd.f32 %v4185, %v4557
        %v4559 = vpop.f32.mrb[0].mxu0
        %v4560 = vpop.f32.mrb[0].mxu0
        %v4561 = vadd.f32 %v4185, %v4560
        %v4562 = vpop.f32.mrb[0].mxu0
        %4563 = vmatprep.mubr.bf16.mxu0 %v4079
        %4564 = vmatmul.mubr.bf16.gmra.mrb[0].mxu0 %v4078
        %v4565 = vpop.f32.mrb[0].mxu0
        %v4566 = vadd.f32 %v4185, %v4565
        %v4567 = vpop.f32.mrb[0].mxu0
        %v4568 = vpop.f32.mrb[0].mxu0
        %v4569 = vadd.f32 %v4185, %v4568
        %v4570 = vpop.f32.mrb[0].mxu0
        %4571 = vmatprep.mubr.bf16.mxu0 %v4084
        %4572 = vmatmul.mubr.bf16.gmra.mrb[0].mxu0 %v4083
        %v4573 = vpop.f32.mrb[0].mxu0
        %v4574 = vadd.f32 %v4185, %v4573
        %v4575 = vpop.f32.mrb[0].mxu0
        %v4576 = vpop.f32.mrb[0].mxu0
        %v4577 = vadd.f32 %v4185, %v4576
        %v4578 = vpop.f32.mrb[0].mxu0
        %4579 = vmatprep.mubr.bf16.mxu0 %v4089
        %4580 = vmatmul.mubr.bf16.gmra.mrb[0].mxu0 %v4088
        %v4581 = vpop.f32.mrb[0].mxu0
        %v4582 = vadd.f32 %v4185, %v4581
        %v4583 = vpop.f32.mrb[0].mxu0
        %v4584 = vpop.f32.mrb[0].mxu0
        %v4585 = vadd.f32 %v4185, %v4584
        %v4586 = vpop.f32.mrb[0].mxu0
        %4587 = vmatprep.mubr.bf16.mxu0 %v4094
        %4588 = vmatmul.mubr.bf16.gmra.mrb[0].mxu0 %v4093
        %v4589 = vpop.f32.mrb[0].mxu0
        %v4590 = vadd.f32 %v4185, %v4589
        %v4591 = vpop.f32.mrb[0].mxu0
        %v4592 = vpop.f32.mrb[0].mxu0
        %v4593 = vadd.f32 %v4185, %v4592
        %v4594 = vpop.f32.mrb[0].mxu0
        %4595 = vmatprep.mubr.bf16.mxu0 %v4099
        %4596 = vmatmul.mubr.bf16.gmra.mrb[0].mxu0 %v4098
        %v4597 = vpop.f32.mrb[0].mxu0
        %v4598 = vadd.f32 %v4185, %v4597
        %v4599 = vpop.f32.mrb[0].mxu0
        %v4600 = vpop.f32.mrb[0].mxu0
        %v4601 = vadd.f32 %v4185, %v4600
        %v4602 = vpop.f32.mrb[0].mxu0
        %4603 = vmatprep.mubr.bf16.mxu0 %v4104
        %4604 = vmatmul.mubr.bf16.gmra.mrb[0].mxu0 %v4103
        %v4605 = vpop.f32.mrb[0].mxu0
        %v4606 = vadd.f32 %v4185, %v4605
        %v4607 = vpop.f32.mrb[0].mxu0
        %v4608 = vpop.f32.mrb[0].mxu0
        %v4609 = vadd.f32 %v4185, %v4608
        %v4610 = vpop.f32.mrb[0].mxu0
        %4611 = vdwg.mxu0
        %4612 = vmatprep.subr.bf16.mxu0 0
        %4613 = vmatpush1.bf16.msra.mxu0 %v4347
        %4614 = vmatprep.subr.bf16.mxu0 0
        %4615 = vmatpush1.bf16.msra.mxu0 %v4348
        %4616 = vmatprep.subr.bf16.mxu0 0
        %4617 = vmatpush1.bf16.msra.mxu0 %v4349
        %4618 = vmatprep.subr.bf16.mxu0 0
        %4619 = vmatpush1.bf16.msra.mxu0 %v4350
        %4620 = vmatprep.subr.bf16.mxu0 0
        %4621 = vmatpush1.bf16.msra.mxu0 %v4351
        %4622 = vmatprep.subr.bf16.mxu0 0
        %4623 = vmatpush1.bf16.msra.mxu0 %v4352
        %4624 = vmatprep.subr.bf16.mxu0 0
        %4625 = vmatpush1.bf16.msra.mxu0 %v4353
        %4626 = vmatprep.subr.bf16.mxu0 0
        %4627 = vmatpush1.bf16.msra.mxu0 %v4354
        %4628 = vmatprep.subr.bf16.mxu0 0
        %4629 = vmatpush1.bf16.msra.mxu0 %v4355
        %4630 = vmatprep.subr.bf16.mxu0 0
        %4631 = vmatpush1.bf16.msra.mxu0 %v4356
        %4632 = vmatprep.subr.bf16.mxu0 0
        %4633 = vmatpush1.bf16.msra.mxu0 %v4357
        %4634 = vmatprep.subr.bf16.mxu0 0
        %4635 = vmatpush1.bf16.msra.mxu0 %v4358
        %4636 = vmatprep.subr.bf16.mxu0 0
        %4637 = vmatpush1.bf16.msra.mxu0 %v4359
        %4638 = vmatprep.subr.bf16.mxu0 0
        %4639 = vmatpush1.bf16.msra.mxu0 %v4360
        %4640 = vmatprep.subr.bf16.mxu0 0
        %4641 = vmatpush1.bf16.msra.mxu0 %v4361
        %4642 = vmatprep.subr.bf16.mxu0 0
        %4643 = vmatpush1.bf16.msra.mxu0 %v4362
        %4644 = vmatprep.mubr.bf16.mxu0 %v4031
        %4645 = vmatmul.mubr.bf16.gmra.mrb[0].mxu0 %v4030
        %v4646 = vpop.f32.mrb[0].mxu0
        %v4647 = vadd.f32 %v4486, %v4646
        %v4648 = vpop.f32.mrb[0].mxu0
        %v4649 = vpop.f32.mrb[0].mxu0
        %v4650 = vadd.f32 %v4489, %v4649
        %v4651 = vpop.f32.mrb[0].mxu0
        %4652 = vmatprep.mubr.bf16.mxu0 %v4036
        %4653 = vmatmul.mubr.bf16.gmra.mrb[0].mxu0 %v4035
        %v4654 = vpop.f32.mrb[0].mxu0
        %v4655 = vadd.f32 %v4494, %v4654
        %v4656 = vpop.f32.mrb[0].mxu0
        %v4657 = vpop.f32.mrb[0].mxu0
        %v4658 = vadd.f32 %v4497, %v4657
        %v4659 = vpop.f32.mrb[0].mxu0
        %4660 = vmatprep.mubr.bf16.mxu0 %v4041
        %4661 = vmatmul.mubr.bf16.gmra.mrb[0].mxu0 %v4040
        %v4662 = vpop.f32.mrb[0].mxu0
        %v4663 = vadd.f32 %v4502, %v4662
        %v4664 = vpop.f32.mrb[0].mxu0
        %v4665 = vpop.f32.mrb[0].mxu0
        %v4666 = vadd.f32 %v4505, %v4665
        %v4667 = vpop.f32.mrb[0].mxu0
        %4668 = vmatprep.mubr.bf16.mxu0 %v4046
        %4669 = vmatmul.mubr.bf16.gmra.mrb[0].mxu0 %v4045
        %v4670 = vpop.f32.mrb[0].mxu0
        %v4671 = vadd.f32 %v4510, %v4670
        %v4672 = vpop.f32.mrb[0].mxu0
        %v4673 = vpop.f32.mrb[0].mxu0
        %v4674 = vadd.f32 %v4513, %v4673
        %v4675 = vpop.f32.mrb[0].mxu0
        %4676 = vmatprep.mubr.bf16.mxu0 %v4051
        %4677 = vmatmul.mubr.bf16.gmra.mrb[0].mxu0 %v4050
        %v4678 = vpop.f32.mrb[0].mxu0
        %v4679 = vadd.f32 %v4518, %v4678
        %v4680 = vpop.f32.mrb[0].mxu0
        %v4681 = vpop.f32.mrb[0].mxu0
        %v4682 = vadd.f32 %v4521, %v4681
        %v4683 = vpop.f32.mrb[0].mxu0
        %4684 = vmatprep.mubr.bf16.mxu0 %v4056
        %4685 = vmatmul.mubr.bf16.gmra.mrb[0].mxu0 %v4055
        %v4686 = vpop.f32.mrb[0].mxu0
        %v4687 = vadd.f32 %v4526, %v4686
        %v4688 = vpop.f32.mrb[0].mxu0
        %v4689 = vpop.f32.mrb[0].mxu0
        %v4690 = vadd.f32 %v4529, %v4689
        %v4691 = vpop.f32.mrb[0].mxu0
        %4692 = vmatprep.mubr.bf16.mxu0 %v4061
        %4693 = vmatmul.mubr.bf16.gmra.mrb[0].mxu0 %v4060
        %v4694 = vpop.f32.mrb[0].mxu0
        %v4695 = vadd.f32 %v4534, %v4694
        %v4696 = vpop.f32.mrb[0].mxu0
        %v4697 = vpop.f32.mrb[0].mxu0
        %v4698 = vadd.f32 %v4537, %v4697
        %v4699 = vpop.f32.mrb[0].mxu0
        %4700 = vmatprep.mubr.bf16.mxu0 %v4066
        %4701 = vmatmul.mubr.bf16.gmra.mrb[0].mxu0 %v4065
        %v4702 = vpop.f32.mrb[0].mxu0
        %v4703 = vadd.f32 %v4542, %v4702
        %v4704 = vpop.f32.mrb[0].mxu0
        %v4705 = vpop.f32.mrb[0].mxu0
        %v4706 = vadd.f32 %v4545, %v4705
        %v4707 = vpop.f32.mrb[0].mxu0
        %4708 = vmatprep.mubr.bf16.mxu0 %v4071
        %4709 = vmatmul.mubr.bf16.gmra.mrb[0].mxu0 %v4070
        %v4710 = vpop.f32.mrb[0].mxu0
        %v4711 = vadd.f32 %v4550, %v4710
        %v4712 = vpop.f32.mrb[0].mxu0
        %v4713 = vpop.f32.mrb[0].mxu0
        %v4714 = vadd.f32 %v4553, %v4713
        %v4715 = vpop.f32.mrb[0].mxu0
        %4716 = vmatprep.mubr.bf16.mxu0 %v4076
        %4717 = vmatmul.mubr.bf16.gmra.mrb[0].mxu0 %v4075
        %v4718 = vpop.f32.mrb[0].mxu0
        %v4719 = vadd.f32 %v4558, %v4718
        %v4720 = vpop.f32.mrb[0].mxu0
        %v4721 = vpop.f32.mrb[0].mxu0
        %v4722 = vadd.f32 %v4561, %v4721
        %v4723 = vpop.f32.mrb[0].mxu0
        %4724 = vmatprep.mubr.bf16.mxu0 %v4081
        %4725 = vmatmul.mubr.bf16.gmra.mrb[0].mxu0 %v4080
        %v4726 = vpop.f32.mrb[0].mxu0
        %v4727 = vadd.f32 %v4566, %v4726
        %v4728 = vpop.f32.mrb[0].mxu0
        %v4729 = vpop.f32.mrb[0].mxu0
        %v4730 = vadd.f32 %v4569, %v4729
        %v4731 = vpop.f32.mrb[0].mxu0
        %4732 = vmatprep.mubr.bf16.mxu0 %v4086
        %4733 = vmatmul.mubr.bf16.gmra.mrb[0].mxu0 %v4085
        %v4734 = vpop.f32.mrb[0].mxu0
        %v4735 = vadd.f32 %v4574, %v4734
        %v4736 = vpop.f32.mrb[0].mxu0
        %v4737 = vpop.f32.mrb[0].mxu0
        %v4738 = vadd.f32 %v4577, %v4737
        %v4739 = vpop.f32.mrb[0].mxu0
        %4740 = vmatprep.mubr.bf16.mxu0 %v4091
        %4741 = vmatmul.mubr.bf16.gmra.mrb[0].mxu0 %v4090
        %v4742 = vpop.f32.mrb[0].mxu0
        %v4743 = vadd.f32 %v4582, %v4742
        %v4744 = vpop.f32.mrb[0].mxu0
        %v4745 = vpop.f32.mrb[0].mxu0
        %v4746 = vadd.f32 %v4585, %v4745
        %v4747 = vpop.f32.mrb[0].mxu0
        %4748 = vmatprep.mubr.bf16.mxu0 %v4096
        %4749 = vmatmul.mubr.bf16.gmra.mrb[0].mxu0 %v4095
        %v4750 = vpop.f32.mrb[0].mxu0
        %v4751 = vadd.f32 %v4590, %v4750
        %v4752 = vpop.f32.mrb[0].mxu0
        %v4753 = vpop.f32.mrb[0].mxu0
        %v4754 = vadd.f32 %v4593, %v4753
        %v4755 = vpop.f32.mrb[0].mxu0
        %4756 = vmatprep.mubr.bf16.mxu0 %v4101
        %4757 = vmatmul.mubr.bf16.gmra.mrb[0].mxu0 %v4100
        %v4758 = vpop.f32.mrb[0].mxu0
        %v4759 = vadd.f32 %v4598, %v4758
        %v4760 = vpop.f32.mrb[0].mxu0
        %v4761 = vpop.f32.mrb[0].mxu0
        %v4762 = vadd.f32 %v4601, %v4761
        %v4763 = vpop.f32.mrb[0].mxu0
        %4764 = vmatprep.mubr.bf16.mxu0 %v4106
        %4765 = vmatmul.mubr.bf16.gmra.mrb[0].mxu0 %v4105
        %v4766 = vpop.f32.mrb[0].mxu0
        %v4767 = vadd.f32 %v4606, %v4766
        %v4768 = vpop.f32.mrb[0].mxu0
        %v4769 = vpop.f32.mrb[0].mxu0
        %v4770 = vadd.f32 %v4609, %v4769
        %v4771 = vpop.f32.mrb[0].mxu0
        %4772 = vdwg.mxu0
        %4773 = vmatprep.subr.bf16.mxu0 0
        %4774 = vmatpush1.bf16.msra.mxu0 %v4363
        %4775 = vmatprep.subr.bf16.mxu0 0
        %4776 = vmatpush1.bf16.msra.mxu0 %v4364
        %4777 = vmatprep.subr.bf16.mxu0 0
        %4778 = vmatpush1.bf16.msra.mxu0 %v4365
        %4779 = vmatprep.subr.bf16.mxu0 0
        %4780 = vmatpush1.bf16.msra.mxu0 %v4366
        %4781 = vmatprep.subr.bf16.mxu0 0
        %4782 = vmatpush1.bf16.msra.mxu0 0
        %4783 = vmatprep.subr.bf16.mxu0 0
        %4784 = vmatpush1.bf16.msra.mxu0 0
        %4785 = vmatprep.subr.bf16.mxu0 0
        %4786 = vmatpush1.bf16.msra.mxu0 0
        %4787 = vmatprep.subr.bf16.mxu0 0
        %4788 = vmatpush1.bf16.msra.mxu0 0
        %4789 = vmatprep.subr.bf16.mxu0 0
        %4790 = vmatpush1.bf16.msra.mxu0 0
        %4791 = vmatprep.subr.bf16.mxu0 0
        %4792 = vmatpush1.bf16.msra.mxu0 0
        %4793 = vmatprep.subr.bf16.mxu0 0
        %4794 = vmatpush1.bf16.msra.mxu0 0
        %4795 = vmatprep.subr.bf16.mxu0 0
        %4796 = vmatpush1.bf16.msra.mxu0 0
        %4797 = vmatprep.subr.bf16.mxu0 0
        %4798 = vmatpush1.bf16.msra.mxu0 0
        %4799 = vmatprep.subr.bf16.mxu0 0
        %4800 = vmatpush1.bf16.msra.mxu0 0
        %4801 = vmatprep.subr.bf16.mxu0 0
        %4802 = vmatpush1.bf16.msra.mxu0 0
        %4803 = vmatprep.subr.bf16.mxu0 0
        %4804 = vmatpush1.bf16.msra.mxu0 0
        %4805 = vmatprep.mubr.bf16.mxu0 0
        %4806 = vmatmul.mubr.bf16.gmra.mrb[0].mxu0 %v4404
        %v4807 = vpop.f32.mrb[0].mxu0
        %v4808 = vadd.f32 %v4647, %v4807
        %v4809 = vpop.f32.mrb[0].mxu0
        %v4810 = vpop.f32.mrb[0].mxu0
        %v4811 = vadd.f32 %v4650, %v4810
        %v4812 = vpop.f32.mrb[0].mxu0
        %4813 = vmatprep.mubr.bf16.mxu0 0
        %4814 = vmatmul.mubr.bf16.gmra.mrb[0].mxu0 %v4407
        %v4815 = vpop.f32.mrb[0].mxu0
        %v4816 = vadd.f32 %v4655, %v4815
        %v4817 = vpop.f32.mrb[0].mxu0
        %v4818 = vpop.f32.mrb[0].mxu0
        %v4819 = vadd.f32 %v4658, %v4818
        %v4820 = vpop.f32.mrb[0].mxu0
        %4821 = vmatprep.mubr.bf16.mxu0 0
        %4822 = vmatmul.mubr.bf16.gmra.mrb[0].mxu0 %v4410
        %v4823 = vpop.f32.mrb[0].mxu0
        %v4824 = vadd.f32 %v4663, %v4823
        %v4825 = vpop.f32.mrb[0].mxu0
        %v4826 = vpop.f32.mrb[0].mxu0
        %v4827 = vadd.f32 %v4666, %v4826
        %v4828 = vpop.f32.mrb[0].mxu0
        %4829 = vmatprep.mubr.bf16.mxu0 0
        %4830 = vmatmul.mubr.bf16.gmra.mrb[0].mxu0 %v4413
        %v4831 = vpop.f32.mrb[0].mxu0
        %v4832 = vadd.f32 %v4671, %v4831
        %v4833 = vpop.f32.mrb[0].mxu0
        %v4834 = vpop.f32.mrb[0].mxu0
        %v4835 = vadd.f32 %v4674, %v4834
        %v4836 = vpop.f32.mrb[0].mxu0
        %4837 = vmatprep.mubr.bf16.mxu0 0
        %4838 = vmatmul.mubr.bf16.gmra.mrb[0].mxu0 %v4416
        %v4839 = vpop.f32.mrb[0].mxu0
        %v4840 = vadd.f32 %v4679, %v4839
        %v4841 = vpop.f32.mrb[0].mxu0
        %v4842 = vpop.f32.mrb[0].mxu0
        %v4843 = vadd.f32 %v4682, %v4842
        %v4844 = vpop.f32.mrb[0].mxu0
        %4845 = vmatprep.mubr.bf16.mxu0 0
        %4846 = vmatmul.mubr.bf16.gmra.mrb[0].mxu0 %v4419
        %v4847 = vpop.f32.mrb[0].mxu0
        %v4848 = vadd.f32 %v4687, %v4847
        %v4849 = vpop.f32.mrb[0].mxu0
        %v4850 = vpop.f32.mrb[0].mxu0
        %v4851 = vadd.f32 %v4690, %v4850
        %v4852 = vpop.f32.mrb[0].mxu0
        %4853 = vmatprep.mubr.bf16.mxu0 0
        %4854 = vmatmul.mubr.bf16.gmra.mrb[0].mxu0 %v4422
        %v4855 = vpop.f32.mrb[0].mxu0
        %v4856 = vadd.f32 %v4695, %v4855
        %v4857 = vpop.f32.mrb[0].mxu0
        %v4858 = vpop.f32.mrb[0].mxu0
        %v4859 = vadd.f32 %v4698, %v4858
        %v4860 = vpop.f32.mrb[0].mxu0
        %4861 = vmatprep.mubr.bf16.mxu0 0
        %4862 = vmatmul.mubr.bf16.gmra.mrb[0].mxu0 %v4425
        %v4863 = vpop.f32.mrb[0].mxu0
        %v4864 = vadd.f32 %v4703, %v4863
        %v4865 = vpop.f32.mrb[0].mxu0
        %v4866 = vpop.f32.mrb[0].mxu0
        %v4867 = vadd.f32 %v4706, %v4866
        %v4868 = vpop.f32.mrb[0].mxu0
        %4869 = vmatprep.mubr.bf16.mxu0 0
        %4870 = vmatmul.mubr.bf16.gmra.mrb[0].mxu0 %v4428
        %v4871 = vpop.f32.mrb[0].mxu0
        %v4872 = vadd.f32 %v4711, %v4871
        %v4873 = vpop.f32.mrb[0].mxu0
        %v4874 = vpop.f32.mrb[0].mxu0
        %v4875 = vadd.f32 %v4714, %v4874
        %v4876 = vpop.f32.mrb[0].mxu0
        %4877 = vmatprep.mubr.bf16.mxu0 0
        %4878 = vmatmul.mubr.bf16.gmra.mrb[0].mxu0 %v4431
        %v4879 = vpop.f32.mrb[0].mxu0
        %v4880 = vadd.f32 %v4719, %v4879
        %v4881 = vpop.f32.mrb[0].mxu0
        %v4882 = vpop.f32.mrb[0].mxu0
        %v4883 = vadd.f32 %v4722, %v4882
        %v4884 = vpop.f32.mrb[0].mxu0
        %4885 = vmatprep.mubr.bf16.mxu0 0
        %4886 = vmatmul.mubr.bf16.gmra.mrb[0].mxu0 %v4434
        %v4887 = vpop.f32.mrb[0].mxu0
        %v4888 = vadd.f32 %v4727, %v4887
        %v4889 = vpop.f32.mrb[0].mxu0
        %v4890 = vpop.f32.mrb[0].mxu0
        %v4891 = vadd.f32 %v4730, %v4890
        %v4892 = vpop.f32.mrb[0].mxu0
        %4893 = vmatprep.mubr.bf16.mxu0 0
        %4894 = vmatmul.mubr.bf16.gmra.mrb[0].mxu0 %v4437
        %v4895 = vpop.f32.mrb[0].mxu0
        %v4896 = vadd.f32 %v4735, %v4895
        %v4897 = vpop.f32.mrb[0].mxu0
        %v4898 = vpop.f32.mrb[0].mxu0
        %v4899 = vadd.f32 %v4738, %v4898
        %v4900 = vpop.f32.mrb[0].mxu0
        %4901 = vmatprep.mubr.bf16.mxu0 0
        %4902 = vmatmul.mubr.bf16.gmra.mrb[0].mxu0 %v4440
        %v4903 = vpop.f32.mrb[0].mxu0
        %v4904 = vadd.f32 %v4743, %v4903
        %v4905 = vpop.f32.mrb[0].mxu0
        %v4906 = vpop.f32.mrb[0].mxu0
        %v4907 = vadd.f32 %v4746, %v4906
        %v4908 = vpop.f32.mrb[0].mxu0
        %4909 = vmatprep.mubr.bf16.mxu0 0
        %4910 = vmatmul.mubr.bf16.gmra.mrb[0].mxu0 %v4443
        %v4911 = vpop.f32.mrb[0].mxu0
        %v4912 = vadd.f32 %v4751, %v4911
        %v4913 = vpop.f32.mrb[0].mxu0
        %v4914 = vpop.f32.mrb[0].mxu0
        %v4915 = vadd.f32 %v4754, %v4914
        %v4916 = vpop.f32.mrb[0].mxu0
        %4917 = vmatprep.mubr.bf16.mxu0 0
        %4918 = vmatmul.mubr.bf16.gmra.mrb[0].mxu0 %v4446
        %v4919 = vpop.f32.mrb[0].mxu0
        %v4920 = vadd.f32 %v4759, %v4919
        %v4921 = vpop.f32.mrb[0].mxu0
        %v4922 = vpop.f32.mrb[0].mxu0
        %v4923 = vadd.f32 %v4762, %v4922
        %v4924 = vpop.f32.mrb[0].mxu0
        %4925 = vmatprep.mubr.bf16.mxu0 0
        %4926 = vmatmul.mubr.bf16.gmra.mrb[0].mxu0 %v4449
        %v4927 = vpop.f32.mrb[0].mxu0
        %v4928 = vadd.f32 %v4767, %v4927
        %v4929 = vpop.f32.mrb[0].mxu0
        %v4930 = vpop.f32.mrb[0].mxu0
        %v4931 = vadd.f32 %v4770, %v4930
        %v4932 = vpop.f32.mrb[0].mxu0
        %4933 = vdwg.mxu0
        %v4934 = vld [vmem:[%s7] sm:$0x1]
        %v4935 = vld [vmem:[%s8] sm:$0x1]
        %v4936 = vsel %vm1645, %v4808, 0.0
        %4937 = vadd.xlane.f32.xlu0 %v4936
        %v4938 = vpop.xlane.xlu0 %4937
        %v4939 = vsel %vm1645, %v4811, 0.0
        %4940 = vadd.xlane.f32.xlu0 %v4939
        %v4941 = vpop.xlane.xlu0 %4940
        %v4942 = vsel %vm1645, %v4816, 0.0
        %4943 = vadd.xlane.f32.xlu0 %v4942
        %v4944 = vpop.xlane.xlu0 %4943
        %v4945 = vsel %vm1645, %v4819, 0.0
        %4946 = vadd.xlane.f32.xlu0 %v4945
        %v4947 = vpop.xlane.xlu0 %4946
        %v4948 = vsel %vm1645, %v4824, 0.0
        %4949 = vadd.xlane.f32.xlu0 %v4948
        %v4950 = vpop.xlane.xlu0 %4949
        %v4951 = vsel %vm1645, %v4827, 0.0
        %4952 = vadd.xlane.f32.xlu0 %v4951
        %v4953 = vpop.xlane.xlu0 %4952
        %v4954 = vsel %vm1645, %v4832, 0.0
        %4955 = vadd.xlane.f32.xlu0 %v4954
        %v4956 = vpop.xlane.xlu0 %4955
        %v4957 = vsel %vm1645, %v4835, 0.0
        %4958 = vadd.xlane.f32.xlu0 %v4957
        %v4959 = vpop.xlane.xlu0 %4958
        %v4960 = vsel %vm1645, %v4840, 0.0
        %4961 = vadd.xlane.f32.xlu0 %v4960
        %v4962 = vpop.xlane.xlu0 %4961
        %v4963 = vsel %vm1645, %v4843, 0.0
        %4964 = vadd.xlane.f32.xlu0 %v4963
        %v4965 = vpop.xlane.xlu0 %4964
        %v4966 = vsel %vm1645, %v4848, 0.0
        %4967 = vadd.xlane.f32.xlu0 %v4966
        %v4968 = vpop.xlane.xlu0 %4967
        %v4969 = vsel %vm1645, %v4851, 0.0
        %4970 = vadd.xlane.f32.xlu0 %v4969
        %v4971 = vpop.xlane.xlu0 %4970
        %v4972 = vsel %vm1645, %v4856, 0.0
        %4973 = vadd.xlane.f32.xlu0 %v4972
        %v4974 = vpop.xlane.xlu0 %4973
        %v4975 = vsel %vm1645, %v4859, 0.0
        %4976 = vadd.xlane.f32.xlu0 %v4975
        %v4977 = vpop.xlane.xlu0 %4976
        %v4978 = vsel %vm1645, %v4864, 0.0
        %4979 = vadd.xlane.f32.xlu0 %v4978
        %v4980 = vpop.xlane.xlu0 %4979
        %v4981 = vsel %vm1645, %v4867, 0.0
        %4982 = vadd.xlane.f32.xlu0 %v4981
        %v4983 = vpop.xlane.xlu0 %4982
        %v4984 = vsel %vm1645, %v4872, 0.0
        %4985 = vadd.xlane.f32.xlu0 %v4984
        %v4986 = vpop.xlane.xlu0 %4985
        %v4987 = vsel %vm1645, %v4875, 0.0
        %4988 = vadd.xlane.f32.xlu0 %v4987
        %v4989 = vpop.xlane.xlu0 %4988
        %v4990 = vsel %vm1645, %v4880, 0.0
        %4991 = vadd.xlane.f32.xlu0 %v4990
        %v4992 = vpop.xlane.xlu0 %4991
        %v4993 = vsel %vm1645, %v4883, 0.0
        %4994 = vadd.xlane.f32.xlu0 %v4993
        %v4995 = vpop.xlane.xlu0 %4994
        %v4996 = vsel %vm1645, %v4888, 0.0
        %4997 = vadd.xlane.f32.xlu0 %v4996
        %v4998 = vpop.xlane.xlu0 %4997
        %v4999 = vsel %vm1645, %v4891, 0.0
        %5000 = vadd.xlane.f32.xlu0 %v4999
        %v5001 = vpop.xlane.xlu0 %5000
        %v5002 = vsel %vm1645, %v4896, 0.0
        %5003 = vadd.xlane.f32.xlu0 %v5002
        %v5004 = vpop.xlane.xlu0 %5003
        %v5005 = vsel %vm1645, %v4899, 0.0
        %5006 = vadd.xlane.f32.xlu0 %v5005
        %v5007 = vpop.xlane.xlu0 %5006
        %v5008 = vsel %vm1645, %v4904, 0.0
        %5009 = vadd.xlane.f32.xlu0 %v5008
        %v5010 = vpop.xlane.xlu0 %5009
        %v5011 = vsel %vm1645, %v4907, 0.0
        %5012 = vadd.xlane.f32.xlu0 %v5011
        %v5013 = vpop.xlane.xlu0 %5012
        %v5014 = vsel %vm1645, %v4912, 0.0
        %5015 = vadd.xlane.f32.xlu0 %v5014
        %v5016 = vpop.xlane.xlu0 %5015
        %v5017 = vsel %vm1645, %v4915, 0.0
        %5018 = vadd.xlane.f32.xlu0 %v5017
        %v5019 = vpop.xlane.xlu0 %5018
        %v5020 = vsel %vm1645, %v4920, 0.0
        %5021 = vadd.xlane.f32.xlu0 %v5020
        %v5022 = vpop.xlane.xlu0 %5021
        %v5023 = vsel %vm1645, %v4923, 0.0
        %5024 = vadd.xlane.f32.xlu0 %v5023
        %v5025 = vpop.xlane.xlu0 %5024
        %v5026 = vsel %vm1645, %v4928, 0.0
        %5027 = vadd.xlane.f32.xlu0 %v5026
        %v5028 = vpop.xlane.xlu0 %5027
        %v5029 = vsel %vm1645, %v4931, 0.0
        %5030 = vadd.xlane.f32.xlu0 %v5029
        %v5031 = vpop.xlane.xlu0 %5030
        %v5032 = vmul.f32 %v4938, %v2474
        %v5033 = vmul.f32 %v4941, %v2474
        %v5034 = vmul.f32 %v4944, %v2474
        %v5035 = vmul.f32 %v4947, %v2474
        %v5036 = vmul.f32 %v4950, %v2474
        %v5037 = vmul.f32 %v4953, %v2474
        %v5038 = vmul.f32 %v4956, %v2474
        %v5039 = vmul.f32 %v4959, %v2474
        %v5040 = vmul.f32 %v4962, %v2474
        %v5041 = vmul.f32 %v4965, %v2474
        %v5042 = vmul.f32 %v4968, %v2474
        %v5043 = vmul.f32 %v4971, %v2474
        %v5044 = vmul.f32 %v4974, %v2474
        %v5045 = vmul.f32 %v4977, %v2474
        %v5046 = vmul.f32 %v4980, %v2474
        %v5047 = vmul.f32 %v4983, %v2474
        %v5048 = vmul.f32 %v4986, %v2474
        %v5049 = vmul.f32 %v4989, %v2474
        %v5050 = vmul.f32 %v4992, %v2474
        %v5051 = vmul.f32 %v4995, %v2474
        %v5052 = vmul.f32 %v4998, %v2474
        %v5053 = vmul.f32 %v5001, %v2474
        %v5054 = vmul.f32 %v5004, %v2474
        %v5055 = vmul.f32 %v5007, %v2474
        %v5056 = vmul.f32 %v5010, %v2474
        %v5057 = vmul.f32 %v5013, %v2474
        %v5058 = vmul.f32 %v5016, %v2474
        %v5059 = vmul.f32 %v5019, %v2474
        %v5060 = vmul.f32 %v5022, %v2474
        %v5061 = vmul.f32 %v5025, %v2474
        %v5062 = vmul.f32 %v5028, %v2474
        %v5063 = vmul.f32 %v5031, %v2474
        %v5064 = vsub.f32 %v4808, %v5032
        %v5065 = vsub.f32 %v4811, %v5033
        %v5066 = vsub.f32 %v4816, %v5034
        %v5067 = vsub.f32 %v4819, %v5035
        %v5068 = vsub.f32 %v4824, %v5036
        %v5069 = vsub.f32 %v4827, %v5037
        %v5070 = vsub.f32 %v4832, %v5038
        %v5071 = vsub.f32 %v4835, %v5039
        %v5072 = vsub.f32 %v4840, %v5040
        %v5073 = vsub.f32 %v4843, %v5041
        %v5074 = vsub.f32 %v4848, %v5042
        %v5075 = vsub.f32 %v4851, %v5043
        %v5076 = vsub.f32 %v4856, %v5044
        %v5077 = vsub.f32 %v4859, %v5045
        %v5078 = vsub.f32 %v4864, %v5046
        %v5079 = vsub.f32 %v4867, %v5047
        %v5080 = vsub.f32 %v4872, %v5048
        %v5081 = vsub.f32 %v4875, %v5049
        %v5082 = vsub.f32 %v4880, %v5050
        %v5083 = vsub.f32 %v4883, %v5051
        %v5084 = vsub.f32 %v4888, %v5052
        %v5085 = vsub.f32 %v4891, %v5053
        %v5086 = vsub.f32 %v4896, %v5054
        %v5087 = vsub.f32 %v4899, %v5055
        %v5088 = vsub.f32 %v4904, %v5056
        %v5089 = vsub.f32 %v4907, %v5057
        %v5090 = vsub.f32 %v4912, %v5058
        %v5091 = vsub.f32 %v4915, %v5059
        %v5092 = vsub.f32 %v4920, %v5060
        %v5093 = vsub.f32 %v4923, %v5061
        %v5094 = vsub.f32 %v4928, %v5062
        %v5095 = vsub.f32 %v4931, %v5063
        %v5096 = vmul.f32 %v5064, %v5064
        %v5097 = vmul.f32 %v5065, %v5065
        %v5098 = vmul.f32 %v5066, %v5066
        %v5099 = vmul.f32 %v5067, %v5067
        %v5100 = vmul.f32 %v5068, %v5068
        %v5101 = vmul.f32 %v5069, %v5069
        %v5102 = vmul.f32 %v5070, %v5070
        %v5103 = vmul.f32 %v5071, %v5071
        %v5104 = vmul.f32 %v5072, %v5072
        %v5105 = vmul.f32 %v5073, %v5073
        %v5106 = vmul.f32 %v5074, %v5074
        %v5107 = vmul.f32 %v5075, %v5075
        %v5108 = vmul.f32 %v5076, %v5076
        %v5109 = vmul.f32 %v5077, %v5077
        %v5110 = vmul.f32 %v5078, %v5078
        %v5111 = vmul.f32 %v5079, %v5079
        %v5112 = vmul.f32 %v5080, %v5080
        %v5113 = vmul.f32 %v5081, %v5081
        %v5114 = vmul.f32 %v5082, %v5082
        %v5115 = vmul.f32 %v5083, %v5083
        %v5116 = vmul.f32 %v5084, %v5084
        %v5117 = vmul.f32 %v5085, %v5085
        %v5118 = vmul.f32 %v5086, %v5086
        %v5119 = vmul.f32 %v5087, %v5087
        %v5120 = vmul.f32 %v5088, %v5088
        %v5121 = vmul.f32 %v5089, %v5089
        %v5122 = vmul.f32 %v5090, %v5090
        %v5123 = vmul.f32 %v5091, %v5091
        %v5124 = vmul.f32 %v5092, %v5092
        %v5125 = vmul.f32 %v5093, %v5093
        %v5126 = vmul.f32 %v5094, %v5094
        %v5127 = vmul.f32 %v5095, %v5095
        %v5128 = vsel %vm1645, %v5096, 0.0
        %5129 = vadd.xlane.f32.xlu0 %v5128
        %v5130 = vpop.xlane.xlu0 %5129
        %v5131 = vsel %vm1645, %v5097, 0.0
        %5132 = vadd.xlane.f32.xlu0 %v5131
        %v5133 = vpop.xlane.xlu0 %5132
        %v5134 = vsel %vm1645, %v5098, 0.0
        %5135 = vadd.xlane.f32.xlu0 %v5134
        %v5136 = vpop.xlane.xlu0 %5135
        %v5137 = vsel %vm1645, %v5099, 0.0
        %5138 = vadd.xlane.f32.xlu0 %v5137
        %v5139 = vpop.xlane.xlu0 %5138
        %v5140 = vsel %vm1645, %v5100, 0.0
        %5141 = vadd.xlane.f32.xlu0 %v5140
        %v5142 = vpop.xlane.xlu0 %5141
        %v5143 = vsel %vm1645, %v5101, 0.0
        %5144 = vadd.xlane.f32.xlu0 %v5143
        %v5145 = vpop.xlane.xlu0 %5144
        %v5146 = vsel %vm1645, %v5102, 0.0
        %5147 = vadd.xlane.f32.xlu0 %v5146
        %v5148 = vpop.xlane.xlu0 %5147
        %v5149 = vsel %vm1645, %v5103, 0.0
        %5150 = vadd.xlane.f32.xlu0 %v5149
        %v5151 = vpop.xlane.xlu0 %5150
        %v5152 = vsel %vm1645, %v5104, 0.0
        %5153 = vadd.xlane.f32.xlu0 %v5152
        %v5154 = vpop.xlane.xlu0 %5153
        %v5155 = vsel %vm1645, %v5105, 0.0
        %5156 = vadd.xlane.f32.xlu0 %v5155
        %v5157 = vpop.xlane.xlu0 %5156
        %v5158 = vsel %vm1645, %v5106, 0.0
        %5159 = vadd.xlane.f32.xlu0 %v5158
        %v5160 = vpop.xlane.xlu0 %5159
        %v5161 = vsel %vm1645, %v5107, 0.0
        %5162 = vadd.xlane.f32.xlu0 %v5161
        %v5163 = vpop.xlane.xlu0 %5162
        %v5164 = vsel %vm1645, %v5108, 0.0
        %5165 = vadd.xlane.f32.xlu0 %v5164
        %v5166 = vpop.xlane.xlu0 %5165
        %v5167 = vsel %vm1645, %v5109, 0.0
        %5168 = vadd.xlane.f32.xlu0 %v5167
        %v5169 = vpop.xlane.xlu0 %5168
        %v5170 = vsel %vm1645, %v5110, 0.0
        %5171 = vadd.xlane.f32.xlu0 %v5170
        %v5172 = vpop.xlane.xlu0 %5171
        %v5173 = vsel %vm1645, %v5111, 0.0
        %5174 = vadd.xlane.f32.xlu0 %v5173
        %v5175 = vpop.xlane.xlu0 %5174
        %v5176 = vsel %vm1645, %v5112, 0.0
        %5177 = vadd.xlane.f32.xlu0 %v5176
        %v5178 = vpop.xlane.xlu0 %5177
        %v5179 = vsel %vm1645, %v5113, 0.0
        %5180 = vadd.xlane.f32.xlu0 %v5179
        %v5181 = vpop.xlane.xlu0 %5180
        %v5182 = vsel %vm1645, %v5114, 0.0
        %5183 = vadd.xlane.f32.xlu0 %v5182
        %v5184 = vpop.xlane.xlu0 %5183
        %v5185 = vsel %vm1645, %v5115, 0.0
        %5186 = vadd.xlane.f32.xlu0 %v5185
        %v5187 = vpop.xlane.xlu0 %5186
        %v5188 = vsel %vm1645, %v5116, 0.0
        %5189 = vadd.xlane.f32.xlu0 %v5188
        %v5190 = vpop.xlane.xlu0 %5189
        %v5191 = vsel %vm1645, %v5117, 0.0
        %5192 = vadd.xlane.f32.xlu0 %v5191
        %v5193 = vpop.xlane.xlu0 %5192
        %v5194 = vsel %vm1645, %v5118, 0.0
        %5195 = vadd.xlane.f32.xlu0 %v5194
        %v5196 = vpop.xlane.xlu0 %5195
        %v5197 = vsel %vm1645, %v5119, 0.0
        %5198 = vadd.xlane.f32.xlu0 %v5197
        %v5199 = vpop.xlane.xlu0 %5198
        %v5200 = vsel %vm1645, %v5120, 0.0
        %5201 = vadd.xlane.f32.xlu0 %v5200
        %v5202 = vpop.xlane.xlu0 %5201
        %v5203 = vsel %vm1645, %v5121, 0.0
        %5204 = vadd.xlane.f32.xlu0 %v5203
        %v5205 = vpop.xlane.xlu0 %5204
        %v5206 = vsel %vm1645, %v5122, 0.0
        %5207 = vadd.xlane.f32.xlu0 %v5206
        %v5208 = vpop.xlane.xlu0 %5207
        %v5209 = vsel %vm1645, %v5123, 0.0
        %5210 = vadd.xlane.f32.xlu0 %v5209
        %v5211 = vpop.xlane.xlu0 %5210
        %v5212 = vsel %vm1645, %v5124, 0.0
        %5213 = vadd.xlane.f32.xlu0 %v5212
        %v5214 = vpop.xlane.xlu0 %5213
        %v5215 = vsel %vm1645, %v5125, 0.0
        %5216 = vadd.xlane.f32.xlu0 %v5215
        %v5217 = vpop.xlane.xlu0 %5216
        %v5218 = vsel %vm1645, %v5126, 0.0
        %5219 = vadd.xlane.f32.xlu0 %v5218
        %v5220 = vpop.xlane.xlu0 %5219
        %v5221 = vsel %vm1645, %v5127, 0.0
        %5222 = vadd.xlane.f32.xlu0 %v5221
        %v5223 = vpop.xlane.xlu0 %5222
        %v5224 = vmul.f32 %v5130, %v2474
        %v5225 = vmul.f32 %v5133, %v2474
        %v5226 = vmul.f32 %v5136, %v2474
        %v5227 = vmul.f32 %v5139, %v2474
        %v5228 = vmul.f32 %v5142, %v2474
        %v5229 = vmul.f32 %v5145, %v2474
        %v5230 = vmul.f32 %v5148, %v2474
        %v5231 = vmul.f32 %v5151, %v2474
        %v5232 = vmul.f32 %v5154, %v2474
        %v5233 = vmul.f32 %v5157, %v2474
        %v5234 = vmul.f32 %v5160, %v2474
        %v5235 = vmul.f32 %v5163, %v2474
        %v5236 = vmul.f32 %v5166, %v2474
        %v5237 = vmul.f32 %v5169, %v2474
        %v5238 = vmul.f32 %v5172, %v2474
        %v5239 = vmul.f32 %v5175, %v2474
        %v5240 = vmul.f32 %v5178, %v2474
        %v5241 = vmul.f32 %v5181, %v2474
        %v5242 = vmul.f32 %v5184, %v2474
        %v5243 = vmul.f32 %v5187, %v2474
        %v5244 = vmul.f32 %v5190, %v2474
        %v5245 = vmul.f32 %v5193, %v2474
        %v5246 = vmul.f32 %v5196, %v2474
        %v5247 = vmul.f32 %v5199, %v2474
        %v5248 = vmul.f32 %v5202, %v2474
        %v5249 = vmul.f32 %v5205, %v2474
        %v5250 = vmul.f32 %v5208, %v2474
        %v5251 = vmul.f32 %v5211, %v2474
        %v5252 = vmul.f32 %v5214, %v2474
        %v5253 = vmul.f32 %v5217, %v2474
        %v5254 = vmul.f32 %v5220, %v2474
        %v5255 = vmul.f32 %v5223, %v2474
        %v5256 = vadd.f32 %v5224, 1e-05
        %v5257 = vadd.f32 %v5225, 1e-05
        %v5258 = vadd.f32 %v5226, 1e-05
        %v5259 = vadd.f32 %v5227, 1e-05
        %v5260 = vadd.f32 %v5228, 1e-05
        %v5261 = vadd.f32 %v5229, 1e-05
        %v5262 = vadd.f32 %v5230, 1e-05
        %v5263 = vadd.f32 %v5231, 1e-05
        %v5264 = vadd.f32 %v5232, 1e-05
        %v5265 = vadd.f32 %v5233, 1e-05
        %v5266 = vadd.f32 %v5234, 1e-05
        %v5267 = vadd.f32 %v5235, 1e-05
        %v5268 = vadd.f32 %v5236, 1e-05
        %v5269 = vadd.f32 %v5237, 1e-05
        %v5270 = vadd.f32 %v5238, 1e-05
        %v5271 = vadd.f32 %v5239, 1e-05
        %v5272 = vadd.f32 %v5240, 1e-05
        %v5273 = vadd.f32 %v5241, 1e-05
        %v5274 = vadd.f32 %v5242, 1e-05
        %v5275 = vadd.f32 %v5243, 1e-05
        %v5276 = vadd.f32 %v5244, 1e-05
        %v5277 = vadd.f32 %v5245, 1e-05
        %v5278 = vadd.f32 %v5246, 1e-05
        %v5279 = vadd.f32 %v5247, 1e-05
        %v5280 = vadd.f32 %v5248, 1e-05
        %v5281 = vadd.f32 %v5249, 1e-05
        %v5282 = vadd.f32 %v5250, 1e-05
        %v5283 = vadd.f32 %v5251, 1e-05
        %v5284 = vadd.f32 %v5252, 1e-05
        %v5285 = vadd.f32 %v5253, 1e-05
        %v5286 = vadd.f32 %v5254, 1e-05
        %v5287 = vadd.f32 %v5255, 1e-05
        %v5288 = vrsqrt.pop %v5256
        %v5289 = vrsqrt.pop %v5257
        %v5290 = vrsqrt.pop %v5258
        %v5291 = vrsqrt.pop %v5259
        %v5292 = vrsqrt.pop %v5260
        %v5293 = vrsqrt.pop %v5261
        %v5294 = vrsqrt.pop %v5262
        %v5295 = vrsqrt.pop %v5263
        %v5296 = vrsqrt.pop %v5264
        %v5297 = vrsqrt.pop %v5265
        %v5298 = vrsqrt.pop %v5266
        %v5299 = vrsqrt.pop %v5267
        %v5300 = vrsqrt.pop %v5268
        %v5301 = vrsqrt.pop %v5269
        %v5302 = vrsqrt.pop %v5270
        %v5303 = vrsqrt.pop %v5271
        %v5304 = vrsqrt.pop %v5272
        %v5305 = vrsqrt.pop %v5273
        %v5306 = vrsqrt.pop %v5274
        %v5307 = vrsqrt.pop %v5275
        %v5308 = vrsqrt.pop %v5276
        %v5309 = vrsqrt.pop %v5277
        %v5310 = vrsqrt.pop %v5278
        %v5311 = vrsqrt.pop %v5279
        %v5312 = vrsqrt.pop %v5280
        %v5313 = vrsqrt.pop %v5281
        %v5314 = vrsqrt.pop %v5282
        %v5315 = vrsqrt.pop %v5283
        %v5316 = vrsqrt.pop %v5284
        %v5317 = vrsqrt.pop %v5285
        %v5318 = vrsqrt.pop %v5286
        %v5319 = vrsqrt.pop %v5287
        %v5320 = vmul.f32 %v5064, %v5288
        %v5321 = vmul.f32 %v5065, %v5289
        %v5322 = vmul.f32 %v5066, %v5290
        %v5323 = vmul.f32 %v5067, %v5291
        %v5324 = vmul.f32 %v5068, %v5292
        %v5325 = vmul.f32 %v5069, %v5293
        %v5326 = vmul.f32 %v5070, %v5294
        %v5327 = vmul.f32 %v5071, %v5295
        %v5328 = vmul.f32 %v5072, %v5296
        %v5329 = vmul.f32 %v5073, %v5297
        %v5330 = vmul.f32 %v5074, %v5298
        %v5331 = vmul.f32 %v5075, %v5299
        %v5332 = vmul.f32 %v5076, %v5300
        %v5333 = vmul.f32 %v5077, %v5301
        %v5334 = vmul.f32 %v5078, %v5302
        %v5335 = vmul.f32 %v5079, %v5303
        %v5336 = vmul.f32 %v5080, %v5304
        %v5337 = vmul.f32 %v5081, %v5305
        %v5338 = vmul.f32 %v5082, %v5306
        %v5339 = vmul.f32 %v5083, %v5307
        %v5340 = vmul.f32 %v5084, %v5308
        %v5341 = vmul.f32 %v5085, %v5309
        %v5342 = vmul.f32 %v5086, %v5310
        %v5343 = vmul.f32 %v5087, %v5311
        %v5344 = vmul.f32 %v5088, %v5312
        %v5345 = vmul.f32 %v5089, %v5313
        %v5346 = vmul.f32 %v5090, %v5314
        %v5347 = vmul.f32 %v5091, %v5315
        %v5348 = vmul.f32 %v5092, %v5316
        %v5349 = vmul.f32 %v5093, %v5317
        %v5350 = vmul.f32 %v5094, %v5318
        %v5351 = vmul.f32 %v5095, %v5319
        %v5353 = vlaneseq
        %v5354 = vshrl.u32 %v5353, 7
        %v5355 = vsub.s32 0, %v5354
        %v5356 = vrot.slane %v4934, %v5355
        %v5358 = vmul.f32 %v5320, %v5356
        %v5359 = vmul.f32 %v5321, %v5356
        %v5360 = vmul.f32 %v5322, %v5356
        %v5361 = vmul.f32 %v5323, %v5356
        %v5362 = vmul.f32 %v5324, %v5356
        %v5363 = vmul.f32 %v5325, %v5356
        %v5364 = vmul.f32 %v5326, %v5356
        %v5365 = vmul.f32 %v5327, %v5356
        %v5366 = vmul.f32 %v5328, %v5356
        %v5367 = vmul.f32 %v5329, %v5356
        %v5368 = vmul.f32 %v5330, %v5356
        %v5369 = vmul.f32 %v5331, %v5356
        %v5370 = vmul.f32 %v5332, %v5356
        %v5371 = vmul.f32 %v5333, %v5356
        %v5372 = vmul.f32 %v5334, %v5356
        %v5373 = vmul.f32 %v5335, %v5356
        %v5374 = vmul.f32 %v5336, %v5356
        %v5375 = vmul.f32 %v5337, %v5356
        %v5376 = vmul.f32 %v5338, %v5356
        %v5377 = vmul.f32 %v5339, %v5356
        %v5378 = vmul.f32 %v5340, %v5356
        %v5379 = vmul.f32 %v5341, %v5356
        %v5380 = vmul.f32 %v5342, %v5356
        %v5381 = vmul.f32 %v5343, %v5356
        %v5382 = vmul.f32 %v5344, %v5356
        %v5383 = vmul.f32 %v5345, %v5356
        %v5384 = vmul.f32 %v5346, %v5356
        %v5385 = vmul.f32 %v5347, %v5356
        %v5386 = vmul.f32 %v5348, %v5356
        %v5387 = vmul.f32 %v5349, %v5356
        %v5388 = vmul.f32 %v5350, %v5356
        %v5389 = vmul.f32 %v5351, %v5356
        %v5391 = vlaneseq
        %v5392 = vshrl.u32 %v5391, 7
        %v5393 = vsub.s32 0, %v5392
        %v5394 = vrot.slane %v4935, %v5393
        %v5396 = vadd.f32 %v5358, %v5394
        %v5397 = vadd.f32 %v5359, %v5394
        %v5398 = vadd.f32 %v5360, %v5394
        %v5399 = vadd.f32 %v5361, %v5394
        %v5400 = vadd.f32 %v5362, %v5394
        %v5401 = vadd.f32 %v5363, %v5394
        %v5402 = vadd.f32 %v5364, %v5394
        %v5403 = vadd.f32 %v5365, %v5394
        %v5404 = vadd.f32 %v5366, %v5394
        %v5405 = vadd.f32 %v5367, %v5394
        %v5406 = vadd.f32 %v5368, %v5394
        %v5407 = vadd.f32 %v5369, %v5394
        %v5408 = vadd.f32 %v5370, %v5394
        %v5409 = vadd.f32 %v5371, %v5394
        %v5410 = vadd.f32 %v5372, %v5394
        %v5411 = vadd.f32 %v5373, %v5394
        %v5412 = vadd.f32 %v5374, %v5394
        %v5413 = vadd.f32 %v5375, %v5394
        %v5414 = vadd.f32 %v5376, %v5394
        %v5415 = vadd.f32 %v5377, %v5394
        %v5416 = vadd.f32 %v5378, %v5394
        %v5417 = vadd.f32 %v5379, %v5394
        %v5418 = vadd.f32 %v5380, %v5394
        %v5419 = vadd.f32 %v5381, %v5394
        %v5420 = vadd.f32 %v5382, %v5394
        %v5421 = vadd.f32 %v5383, %v5394
        %v5422 = vadd.f32 %v5384, %v5394
        %v5423 = vadd.f32 %v5385, %v5394
        %v5424 = vadd.f32 %v5386, %v5394
        %v5425 = vadd.f32 %v5387, %v5394
        %v5426 = vadd.f32 %v5388, %v5394
        %v5427 = vadd.f32 %v5389, %v5394
        %vm5428 = vcmp.gt.f32.partialorder %v5396, 0.0
        %vm5429 = vcmp.gt.f32.partialorder %v5397, 0.0
        %vm5430 = vcmp.gt.f32.partialorder %v5398, 0.0
        %vm5431 = vcmp.gt.f32.partialorder %v5399, 0.0
        %vm5432 = vcmp.gt.f32.partialorder %v5400, 0.0
        %vm5433 = vcmp.gt.f32.partialorder %v5401, 0.0
        %vm5434 = vcmp.gt.f32.partialorder %v5402, 0.0
        %vm5435 = vcmp.gt.f32.partialorder %v5403, 0.0
        %vm5436 = vcmp.gt.f32.partialorder %v5404, 0.0
        %vm5437 = vcmp.gt.f32.partialorder %v5405, 0.0
        %vm5438 = vcmp.gt.f32.partialorder %v5406, 0.0
        %vm5439 = vcmp.gt.f32.partialorder %v5407, 0.0
        %vm5440 = vcmp.gt.f32.partialorder %v5408, 0.0
        %vm5441 = vcmp.gt.f32.partialorder %v5409, 0.0
        %vm5442 = vcmp.gt.f32.partialorder %v5410, 0.0
        %vm5443 = vcmp.gt.f32.partialorder %v5411, 0.0
        %vm5444 = vcmp.gt.f32.partialorder %v5412, 0.0
        %vm5445 = vcmp.gt.f32.partialorder %v5413, 0.0
        %vm5446 = vcmp.gt.f32.partialorder %v5414, 0.0
        %vm5447 = vcmp.gt.f32.partialorder %v5415, 0.0
        %vm5448 = vcmp.gt.f32.partialorder %v5416, 0.0
        %vm5449 = vcmp.gt.f32.partialorder %v5417, 0.0
        %vm5450 = vcmp.gt.f32.partialorder %v5418, 0.0
        %vm5451 = vcmp.gt.f32.partialorder %v5419, 0.0
        %vm5452 = vcmp.gt.f32.partialorder %v5420, 0.0
        %vm5453 = vcmp.gt.f32.partialorder %v5421, 0.0
        %vm5454 = vcmp.gt.f32.partialorder %v5422, 0.0
        %vm5455 = vcmp.gt.f32.partialorder %v5423, 0.0
        %vm5456 = vcmp.gt.f32.partialorder %v5424, 0.0
        %vm5457 = vcmp.gt.f32.partialorder %v5425, 0.0
        %vm5458 = vcmp.gt.f32.partialorder %v5426, 0.0
        %vm5459 = vcmp.gt.f32.partialorder %v5427, 0.0
        %v5460 = vmul.f32 %v5396, 0.01
        %v5461 = vmul.f32 %v5397, 0.01
        %v5462 = vmul.f32 %v5398, 0.01
        %v5463 = vmul.f32 %v5399, 0.01
        %v5464 = vmul.f32 %v5400, 0.01
        %v5465 = vmul.f32 %v5401, 0.01
        %v5466 = vmul.f32 %v5402, 0.01
        %v5467 = vmul.f32 %v5403, 0.01
        %v5468 = vmul.f32 %v5404, 0.01
        %v5469 = vmul.f32 %v5405, 0.01
        %v5470 = vmul.f32 %v5406, 0.01
        %v5471 = vmul.f32 %v5407, 0.01
        %v5472 = vmul.f32 %v5408, 0.01
        %v5473 = vmul.f32 %v5409, 0.01
        %v5474 = vmul.f32 %v5410, 0.01
        %v5475 = vmul.f32 %v5411, 0.01
        %v5476 = vmul.f32 %v5412, 0.01
        %v5477 = vmul.f32 %v5413, 0.01
        %v5478 = vmul.f32 %v5414, 0.01
        %v5479 = vmul.f32 %v5415, 0.01
        %v5480 = vmul.f32 %v5416, 0.01
        %v5481 = vmul.f32 %v5417, 0.01
        %v5482 = vmul.f32 %v5418, 0.01
        %v5483 = vmul.f32 %v5419, 0.01
        %v5484 = vmul.f32 %v5420, 0.01
        %v5485 = vmul.f32 %v5421, 0.01
        %v5486 = vmul.f32 %v5422, 0.01
        %v5487 = vmul.f32 %v5423, 0.01
        %v5488 = vmul.f32 %v5424, 0.01
        %v5489 = vmul.f32 %v5425, 0.01
        %v5490 = vmul.f32 %v5426, 0.01
        %v5491 = vmul.f32 %v5427, 0.01
        %v5492 = vsel %vm5428, %v5396, %v5460
        %v5493 = vsel %vm5429, %v5397, %v5461
        %v5494 = vsel %vm5430, %v5398, %v5462
        %v5495 = vsel %vm5431, %v5399, %v5463
        %v5496 = vsel %vm5432, %v5400, %v5464
        %v5497 = vsel %vm5433, %v5401, %v5465
        %v5498 = vsel %vm5434, %v5402, %v5466
        %v5499 = vsel %vm5435, %v5403, %v5467
        %v5500 = vsel %vm5436, %v5404, %v5468
        %v5501 = vsel %vm5437, %v5405, %v5469
        %v5502 = vsel %vm5438, %v5406, %v5470
        %v5503 = vsel %vm5439, %v5407, %v5471
        %v5504 = vsel %vm5440, %v5408, %v5472
        %v5505 = vsel %vm5441, %v5409, %v5473
        %v5506 = vsel %vm5442, %v5410, %v5474
        %v5507 = vsel %vm5443, %v5411, %v5475
        %v5508 = vsel %vm5444, %v5412, %v5476
        %v5509 = vsel %vm5445, %v5413, %v5477
        %v5510 = vsel %vm5446, %v5414, %v5478
        %v5511 = vsel %vm5447, %v5415, %v5479
        %v5512 = vsel %vm5448, %v5416, %v5480
        %v5513 = vsel %vm5449, %v5417, %v5481
        %v5514 = vsel %vm5450, %v5418, %v5482
        %v5515 = vsel %vm5451, %v5419, %v5483
        %v5516 = vsel %vm5452, %v5420, %v5484
        %v5517 = vsel %vm5453, %v5421, %v5485
        %v5518 = vsel %vm5454, %v5422, %v5486
        %v5519 = vsel %vm5455, %v5423, %v5487
        %v5520 = vsel %vm5456, %v5424, %v5488
        %v5521 = vsel %vm5457, %v5425, %v5489
        %v5522 = vsel %vm5458, %v5426, %v5490
        %v5523 = vsel %vm5459, %v5427, %v5491
        %v5524 = vpack.c.bf16 %v5493, %v5492
        %v5525 = vpack.c.bf16 %v5495, %v5494
        %v5526 = vpack.c.bf16 %v5497, %v5496
        %v5527 = vpack.c.bf16 %v5499, %v5498
        %v5528 = vpack.c.bf16 %v5501, %v5500
        %v5529 = vpack.c.bf16 %v5503, %v5502
        %v5530 = vpack.c.bf16 %v5505, %v5504
        %v5531 = vpack.c.bf16 %v5507, %v5506
        %v5532 = vpack.c.bf16 %v5509, %v5508
        %v5533 = vpack.c.bf16 %v5511, %v5510
        %v5534 = vpack.c.bf16 %v5513, %v5512
        %v5535 = vpack.c.bf16 %v5515, %v5514
        %v5536 = vpack.c.bf16 %v5517, %v5516
        %v5537 = vpack.c.bf16 %v5519, %v5518
        %v5538 = vpack.c.bf16 %v5521, %v5520
        %v5539 = vpack.c.bf16 %v5523, %v5522
        %v5540 = vld [vmem:[%s9] sm:$0xf]
        %v5541 = vld [vmem:[%s9 + $0x4] sm:$0xf]
        %v5542 = vld [vmem:[%s9 + $0x8] sm:$0xf]
        %v5543 = vld [vmem:[%s9 + $0xc] sm:$0xf]
        %v5544 = vld [vmem:[%s9 + $0x10] sm:$0xf]
        %v5545 = vld [vmem:[%s9 + $0x14] sm:$0xf]
        %v5546 = vld [vmem:[%s9 + $0x18] sm:$0xf]
        %v5547 = vld [vmem:[%s9 + $0x1c] sm:$0xf]
        %v5548 = vld [vmem:[%s10] sm:$0x1]
        %v5550 = vlaneseq
        %v5551 = vshrl.u32 %v5550, 7
        %v5552 = vsub.s32 0, %v5551
        %v5553 = vrot.slane %v5548, %v5552
        %v5563 = vunpack.c.l.b16 %v5540
        %v5564 = vunpack.c.l.b16 %v5541
        %v5565 = vunpack.c.l.b16 %v5542
        %v5566 = vunpack.c.l.b16 %v5543
        %v5567 = vunpack.c.l.b16 %v5544
        %v5568 = vunpack.c.l.b16 %v5545
        %v5569 = vunpack.c.l.b16 %v5546
        %v5570 = vunpack.c.l.b16 %v5547
        %v5571 = vpack.c.b16 %v5564, %v5563
        %v5572 = vpack.c.b16 %v5566, %v5565
        %v5573 = vpack.c.b16 %v5568, %v5567
        %v5574 = vpack.c.b16 %v5570, %v5569
        %v5580 = vsel %vm1645, %v5524, 0
        %v5583 = vsel %vm1645, %v5525, 0
        %v5586 = vsel %vm1645, %v5526, 0
        %v5589 = vsel %vm1645, %v5527, 0
        %v5592 = vsel %vm1645, %v5528, 0
        %v5595 = vsel %vm1645, %v5529, 0
        %v5598 = vsel %vm1645, %v5530, 0
        %v5601 = vsel %vm1645, %v5531, 0
        %v5604 = vsel %vm1645, %v5532, 0
        %v5607 = vsel %vm1645, %v5533, 0
        %v5610 = vsel %vm1645, %v5534, 0
        %v5613 = vsel %vm1645, %v5535, 0
        %v5616 = vsel %vm1645, %v5536, 0
        %v5619 = vsel %vm1645, %v5537, 0
        %v5622 = vsel %vm1645, %v5538, 0
        %v5625 = vsel %vm1645, %v5539, 0
        %5627 = vmatprep.subr.bf16.mxu0 0
        %5628 = vmatpush1.bf16.msra.mxu0 %v5571
        %5629 = vmatprep.subr.bf16.mxu0 0
        %5630 = vmatpush1.bf16.msra.mxu0 %v5572
        %5631 = vmatprep.subr.bf16.mxu0 0
        %5632 = vmatpush1.bf16.msra.mxu0 %v5573
        %5633 = vmatprep.subr.bf16.mxu0 0
        %5634 = vmatpush1.bf16.msra.mxu0 %v5574
        %5635 = vmatprep.subr.bf16.mxu0 0
        %5636 = vmatpush1.bf16.msra.mxu0 0
        %5637 = vmatprep.subr.bf16.mxu0 0
        %5638 = vmatpush1.bf16.msra.mxu0 0
        %5639 = vmatprep.subr.bf16.mxu0 0
        %5640 = vmatpush1.bf16.msra.mxu0 0
        %5641 = vmatprep.subr.bf16.mxu0 0
        %5642 = vmatpush1.bf16.msra.mxu0 0
        %5643 = vmatprep.subr.bf16.mxu0 0
        %5644 = vmatpush1.bf16.msra.mxu0 0
        %5645 = vmatprep.subr.bf16.mxu0 0
        %5646 = vmatpush1.bf16.msra.mxu0 0
        %5647 = vmatprep.subr.bf16.mxu0 0
        %5648 = vmatpush1.bf16.msra.mxu0 0
        %5649 = vmatprep.subr.bf16.mxu0 0
        %5650 = vmatpush1.bf16.msra.mxu0 0
        %5651 = vmatprep.subr.bf16.mxu0 0
        %5652 = vmatpush1.bf16.msra.mxu0 0
        %5653 = vmatprep.subr.bf16.mxu0 0
        %5654 = vmatpush1.bf16.msra.mxu0 0
        %5655 = vmatprep.subr.bf16.mxu0 0
        %5656 = vmatpush1.bf16.msra.mxu0 0
        %5657 = vmatprep.subr.bf16.mxu0 0
        %5658 = vmatpush1.bf16.msra.mxu0 0
        %5659 = vmatprep.mubr.bf16.mxu0 0
        %5660 = vmatmul.mubr.bf16.gmra.mrb[0].mxu0 %v5580
        %v5661 = vpop.f32.mrb[0].mxu0
        %v5662 = vadd.f32 %v5553, %v5661
        %v5663 = vpop.f32.mrb[0].mxu0
        %v5664 = vpop.f32.mrb[0].mxu0
        %v5665 = vadd.f32 %v5553, %v5664
        %v5666 = vpop.f32.mrb[0].mxu0
        %5667 = vmatprep.mubr.bf16.mxu0 0
        %5668 = vmatmul.mubr.bf16.gmra.mrb[0].mxu0 %v5583
        %v5669 = vpop.f32.mrb[0].mxu0
        %v5670 = vadd.f32 %v5553, %v5669
        %v5671 = vpop.f32.mrb[0].mxu0
        %v5672 = vpop.f32.mrb[0].mxu0
        %v5673 = vadd.f32 %v5553, %v5672
        %v5674 = vpop.f32.mrb[0].mxu0
        %5675 = vmatprep.mubr.bf16.mxu0 0
        %5676 = vmatmul.mubr.bf16.gmra.mrb[0].mxu0 %v5586
        %v5677 = vpop.f32.mrb[0].mxu0
        %v5678 = vadd.f32 %v5553, %v5677
        %v5679 = vpop.f32.mrb[0].mxu0
        %v5680 = vpop.f32.mrb[0].mxu0
        %v5681 = vadd.f32 %v5553, %v5680
        %v5682 = vpop.f32.mrb[0].mxu0
        %5683 = vmatprep.mubr.bf16.mxu0 0
        %5684 = vmatmul.mubr.bf16.gmra.mrb[0].mxu0 %v5589
        %v5685 = vpop.f32.mrb[0].mxu0
        %v5686 = vadd.f32 %v5553, %v5685
        %v5687 = vpop.f32.mrb[0].mxu0
        %v5688 = vpop.f32.mrb[0].mxu0
        %v5689 = vadd.f32 %v5553, %v5688
        %v5690 = vpop.f32.mrb[0].mxu0
        %5691 = vmatprep.mubr.bf16.mxu0 0
        %5692 = vmatmul.mubr.bf16.gmra.mrb[0].mxu0 %v5592
        %v5693 = vpop.f32.mrb[0].mxu0
        %v5694 = vadd.f32 %v5553, %v5693
        %v5695 = vpop.f32.mrb[0].mxu0
        %v5696 = vpop.f32.mrb[0].mxu0
        %v5697 = vadd.f32 %v5553, %v5696
        %v5698 = vpop.f32.mrb[0].mxu0
        %5699 = vmatprep.mubr.bf16.mxu0 0
        %5700 = vmatmul.mubr.bf16.gmra.mrb[0].mxu0 %v5595
        %v5701 = vpop.f32.mrb[0].mxu0
        %v5702 = vadd.f32 %v5553, %v5701
        %v5703 = vpop.f32.mrb[0].mxu0
        %v5704 = vpop.f32.mrb[0].mxu0
        %v5705 = vadd.f32 %v5553, %v5704
        %v5706 = vpop.f32.mrb[0].mxu0
        %5707 = vmatprep.mubr.bf16.mxu0 0
        %5708 = vmatmul.mubr.bf16.gmra.mrb[0].mxu0 %v5598
        %v5709 = vpop.f32.mrb[0].mxu0
        %v5710 = vadd.f32 %v5553, %v5709
        %v5711 = vpop.f32.mrb[0].mxu0
        %v5712 = vpop.f32.mrb[0].mxu0
        %v5713 = vadd.f32 %v5553, %v5712
        %v5714 = vpop.f32.mrb[0].mxu0
        %5715 = vmatprep.mubr.bf16.mxu0 0
        %5716 = vmatmul.mubr.bf16.gmra.mrb[0].mxu0 %v5601
        %v5717 = vpop.f32.mrb[0].mxu0
        %v5718 = vadd.f32 %v5553, %v5717
        %v5719 = vpop.f32.mrb[0].mxu0
        %v5720 = vpop.f32.mrb[0].mxu0
        %v5721 = vadd.f32 %v5553, %v5720
        %v5722 = vpop.f32.mrb[0].mxu0
        %5723 = vmatprep.mubr.bf16.mxu0 0
        %5724 = vmatmul.mubr.bf16.gmra.mrb[0].mxu0 %v5604
        %v5725 = vpop.f32.mrb[0].mxu0
        %v5726 = vadd.f32 %v5553, %v5725
        %v5727 = vpop.f32.mrb[0].mxu0
        %v5728 = vpop.f32.mrb[0].mxu0
        %v5729 = vadd.f32 %v5553, %v5728
        %v5730 = vpop.f32.mrb[0].mxu0
        %5731 = vmatprep.mubr.bf16.mxu0 0
        %5732 = vmatmul.mubr.bf16.gmra.mrb[0].mxu0 %v5607
        %v5733 = vpop.f32.mrb[0].mxu0
        %v5734 = vadd.f32 %v5553, %v5733
        %v5735 = vpop.f32.mrb[0].mxu0
        %v5736 = vpop.f32.mrb[0].mxu0
        %v5737 = vadd.f32 %v5553, %v5736
        %v5738 = vpop.f32.mrb[0].mxu0
        %5739 = vmatprep.mubr.bf16.mxu0 0
        %5740 = vmatmul.mubr.bf16.gmra.mrb[0].mxu0 %v5610
        %v5741 = vpop.f32.mrb[0].mxu0
        %v5742 = vadd.f32 %v5553, %v5741
        %v5743 = vpop.f32.mrb[0].mxu0
        %v5744 = vpop.f32.mrb[0].mxu0
        %v5745 = vadd.f32 %v5553, %v5744
        %v5746 = vpop.f32.mrb[0].mxu0
        %5747 = vmatprep.mubr.bf16.mxu0 0
        %5748 = vmatmul.mubr.bf16.gmra.mrb[0].mxu0 %v5613
        %v5749 = vpop.f32.mrb[0].mxu0
        %v5750 = vadd.f32 %v5553, %v5749
        %v5751 = vpop.f32.mrb[0].mxu0
        %v5752 = vpop.f32.mrb[0].mxu0
        %v5753 = vadd.f32 %v5553, %v5752
        %v5754 = vpop.f32.mrb[0].mxu0
        %5755 = vmatprep.mubr.bf16.mxu0 0
        %5756 = vmatmul.mubr.bf16.gmra.mrb[0].mxu0 %v5616
        %v5757 = vpop.f32.mrb[0].mxu0
        %v5758 = vadd.f32 %v5553, %v5757
        %v5759 = vpop.f32.mrb[0].mxu0
        %v5760 = vpop.f32.mrb[0].mxu0
        %v5761 = vadd.f32 %v5553, %v5760
        %v5762 = vpop.f32.mrb[0].mxu0
        %5763 = vmatprep.mubr.bf16.mxu0 0
        %5764 = vmatmul.mubr.bf16.gmra.mrb[0].mxu0 %v5619
        %v5765 = vpop.f32.mrb[0].mxu0
        %v5766 = vadd.f32 %v5553, %v5765
        %v5767 = vpop.f32.mrb[0].mxu0
        %v5768 = vpop.f32.mrb[0].mxu0
        %v5769 = vadd.f32 %v5553, %v5768
        %v5770 = vpop.f32.mrb[0].mxu0
        %5771 = vmatprep.mubr.bf16.mxu0 0
        %5772 = vmatmul.mubr.bf16.gmra.mrb[0].mxu0 %v5622
        %v5773 = vpop.f32.mrb[0].mxu0
        %v5774 = vadd.f32 %v5553, %v5773
        %v5775 = vpop.f32.mrb[0].mxu0
        %v5776 = vpop.f32.mrb[0].mxu0
        %v5777 = vadd.f32 %v5553, %v5776
        %v5778 = vpop.f32.mrb[0].mxu0
        %5779 = vmatprep.mubr.bf16.mxu0 0
        %5780 = vmatmul.mubr.bf16.gmra.mrb[0].mxu0 %v5625
        %v5781 = vpop.f32.mrb[0].mxu0
        %v5782 = vadd.f32 %v5553, %v5781
        %v5783 = vpop.f32.mrb[0].mxu0
        %v5784 = vpop.f32.mrb[0].mxu0
        %v5785 = vadd.f32 %v5553, %v5784
        %v5786 = vpop.f32.mrb[0].mxu0
        %5787 = vdwg.mxu0
        %v5788 = vld [vmem:[%s11] sm:$0x1]
        %v5789 = vld [vmem:[%s12] sm:$0x1]
        %v5790 = vsel %vm1612, %v5662, 0.0
        %5791 = vadd.xlane.f32.xlu0 %v5790
        %v5792 = vpop.xlane.xlu0 %5791
        %v5793 = vsel %vm1612, %v5665, 0.0
        %5794 = vadd.xlane.f32.xlu0 %v5793
        %v5795 = vpop.xlane.xlu0 %5794
        %v5796 = vsel %vm1612, %v5670, 0.0
        %5797 = vadd.xlane.f32.xlu0 %v5796
        %v5798 = vpop.xlane.xlu0 %5797
        %v5799 = vsel %vm1612, %v5673, 0.0
        %5800 = vadd.xlane.f32.xlu0 %v5799
        %v5801 = vpop.xlane.xlu0 %5800
        %v5802 = vsel %vm1612, %v5678, 0.0
        %5803 = vadd.xlane.f32.xlu0 %v5802
        %v5804 = vpop.xlane.xlu0 %5803
        %v5805 = vsel %vm1612, %v5681, 0.0
        %5806 = vadd.xlane.f32.xlu0 %v5805
        %v5807 = vpop.xlane.xlu0 %5806
        %v5808 = vsel %vm1612, %v5686, 0.0
        %5809 = vadd.xlane.f32.xlu0 %v5808
        %v5810 = vpop.xlane.xlu0 %5809
        %v5811 = vsel %vm1612, %v5689, 0.0
        %5812 = vadd.xlane.f32.xlu0 %v5811
        %v5813 = vpop.xlane.xlu0 %5812
        %v5814 = vsel %vm1612, %v5694, 0.0
        %5815 = vadd.xlane.f32.xlu0 %v5814
        %v5816 = vpop.xlane.xlu0 %5815
        %v5817 = vsel %vm1612, %v5697, 0.0
        %5818 = vadd.xlane.f32.xlu0 %v5817
        %v5819 = vpop.xlane.xlu0 %5818
        %v5820 = vsel %vm1612, %v5702, 0.0
        %5821 = vadd.xlane.f32.xlu0 %v5820
        %v5822 = vpop.xlane.xlu0 %5821
        %v5823 = vsel %vm1612, %v5705, 0.0
        %5824 = vadd.xlane.f32.xlu0 %v5823
        %v5825 = vpop.xlane.xlu0 %5824
        %v5826 = vsel %vm1612, %v5710, 0.0
        %5827 = vadd.xlane.f32.xlu0 %v5826
        %v5828 = vpop.xlane.xlu0 %5827
        %v5829 = vsel %vm1612, %v5713, 0.0
        %5830 = vadd.xlane.f32.xlu0 %v5829
        %v5831 = vpop.xlane.xlu0 %5830
        %v5832 = vsel %vm1612, %v5718, 0.0
        %5833 = vadd.xlane.f32.xlu0 %v5832
        %v5834 = vpop.xlane.xlu0 %5833
        %v5835 = vsel %vm1612, %v5721, 0.0
        %5836 = vadd.xlane.f32.xlu0 %v5835
        %v5837 = vpop.xlane.xlu0 %5836
        %v5838 = vsel %vm1612, %v5726, 0.0
        %5839 = vadd.xlane.f32.xlu0 %v5838
        %v5840 = vpop.xlane.xlu0 %5839
        %v5841 = vsel %vm1612, %v5729, 0.0
        %5842 = vadd.xlane.f32.xlu0 %v5841
        %v5843 = vpop.xlane.xlu0 %5842
        %v5844 = vsel %vm1612, %v5734, 0.0
        %5845 = vadd.xlane.f32.xlu0 %v5844
        %v5846 = vpop.xlane.xlu0 %5845
        %v5847 = vsel %vm1612, %v5737, 0.0
        %5848 = vadd.xlane.f32.xlu0 %v5847
        %v5849 = vpop.xlane.xlu0 %5848
        %v5850 = vsel %vm1612, %v5742, 0.0
        %5851 = vadd.xlane.f32.xlu0 %v5850
        %v5852 = vpop.xlane.xlu0 %5851
        %v5853 = vsel %vm1612, %v5745, 0.0
        %5854 = vadd.xlane.f32.xlu0 %v5853
        %v5855 = vpop.xlane.xlu0 %5854
        %v5856 = vsel %vm1612, %v5750, 0.0
        %5857 = vadd.xlane.f32.xlu0 %v5856
        %v5858 = vpop.xlane.xlu0 %5857
        %v5859 = vsel %vm1612, %v5753, 0.0
        %5860 = vadd.xlane.f32.xlu0 %v5859
        %v5861 = vpop.xlane.xlu0 %5860
        %v5862 = vsel %vm1612, %v5758, 0.0
        %5863 = vadd.xlane.f32.xlu0 %v5862
        %v5864 = vpop.xlane.xlu0 %5863
        %v5865 = vsel %vm1612, %v5761, 0.0
        %5866 = vadd.xlane.f32.xlu0 %v5865
        %v5867 = vpop.xlane.xlu0 %5866
        %v5868 = vsel %vm1612, %v5766, 0.0
        %5869 = vadd.xlane.f32.xlu0 %v5868
        %v5870 = vpop.xlane.xlu0 %5869
        %v5871 = vsel %vm1612, %v5769, 0.0
        %5872 = vadd.xlane.f32.xlu0 %v5871
        %v5873 = vpop.xlane.xlu0 %5872
        %v5874 = vsel %vm1612, %v5774, 0.0
        %5875 = vadd.xlane.f32.xlu0 %v5874
        %v5876 = vpop.xlane.xlu0 %5875
        %v5877 = vsel %vm1612, %v5777, 0.0
        %5878 = vadd.xlane.f32.xlu0 %v5877
        %v5879 = vpop.xlane.xlu0 %5878
        %v5880 = vsel %vm1612, %v5782, 0.0
        %5881 = vadd.xlane.f32.xlu0 %v5880
        %v5882 = vpop.xlane.xlu0 %5881
        %v5883 = vsel %vm1612, %v5785, 0.0
        %5884 = vadd.xlane.f32.xlu0 %v5883
        %v5885 = vpop.xlane.xlu0 %5884
        %v5886 = vrcp.pop 32.0
        %v5887 = vmul.f32 %v5792, %v5886
        %v5888 = vmul.f32 %v5795, %v5886
        %v5889 = vmul.f32 %v5798, %v5886
        %v5890 = vmul.f32 %v5801, %v5886
        %v5891 = vmul.f32 %v5804, %v5886
        %v5892 = vmul.f32 %v5807, %v5886
        %v5893 = vmul.f32 %v5810, %v5886
        %v5894 = vmul.f32 %v5813, %v5886
        %v5895 = vmul.f32 %v5816, %v5886
        %v5896 = vmul.f32 %v5819, %v5886
        %v5897 = vmul.f32 %v5822, %v5886
        %v5898 = vmul.f32 %v5825, %v5886
        %v5899 = vmul.f32 %v5828, %v5886
        %v5900 = vmul.f32 %v5831, %v5886
        %v5901 = vmul.f32 %v5834, %v5886
        %v5902 = vmul.f32 %v5837, %v5886
        %v5903 = vmul.f32 %v5840, %v5886
        %v5904 = vmul.f32 %v5843, %v5886
        %v5905 = vmul.f32 %v5846, %v5886
        %v5906 = vmul.f32 %v5849, %v5886
        %v5907 = vmul.f32 %v5852, %v5886
        %v5908 = vmul.f32 %v5855, %v5886
        %v5909 = vmul.f32 %v5858, %v5886
        %v5910 = vmul.f32 %v5861, %v5886
        %v5911 = vmul.f32 %v5864, %v5886
        %v5912 = vmul.f32 %v5867, %v5886
        %v5913 = vmul.f32 %v5870, %v5886
        %v5914 = vmul.f32 %v5873, %v5886
        %v5915 = vmul.f32 %v5876, %v5886
        %v5916 = vmul.f32 %v5879, %v5886
        %v5917 = vmul.f32 %v5882, %v5886
        %v5918 = vmul.f32 %v5885, %v5886
        %v5919 = vsub.f32 %v5662, %v5887
        %v5920 = vsub.f32 %v5665, %v5888
        %v5921 = vsub.f32 %v5670, %v5889
        %v5922 = vsub.f32 %v5673, %v5890
        %v5923 = vsub.f32 %v5678, %v5891
        %v5924 = vsub.f32 %v5681, %v5892
        %v5925 = vsub.f32 %v5686, %v5893
        %v5926 = vsub.f32 %v5689, %v5894
        %v5927 = vsub.f32 %v5694, %v5895
        %v5928 = vsub.f32 %v5697, %v5896
        %v5929 = vsub.f32 %v5702, %v5897
        %v5930 = vsub.f32 %v5705, %v5898
        %v5931 = vsub.f32 %v5710, %v5899
        %v5932 = vsub.f32 %v5713, %v5900
        %v5933 = vsub.f32 %v5718, %v5901
        %v5934 = vsub.f32 %v5721, %v5902
        %v5935 = vsub.f32 %v5726, %v5903
        %v5936 = vsub.f32 %v5729, %v5904
        %v5937 = vsub.f32 %v5734, %v5905
        %v5938 = vsub.f32 %v5737, %v5906
        %v5939 = vsub.f32 %v5742, %v5907
        %v5940 = vsub.f32 %v5745, %v5908
        %v5941 = vsub.f32 %v5750, %v5909
        %v5942 = vsub.f32 %v5753, %v5910
        %v5943 = vsub.f32 %v5758, %v5911
        %v5944 = vsub.f32 %v5761, %v5912
        %v5945 = vsub.f32 %v5766, %v5913
        %v5946 = vsub.f32 %v5769, %v5914
        %v5947 = vsub.f32 %v5774, %v5915
        %v5948 = vsub.f32 %v5777, %v5916
        %v5949 = vsub.f32 %v5782, %v5917
        %v5950 = vsub.f32 %v5785, %v5918
        %v5951 = vmul.f32 %v5919, %v5919
        %v5952 = vmul.f32 %v5920, %v5920
        %v5953 = vmul.f32 %v5921, %v5921
        %v5954 = vmul.f32 %v5922, %v5922
        %v5955 = vmul.f32 %v5923, %v5923
        %v5956 = vmul.f32 %v5924, %v5924
        %v5957 = vmul.f32 %v5925, %v5925
        %v5958 = vmul.f32 %v5926, %v5926
        %v5959 = vmul.f32 %v5927, %v5927
        %v5960 = vmul.f32 %v5928, %v5928
        %v5961 = vmul.f32 %v5929, %v5929
        %v5962 = vmul.f32 %v5930, %v5930
        %v5963 = vmul.f32 %v5931, %v5931
        %v5964 = vmul.f32 %v5932, %v5932
        %v5965 = vmul.f32 %v5933, %v5933
        %v5966 = vmul.f32 %v5934, %v5934
        %v5967 = vmul.f32 %v5935, %v5935
        %v5968 = vmul.f32 %v5936, %v5936
        %v5969 = vmul.f32 %v5937, %v5937
        %v5970 = vmul.f32 %v5938, %v5938
        %v5971 = vmul.f32 %v5939, %v5939
        %v5972 = vmul.f32 %v5940, %v5940
        %v5973 = vmul.f32 %v5941, %v5941
        %v5974 = vmul.f32 %v5942, %v5942
        %v5975 = vmul.f32 %v5943, %v5943
        %v5976 = vmul.f32 %v5944, %v5944
        %v5977 = vmul.f32 %v5945, %v5945
        %v5978 = vmul.f32 %v5946, %v5946
        %v5979 = vmul.f32 %v5947, %v5947
        %v5980 = vmul.f32 %v5948, %v5948
        %v5981 = vmul.f32 %v5949, %v5949
        %v5982 = vmul.f32 %v5950, %v5950
        %v5983 = vsel %vm1612, %v5951, 0.0
        %5984 = vadd.xlane.f32.xlu0 %v5983
        %v5985 = vpop.xlane.xlu0 %5984
        %v5986 = vsel %vm1612, %v5952, 0.0
        %5987 = vadd.xlane.f32.xlu0 %v5986
        %v5988 = vpop.xlane.xlu0 %5987
        %v5989 = vsel %vm1612, %v5953, 0.0
        %5990 = vadd.xlane.f32.xlu0 %v5989
        %v5991 = vpop.xlane.xlu0 %5990
        %v5992 = vsel %vm1612, %v5954, 0.0
        %5993 = vadd.xlane.f32.xlu0 %v5992
        %v5994 = vpop.xlane.xlu0 %5993
        %v5995 = vsel %vm1612, %v5955, 0.0
        %5996 = vadd.xlane.f32.xlu0 %v5995
        %v5997 = vpop.xlane.xlu0 %5996
        %v5998 = vsel %vm1612, %v5956, 0.0
        %5999 = vadd.xlane.f32.xlu0 %v5998
        %v6000 = vpop.xlane.xlu0 %5999
        %v6001 = vsel %vm1612, %v5957, 0.0
        %6002 = vadd.xlane.f32.xlu0 %v6001
        %v6003 = vpop.xlane.xlu0 %6002
        %v6004 = vsel %vm1612, %v5958, 0.0
        %6005 = vadd.xlane.f32.xlu0 %v6004
        %v6006 = vpop.xlane.xlu0 %6005
        %v6007 = vsel %vm1612, %v5959, 0.0
        %6008 = vadd.xlane.f32.xlu0 %v6007
        %v6009 = vpop.xlane.xlu0 %6008
        %v6010 = vsel %vm1612, %v5960, 0.0
        %6011 = vadd.xlane.f32.xlu0 %v6010
        %v6012 = vpop.xlane.xlu0 %6011
        %v6013 = vsel %vm1612, %v5961, 0.0
        %6014 = vadd.xlane.f32.xlu0 %v6013
        %v6015 = vpop.xlane.xlu0 %6014
        %v6016 = vsel %vm1612, %v5962, 0.0
        %6017 = vadd.xlane.f32.xlu0 %v6016
        %v6018 = vpop.xlane.xlu0 %6017
        %v6019 = vsel %vm1612, %v5963, 0.0
        %6020 = vadd.xlane.f32.xlu0 %v6019
        %v6021 = vpop.xlane.xlu0 %6020
        %v6022 = vsel %vm1612, %v5964, 0.0
        %6023 = vadd.xlane.f32.xlu0 %v6022
        %v6024 = vpop.xlane.xlu0 %6023
        %v6025 = vsel %vm1612, %v5965, 0.0
        %6026 = vadd.xlane.f32.xlu0 %v6025
        %v6027 = vpop.xlane.xlu0 %6026
        %v6028 = vsel %vm1612, %v5966, 0.0
        %6029 = vadd.xlane.f32.xlu0 %v6028
        %v6030 = vpop.xlane.xlu0 %6029
        %v6031 = vsel %vm1612, %v5967, 0.0
        %6032 = vadd.xlane.f32.xlu0 %v6031
        %v6033 = vpop.xlane.xlu0 %6032
        %v6034 = vsel %vm1612, %v5968, 0.0
        %6035 = vadd.xlane.f32.xlu0 %v6034
        %v6036 = vpop.xlane.xlu0 %6035
        %v6037 = vsel %vm1612, %v5969, 0.0
        %6038 = vadd.xlane.f32.xlu0 %v6037
        %v6039 = vpop.xlane.xlu0 %6038
        %v6040 = vsel %vm1612, %v5970, 0.0
        %6041 = vadd.xlane.f32.xlu0 %v6040
        %v6042 = vpop.xlane.xlu0 %6041
        %v6043 = vsel %vm1612, %v5971, 0.0
        %6044 = vadd.xlane.f32.xlu0 %v6043
        %v6045 = vpop.xlane.xlu0 %6044
        %v6046 = vsel %vm1612, %v5972, 0.0
        %6047 = vadd.xlane.f32.xlu0 %v6046
        %v6048 = vpop.xlane.xlu0 %6047
        %v6049 = vsel %vm1612, %v5973, 0.0
        %6050 = vadd.xlane.f32.xlu0 %v6049
        %v6051 = vpop.xlane.xlu0 %6050
        %v6052 = vsel %vm1612, %v5974, 0.0
        %6053 = vadd.xlane.f32.xlu0 %v6052
        %v6054 = vpop.xlane.xlu0 %6053
        %v6055 = vsel %vm1612, %v5975, 0.0
        %6056 = vadd.xlane.f32.xlu0 %v6055
        %v6057 = vpop.xlane.xlu0 %6056
        %v6058 = vsel %vm1612, %v5976, 0.0
        %6059 = vadd.xlane.f32.xlu0 %v6058
        %v6060 = vpop.xlane.xlu0 %6059
        %v6061 = vsel %vm1612, %v5977, 0.0
        %6062 = vadd.xlane.f32.xlu0 %v6061
        %v6063 = vpop.xlane.xlu0 %6062
        %v6064 = vsel %vm1612, %v5978, 0.0
        %6065 = vadd.xlane.f32.xlu0 %v6064
        %v6066 = vpop.xlane.xlu0 %6065
        %v6067 = vsel %vm1612, %v5979, 0.0
        %6068 = vadd.xlane.f32.xlu0 %v6067
        %v6069 = vpop.xlane.xlu0 %6068
        %v6070 = vsel %vm1612, %v5980, 0.0
        %6071 = vadd.xlane.f32.xlu0 %v6070
        %v6072 = vpop.xlane.xlu0 %6071
        %v6073 = vsel %vm1612, %v5981, 0.0
        %6074 = vadd.xlane.f32.xlu0 %v6073
        %v6075 = vpop.xlane.xlu0 %6074
        %v6076 = vsel %vm1612, %v5982, 0.0
        %6077 = vadd.xlane.f32.xlu0 %v6076
        %v6078 = vpop.xlane.xlu0 %6077
        %v6079 = vmul.f32 %v5985, %v5886
        %v6080 = vmul.f32 %v5988, %v5886
        %v6081 = vmul.f32 %v5991, %v5886
        %v6082 = vmul.f32 %v5994, %v5886
        %v6083 = vmul.f32 %v5997, %v5886
        %v6084 = vmul.f32 %v6000, %v5886
        %v6085 = vmul.f32 %v6003, %v5886
        %v6086 = vmul.f32 %v6006, %v5886
        %v6087 = vmul.f32 %v6009, %v5886
        %v6088 = vmul.f32 %v6012, %v5886
        %v6089 = vmul.f32 %v6015, %v5886
        %v6090 = vmul.f32 %v6018, %v5886
        %v6091 = vmul.f32 %v6021, %v5886
        %v6092 = vmul.f32 %v6024, %v5886
        %v6093 = vmul.f32 %v6027, %v5886
        %v6094 = vmul.f32 %v6030, %v5886
        %v6095 = vmul.f32 %v6033, %v5886
        %v6096 = vmul.f32 %v6036, %v5886
        %v6097 = vmul.f32 %v6039, %v5886
        %v6098 = vmul.f32 %v6042, %v5886
        %v6099 = vmul.f32 %v6045, %v5886
        %v6100 = vmul.f32 %v6048, %v5886
        %v6101 = vmul.f32 %v6051, %v5886
        %v6102 = vmul.f32 %v6054, %v5886
        %v6103 = vmul.f32 %v6057, %v5886
        %v6104 = vmul.f32 %v6060, %v5886
        %v6105 = vmul.f32 %v6063, %v5886
        %v6106 = vmul.f32 %v6066, %v5886
        %v6107 = vmul.f32 %v6069, %v5886
        %v6108 = vmul.f32 %v6072, %v5886
        %v6109 = vmul.f32 %v6075, %v5886
        %v6110 = vmul.f32 %v6078, %v5886
        %v6111 = vadd.f32 %v6079, 1e-05
        %v6112 = vadd.f32 %v6080, 1e-05
        %v6113 = vadd.f32 %v6081, 1e-05
        %v6114 = vadd.f32 %v6082, 1e-05
        %v6115 = vadd.f32 %v6083, 1e-05
        %v6116 = vadd.f32 %v6084, 1e-05
        %v6117 = vadd.f32 %v6085, 1e-05
        %v6118 = vadd.f32 %v6086, 1e-05
        %v6119 = vadd.f32 %v6087, 1e-05
        %v6120 = vadd.f32 %v6088, 1e-05
        %v6121 = vadd.f32 %v6089, 1e-05
        %v6122 = vadd.f32 %v6090, 1e-05
        %v6123 = vadd.f32 %v6091, 1e-05
        %v6124 = vadd.f32 %v6092, 1e-05
        %v6125 = vadd.f32 %v6093, 1e-05
        %v6126 = vadd.f32 %v6094, 1e-05
        %v6127 = vadd.f32 %v6095, 1e-05
        %v6128 = vadd.f32 %v6096, 1e-05
        %v6129 = vadd.f32 %v6097, 1e-05
        %v6130 = vadd.f32 %v6098, 1e-05
        %v6131 = vadd.f32 %v6099, 1e-05
        %v6132 = vadd.f32 %v6100, 1e-05
        %v6133 = vadd.f32 %v6101, 1e-05
        %v6134 = vadd.f32 %v6102, 1e-05
        %v6135 = vadd.f32 %v6103, 1e-05
        %v6136 = vadd.f32 %v6104, 1e-05
        %v6137 = vadd.f32 %v6105, 1e-05
        %v6138 = vadd.f32 %v6106, 1e-05
        %v6139 = vadd.f32 %v6107, 1e-05
        %v6140 = vadd.f32 %v6108, 1e-05
        %v6141 = vadd.f32 %v6109, 1e-05
        %v6142 = vadd.f32 %v6110, 1e-05
        %v6143 = vrsqrt.pop %v6111
        %v6144 = vrsqrt.pop %v6112
        %v6145 = vrsqrt.pop %v6113
        %v6146 = vrsqrt.pop %v6114
        %v6147 = vrsqrt.pop %v6115
        %v6148 = vrsqrt.pop %v6116
        %v6149 = vrsqrt.pop %v6117
        %v6150 = vrsqrt.pop %v6118
        %v6151 = vrsqrt.pop %v6119
        %v6152 = vrsqrt.pop %v6120
        %v6153 = vrsqrt.pop %v6121
        %v6154 = vrsqrt.pop %v6122
        %v6155 = vrsqrt.pop %v6123
        %v6156 = vrsqrt.pop %v6124
        %v6157 = vrsqrt.pop %v6125
        %v6158 = vrsqrt.pop %v6126
        %v6159 = vrsqrt.pop %v6127
        %v6160 = vrsqrt.pop %v6128
        %v6161 = vrsqrt.pop %v6129
        %v6162 = vrsqrt.pop %v6130
        %v6163 = vrsqrt.pop %v6131
        %v6164 = vrsqrt.pop %v6132
        %v6165 = vrsqrt.pop %v6133
        %v6166 = vrsqrt.pop %v6134
        %v6167 = vrsqrt.pop %v6135
        %v6168 = vrsqrt.pop %v6136
        %v6169 = vrsqrt.pop %v6137
        %v6170 = vrsqrt.pop %v6138
        %v6171 = vrsqrt.pop %v6139
        %v6172 = vrsqrt.pop %v6140
        %v6173 = vrsqrt.pop %v6141
        %v6174 = vrsqrt.pop %v6142
        %v6175 = vmul.f32 %v5919, %v6143
        %v6176 = vmul.f32 %v5920, %v6144
        %v6177 = vmul.f32 %v5921, %v6145
        %v6178 = vmul.f32 %v5922, %v6146
        %v6179 = vmul.f32 %v5923, %v6147
        %v6180 = vmul.f32 %v5924, %v6148
        %v6181 = vmul.f32 %v5925, %v6149
        %v6182 = vmul.f32 %v5926, %v6150
        %v6183 = vmul.f32 %v5927, %v6151
        %v6184 = vmul.f32 %v5928, %v6152
        %v6185 = vmul.f32 %v5929, %v6153
        %v6186 = vmul.f32 %v5930, %v6154
        %v6187 = vmul.f32 %v5931, %v6155
        %v6188 = vmul.f32 %v5932, %v6156
        %v6189 = vmul.f32 %v5933, %v6157
        %v6190 = vmul.f32 %v5934, %v6158
        %v6191 = vmul.f32 %v5935, %v6159
        %v6192 = vmul.f32 %v5936, %v6160
        %v6193 = vmul.f32 %v5937, %v6161
        %v6194 = vmul.f32 %v5938, %v6162
        %v6195 = vmul.f32 %v5939, %v6163
        %v6196 = vmul.f32 %v5940, %v6164
        %v6197 = vmul.f32 %v5941, %v6165
        %v6198 = vmul.f32 %v5942, %v6166
        %v6199 = vmul.f32 %v5943, %v6167
        %v6200 = vmul.f32 %v5944, %v6168
        %v6201 = vmul.f32 %v5945, %v6169
        %v6202 = vmul.f32 %v5946, %v6170
        %v6203 = vmul.f32 %v5947, %v6171
        %v6204 = vmul.f32 %v5948, %v6172
        %v6205 = vmul.f32 %v5949, %v6173
        %v6206 = vmul.f32 %v5950, %v6174
        %v6208 = vlaneseq
        %v6209 = vshrl.u32 %v6208, 7
        %v6210 = vsub.s32 0, %v6209
        %v6211 = vrot.slane %v5788, %v6210
        %v6213 = vmul.f32 %v6175, %v6211
        %v6214 = vmul.f32 %v6176, %v6211
        %v6215 = vmul.f32 %v6177, %v6211
        %v6216 = vmul.f32 %v6178, %v6211
        %v6217 = vmul.f32 %v6179, %v6211
        %v6218 = vmul.f32 %v6180, %v6211
        %v6219 = vmul.f32 %v6181, %v6211
        %v6220 = vmul.f32 %v6182, %v6211
        %v6221 = vmul.f32 %v6183, %v6211
        %v6222 = vmul.f32 %v6184, %v6211
        %v6223 = vmul.f32 %v6185, %v6211
        %v6224 = vmul.f32 %v6186, %v6211
        %v6225 = vmul.f32 %v6187, %v6211
        %v6226 = vmul.f32 %v6188, %v6211
        %v6227 = vmul.f32 %v6189, %v6211
        %v6228 = vmul.f32 %v6190, %v6211
        %v6229 = vmul.f32 %v6191, %v6211
        %v6230 = vmul.f32 %v6192, %v6211
        %v6231 = vmul.f32 %v6193, %v6211
        %v6232 = vmul.f32 %v6194, %v6211
        %v6233 = vmul.f32 %v6195, %v6211
        %v6234 = vmul.f32 %v6196, %v6211
        %v6235 = vmul.f32 %v6197, %v6211
        %v6236 = vmul.f32 %v6198, %v6211
        %v6237 = vmul.f32 %v6199, %v6211
        %v6238 = vmul.f32 %v6200, %v6211
        %v6239 = vmul.f32 %v6201, %v6211
        %v6240 = vmul.f32 %v6202, %v6211
        %v6241 = vmul.f32 %v6203, %v6211
        %v6242 = vmul.f32 %v6204, %v6211
        %v6243 = vmul.f32 %v6205, %v6211
        %v6244 = vmul.f32 %v6206, %v6211
        %v6246 = vlaneseq
        %v6247 = vshrl.u32 %v6246, 7
        %v6248 = vsub.s32 0, %v6247
        %v6249 = vrot.slane %v5789, %v6248
        %v6251 = vadd.f32 %v6213, %v6249
        %v6252 = vadd.f32 %v6214, %v6249
        %v6253 = vadd.f32 %v6215, %v6249
        %v6254 = vadd.f32 %v6216, %v6249
        %v6255 = vadd.f32 %v6217, %v6249
        %v6256 = vadd.f32 %v6218, %v6249
        %v6257 = vadd.f32 %v6219, %v6249
        %v6258 = vadd.f32 %v6220, %v6249
        %v6259 = vadd.f32 %v6221, %v6249
        %v6260 = vadd.f32 %v6222, %v6249
        %v6261 = vadd.f32 %v6223, %v6249
        %v6262 = vadd.f32 %v6224, %v6249
        %v6263 = vadd.f32 %v6225, %v6249
        %v6264 = vadd.f32 %v6226, %v6249
        %v6265 = vadd.f32 %v6227, %v6249
        %v6266 = vadd.f32 %v6228, %v6249
        %v6267 = vadd.f32 %v6229, %v6249
        %v6268 = vadd.f32 %v6230, %v6249
        %v6269 = vadd.f32 %v6231, %v6249
        %v6270 = vadd.f32 %v6232, %v6249
        %v6271 = vadd.f32 %v6233, %v6249
        %v6272 = vadd.f32 %v6234, %v6249
        %v6273 = vadd.f32 %v6235, %v6249
        %v6274 = vadd.f32 %v6236, %v6249
        %v6275 = vadd.f32 %v6237, %v6249
        %v6276 = vadd.f32 %v6238, %v6249
        %v6277 = vadd.f32 %v6239, %v6249
        %v6278 = vadd.f32 %v6240, %v6249
        %v6279 = vadd.f32 %v6241, %v6249
        %v6280 = vadd.f32 %v6242, %v6249
        %v6281 = vadd.f32 %v6243, %v6249
        %v6282 = vadd.f32 %v6244, %v6249
        %vm6283 = vcmp.gt.f32.partialorder %v6251, 0.0
        %vm6284 = vcmp.gt.f32.partialorder %v6252, 0.0
        %vm6285 = vcmp.gt.f32.partialorder %v6253, 0.0
        %vm6286 = vcmp.gt.f32.partialorder %v6254, 0.0
        %vm6287 = vcmp.gt.f32.partialorder %v6255, 0.0
        %vm6288 = vcmp.gt.f32.partialorder %v6256, 0.0
        %vm6289 = vcmp.gt.f32.partialorder %v6257, 0.0
        %vm6290 = vcmp.gt.f32.partialorder %v6258, 0.0
        %vm6291 = vcmp.gt.f32.partialorder %v6259, 0.0
        %vm6292 = vcmp.gt.f32.partialorder %v6260, 0.0
        %vm6293 = vcmp.gt.f32.partialorder %v6261, 0.0
        %vm6294 = vcmp.gt.f32.partialorder %v6262, 0.0
        %vm6295 = vcmp.gt.f32.partialorder %v6263, 0.0
        %vm6296 = vcmp.gt.f32.partialorder %v6264, 0.0
        %vm6297 = vcmp.gt.f32.partialorder %v6265, 0.0
        %vm6298 = vcmp.gt.f32.partialorder %v6266, 0.0
        %vm6299 = vcmp.gt.f32.partialorder %v6267, 0.0
        %vm6300 = vcmp.gt.f32.partialorder %v6268, 0.0
        %vm6301 = vcmp.gt.f32.partialorder %v6269, 0.0
        %vm6302 = vcmp.gt.f32.partialorder %v6270, 0.0
        %vm6303 = vcmp.gt.f32.partialorder %v6271, 0.0
        %vm6304 = vcmp.gt.f32.partialorder %v6272, 0.0
        %vm6305 = vcmp.gt.f32.partialorder %v6273, 0.0
        %vm6306 = vcmp.gt.f32.partialorder %v6274, 0.0
        %vm6307 = vcmp.gt.f32.partialorder %v6275, 0.0
        %vm6308 = vcmp.gt.f32.partialorder %v6276, 0.0
        %vm6309 = vcmp.gt.f32.partialorder %v6277, 0.0
        %vm6310 = vcmp.gt.f32.partialorder %v6278, 0.0
        %vm6311 = vcmp.gt.f32.partialorder %v6279, 0.0
        %vm6312 = vcmp.gt.f32.partialorder %v6280, 0.0
        %vm6313 = vcmp.gt.f32.partialorder %v6281, 0.0
        %vm6314 = vcmp.gt.f32.partialorder %v6282, 0.0
        %v6315 = vmul.f32 %v6251, 0.01
        %v6316 = vmul.f32 %v6252, 0.01
        %v6317 = vmul.f32 %v6253, 0.01
        %v6318 = vmul.f32 %v6254, 0.01
        %v6319 = vmul.f32 %v6255, 0.01
        %v6320 = vmul.f32 %v6256, 0.01
        %v6321 = vmul.f32 %v6257, 0.01
        %v6322 = vmul.f32 %v6258, 0.01
        %v6323 = vmul.f32 %v6259, 0.01
        %v6324 = vmul.f32 %v6260, 0.01
        %v6325 = vmul.f32 %v6261, 0.01
        %v6326 = vmul.f32 %v6262, 0.01
        %v6327 = vmul.f32 %v6263, 0.01
        %v6328 = vmul.f32 %v6264, 0.01
        %v6329 = vmul.f32 %v6265, 0.01
        %v6330 = vmul.f32 %v6266, 0.01
        %v6331 = vmul.f32 %v6267, 0.01
        %v6332 = vmul.f32 %v6268, 0.01
        %v6333 = vmul.f32 %v6269, 0.01
        %v6334 = vmul.f32 %v6270, 0.01
        %v6335 = vmul.f32 %v6271, 0.01
        %v6336 = vmul.f32 %v6272, 0.01
        %v6337 = vmul.f32 %v6273, 0.01
        %v6338 = vmul.f32 %v6274, 0.01
        %v6339 = vmul.f32 %v6275, 0.01
        %v6340 = vmul.f32 %v6276, 0.01
        %v6341 = vmul.f32 %v6277, 0.01
        %v6342 = vmul.f32 %v6278, 0.01
        %v6343 = vmul.f32 %v6279, 0.01
        %v6344 = vmul.f32 %v6280, 0.01
        %v6345 = vmul.f32 %v6281, 0.01
        %v6346 = vmul.f32 %v6282, 0.01
        %v6347 = vsel %vm6283, %v6251, %v6315
        %v6348 = vsel %vm6284, %v6252, %v6316
        %v6349 = vsel %vm6285, %v6253, %v6317
        %v6350 = vsel %vm6286, %v6254, %v6318
        %v6351 = vsel %vm6287, %v6255, %v6319
        %v6352 = vsel %vm6288, %v6256, %v6320
        %v6353 = vsel %vm6289, %v6257, %v6321
        %v6354 = vsel %vm6290, %v6258, %v6322
        %v6355 = vsel %vm6291, %v6259, %v6323
        %v6356 = vsel %vm6292, %v6260, %v6324
        %v6357 = vsel %vm6293, %v6261, %v6325
        %v6358 = vsel %vm6294, %v6262, %v6326
        %v6359 = vsel %vm6295, %v6263, %v6327
        %v6360 = vsel %vm6296, %v6264, %v6328
        %v6361 = vsel %vm6297, %v6265, %v6329
        %v6362 = vsel %vm6298, %v6266, %v6330
        %v6363 = vsel %vm6299, %v6267, %v6331
        %v6364 = vsel %vm6300, %v6268, %v6332
        %v6365 = vsel %vm6301, %v6269, %v6333
        %v6366 = vsel %vm6302, %v6270, %v6334
        %v6367 = vsel %vm6303, %v6271, %v6335
        %v6368 = vsel %vm6304, %v6272, %v6336
        %v6369 = vsel %vm6305, %v6273, %v6337
        %v6370 = vsel %vm6306, %v6274, %v6338
        %v6371 = vsel %vm6307, %v6275, %v6339
        %v6372 = vsel %vm6308, %v6276, %v6340
        %v6373 = vsel %vm6309, %v6277, %v6341
        %v6374 = vsel %vm6310, %v6278, %v6342
        %v6375 = vsel %vm6311, %v6279, %v6343
        %v6376 = vsel %vm6312, %v6280, %v6344
        %v6377 = vsel %vm6313, %v6281, %v6345
        %v6378 = vsel %vm6314, %v6282, %v6346
        %v6379 = vld [vmem:[%s13] sm:$0xf]
        %v6380 = vld [vmem:[%s13 + $0x4] sm:$0xf]
        %v6381 = vld [vmem:[%s13 + $0x8] sm:$0xf]
        %v6382 = vld [vmem:[%s13 + $0xc] sm:$0xf]
        %v6383 = vld [vmem:[%s13 + $0x10] sm:$0xf]
        %v6384 = vld [vmem:[%s13 + $0x14] sm:$0xf]
        %v6385 = vld [vmem:[%s13 + $0x18] sm:$0xf]
        %v6386 = vld [vmem:[%s13 + $0x1c] sm:$0xf]
        %v6387 = vld [vmem:[%s14] sm:$0x1]
        %v6389 = vlaneseq
        %v6390 = vshrl.u32 %v6389, 7
        %v6391 = vsub.s32 0, %v6390
        %v6392 = vrot.slane %v6387, %v6391
        %v6402 = vunpack.c.l.b16 %v6379
        %v6403 = vunpack.c.l.b16 %v6380
        %v6404 = vunpack.c.l.b16 %v6381
        %v6405 = vunpack.c.l.b16 %v6382
        %v6406 = vunpack.c.l.b16 %v6383
        %v6407 = vunpack.c.l.b16 %v6384
        %v6408 = vunpack.c.l.b16 %v6385
        %v6409 = vunpack.c.l.b16 %v6386
        %v6410 = vpack.c.b16 %v6403, %v6402
        %v6411 = vpack.c.b16 %v6405, %v6404
        %v6412 = vpack.c.b16 %v6407, %v6406
        %v6413 = vpack.c.b16 %v6409, %v6408
        %6418 = vmatprep.subr.bf16.mxu0 0
        %6419 = vmatpush1.bf16.msra.mxu0 %v6410
        %6420 = vmatprep.subr.bf16.mxu0 0
        %6421 = vmatpush1.bf16.msra.mxu0 %v6411
        %6422 = vmatprep.subr.bf16.mxu0 0
        %6423 = vmatpush1.bf16.msra.mxu0 %v6412
        %6424 = vmatprep.subr.bf16.mxu0 0
        %6425 = vmatpush1.bf16.msra.mxu0 %v6413
        %6426 = vmatprep.subr.bf16.mxu0 0
        %6427 = vmatpush1.bf16.msra.mxu0 0
        %6428 = vmatprep.subr.bf16.mxu0 0
        %6429 = vmatpush1.bf16.msra.mxu0 0
        %6430 = vmatprep.subr.bf16.mxu0 0
        %6431 = vmatpush1.bf16.msra.mxu0 0
        %6432 = vmatprep.subr.bf16.mxu0 0
        %6433 = vmatpush1.bf16.msra.mxu0 0
        %6434 = vmatprep.subr.bf16.mxu0 0
        %6435 = vmatpush1.bf16.msra.mxu0 0
        %6436 = vmatprep.subr.bf16.mxu0 0
        %6437 = vmatpush1.bf16.msra.mxu0 0
        %6438 = vmatprep.subr.bf16.mxu0 0
        %6439 = vmatpush1.bf16.msra.mxu0 0
        %6440 = vmatprep.subr.bf16.mxu0 0
        %6441 = vmatpush1.bf16.msra.mxu0 0
        %6442 = vmatprep.subr.bf16.mxu0 0
        %6443 = vmatpush1.bf16.msra.mxu0 0
        %6444 = vmatprep.subr.bf16.mxu0 0
        %6445 = vmatpush1.bf16.msra.mxu0 0
        %6446 = vmatprep.subr.bf16.mxu0 0
        %6447 = vmatpush1.bf16.msra.mxu0 0
        %6448 = vmatprep.subr.bf16.mxu0 0
        %6449 = vmatpush1.bf16.msra.mxu0 0
        %6450 = vmatprep.mubr.bf16.mxu0 0
        %6451 = vmatmul.mubr.bf16.gmra.mrb[0].mxu0 %v5580
        %v6452 = vpop.f32.mrb[0].mxu0
        %v6453 = vadd.f32 %v6392, %v6452
        %v6454 = vpop.f32.mrb[0].mxu0
        %v6455 = vpop.f32.mrb[0].mxu0
        %v6456 = vadd.f32 %v6392, %v6455
        %v6457 = vpop.f32.mrb[0].mxu0
        %6458 = vmatprep.mubr.bf16.mxu0 0
        %6459 = vmatmul.mubr.bf16.gmra.mrb[0].mxu0 %v5583
        %v6460 = vpop.f32.mrb[0].mxu0
        %v6461 = vadd.f32 %v6392, %v6460
        %v6462 = vpop.f32.mrb[0].mxu0
        %v6463 = vpop.f32.mrb[0].mxu0
        %v6464 = vadd.f32 %v6392, %v6463
        %v6465 = vpop.f32.mrb[0].mxu0
        %6466 = vmatprep.mubr.bf16.mxu0 0
        %6467 = vmatmul.mubr.bf16.gmra.mrb[0].mxu0 %v5586
        %v6468 = vpop.f32.mrb[0].mxu0
        %v6469 = vadd.f32 %v6392, %v6468
        %v6470 = vpop.f32.mrb[0].mxu0
        %v6471 = vpop.f32.mrb[0].mxu0
        %v6472 = vadd.f32 %v6392, %v6471
        %v6473 = vpop.f32.mrb[0].mxu0
        %6474 = vmatprep.mubr.bf16.mxu0 0
        %6475 = vmatmul.mubr.bf16.gmra.mrb[0].mxu0 %v5589
        %v6476 = vpop.f32.mrb[0].mxu0
        %v6477 = vadd.f32 %v6392, %v6476
        %v6478 = vpop.f32.mrb[0].mxu0
        %v6479 = vpop.f32.mrb[0].mxu0
        %v6480 = vadd.f32 %v6392, %v6479
        %v6481 = vpop.f32.mrb[0].mxu0
        %6482 = vmatprep.mubr.bf16.mxu0 0
        %6483 = vmatmul.mubr.bf16.gmra.mrb[0].mxu0 %v5592
        %v6484 = vpop.f32.mrb[0].mxu0
        %v6485 = vadd.f32 %v6392, %v6484
        %v6486 = vpop.f32.mrb[0].mxu0
        %v6487 = vpop.f32.mrb[0].mxu0
        %v6488 = vadd.f32 %v6392, %v6487
        %v6489 = vpop.f32.mrb[0].mxu0
        %6490 = vmatprep.mubr.bf16.mxu0 0
        %6491 = vmatmul.mubr.bf16.gmra.mrb[0].mxu0 %v5595
        %v6492 = vpop.f32.mrb[0].mxu0
        %v6493 = vadd.f32 %v6392, %v6492
        %v6494 = vpop.f32.mrb[0].mxu0
        %v6495 = vpop.f32.mrb[0].mxu0
        %v6496 = vadd.f32 %v6392, %v6495
        %v6497 = vpop.f32.mrb[0].mxu0
        %6498 = vmatprep.mubr.bf16.mxu0 0
        %6499 = vmatmul.mubr.bf16.gmra.mrb[0].mxu0 %v5598
        %v6500 = vpop.f32.mrb[0].mxu0
        %v6501 = vadd.f32 %v6392, %v6500
        %v6502 = vpop.f32.mrb[0].mxu0
        %v6503 = vpop.f32.mrb[0].mxu0
        %v6504 = vadd.f32 %v6392, %v6503
        %v6505 = vpop.f32.mrb[0].mxu0
        %6506 = vmatprep.mubr.bf16.mxu0 0
        %6507 = vmatmul.mubr.bf16.gmra.mrb[0].mxu0 %v5601
        %v6508 = vpop.f32.mrb[0].mxu0
        %v6509 = vadd.f32 %v6392, %v6508
        %v6510 = vpop.f32.mrb[0].mxu0
        %v6511 = vpop.f32.mrb[0].mxu0
        %v6512 = vadd.f32 %v6392, %v6511
        %v6513 = vpop.f32.mrb[0].mxu0
        %6514 = vmatprep.mubr.bf16.mxu0 0
        %6515 = vmatmul.mubr.bf16.gmra.mrb[0].mxu0 %v5604
        %v6516 = vpop.f32.mrb[0].mxu0
        %v6517 = vadd.f32 %v6392, %v6516
        %v6518 = vpop.f32.mrb[0].mxu0
        %v6519 = vpop.f32.mrb[0].mxu0
        %v6520 = vadd.f32 %v6392, %v6519
        %v6521 = vpop.f32.mrb[0].mxu0
        %6522 = vmatprep.mubr.bf16.mxu0 0
        %6523 = vmatmul.mubr.bf16.gmra.mrb[0].mxu0 %v5607
        %v6524 = vpop.f32.mrb[0].mxu0
        %v6525 = vadd.f32 %v6392, %v6524
        %v6526 = vpop.f32.mrb[0].mxu0
        %v6527 = vpop.f32.mrb[0].mxu0
        %v6528 = vadd.f32 %v6392, %v6527
        %v6529 = vpop.f32.mrb[0].mxu0
        %6530 = vmatprep.mubr.bf16.mxu0 0
        %6531 = vmatmul.mubr.bf16.gmra.mrb[0].mxu0 %v5610
        %v6532 = vpop.f32.mrb[0].mxu0
        %v6533 = vadd.f32 %v6392, %v6532
        %v6534 = vpop.f32.mrb[0].mxu0
        %v6535 = vpop.f32.mrb[0].mxu0
        %v6536 = vadd.f32 %v6392, %v6535
        %v6537 = vpop.f32.mrb[0].mxu0
        %6538 = vmatprep.mubr.bf16.mxu0 0
        %6539 = vmatmul.mubr.bf16.gmra.mrb[0].mxu0 %v5613
        %v6540 = vpop.f32.mrb[0].mxu0
        %v6541 = vadd.f32 %v6392, %v6540
        %v6542 = vpop.f32.mrb[0].mxu0
        %v6543 = vpop.f32.mrb[0].mxu0
        %v6544 = vadd.f32 %v6392, %v6543
        %v6545 = vpop.f32.mrb[0].mxu0
        %6546 = vmatprep.mubr.bf16.mxu0 0
        %6547 = vmatmul.mubr.bf16.gmra.mrb[0].mxu0 %v5616
        %v6548 = vpop.f32.mrb[0].mxu0
        %v6549 = vadd.f32 %v6392, %v6548
        %v6550 = vpop.f32.mrb[0].mxu0
        %v6551 = vpop.f32.mrb[0].mxu0
        %v6552 = vadd.f32 %v6392, %v6551
        %v6553 = vpop.f32.mrb[0].mxu0
        %6554 = vmatprep.mubr.bf16.mxu0 0
        %6555 = vmatmul.mubr.bf16.gmra.mrb[0].mxu0 %v5619
        %v6556 = vpop.f32.mrb[0].mxu0
        %v6557 = vadd.f32 %v6392, %v6556
        %v6558 = vpop.f32.mrb[0].mxu0
        %v6559 = vpop.f32.mrb[0].mxu0
        %v6560 = vadd.f32 %v6392, %v6559
        %v6561 = vpop.f32.mrb[0].mxu0
        %6562 = vmatprep.mubr.bf16.mxu0 0
        %6563 = vmatmul.mubr.bf16.gmra.mrb[0].mxu0 %v5622
        %v6564 = vpop.f32.mrb[0].mxu0
        %v6565 = vadd.f32 %v6392, %v6564
        %v6566 = vpop.f32.mrb[0].mxu0
        %v6567 = vpop.f32.mrb[0].mxu0
        %v6568 = vadd.f32 %v6392, %v6567
        %v6569 = vpop.f32.mrb[0].mxu0
        %6570 = vmatprep.mubr.bf16.mxu0 0
        %6571 = vmatmul.mubr.bf16.gmra.mrb[0].mxu0 %v5625
        %v6572 = vpop.f32.mrb[0].mxu0
        %v6573 = vadd.f32 %v6392, %v6572
        %v6574 = vpop.f32.mrb[0].mxu0
        %v6575 = vpop.f32.mrb[0].mxu0
        %v6576 = vadd.f32 %v6392, %v6575
        %v6577 = vpop.f32.mrb[0].mxu0
        %6578 = vdwg.mxu0
        %v6579 = vld [vmem:[%s15] sm:$0x1]
        %v6580 = vld [vmem:[%s16] sm:$0x1]
        %v6581 = vsel %vm1612, %v6453, 0.0
        %6582 = vadd.xlane.f32.xlu0 %v6581
        %v6583 = vpop.xlane.xlu0 %6582
        %v6584 = vsel %vm1612, %v6456, 0.0
        %6585 = vadd.xlane.f32.xlu0 %v6584
        %v6586 = vpop.xlane.xlu0 %6585
        %v6587 = vsel %vm1612, %v6461, 0.0
        %6588 = vadd.xlane.f32.xlu0 %v6587
        %v6589 = vpop.xlane.xlu0 %6588
        %v6590 = vsel %vm1612, %v6464, 0.0
        %6591 = vadd.xlane.f32.xlu0 %v6590
        %v6592 = vpop.xlane.xlu0 %6591
        %v6593 = vsel %vm1612, %v6469, 0.0
        %6594 = vadd.xlane.f32.xlu0 %v6593
        %v6595 = vpop.xlane.xlu0 %6594
        %v6596 = vsel %vm1612, %v6472, 0.0
        %6597 = vadd.xlane.f32.xlu0 %v6596
        %v6598 = vpop.xlane.xlu0 %6597
        %v6599 = vsel %vm1612, %v6477, 0.0
        %6600 = vadd.xlane.f32.xlu0 %v6599
        %v6601 = vpop.xlane.xlu0 %6600
        %v6602 = vsel %vm1612, %v6480, 0.0
        %6603 = vadd.xlane.f32.xlu0 %v6602
        %v6604 = vpop.xlane.xlu0 %6603
        %v6605 = vsel %vm1612, %v6485, 0.0
        %6606 = vadd.xlane.f32.xlu0 %v6605
        %v6607 = vpop.xlane.xlu0 %6606
        %v6608 = vsel %vm1612, %v6488, 0.0
        %6609 = vadd.xlane.f32.xlu0 %v6608
        %v6610 = vpop.xlane.xlu0 %6609
        %v6611 = vsel %vm1612, %v6493, 0.0
        %6612 = vadd.xlane.f32.xlu0 %v6611
        %v6613 = vpop.xlane.xlu0 %6612
        %v6614 = vsel %vm1612, %v6496, 0.0
        %6615 = vadd.xlane.f32.xlu0 %v6614
        %v6616 = vpop.xlane.xlu0 %6615
        %v6617 = vsel %vm1612, %v6501, 0.0
        %6618 = vadd.xlane.f32.xlu0 %v6617
        %v6619 = vpop.xlane.xlu0 %6618
        %v6620 = vsel %vm1612, %v6504, 0.0
        %6621 = vadd.xlane.f32.xlu0 %v6620
        %v6622 = vpop.xlane.xlu0 %6621
        %v6623 = vsel %vm1612, %v6509, 0.0
        %6624 = vadd.xlane.f32.xlu0 %v6623
        %v6625 = vpop.xlane.xlu0 %6624
        %v6626 = vsel %vm1612, %v6512, 0.0
        %6627 = vadd.xlane.f32.xlu0 %v6626
        %v6628 = vpop.xlane.xlu0 %6627
        %v6629 = vsel %vm1612, %v6517, 0.0
        %6630 = vadd.xlane.f32.xlu0 %v6629
        %v6631 = vpop.xlane.xlu0 %6630
        %v6632 = vsel %vm1612, %v6520, 0.0
        %6633 = vadd.xlane.f32.xlu0 %v6632
        %v6634 = vpop.xlane.xlu0 %6633
        %v6635 = vsel %vm1612, %v6525, 0.0
        %6636 = vadd.xlane.f32.xlu0 %v6635
        %v6637 = vpop.xlane.xlu0 %6636
        %v6638 = vsel %vm1612, %v6528, 0.0
        %6639 = vadd.xlane.f32.xlu0 %v6638
        %v6640 = vpop.xlane.xlu0 %6639
        %v6641 = vsel %vm1612, %v6533, 0.0
        %6642 = vadd.xlane.f32.xlu0 %v6641
        %v6643 = vpop.xlane.xlu0 %6642
        %v6644 = vsel %vm1612, %v6536, 0.0
        %6645 = vadd.xlane.f32.xlu0 %v6644
        %v6646 = vpop.xlane.xlu0 %6645
        %v6647 = vsel %vm1612, %v6541, 0.0
        %6648 = vadd.xlane.f32.xlu0 %v6647
        %v6649 = vpop.xlane.xlu0 %6648
        %v6650 = vsel %vm1612, %v6544, 0.0
        %6651 = vadd.xlane.f32.xlu0 %v6650
        %v6652 = vpop.xlane.xlu0 %6651
        %v6653 = vsel %vm1612, %v6549, 0.0
        %6654 = vadd.xlane.f32.xlu0 %v6653
        %v6655 = vpop.xlane.xlu0 %6654
        %v6656 = vsel %vm1612, %v6552, 0.0
        %6657 = vadd.xlane.f32.xlu0 %v6656
        %v6658 = vpop.xlane.xlu0 %6657
        %v6659 = vsel %vm1612, %v6557, 0.0
        %6660 = vadd.xlane.f32.xlu0 %v6659
        %v6661 = vpop.xlane.xlu0 %6660
        %v6662 = vsel %vm1612, %v6560, 0.0
        %6663 = vadd.xlane.f32.xlu0 %v6662
        %v6664 = vpop.xlane.xlu0 %6663
        %v6665 = vsel %vm1612, %v6565, 0.0
        %6666 = vadd.xlane.f32.xlu0 %v6665
        %v6667 = vpop.xlane.xlu0 %6666
        %v6668 = vsel %vm1612, %v6568, 0.0
        %6669 = vadd.xlane.f32.xlu0 %v6668
        %v6670 = vpop.xlane.xlu0 %6669
        %v6671 = vsel %vm1612, %v6573, 0.0
        %6672 = vadd.xlane.f32.xlu0 %v6671
        %v6673 = vpop.xlane.xlu0 %6672
        %v6674 = vsel %vm1612, %v6576, 0.0
        %6675 = vadd.xlane.f32.xlu0 %v6674
        %v6676 = vpop.xlane.xlu0 %6675
        %v6677 = vmul.f32 %v6583, %v5886
        %v6678 = vmul.f32 %v6586, %v5886
        %v6679 = vmul.f32 %v6589, %v5886
        %v6680 = vmul.f32 %v6592, %v5886
        %v6681 = vmul.f32 %v6595, %v5886
        %v6682 = vmul.f32 %v6598, %v5886
        %v6683 = vmul.f32 %v6601, %v5886
        %v6684 = vmul.f32 %v6604, %v5886
        %v6685 = vmul.f32 %v6607, %v5886
        %v6686 = vmul.f32 %v6610, %v5886
        %v6687 = vmul.f32 %v6613, %v5886
        %v6688 = vmul.f32 %v6616, %v5886
        %v6689 = vmul.f32 %v6619, %v5886
        %v6690 = vmul.f32 %v6622, %v5886
        %v6691 = vmul.f32 %v6625, %v5886
        %v6692 = vmul.f32 %v6628, %v5886
        %v6693 = vmul.f32 %v6631, %v5886
        %v6694 = vmul.f32 %v6634, %v5886
        %v6695 = vmul.f32 %v6637, %v5886
        %v6696 = vmul.f32 %v6640, %v5886
        %v6697 = vmul.f32 %v6643, %v5886
        %v6698 = vmul.f32 %v6646, %v5886
        %v6699 = vmul.f32 %v6649, %v5886
        %v6700 = vmul.f32 %v6652, %v5886
        %v6701 = vmul.f32 %v6655, %v5886
        %v6702 = vmul.f32 %v6658, %v5886
        %v6703 = vmul.f32 %v6661, %v5886
        %v6704 = vmul.f32 %v6664, %v5886
        %v6705 = vmul.f32 %v6667, %v5886
        %v6706 = vmul.f32 %v6670, %v5886
        %v6707 = vmul.f32 %v6673, %v5886
        %v6708 = vmul.f32 %v6676, %v5886
        %v6709 = vsub.f32 %v6453, %v6677
        %v6710 = vsub.f32 %v6456, %v6678
        %v6711 = vsub.f32 %v6461, %v6679
        %v6712 = vsub.f32 %v6464, %v6680
        %v6713 = vsub.f32 %v6469, %v6681
        %v6714 = vsub.f32 %v6472, %v6682
        %v6715 = vsub.f32 %v6477, %v6683
        %v6716 = vsub.f32 %v6480, %v6684
        %v6717 = vsub.f32 %v6485, %v6685
        %v6718 = vsub.f32 %v6488, %v6686
        %v6719 = vsub.f32 %v6493, %v6687
        %v6720 = vsub.f32 %v6496, %v6688
        %v6721 = vsub.f32 %v6501, %v6689
        %v6722 = vsub.f32 %v6504, %v6690
        %v6723 = vsub.f32 %v6509, %v6691
        %v6724 = vsub.f32 %v6512, %v6692
        %v6725 = vsub.f32 %v6517, %v6693
        %v6726 = vsub.f32 %v6520, %v6694
        %v6727 = vsub.f32 %v6525, %v6695
        %v6728 = vsub.f32 %v6528, %v6696
        %v6729 = vsub.f32 %v6533, %v6697
        %v6730 = vsub.f32 %v6536, %v6698
        %v6731 = vsub.f32 %v6541, %v6699
        %v6732 = vsub.f32 %v6544, %v6700
        %v6733 = vsub.f32 %v6549, %v6701
        %v6734 = vsub.f32 %v6552, %v6702
        %v6735 = vsub.f32 %v6557, %v6703
        %v6736 = vsub.f32 %v6560, %v6704
        %v6737 = vsub.f32 %v6565, %v6705
        %v6738 = vsub.f32 %v6568, %v6706
        %v6739 = vsub.f32 %v6573, %v6707
        %v6740 = vsub.f32 %v6576, %v6708
        %v6741 = vmul.f32 %v6709, %v6709
        %v6742 = vmul.f32 %v6710, %v6710
        %v6743 = vmul.f32 %v6711, %v6711
        %v6744 = vmul.f32 %v6712, %v6712
        %v6745 = vmul.f32 %v6713, %v6713
        %v6746 = vmul.f32 %v6714, %v6714
        %v6747 = vmul.f32 %v6715, %v6715
        %v6748 = vmul.f32 %v6716, %v6716
        %v6749 = vmul.f32 %v6717, %v6717
        %v6750 = vmul.f32 %v6718, %v6718
        %v6751 = vmul.f32 %v6719, %v6719
        %v6752 = vmul.f32 %v6720, %v6720
        %v6753 = vmul.f32 %v6721, %v6721
        %v6754 = vmul.f32 %v6722, %v6722
        %v6755 = vmul.f32 %v6723, %v6723
        %v6756 = vmul.f32 %v6724, %v6724
        %v6757 = vmul.f32 %v6725, %v6725
        %v6758 = vmul.f32 %v6726, %v6726
        %v6759 = vmul.f32 %v6727, %v6727
        %v6760 = vmul.f32 %v6728, %v6728
        %v6761 = vmul.f32 %v6729, %v6729
        %v6762 = vmul.f32 %v6730, %v6730
        %v6763 = vmul.f32 %v6731, %v6731
        %v6764 = vmul.f32 %v6732, %v6732
        %v6765 = vmul.f32 %v6733, %v6733
        %v6766 = vmul.f32 %v6734, %v6734
        %v6767 = vmul.f32 %v6735, %v6735
        %v6768 = vmul.f32 %v6736, %v6736
        %v6769 = vmul.f32 %v6737, %v6737
        %v6770 = vmul.f32 %v6738, %v6738
        %v6771 = vmul.f32 %v6739, %v6739
        %v6772 = vmul.f32 %v6740, %v6740
        %v6773 = vsel %vm1612, %v6741, 0.0
        %6774 = vadd.xlane.f32.xlu0 %v6773
        %v6775 = vpop.xlane.xlu0 %6774
        %v6776 = vsel %vm1612, %v6742, 0.0
        %6777 = vadd.xlane.f32.xlu0 %v6776
        %v6778 = vpop.xlane.xlu0 %6777
        %v6779 = vsel %vm1612, %v6743, 0.0
        %6780 = vadd.xlane.f32.xlu0 %v6779
        %v6781 = vpop.xlane.xlu0 %6780
        %v6782 = vsel %vm1612, %v6744, 0.0
        %6783 = vadd.xlane.f32.xlu0 %v6782
        %v6784 = vpop.xlane.xlu0 %6783
        %v6785 = vsel %vm1612, %v6745, 0.0
        %6786 = vadd.xlane.f32.xlu0 %v6785
        %v6787 = vpop.xlane.xlu0 %6786
        %v6788 = vsel %vm1612, %v6746, 0.0
        %6789 = vadd.xlane.f32.xlu0 %v6788
        %v6790 = vpop.xlane.xlu0 %6789
        %v6791 = vsel %vm1612, %v6747, 0.0
        %6792 = vadd.xlane.f32.xlu0 %v6791
        %v6793 = vpop.xlane.xlu0 %6792
        %v6794 = vsel %vm1612, %v6748, 0.0
        %6795 = vadd.xlane.f32.xlu0 %v6794
        %v6796 = vpop.xlane.xlu0 %6795
        %v6797 = vsel %vm1612, %v6749, 0.0
        %6798 = vadd.xlane.f32.xlu0 %v6797
        %v6799 = vpop.xlane.xlu0 %6798
        %v6800 = vsel %vm1612, %v6750, 0.0
        %6801 = vadd.xlane.f32.xlu0 %v6800
        %v6802 = vpop.xlane.xlu0 %6801
        %v6803 = vsel %vm1612, %v6751, 0.0
        %6804 = vadd.xlane.f32.xlu0 %v6803
        %v6805 = vpop.xlane.xlu0 %6804
        %v6806 = vsel %vm1612, %v6752, 0.0
        %6807 = vadd.xlane.f32.xlu0 %v6806
        %v6808 = vpop.xlane.xlu0 %6807
        %v6809 = vsel %vm1612, %v6753, 0.0
        %6810 = vadd.xlane.f32.xlu0 %v6809
        %v6811 = vpop.xlane.xlu0 %6810
        %v6812 = vsel %vm1612, %v6754, 0.0
        %6813 = vadd.xlane.f32.xlu0 %v6812
        %v6814 = vpop.xlane.xlu0 %6813
        %v6815 = vsel %vm1612, %v6755, 0.0
        %6816 = vadd.xlane.f32.xlu0 %v6815
        %v6817 = vpop.xlane.xlu0 %6816
        %v6818 = vsel %vm1612, %v6756, 0.0
        %6819 = vadd.xlane.f32.xlu0 %v6818
        %v6820 = vpop.xlane.xlu0 %6819
        %v6821 = vsel %vm1612, %v6757, 0.0
        %6822 = vadd.xlane.f32.xlu0 %v6821
        %v6823 = vpop.xlane.xlu0 %6822
        %v6824 = vsel %vm1612, %v6758, 0.0
        %6825 = vadd.xlane.f32.xlu0 %v6824
        %v6826 = vpop.xlane.xlu0 %6825
        %v6827 = vsel %vm1612, %v6759, 0.0
        %6828 = vadd.xlane.f32.xlu0 %v6827
        %v6829 = vpop.xlane.xlu0 %6828
        %v6830 = vsel %vm1612, %v6760, 0.0
        %6831 = vadd.xlane.f32.xlu0 %v6830
        %v6832 = vpop.xlane.xlu0 %6831
        %v6833 = vsel %vm1612, %v6761, 0.0
        %6834 = vadd.xlane.f32.xlu0 %v6833
        %v6835 = vpop.xlane.xlu0 %6834
        %v6836 = vsel %vm1612, %v6762, 0.0
        %6837 = vadd.xlane.f32.xlu0 %v6836
        %v6838 = vpop.xlane.xlu0 %6837
        %v6839 = vsel %vm1612, %v6763, 0.0
        %6840 = vadd.xlane.f32.xlu0 %v6839
        %v6841 = vpop.xlane.xlu0 %6840
        %v6842 = vsel %vm1612, %v6764, 0.0
        %6843 = vadd.xlane.f32.xlu0 %v6842
        %v6844 = vpop.xlane.xlu0 %6843
        %v6845 = vsel %vm1612, %v6765, 0.0
        %6846 = vadd.xlane.f32.xlu0 %v6845
        %v6847 = vpop.xlane.xlu0 %6846
        %v6848 = vsel %vm1612, %v6766, 0.0
        %6849 = vadd.xlane.f32.xlu0 %v6848
        %v6850 = vpop.xlane.xlu0 %6849
        %v6851 = vsel %vm1612, %v6767, 0.0
        %6852 = vadd.xlane.f32.xlu0 %v6851
        %v6853 = vpop.xlane.xlu0 %6852
        %v6854 = vsel %vm1612, %v6768, 0.0
        %6855 = vadd.xlane.f32.xlu0 %v6854
        %v6856 = vpop.xlane.xlu0 %6855
        %v6857 = vsel %vm1612, %v6769, 0.0
        %6858 = vadd.xlane.f32.xlu0 %v6857
        %v6859 = vpop.xlane.xlu0 %6858
        %v6860 = vsel %vm1612, %v6770, 0.0
        %6861 = vadd.xlane.f32.xlu0 %v6860
        %v6862 = vpop.xlane.xlu0 %6861
        %v6863 = vsel %vm1612, %v6771, 0.0
        %6864 = vadd.xlane.f32.xlu0 %v6863
        %v6865 = vpop.xlane.xlu0 %6864
        %v6866 = vsel %vm1612, %v6772, 0.0
        %6867 = vadd.xlane.f32.xlu0 %v6866
        %v6868 = vpop.xlane.xlu0 %6867
        %v6869 = vmul.f32 %v6775, %v5886
        %v6870 = vmul.f32 %v6778, %v5886
        %v6871 = vmul.f32 %v6781, %v5886
        %v6872 = vmul.f32 %v6784, %v5886
        %v6873 = vmul.f32 %v6787, %v5886
        %v6874 = vmul.f32 %v6790, %v5886
        %v6875 = vmul.f32 %v6793, %v5886
        %v6876 = vmul.f32 %v6796, %v5886
        %v6877 = vmul.f32 %v6799, %v5886
        %v6878 = vmul.f32 %v6802, %v5886
        %v6879 = vmul.f32 %v6805, %v5886
        %v6880 = vmul.f32 %v6808, %v5886
        %v6881 = vmul.f32 %v6811, %v5886
        %v6882 = vmul.f32 %v6814, %v5886
        %v6883 = vmul.f32 %v6817, %v5886
        %v6884 = vmul.f32 %v6820, %v5886
        %v6885 = vmul.f32 %v6823, %v5886
        %v6886 = vmul.f32 %v6826, %v5886
        %v6887 = vmul.f32 %v6829, %v5886
        %v6888 = vmul.f32 %v6832, %v5886
        %v6889 = vmul.f32 %v6835, %v5886
        %v6890 = vmul.f32 %v6838, %v5886
        %v6891 = vmul.f32 %v6841, %v5886
        %v6892 = vmul.f32 %v6844, %v5886
        %v6893 = vmul.f32 %v6847, %v5886
        %v6894 = vmul.f32 %v6850, %v5886
        %v6895 = vmul.f32 %v6853, %v5886
        %v6896 = vmul.f32 %v6856, %v5886
        %v6897 = vmul.f32 %v6859, %v5886
        %v6898 = vmul.f32 %v6862, %v5886
        %v6899 = vmul.f32 %v6865, %v5886
        %v6900 = vmul.f32 %v6868, %v5886
        %v6901 = vadd.f32 %v6869, 1e-05
        %v6902 = vadd.f32 %v6870, 1e-05
        %v6903 = vadd.f32 %v6871, 1e-05
        %v6904 = vadd.f32 %v6872, 1e-05
        %v6905 = vadd.f32 %v6873, 1e-05
        %v6906 = vadd.f32 %v6874, 1e-05
        %v6907 = vadd.f32 %v6875, 1e-05
        %v6908 = vadd.f32 %v6876, 1e-05
        %v6909 = vadd.f32 %v6877, 1e-05
        %v6910 = vadd.f32 %v6878, 1e-05
        %v6911 = vadd.f32 %v6879, 1e-05
        %v6912 = vadd.f32 %v6880, 1e-05
        %v6913 = vadd.f32 %v6881, 1e-05
        %v6914 = vadd.f32 %v6882, 1e-05
        %v6915 = vadd.f32 %v6883, 1e-05
        %v6916 = vadd.f32 %v6884, 1e-05
        %v6917 = vadd.f32 %v6885, 1e-05
        %v6918 = vadd.f32 %v6886, 1e-05
        %v6919 = vadd.f32 %v6887, 1e-05
        %v6920 = vadd.f32 %v6888, 1e-05
        %v6921 = vadd.f32 %v6889, 1e-05
        %v6922 = vadd.f32 %v6890, 1e-05
        %v6923 = vadd.f32 %v6891, 1e-05
        %v6924 = vadd.f32 %v6892, 1e-05
        %v6925 = vadd.f32 %v6893, 1e-05
        %v6926 = vadd.f32 %v6894, 1e-05
        %v6927 = vadd.f32 %v6895, 1e-05
        %v6928 = vadd.f32 %v6896, 1e-05
        %v6929 = vadd.f32 %v6897, 1e-05
        %v6930 = vadd.f32 %v6898, 1e-05
        %v6931 = vadd.f32 %v6899, 1e-05
        %v6932 = vadd.f32 %v6900, 1e-05
        %v6933 = vrsqrt.pop %v6901
        %v6934 = vrsqrt.pop %v6902
        %v6935 = vrsqrt.pop %v6903
        %v6936 = vrsqrt.pop %v6904
        %v6937 = vrsqrt.pop %v6905
        %v6938 = vrsqrt.pop %v6906
        %v6939 = vrsqrt.pop %v6907
        %v6940 = vrsqrt.pop %v6908
        %v6941 = vrsqrt.pop %v6909
        %v6942 = vrsqrt.pop %v6910
        %v6943 = vrsqrt.pop %v6911
        %v6944 = vrsqrt.pop %v6912
        %v6945 = vrsqrt.pop %v6913
        %v6946 = vrsqrt.pop %v6914
        %v6947 = vrsqrt.pop %v6915
        %v6948 = vrsqrt.pop %v6916
        %v6949 = vrsqrt.pop %v6917
        %v6950 = vrsqrt.pop %v6918
        %v6951 = vrsqrt.pop %v6919
        %v6952 = vrsqrt.pop %v6920
        %v6953 = vrsqrt.pop %v6921
        %v6954 = vrsqrt.pop %v6922
        %v6955 = vrsqrt.pop %v6923
        %v6956 = vrsqrt.pop %v6924
        %v6957 = vrsqrt.pop %v6925
        %v6958 = vrsqrt.pop %v6926
        %v6959 = vrsqrt.pop %v6927
        %v6960 = vrsqrt.pop %v6928
        %v6961 = vrsqrt.pop %v6929
        %v6962 = vrsqrt.pop %v6930
        %v6963 = vrsqrt.pop %v6931
        %v6964 = vrsqrt.pop %v6932
        %v6965 = vmul.f32 %v6709, %v6933
        %v6966 = vmul.f32 %v6710, %v6934
        %v6967 = vmul.f32 %v6711, %v6935
        %v6968 = vmul.f32 %v6712, %v6936
        %v6969 = vmul.f32 %v6713, %v6937
        %v6970 = vmul.f32 %v6714, %v6938
        %v6971 = vmul.f32 %v6715, %v6939
        %v6972 = vmul.f32 %v6716, %v6940
        %v6973 = vmul.f32 %v6717, %v6941
        %v6974 = vmul.f32 %v6718, %v6942
        %v6975 = vmul.f32 %v6719, %v6943
        %v6976 = vmul.f32 %v6720, %v6944
        %v6977 = vmul.f32 %v6721, %v6945
        %v6978 = vmul.f32 %v6722, %v6946
        %v6979 = vmul.f32 %v6723, %v6947
        %v6980 = vmul.f32 %v6724, %v6948
        %v6981 = vmul.f32 %v6725, %v6949
        %v6982 = vmul.f32 %v6726, %v6950
        %v6983 = vmul.f32 %v6727, %v6951
        %v6984 = vmul.f32 %v6728, %v6952
        %v6985 = vmul.f32 %v6729, %v6953
        %v6986 = vmul.f32 %v6730, %v6954
        %v6987 = vmul.f32 %v6731, %v6955
        %v6988 = vmul.f32 %v6732, %v6956
        %v6989 = vmul.f32 %v6733, %v6957
        %v6990 = vmul.f32 %v6734, %v6958
        %v6991 = vmul.f32 %v6735, %v6959
        %v6992 = vmul.f32 %v6736, %v6960
        %v6993 = vmul.f32 %v6737, %v6961
        %v6994 = vmul.f32 %v6738, %v6962
        %v6995 = vmul.f32 %v6739, %v6963
        %v6996 = vmul.f32 %v6740, %v6964
        %v6998 = vlaneseq
        %v6999 = vshrl.u32 %v6998, 7
        %v7000 = vsub.s32 0, %v6999
        %v7001 = vrot.slane %v6579, %v7000
        %v7003 = vmul.f32 %v6965, %v7001
        %v7004 = vmul.f32 %v6966, %v7001
        %v7005 = vmul.f32 %v6967, %v7001
        %v7006 = vmul.f32 %v6968, %v7001
        %v7007 = vmul.f32 %v6969, %v7001
        %v7008 = vmul.f32 %v6970, %v7001
        %v7009 = vmul.f32 %v6971, %v7001
        %v7010 = vmul.f32 %v6972, %v7001
        %v7011 = vmul.f32 %v6973, %v7001
        %v7012 = vmul.f32 %v6974, %v7001
        %v7013 = vmul.f32 %v6975, %v7001
        %v7014 = vmul.f32 %v6976, %v7001
        %v7015 = vmul.f32 %v6977, %v7001
        %v7016 = vmul.f32 %v6978, %v7001
        %v7017 = vmul.f32 %v6979, %v7001
        %v7018 = vmul.f32 %v6980, %v7001
        %v7019 = vmul.f32 %v6981, %v7001
        %v7020 = vmul.f32 %v6982, %v7001
        %v7021 = vmul.f32 %v6983, %v7001
        %v7022 = vmul.f32 %v6984, %v7001
        %v7023 = vmul.f32 %v6985, %v7001
        %v7024 = vmul.f32 %v6986, %v7001
        %v7025 = vmul.f32 %v6987, %v7001
        %v7026 = vmul.f32 %v6988, %v7001
        %v7027 = vmul.f32 %v6989, %v7001
        %v7028 = vmul.f32 %v6990, %v7001
        %v7029 = vmul.f32 %v6991, %v7001
        %v7030 = vmul.f32 %v6992, %v7001
        %v7031 = vmul.f32 %v6993, %v7001
        %v7032 = vmul.f32 %v6994, %v7001
        %v7033 = vmul.f32 %v6995, %v7001
        %v7034 = vmul.f32 %v6996, %v7001
        %v7036 = vlaneseq
        %v7037 = vshrl.u32 %v7036, 7
        %v7038 = vsub.s32 0, %v7037
        %v7039 = vrot.slane %v6580, %v7038
        %v7041 = vadd.f32 %v7003, %v7039
        %v7042 = vadd.f32 %v7004, %v7039
        %v7043 = vadd.f32 %v7005, %v7039
        %v7044 = vadd.f32 %v7006, %v7039
        %v7045 = vadd.f32 %v7007, %v7039
        %v7046 = vadd.f32 %v7008, %v7039
        %v7047 = vadd.f32 %v7009, %v7039
        %v7048 = vadd.f32 %v7010, %v7039
        %v7049 = vadd.f32 %v7011, %v7039
        %v7050 = vadd.f32 %v7012, %v7039
        %v7051 = vadd.f32 %v7013, %v7039
        %v7052 = vadd.f32 %v7014, %v7039
        %v7053 = vadd.f32 %v7015, %v7039
        %v7054 = vadd.f32 %v7016, %v7039
        %v7055 = vadd.f32 %v7017, %v7039
        %v7056 = vadd.f32 %v7018, %v7039
        %v7057 = vadd.f32 %v7019, %v7039
        %v7058 = vadd.f32 %v7020, %v7039
        %v7059 = vadd.f32 %v7021, %v7039
        %v7060 = vadd.f32 %v7022, %v7039
        %v7061 = vadd.f32 %v7023, %v7039
        %v7062 = vadd.f32 %v7024, %v7039
        %v7063 = vadd.f32 %v7025, %v7039
        %v7064 = vadd.f32 %v7026, %v7039
        %v7065 = vadd.f32 %v7027, %v7039
        %v7066 = vadd.f32 %v7028, %v7039
        %v7067 = vadd.f32 %v7029, %v7039
        %v7068 = vadd.f32 %v7030, %v7039
        %v7069 = vadd.f32 %v7031, %v7039
        %v7070 = vadd.f32 %v7032, %v7039
        %v7071 = vadd.f32 %v7033, %v7039
        %v7072 = vadd.f32 %v7034, %v7039
        %vm7073 = vcmp.gt.f32.partialorder %v7041, 0.0
        %vm7074 = vcmp.gt.f32.partialorder %v7042, 0.0
        %vm7075 = vcmp.gt.f32.partialorder %v7043, 0.0
        %vm7076 = vcmp.gt.f32.partialorder %v7044, 0.0
        %vm7077 = vcmp.gt.f32.partialorder %v7045, 0.0
        %vm7078 = vcmp.gt.f32.partialorder %v7046, 0.0
        %vm7079 = vcmp.gt.f32.partialorder %v7047, 0.0
        %vm7080 = vcmp.gt.f32.partialorder %v7048, 0.0
        %vm7081 = vcmp.gt.f32.partialorder %v7049, 0.0
        %vm7082 = vcmp.gt.f32.partialorder %v7050, 0.0
        %vm7083 = vcmp.gt.f32.partialorder %v7051, 0.0
        %vm7084 = vcmp.gt.f32.partialorder %v7052, 0.0
        %vm7085 = vcmp.gt.f32.partialorder %v7053, 0.0
        %vm7086 = vcmp.gt.f32.partialorder %v7054, 0.0
        %vm7087 = vcmp.gt.f32.partialorder %v7055, 0.0
        %vm7088 = vcmp.gt.f32.partialorder %v7056, 0.0
        %vm7089 = vcmp.gt.f32.partialorder %v7057, 0.0
        %vm7090 = vcmp.gt.f32.partialorder %v7058, 0.0
        %vm7091 = vcmp.gt.f32.partialorder %v7059, 0.0
        %vm7092 = vcmp.gt.f32.partialorder %v7060, 0.0
        %vm7093 = vcmp.gt.f32.partialorder %v7061, 0.0
        %vm7094 = vcmp.gt.f32.partialorder %v7062, 0.0
        %vm7095 = vcmp.gt.f32.partialorder %v7063, 0.0
        %vm7096 = vcmp.gt.f32.partialorder %v7064, 0.0
        %vm7097 = vcmp.gt.f32.partialorder %v7065, 0.0
        %vm7098 = vcmp.gt.f32.partialorder %v7066, 0.0
        %vm7099 = vcmp.gt.f32.partialorder %v7067, 0.0
        %vm7100 = vcmp.gt.f32.partialorder %v7068, 0.0
        %vm7101 = vcmp.gt.f32.partialorder %v7069, 0.0
        %vm7102 = vcmp.gt.f32.partialorder %v7070, 0.0
        %vm7103 = vcmp.gt.f32.partialorder %v7071, 0.0
        %vm7104 = vcmp.gt.f32.partialorder %v7072, 0.0
        %v7105 = vmul.f32 %v7041, 0.01
        %v7106 = vmul.f32 %v7042, 0.01
        %v7107 = vmul.f32 %v7043, 0.01
        %v7108 = vmul.f32 %v7044, 0.01
        %v7109 = vmul.f32 %v7045, 0.01
        %v7110 = vmul.f32 %v7046, 0.01
        %v7111 = vmul.f32 %v7047, 0.01
        %v7112 = vmul.f32 %v7048, 0.01
        %v7113 = vmul.f32 %v7049, 0.01
        %v7114 = vmul.f32 %v7050, 0.01
        %v7115 = vmul.f32 %v7051, 0.01
        %v7116 = vmul.f32 %v7052, 0.01
        %v7117 = vmul.f32 %v7053, 0.01
        %v7118 = vmul.f32 %v7054, 0.01
        %v7119 = vmul.f32 %v7055, 0.01
        %v7120 = vmul.f32 %v7056, 0.01
        %v7121 = vmul.f32 %v7057, 0.01
        %v7122 = vmul.f32 %v7058, 0.01
        %v7123 = vmul.f32 %v7059, 0.01
        %v7124 = vmul.f32 %v7060, 0.01
        %v7125 = vmul.f32 %v7061, 0.01
        %v7126 = vmul.f32 %v7062, 0.01
        %v7127 = vmul.f32 %v7063, 0.01
        %v7128 = vmul.f32 %v7064, 0.01
        %v7129 = vmul.f32 %v7065, 0.01
        %v7130 = vmul.f32 %v7066, 0.01
        %v7131 = vmul.f32 %v7067, 0.01
        %v7132 = vmul.f32 %v7068, 0.01
        %v7133 = vmul.f32 %v7069, 0.01
        %v7134 = vmul.f32 %v7070, 0.01
        %v7135 = vmul.f32 %v7071, 0.01
        %v7136 = vmul.f32 %v7072, 0.01
        %v7137 = vsel %vm7073, %v7041, %v7105
        %v7138 = vsel %vm7074, %v7042, %v7106
        %v7139 = vsel %vm7075, %v7043, %v7107
        %v7140 = vsel %vm7076, %v7044, %v7108
        %v7141 = vsel %vm7077, %v7045, %v7109
        %v7142 = vsel %vm7078, %v7046, %v7110
        %v7143 = vsel %vm7079, %v7047, %v7111
        %v7144 = vsel %vm7080, %v7048, %v7112
        %v7145 = vsel %vm7081, %v7049, %v7113
        %v7146 = vsel %vm7082, %v7050, %v7114
        %v7147 = vsel %vm7083, %v7051, %v7115
        %v7148 = vsel %vm7084, %v7052, %v7116
        %v7149 = vsel %vm7085, %v7053, %v7117
        %v7150 = vsel %vm7086, %v7054, %v7118
        %v7151 = vsel %vm7087, %v7055, %v7119
        %v7152 = vsel %vm7088, %v7056, %v7120
        %v7153 = vsel %vm7089, %v7057, %v7121
        %v7154 = vsel %vm7090, %v7058, %v7122
        %v7155 = vsel %vm7091, %v7059, %v7123
        %v7156 = vsel %vm7092, %v7060, %v7124
        %v7157 = vsel %vm7093, %v7061, %v7125
        %v7158 = vsel %vm7094, %v7062, %v7126
        %v7159 = vsel %vm7095, %v7063, %v7127
        %v7160 = vsel %vm7096, %v7064, %v7128
        %v7161 = vsel %vm7097, %v7065, %v7129
        %v7162 = vsel %vm7098, %v7066, %v7130
        %v7163 = vsel %vm7099, %v7067, %v7131
        %v7164 = vsel %vm7100, %v7068, %v7132
        %v7165 = vsel %vm7101, %v7069, %v7133
        %v7166 = vsel %vm7102, %v7070, %v7134
        %v7167 = vsel %vm7103, %v7071, %v7135
        %v7168 = vsel %vm7104, %v7072, %v7136
        %7201 = vrot.lane.b32.xlu0 %v7137, 32
        %v7202 = vpop.permute.xlu0 %7201
        %7203 = vrot.lane.b32.xlu0 %v7138, 32
        %v7204 = vpop.permute.xlu0 %7203
        %7205 = vrot.lane.b32.xlu0 %v7139, 32
        %v7206 = vpop.permute.xlu0 %7205
        %7207 = vrot.lane.b32.xlu0 %v7140, 32
        %v7208 = vpop.permute.xlu0 %7207
        %7209 = vrot.lane.b32.xlu0 %v7141, 32
        %v7210 = vpop.permute.xlu0 %7209
        %7211 = vrot.lane.b32.xlu0 %v7142, 32
        %v7212 = vpop.permute.xlu0 %7211
        %7213 = vrot.lane.b32.xlu0 %v7143, 32
        %v7214 = vpop.permute.xlu0 %7213
        %7215 = vrot.lane.b32.xlu0 %v7144, 32
        %v7216 = vpop.permute.xlu0 %7215
        %7217 = vrot.lane.b32.xlu0 %v7145, 32
        %v7218 = vpop.permute.xlu0 %7217
        %7219 = vrot.lane.b32.xlu0 %v7146, 32
        %v7220 = vpop.permute.xlu0 %7219
        %7221 = vrot.lane.b32.xlu0 %v7147, 32
        %v7222 = vpop.permute.xlu0 %7221
        %7223 = vrot.lane.b32.xlu0 %v7148, 32
        %v7224 = vpop.permute.xlu0 %7223
        %7225 = vrot.lane.b32.xlu0 %v7149, 32
        %v7226 = vpop.permute.xlu0 %7225
        %7227 = vrot.lane.b32.xlu0 %v7150, 32
        %v7228 = vpop.permute.xlu0 %7227
        %7229 = vrot.lane.b32.xlu0 %v7151, 32
        %v7230 = vpop.permute.xlu0 %7229
        %7231 = vrot.lane.b32.xlu0 %v7152, 32
        %v7232 = vpop.permute.xlu0 %7231
        %7233 = vrot.lane.b32.xlu0 %v7153, 32
        %v7234 = vpop.permute.xlu0 %7233
        %7235 = vrot.lane.b32.xlu0 %v7154, 32
        %v7236 = vpop.permute.xlu0 %7235
        %7237 = vrot.lane.b32.xlu0 %v7155, 32
        %v7238 = vpop.permute.xlu0 %7237
        %7239 = vrot.lane.b32.xlu0 %v7156, 32
        %v7240 = vpop.permute.xlu0 %7239
        %7241 = vrot.lane.b32.xlu0 %v7157, 32
        %v7242 = vpop.permute.xlu0 %7241
        %7243 = vrot.lane.b32.xlu0 %v7158, 32
        %v7244 = vpop.permute.xlu0 %7243
        %7245 = vrot.lane.b32.xlu0 %v7159, 32
        %v7246 = vpop.permute.xlu0 %7245
        %7247 = vrot.lane.b32.xlu0 %v7160, 32
        %v7248 = vpop.permute.xlu0 %7247
        %7249 = vrot.lane.b32.xlu0 %v7161, 32
        %v7250 = vpop.permute.xlu0 %7249
        %7251 = vrot.lane.b32.xlu0 %v7162, 32
        %v7252 = vpop.permute.xlu0 %7251
        %7253 = vrot.lane.b32.xlu0 %v7163, 32
        %v7254 = vpop.permute.xlu0 %7253
        %7255 = vrot.lane.b32.xlu0 %v7164, 32
        %v7256 = vpop.permute.xlu0 %7255
        %7257 = vrot.lane.b32.xlu0 %v7165, 32
        %v7258 = vpop.permute.xlu0 %7257
        %7259 = vrot.lane.b32.xlu0 %v7166, 32
        %v7260 = vpop.permute.xlu0 %7259
        %7261 = vrot.lane.b32.xlu0 %v7167, 32
        %v7262 = vpop.permute.xlu0 %7261
        %7263 = vrot.lane.b32.xlu0 %v7168, 32
        %v7264 = vpop.permute.xlu0 %7263
        %v7297 = vsel %vm1612, %v6347, %v7202
        %v7298 = vsel %vm1612, %v6348, %v7204
        %v7299 = vsel %vm1612, %v6349, %v7206
        %v7300 = vsel %vm1612, %v6350, %v7208
        %v7301 = vsel %vm1612, %v6351, %v7210
        %v7302 = vsel %vm1612, %v6352, %v7212
        %v7303 = vsel %vm1612, %v6353, %v7214
        %v7304 = vsel %vm1612, %v6354, %v7216
        %v7305 = vsel %vm1612, %v6355, %v7218
        %v7306 = vsel %vm1612, %v6356, %v7220
        %v7307 = vsel %vm1612, %v6357, %v7222
        %v7308 = vsel %vm1612, %v6358, %v7224
        %v7309 = vsel %vm1612, %v6359, %v7226
        %v7310 = vsel %vm1612, %v6360, %v7228
        %v7311 = vsel %vm1612, %v6361, %v7230
        %v7312 = vsel %vm1612, %v6362, %v7232
        %v7313 = vsel %vm1612, %v6363, %v7234
        %v7314 = vsel %vm1612, %v6364, %v7236
        %v7315 = vsel %vm1612, %v6365, %v7238
        %v7316 = vsel %vm1612, %v6366, %v7240
        %v7317 = vsel %vm1612, %v6367, %v7242
        %v7318 = vsel %vm1612, %v6368, %v7244
        %v7319 = vsel %vm1612, %v6369, %v7246
        %v7320 = vsel %vm1612, %v6370, %v7248
        %v7321 = vsel %vm1612, %v6371, %v7250
        %v7322 = vsel %vm1612, %v6372, %v7252
        %v7323 = vsel %vm1612, %v6373, %v7254
        %v7324 = vsel %vm1612, %v6374, %v7256
        %v7325 = vsel %vm1612, %v6375, %v7258
        %v7326 = vsel %vm1612, %v6376, %v7260
        %v7327 = vsel %vm1612, %v6377, %v7262
        %v7328 = vsel %vm1612, %v6378, %v7264
        %7329 = vst.msk [vmem:[%s544] sm:$0xff] %vm1645, %v7297
        %7330 = vst.msk [vmem:[%s544 + $0x8] sm:$0xff] %vm1645, %v7298
        %7331 = vst.msk [vmem:[%s544 + $0x10] sm:$0xff] %vm1645, %v7299
        %7332 = vst.msk [vmem:[%s544 + $0x18] sm:$0xff] %vm1645, %v7300
        %7333 = vst.msk [vmem:[%s544 + $0x20] sm:$0xff] %vm1645, %v7301
        %7334 = vst.msk [vmem:[%s544 + $0x28] sm:$0xff] %vm1645, %v7302
        %7335 = vst.msk [vmem:[%s544 + $0x30] sm:$0xff] %vm1645, %v7303
        %7336 = vst.msk [vmem:[%s544 + $0x38] sm:$0xff] %vm1645, %v7304
        %7337 = vst.msk [vmem:[%s544 + $0x40] sm:$0xff] %vm1645, %v7305
        %7338 = vst.msk [vmem:[%s544 + $0x48] sm:$0xff] %vm1645, %v7306
        %7339 = vst.msk [vmem:[%s544 + $0x50] sm:$0xff] %vm1645, %v7307
        %7340 = vst.msk [vmem:[%s544 + $0x58] sm:$0xff] %vm1645, %v7308
        %7341 = vst.msk [vmem:[%s544 + $0x60] sm:$0xff] %vm1645, %v7309
        %7342 = vst.msk [vmem:[%s544 + $0x68] sm:$0xff] %vm1645, %v7310
        %7343 = vst.msk [vmem:[%s544 + $0x70] sm:$0xff] %vm1645, %v7311
        %7344 = vst.msk [vmem:[%s544 + $0x78] sm:$0xff] %vm1645, %v7312
        %7345 = vst.msk [vmem:[%s544 + $0x80] sm:$0xff] %vm1645, %v7313
        %7346 = vst.msk [vmem:[%s544 + $0x88] sm:$0xff] %vm1645, %v7314
        %7347 = vst.msk [vmem:[%s544 + $0x90] sm:$0xff] %vm1645, %v7315
        %7348 = vst.msk [vmem:[%s544 + $0x98] sm:$0xff] %vm1645, %v7316
        %7349 = vst.msk [vmem:[%s544 + $0xa0] sm:$0xff] %vm1645, %v7317
        %7350 = vst.msk [vmem:[%s544 + $0xa8] sm:$0xff] %vm1645, %v7318
        %7351 = vst.msk [vmem:[%s544 + $0xb0] sm:$0xff] %vm1645, %v7319
        %7352 = vst.msk [vmem:[%s544 + $0xb8] sm:$0xff] %vm1645, %v7320
        %7353 = vst.msk [vmem:[%s544 + $0xc0] sm:$0xff] %vm1645, %v7321
        %7354 = vst.msk [vmem:[%s544 + $0xc8] sm:$0xff] %vm1645, %v7322
        %7355 = vst.msk [vmem:[%s544 + $0xd0] sm:$0xff] %vm1645, %v7323
        %7356 = vst.msk [vmem:[%s544 + $0xd8] sm:$0xff] %vm1645, %v7324
        %7357 = vst.msk [vmem:[%s544 + $0xe0] sm:$0xff] %vm1645, %v7325
        %7358 = vst.msk [vmem:[%s544 + $0xe8] sm:$0xff] %vm1645, %v7326
        %7359 = vst.msk [vmem:[%s544 + $0xf0] sm:$0xff] %vm1645, %v7327
        %7360 = vst.msk [vmem:[%s544 + $0xf8] sm:$0xff] %vm1645, %v7328
        %s7361 = sand.u32 %s401, 1
        %s7362 = scalar_lea.sflag [#allocation4], %s7361
        %s7363 = sand.u32 %s401, 1
        %s7364 = smul.addr %s7363, 256
        %s7365 = scalar_lea.vmem [#allocation3], %s7364
        // Predicated region
        $region89: #{tpu_custom_call.1} parent=87 // pred_check
          %p7366 = pneg %p411
        $region90: #{tpu_custom_call.1} parent=87 // pred_check_branch
          %7368 = sbr.rel (%p7366) target = $region92
        $region91: #{tpu_custom_call.1} parent=87 // pred_region
          %s7369 = smul.u32 4, %s31
          %s7371 = ssub.s32 4096, 4096
          %7372 = vsyncadd %s7362, %s7371
          %s7373 = smul.addr %s7369, 8
          %s7374 = smul.addr %s7373, 128
          %s7375 = scalar_lea.hbm %s17, %s7374
          %s7376 = sshll.u32 %s7365, 4
          %s7377 = int_to_ptr.vmem [resolvable:$true] %s7376
          %7382 = dma.vmem_to_hbm [thread:$0]  %s7377, 4096, %s7375, %s7362, 128, 128, 8
        $region92: #{tpu_custom_call.1} parent=87 // pred_fallthru
          _
      $region88: #{tpu_custom_call.1} parent=5 // pred_fallthru
        _
      %p7383 = scmp.le.s32.totalorder 2, %s26
      // Predicated region
      $region93: #{tpu_custom_call.1} parent=5 // pred_check
        %p7384 = pneg %p7383
      $region94: #{tpu_custom_call.1} parent=5 // pred_check_branch
        %7386 = sbr.rel (%p7384) target = $region96
      $region95: #{tpu_custom_call.1} parent=5 // pred_region
        %s7387 = ssub.s32 %s26, 2
        // Predicated region
        $region97: #{tpu_custom_call.1} parent=95 // pred_check
          %p7388 = pneg %p417
        $region98: #{tpu_custom_call.1} parent=95 // pred_check_branch
          %7390 = sbr.rel (%p7388) target = $region100
        $region99: #{tpu_custom_call.1} parent=95 // pred_region
          %s7391 = sand.u32 %s402, 1
          %s7392 = scalar_lea.sflag [#allocation4], %s7391
          %s7393 = sand.u32 %s402, 1
          %s7394 = smul.addr %s7393, 256
          %s7395 = scalar_lea.vmem [#allocation3], %s7394
          %7396 = dma.done %s7392, 4096
        $region100: #{tpu_custom_call.1} parent=95 // pred_fallthru
          _
      $region96: #{tpu_custom_call.1} parent=5 // pred_fallthru
        _
    $region6: #{tpu_custom_call.1} parent=1 // loop_footer
      %s30 = sadd.s32 1, %s26
    $region7: #{tpu_custom_call.1} parent=1 // loop_footer_branch
      %25 = sbr.rel target = $region3
    $region8: #{tpu_custom_call.1} parent=1 // loop_exit
      _
    %7397 = vsyncpa [#allocation4], 1
    %s7398 = scalar_lea.sflag [#allocation4], 1
    %7399 = vsyncpa %s7398, 1

</llo_original>
